<compile_context>
chip_gen: v7x
topology: tpu7x:2x2x1
jax: 0.10.0
libtpu: 0.0.40
codegen_flags: <defaults>
</compile_context>

<pallas_src>
import functools
import math

import jax
import jax.numpy as jnp
import numpy as np
from jax.experimental import pallas as pl
from jax.experimental.pallas import tpu as pltpu

_EPS = 1e-5
_WDTYPE = jnp.bfloat16   # matmul-operand / activation-scratch dtype (f32 accum)
_NT = 8                  # samples per grid step (M = _NT*P = 128; use 16 on v6e/v7x)


# ----------------------------------------------------------------------------
# Host-side weight packing (one-time, outside the kernel)
# ----------------------------------------------------------------------------
def _bn_fold(p):
    scale = np.asarray(p["gamma"], np.float32) / np.sqrt(
        np.asarray(p["rvar"], np.float32) + _EPS)
    shift = (np.asarray(p["beta"], np.float32)
             - np.asarray(p["rmean"], np.float32) * scale
             + np.asarray(p["b"], np.float32) * scale)
    return scale, shift


def _pack_conv(p, gi, go, stride, pad, pool_interleave=False):
    """Re-block a Conv1d(+folded BN) as row-conv tap matrices.

    Input rows hold `gi` consecutive positions x Cin channels (col o*Cin+ci);
    output rows hold `go` positions x Cout channels.  With gi == go*stride:
        out_row[q] = sum_r in_row[q + d_lo + r] @ taps[r] + shift
    If pool_interleave, output columns are ordered so MaxPool1d(k=2) becomes
    max(first lane half, second lane half) and the pooled tensor is in standard
    packed order for the next layer.
    """
    W = np.asarray(p["W"], np.float32)                 # (Cout, Cin, K)
    Co, Ci, K = W.shape
    scale, shift = _bn_fold(p)
    Ws = W * scale[:, None, None]                      # fold BN scale into W
    d_lo = math.floor(-pad / gi)
    d_hi = math.floor(((go - 1) * stride + (K - 1) - pad) / gi)
    R = d_hi - d_lo + 1
    taps = np.zeros((R, gi * Ci, go * Co), np.float32)
    shift_p = np.zeros((go * Co,), np.float32)
    for s in range(go):
        if pool_interleave:    # pool partners land in opposite lane halves
            col0 = (s // 2) * Co + (s % 2) * (go // 2) * Co
        else:
            col0 = s * Co
        shift_p[col0:col0 + Co] = shift
        for r in range(R):
            d = d_lo + r
            for o in range(gi):
                k = gi * d + o - s * stride + pad
                if 0 <= k < K:
                    taps[r, o * Ci:(o + 1) * Ci, col0:col0 + Co] = Ws[:, :, k].T
    return jnp.asarray(taps, _WDTYPE), jnp.asarray(shift_p[None, :], jnp.float32)


def _pack_fc(pfc1, pfc2, S, C):
    # PyTorch flattens (N, C, L) -> flat[c*S + l]; our feature is feat[l, c],
    # flattened as [l*C + c], so re-index W1 accordingly and flatten to 2D.
    W1 = np.asarray(pfc1["W"], np.float32)             # (256, C*S)
    H = W1.shape[0]
    w1 = W1.reshape(H, C, S).transpose(2, 1, 0).reshape(S * C, H)   # row l*C+c
    b1 = np.asarray(pfc1["b"], np.float32)[None, :]
    W2 = np.asarray(pfc2["W"], np.float32)             # (out, 256)
    out_dim = W2.shape[0]
    padded = max(128, ((out_dim + 127) // 128) * 128)  # lane-dense output store
    w2 = np.pad(W2.T, ((0, 0), (0, padded - out_dim)))
    b2 = np.pad(np.asarray(pfc2["b"], np.float32), (0, padded - out_dim))[None, :]
    return (jnp.asarray(w1, _WDTYPE), jnp.asarray(b1, jnp.float32),
            jnp.asarray(w2, _WDTYPE), jnp.asarray(b2, jnp.float32))


def prepare_weights(params):
    """Fold BN + re-block every layer's weights for the fused kernel."""
    w = {}
    # stage 1: two k=7/s=2 convs; input packed 32 positions/row (128 lanes).
    w["a"], w["sa"] = _pack_conv(params["c1_0"], gi=32, go=16, stride=2, pad=3)
    w["b"], w["sb"] = _pack_conv(params["c1_1"], gi=16, go=8, stride=2, pad=3,
                                 pool_interleave=True)      # fused maxpool1
    # stage 2: two k=3/s=1 convs, packed 4 positions/row.
    w["c"], w["sc"] = _pack_conv(params["c2_0"], gi=4, go=4, stride=1, pad=1)
    w["d"], w["sd"] = _pack_conv(params["c2_1"], gi=4, go=4, stride=1, pad=1,
                                 pool_interleave=True)      # fused maxpool2
    # stage 3: bottleneck stack, packed 2 positions/row.
    w["e"], w["se"] = _pack_conv(params["c3_0"], gi=2, go=2, stride=1, pad=0)
    w["f"], w["sf"] = _pack_conv(params["c3_1"], gi=2, go=2, stride=1, pad=1)
    w["g"], w["sg"] = _pack_conv(params["c3_2"], gi=2, go=2, stride=1, pad=0)
    w["h"], w["sh"] = _pack_conv(params["c3_3"], gi=2, go=2, stride=1, pad=1,
                                 pool_interleave=True)      # fused maxpool3
    cfinal = params["c3_3"]["W"].shape[0]
    s_len = params["fc1"]["W"].shape[1] // cfinal
    w["w1"], w["b1"], w["w2"], w["b2"] = _pack_fc(
        params["fc1"], params["fc2"], S=s_len, C=cfinal)
    return w


# ----------------------------------------------------------------------------
# Fused whole-network Pallas kernel (one grid step = NT samples, batch-stacked)
# ----------------------------------------------------------------------------
def _detection_net_kernel(
        x_ref,
        a_ref, sa_ref, b_ref, sb_ref, c_ref, sc_ref, d_ref, sd_ref,
        e_ref, se_ref, f_ref, sf_ref, g_ref, sg_ref, h_ref, sh_ref,
        w1_ref, b1_ref, w2_ref, b2_ref,
        o_ref,
        s1, s2, s3, s4, s5,
        *, nt, p):
    body = nt * p                 # rows holding real positions (no halos)
    rows = nt * (p + 2)

    # Zero only the per-sample halo rows (first/last nt rows of each slab);
    # they provide the conv zero padding.  Body rows are always overwritten.
    for buf in (s1, s2, s3, s4, s5):
        width = buf.shape[1]
        buf[0:nt, :] = jnp.zeros((nt, width), buf.dtype)
        buf[rows - nt:rows, :] = jnp.zeros((nt, width), buf.dtype)

    def mm(x2d, w2d):             # bf16 x bf16 -> f32 accumulate on the MXU
        return jax.lax.dot_general(
            x2d, w2d, dimension_numbers=(((1,), (0,)), ((), ())),
            preferred_element_type=jnp.float32)

    def block_conv(read, taps_ref, shift_ref):
        acc = mm(read(0), taps_ref[0])
        for r in range(1, taps_ref.shape[0]):
            acc = acc + mm(read(r), taps_ref[r])
        return jnp.maximum(acc + shift_ref[...], 0.0)

    def shifted(buf):             # tap r -> sublane-tile-aligned static slice
        return lambda r: buf[r * nt:r * nt + body, :]

    def pool(v):                  # fused MaxPool1d(k=2): pool partners sit in
        half = v.shape[-1] // 2   # opposite lane halves by construction
        return jnp.maximum(v[:, :half], v[:, half:])

    def store(buf, val):          # cast once to bf16 at the ReLU epilogue
        buf[nt:nt + body, :] = val.astype(buf.dtype)

    # ---- SimpleNet1d (conv stack; all activations stay in VMEM) ----
    y = block_conv(shifted(x_ref), a_ref, sa_ref)
    store(s1, y)
    z = block_conv(shifted(s1), b_ref, sb_ref)
    store(s2, pool(z))                                        # maxpool1
    c0 = block_conv(shifted(s2), c_ref, sc_ref)
    store(s3, c0)
    d0 = block_conv(shifted(s3), d_ref, sd_ref)
    p2 = pool(d0).astype(_WDTYPE)                             # maxpool2
    e0 = block_conv(lambda r: p2, e_ref, se_ref)              # 1x1 conv
    store(s4, e0)
    f0 = block_conv(shifted(s4), f_ref, sf_ref)
    f0b = f0.astype(_WDTYPE)
    g0 = block_conv(lambda r: f0b, g_ref, sg_ref)             # 1x1 conv
    store(s5, g0)
    h0 = block_conv(shifted(s5), h_ref, sh_ref)
    feat = pool(h0).astype(_WDTYPE)                           # maxpool3 -> (body, C)

    # ---- fc: Linear -> ReLU -> Dropout(eval=id) -> Linear -> sigmoid ----
    # Gather per-sample features: (nt, S*C), column order [l*C + c] matches w1.
    cdim = feat.shape[1]
    feat2 = jnp.concatenate(
        [feat[l * nt:(l + 1) * nt, :] for l in range(p)], axis=1)
    hid = jnp.maximum(mm(feat2, w1_ref[...]) + b1_ref[...], 0.0).astype(_WDTYPE)
    del cdim
    out = mm(hid, w2_ref[...]) + b2_ref[...]
    o_ref[...] = pl.reciprocal(1.0 + jnp.exp(-out), approx=True)   # sigmoid (EUP)


def _const_index_map(i, *, nd):
    return (0,) * nd


def detection_net_pallas(x_packed, w, *, nt, p):
    rows = (p + 2) * nt
    width_in = x_packed.shape[1]
    G = x_packed.shape[0] // rows
    out_w = w["w2"].shape[1]

    weight_list = (w["a"], w["sa"], w["b"], w["sb"], w["c"], w["sc"],
                   w["d"], w["sd"], w["e"], w["se"], w["f"], w["sf"],
                   w["g"], w["sg"], w["h"], w["sh"],
                   w["w1"], w["b1"], w["w2"], w["b2"])

    in_specs = [pl.BlockSpec((rows, width_in), lambda i: (i, 0))]
    in_specs += [pl.BlockSpec(a.shape, functools.partial(_const_index_map, nd=a.ndim))
                 for a in weight_list]

    return pl.pallas_call(
        functools.partial(_detection_net_kernel, nt=nt, p=p),
        out_shape=jax.ShapeDtypeStruct((G * nt, out_w), jnp.float32),
        grid=(G,),
        in_specs=in_specs,
        out_specs=pl.BlockSpec((nt, out_w), lambda i: (i, 0)),
        scratch_shapes=[
            pltpu.VMEM((rows, w["a"].shape[2]), _WDTYPE),       # conv1_0 out
            pltpu.VMEM((rows, w["b"].shape[2] // 2), _WDTYPE),  # pooled conv1_1
            pltpu.VMEM((rows, w["c"].shape[2]), _WDTYPE),       # conv2_0 out
            pltpu.VMEM((rows, w["e"].shape[2]), _WDTYPE),       # conv3_0 out
            pltpu.VMEM((rows, w["g"].shape[2]), _WDTYPE),       # conv3_2 out
        ],
        compiler_params=pltpu.CompilerParams(
            dimension_semantics=("parallel",)),
    )(x_packed, *weight_list)


# ----------------------------------------------------------------------------
# Thin JAX glue: input layout packing + final slice/reshape
# ----------------------------------------------------------------------------
def _pack_input(x_ncl, nt, block=32):
    """(N, Cin, L) -> (G*(P+2)*nt, block*Cin): 32 positions/row, position-major
    rows, sample-minor within each row-group, with zero halo position rows."""
    N, Cin, L = x_ncl.shape
    assert L % block == 0
    P = L // block
    G = (N + nt - 1) // nt
    pad_n = G * nt - N
    x = jnp.transpose(x_ncl, (0, 2, 1)).reshape(N, P, block * Cin)
    if pad_n:
        x = jnp.pad(x, ((0, pad_n), (0, 0), (0, 0)))
    x = x.reshape(G, nt, P, block * Cin)
    x = jnp.transpose(x, (0, 2, 1, 3))                   # (G, P, nt, W)
    x = jnp.pad(x, ((0, 0), (1, 1), (0, 0), (0, 0)))     # zero halo rows
    x = x.reshape(G * (P + 2) * nt, block * Cin)
    return x.astype(_WDTYPE), G, P


def simple_detection_net(x_ncl, packed_weights, S=16, B=1, nt=_NT):
    assert nt % 8 == 0, "nt must be a multiple of 8 (sublane alignment)"
    N = x_ncl.shape[0]
    xp, _, P = _pack_input(x_ncl, nt)
    assert P == S, "network downsamples by 32: L must equal 32*S"
    out = detection_net_pallas(xp, packed_weights, nt=nt, p=P)
    out = out[:N, :S * B * 3]                            # drop batch/lane padding
    return out.reshape(-1, S, B * 3)


# ----------------------------------------------------------------------------
# Pure-JAX reference (mirrors the PyTorch forward, eval mode)
# ----------------------------------------------------------------------------
def _ref_conv_bn_relu(x, p, stride, pad):
    y = jax.lax.conv_general_dilated(
        x, p["W"], window_strides=(stride,), padding=[(pad, pad)],
        dimension_numbers=("NCH", "OIH", "NCH"),
        precision=jax.lax.Precision.HIGHEST)
    y = y + p["b"][None, :, None]
    scale = p["gamma"] / jnp.sqrt(p["rvar"] + _EPS)
    shift = p["beta"] - p["rmean"] * scale
    return jnp.maximum(y * scale[None, :, None] + shift[None, :, None], 0.0)


def _ref_maxpool(x):
    N, C, L = x.shape
    return jnp.max(x.reshape(N, C, L // 2, 2), axis=-1)


def reference_forward(x, params, S, B):
    y = _ref_conv_bn_relu(x, params["c1_0"], 2, 3)
    y = _ref_conv_bn_relu(y, params["c1_1"], 2, 3)
    y = _ref_maxpool(y)
    y = _ref_conv_bn_relu(y, params["c2_0"], 1, 1)
    y = _ref_conv_bn_relu(y, params["c2_1"], 1, 1)
    y = _ref_maxpool(y)
    y = _ref_conv_bn_relu(y, params["c3_0"], 1, 0)
    y = _ref_conv_bn_relu(y, params["c3_1"], 1, 1)
    y = _ref_conv_bn_relu(y, params["c3_2"], 1, 0)
    y = _ref_conv_bn_relu(y, params["c3_3"], 1, 1)
    y = _ref_maxpool(y)
    flat = y.reshape(y.shape[0], -1)                     # PyTorch (N, C*S) order
    h = jnp.maximum(jnp.dot(flat, params["fc1"]["W"].T,
                            precision=jax.lax.Precision.HIGHEST)
                    + params["fc1"]["b"], 0.0)
    o = jnp.dot(h, params["fc2"]["W"].T,
                precision=jax.lax.Precision.HIGHEST) + params["fc2"]["b"]
    return jax.nn.sigmoid(o).reshape(-1, S, B * 3)


# ----------------------------------------------------------------------------
# Parameter init (deterministic, synthetic; mirrors the PyTorch module)
# ----------------------------------------------------------------------------
def _conv_bn_params(key, cin, cout, k):
    kw, kb = jax.random.split(key)
    fan_in = cin * k
    return dict(
        W=jax.random.normal(kw, (cout, cin, k), jnp.float32) / jnp.sqrt(fan_in),
        b=0.01 * jax.random.normal(kb, (cout,), jnp.float32),
        gamma=jnp.ones((cout,), jnp.float32),
        beta=jnp.zeros((cout,), jnp.float32),
        rmean=jnp.zeros((cout,), jnp.float32),
        rvar=jnp.ones((cout,), jnp.float32),
    )


def _linear_params(key, in_f, out_f):
    kw, kb = jax.random.split(key)
    return dict(
        W=jax.random.normal(kw, (out_f, in_f), jnp.float32) / jnp.sqrt(in_f),
        b=0.01 * jax.random.normal(kb, (out_f,), jnp.float32),
    )


def init_params(key, in_channels, S=16, B=1, feature_scale=4):
    filters = [int(f / feature_scale) for f in [64, 128, 256, 512, 1024]][:3]
    f0, f1, f2 = filters  # 16, 32, 64
    ks = jax.random.split(key, 12)
    return dict(
        c1_0=_conv_bn_params(ks[0], in_channels, f0, 7),
        c1_1=_conv_bn_params(ks[1], f0, f0, 7),
        c2_0=_conv_bn_params(ks[2], f0, f1, 3),
        c2_1=_conv_bn_params(ks[3], f1, f1, 3),
        c3_0=_conv_bn_params(ks[4], f1, f2 // 4, 1),
        c3_1=_conv_bn_params(ks[5], f2 // 4, f2 // 2, 3),
        c3_2=_conv_bn_params(ks[6], f2 // 2, f2 // 2, 1),
        c3_3=_conv_bn_params(ks[7], f2 // 2, f2, 3),
        fc1=_linear_params(ks[8], f2 * S, 256),
        fc2=_linear_params(ks[9], 256, S * B * 3),
    )


# ----------------------------------------------------------------------------
if __name__ == "__main__":
    key = jax.random.PRNGKey(0)
    k_param, k_x = jax.random.split(key)

    in_channels, B, S = 4, 1, 16
    N = 16                      # -> grid of 2 steps with NT=8 (exercises pipeline)
    L_in = 32 * S               # total downsample factor is 32 -> final length == S
    params = init_params(k_param, in_channels, S=S, B=B)
    weights = prepare_weights(params)

    x = jax.random.normal(k_x, (N, in_channels, L_in), jnp.float32)  # NCL

    fwd = jax.jit(functools.partial(
        simple_detection_net, packed_weights=weights, S=S, B=B, nt=_NT))
    out = jax.block_until_ready(fwd(x))
    ref = jax.block_until_ready(reference_forward(x, params, S, B))

    assert out.shape == (N, S, B * 3), out.shape
    assert bool(jnp.all(jnp.isfinite(out)))
    assert bool(jnp.all((out >= 0.0) & (out <= 1.0)))   # sigmoid range
    max_err = float(jnp.max(jnp.abs(out - ref)))        # bf16 drift tolerance
    assert max_err < 0.05, f"max abs err vs f32 reference: {max_err}"
    print("KERNEL_OK")
</pallas_src>

<mosaic_0001>
module attributes {stable_mosaic.version = 11 : i64} {
  func.func @_detection_net_kernel(%arg0: i32, %arg1: memref<144x128xbf16, #tpu.memory_space<vmem>>, %arg2: memref<3x128x256xbf16, #tpu.memory_space<vmem>>, %arg3: memref<1x256xf32, #tpu.memory_space<vmem>>, %arg4: memref<3x256x128xbf16, #tpu.memory_space<vmem>>, %arg5: memref<1x128xf32, #tpu.memory_space<vmem>>, %arg6: memref<3x64x128xbf16, #tpu.memory_space<vmem>>, %arg7: memref<1x128xf32, #tpu.memory_space<vmem>>, %arg8: memref<3x128x128xbf16, #tpu.memory_space<vmem>>, %arg9: memref<1x128xf32, #tpu.memory_space<vmem>>, %arg10: memref<1x64x32xbf16, #tpu.memory_space<vmem>>, %arg11: memref<1x32xf32, #tpu.memory_space<vmem>>, %arg12: memref<3x32x64xbf16, #tpu.memory_space<vmem>>, %arg13: memref<1x64xf32, #tpu.memory_space<vmem>>, %arg14: memref<1x64x64xbf16, #tpu.memory_space<vmem>>, %arg15: memref<1x64xf32, #tpu.memory_space<vmem>>, %arg16: memref<3x64x128xbf16, #tpu.memory_space<vmem>>, %arg17: memref<1x128xf32, #tpu.memory_space<vmem>>, %arg18: memref<1024x256xbf16, #tpu.memory_space<vmem>>, %arg19: memref<1x256xf32, #tpu.memory_space<vmem>>, %arg20: memref<256x128xbf16, #tpu.memory_space<vmem>>, %arg21: memref<1x128xf32, #tpu.memory_space<vmem>>, %arg22: memref<8x128xf32, #tpu.memory_space<vmem>>, %arg23: memref<144x256xbf16, #tpu.memory_space<vmem>>, %arg24: memref<144x64xbf16, #tpu.memory_space<vmem>>, %arg25: memref<144x128xbf16, #tpu.memory_space<vmem>>, %arg26: memref<144x32xbf16, #tpu.memory_space<vmem>>, %arg27: memref<144x64xbf16, #tpu.memory_space<vmem>>) attributes {dimension_semantics = [#tpu.dimension_semantics<parallel>], iteration_bounds = array<i64: 2>, scalar_prefetch = 0 : i64, scratch_operands = 5 : i64, tpu.core_type = #tpu.core_type<tc>, window_params = [{transform_indices = @transform_0, window_bounds = array<i64: 144, 128>}, {pipeline_mode = #tpu.pipeline_mode<synchronous>, transform_indices = @transform_1, window_bounds = array<i64: 3, 128, 256>}, {pipeline_mode = #tpu.pipeline_mode<synchronous>, transform_indices = @transform_2, window_bounds = array<i64: 1, 256>}, {pipeline_mode = #tpu.pipeline_mode<synchronous>, transform_indices = @transform_3, window_bounds = array<i64: 3, 256, 128>}, {pipeline_mode = #tpu.pipeline_mode<synchronous>, transform_indices = @transform_4, window_bounds = array<i64: 1, 128>}, {pipeline_mode = #tpu.pipeline_mode<synchronous>, transform_indices = @transform_5, window_bounds = array<i64: 3, 64, 128>}, {pipeline_mode = #tpu.pipeline_mode<synchronous>, transform_indices = @transform_6, window_bounds = array<i64: 1, 128>}, {pipeline_mode = #tpu.pipeline_mode<synchronous>, transform_indices = @transform_7, window_bounds = array<i64: 3, 128, 128>}, {pipeline_mode = #tpu.pipeline_mode<synchronous>, transform_indices = @transform_8, window_bounds = array<i64: 1, 128>}, {pipeline_mode = #tpu.pipeline_mode<synchronous>, transform_indices = @transform_9, window_bounds = array<i64: 1, 64, 32>}, {pipeline_mode = #tpu.pipeline_mode<synchronous>, transform_indices = @transform_10, window_bounds = array<i64: 1, 32>}, {pipeline_mode = #tpu.pipeline_mode<synchronous>, transform_indices = @transform_11, window_bounds = array<i64: 3, 32, 64>}, {pipeline_mode = #tpu.pipeline_mode<synchronous>, transform_indices = @transform_12, window_bounds = array<i64: 1, 64>}, {pipeline_mode = #tpu.pipeline_mode<synchronous>, transform_indices = @transform_13, window_bounds = array<i64: 1, 64, 64>}, {pipeline_mode = #tpu.pipeline_mode<synchronous>, transform_indices = @transform_14, window_bounds = array<i64: 1, 64>}, {pipeline_mode = #tpu.pipeline_mode<synchronous>, transform_indices = @transform_15, window_bounds = array<i64: 3, 64, 128>}, {pipeline_mode = #tpu.pipeline_mode<synchronous>, transform_indices = @transform_16, window_bounds = array<i64: 1, 128>}, {pipeline_mode = #tpu.pipeline_mode<synchronous>, transform_indices = @transform_17, window_bounds = array<i64: 1024, 256>}, {pipeline_mode = #tpu.pipeline_mode<synchronous>, transform_indices = @transform_18, window_bounds = array<i64: 1, 256>}, {pipeline_mode = #tpu.pipeline_mode<synchronous>, transform_indices = @transform_19, window_bounds = array<i64: 256, 128>}, {pipeline_mode = #tpu.pipeline_mode<synchronous>, transform_indices = @transform_20, window_bounds = array<i64: 1, 128>}, {transform_indices = @transform_21, window_bounds = array<i64: 8, 128>}]} {
    %cst = arith.constant 0.000000e+00 : bf16
    %0 = vector.broadcast %cst : bf16 to vector<8x256xbf16>
    %c0 = arith.constant 0 : index
    %c0_0 = arith.constant 0 : index
    %1 = vector.load %arg23[%c0, %c0_0] : memref<144x256xbf16, #tpu.memory_space<vmem>>, vector<8x256xbf16>
    tpu.vector_store %arg23[%c0, %c0_0], %0 {strides = array<i32>} : memref<144x256xbf16, #tpu.memory_space<vmem>>, vector<8x256xbf16>,
    %cst_1 = arith.constant 0.000000e+00 : bf16
    %2 = vector.broadcast %cst_1 : bf16 to vector<8x256xbf16>
    %c136 = arith.constant 136 : index
    %c0_2 = arith.constant 0 : index
    %3 = vector.load %arg23[%c136, %c0_2] : memref<144x256xbf16, #tpu.memory_space<vmem>>, vector<8x256xbf16>
    tpu.vector_store %arg23[%c136, %c0_2], %2 {strides = array<i32>} : memref<144x256xbf16, #tpu.memory_space<vmem>>, vector<8x256xbf16>,
    %cst_3 = arith.constant 0.000000e+00 : bf16
    %4 = vector.broadcast %cst_3 : bf16 to vector<8x64xbf16>
    %c0_4 = arith.constant 0 : index
    %c0_5 = arith.constant 0 : index
    %5 = vector.load %arg24[%c0_4, %c0_5] : memref<144x64xbf16, #tpu.memory_space<vmem>>, vector<8x64xbf16>
    tpu.vector_store %arg24[%c0_4, %c0_5], %4 {strides = array<i32>} : memref<144x64xbf16, #tpu.memory_space<vmem>>, vector<8x64xbf16>,
    %cst_6 = arith.constant 0.000000e+00 : bf16
    %6 = vector.broadcast %cst_6 : bf16 to vector<8x64xbf16>
    %c136_7 = arith.constant 136 : index
    %c0_8 = arith.constant 0 : index
    %7 = vector.load %arg24[%c136_7, %c0_8] : memref<144x64xbf16, #tpu.memory_space<vmem>>, vector<8x64xbf16>
    tpu.vector_store %arg24[%c136_7, %c0_8], %6 {strides = array<i32>} : memref<144x64xbf16, #tpu.memory_space<vmem>>, vector<8x64xbf16>,
    %cst_9 = arith.constant 0.000000e+00 : bf16
    %8 = vector.broadcast %cst_9 : bf16 to vector<8x128xbf16>
    %c0_10 = arith.constant 0 : index
    %c0_11 = arith.constant 0 : index
    %9 = vector.load %arg25[%c0_10, %c0_11] : memref<144x128xbf16, #tpu.memory_space<vmem>>, vector<8x128xbf16>
    tpu.vector_store %arg25[%c0_10, %c0_11], %8 {strides = array<i32>} : memref<144x128xbf16, #tpu.memory_space<vmem>>, vector<8x128xbf16>,
    %cst_12 = arith.constant 0.000000e+00 : bf16
    %10 = vector.broadcast %cst_12 : bf16 to vector<8x128xbf16>
    %c136_13 = arith.constant 136 : index
    %c0_14 = arith.constant 0 : index
    %11 = vector.load %arg25[%c136_13, %c0_14] : memref<144x128xbf16, #tpu.memory_space<vmem>>, vector<8x128xbf16>
    tpu.vector_store %arg25[%c136_13, %c0_14], %10 {strides = array<i32>} : memref<144x128xbf16, #tpu.memory_space<vmem>>, vector<8x128xbf16>,
    %cst_15 = arith.constant 0.000000e+00 : bf16
    %12 = vector.broadcast %cst_15 : bf16 to vector<8x32xbf16>
    %c0_16 = arith.constant 0 : index
    %c0_17 = arith.constant 0 : index
    %13 = vector.load %arg26[%c0_16, %c0_17] : memref<144x32xbf16, #tpu.memory_space<vmem>>, vector<8x32xbf16>
    tpu.vector_store %arg26[%c0_16, %c0_17], %12 {strides = array<i32>} : memref<144x32xbf16, #tpu.memory_space<vmem>>, vector<8x32xbf16>,
    %cst_18 = arith.constant 0.000000e+00 : bf16
    %14 = vector.broadcast %cst_18 : bf16 to vector<8x32xbf16>
    %c136_19 = arith.constant 136 : index
    %c0_20 = arith.constant 0 : index
    %15 = vector.load %arg26[%c136_19, %c0_20] : memref<144x32xbf16, #tpu.memory_space<vmem>>, vector<8x32xbf16>
    tpu.vector_store %arg26[%c136_19, %c0_20], %14 {strides = array<i32>} : memref<144x32xbf16, #tpu.memory_space<vmem>>, vector<8x32xbf16>,
    %cst_21 = arith.constant 0.000000e+00 : bf16
    %16 = vector.broadcast %cst_21 : bf16 to vector<8x64xbf16>
    %c0_22 = arith.constant 0 : index
    %c0_23 = arith.constant 0 : index
    %17 = vector.load %arg27[%c0_22, %c0_23] : memref<144x64xbf16, #tpu.memory_space<vmem>>, vector<8x64xbf16>
    tpu.vector_store %arg27[%c0_22, %c0_23], %16 {strides = array<i32>} : memref<144x64xbf16, #tpu.memory_space<vmem>>, vector<8x64xbf16>,
    %cst_24 = arith.constant 0.000000e+00 : bf16
    %18 = vector.broadcast %cst_24 : bf16 to vector<8x64xbf16>
    %c136_25 = arith.constant 136 : index
    %c0_26 = arith.constant 0 : index
    %19 = vector.load %arg27[%c136_25, %c0_26] : memref<144x64xbf16, #tpu.memory_space<vmem>>, vector<8x64xbf16>
    tpu.vector_store %arg27[%c136_25, %c0_26], %18 {strides = array<i32>} : memref<144x64xbf16, #tpu.memory_space<vmem>>, vector<8x64xbf16>,
    %c0_27 = arith.constant 0 : index
    %c0_28 = arith.constant 0 : index
    %20 = vector.load %arg1[%c0_27, %c0_28] : memref<144x128xbf16, #tpu.memory_space<vmem>>, vector<128x128xbf16>
    %c0_29 = arith.constant 0 : index
    %c0_30 = arith.constant 0 : index
    %c0_31 = arith.constant 0 : index
    %21 = vector.load %arg2[%c0_29, %c0_30, %c0_31] : memref<3x128x256xbf16, #tpu.memory_space<vmem>>, vector<1x128x256xbf16>
    %22 = vector.shape_cast %21 : vector<1x128x256xbf16> to vector<128x256xbf16>
    %cst_32 = arith.constant dense<0.000000e+00> : vector<128x256xf32>
    %23 = tpu.matmul %20, %22, %cst_32 {dimension_numbers = #tpu.dot_dimension_numbers<[1], [0], [0], [1], [0, 0, 1, 1], [], []>} : vector<128x128xbf16>, vector<128x256xbf16>, vector<128x256xf32> -> vector<128x256xf32>
    %c8 = arith.constant 8 : index
    %c0_33 = arith.constant 0 : index
    %24 = vector.load %arg1[%c8, %c0_33] : memref<144x128xbf16, #tpu.memory_space<vmem>>, vector<128x128xbf16>
    %c1 = arith.constant 1 : index
    %c0_34 = arith.constant 0 : index
    %c0_35 = arith.constant 0 : index
    %25 = vector.load %arg2[%c1, %c0_34, %c0_35] : memref<3x128x256xbf16, #tpu.memory_space<vmem>>, vector<1x128x256xbf16>
    %26 = vector.shape_cast %25 : vector<1x128x256xbf16> to vector<128x256xbf16>
    %cst_36 = arith.constant dense<0.000000e+00> : vector<128x256xf32>
    %27 = tpu.matmul %24, %26, %cst_36 {dimension_numbers = #tpu.dot_dimension_numbers<[1], [0], [0], [1], [0, 0, 1, 1], [], []>} : vector<128x128xbf16>, vector<128x256xbf16>, vector<128x256xf32> -> vector<128x256xf32>
    %28 = arith.addf %23, %27 : vector<128x256xf32>
    %c16 = arith.constant 16 : index
    %c0_37 = arith.constant 0 : index
    %29 = vector.load %arg1[%c16, %c0_37] : memref<144x128xbf16, #tpu.memory_space<vmem>>, vector<128x128xbf16>
    %c2 = arith.constant 2 : index
    %c0_38 = arith.constant 0 : index
    %c0_39 = arith.constant 0 : index
    %30 = vector.load %arg2[%c2, %c0_38, %c0_39] : memref<3x128x256xbf16, #tpu.memory_space<vmem>>, vector<1x128x256xbf16>
    %31 = vector.shape_cast %30 : vector<1x128x256xbf16> to vector<128x256xbf16>
    %cst_40 = arith.constant dense<0.000000e+00> : vector<128x256xf32>
    %32 = tpu.matmul %29, %31, %cst_40 {dimension_numbers = #tpu.dot_dimension_numbers<[1], [0], [0], [1], [0, 0, 1, 1], [], []>} : vector<128x128xbf16>, vector<128x256xbf16>, vector<128x256xf32> -> vector<128x256xf32>
    %33 = arith.addf %28, %32 : vector<128x256xf32>
    %c0_41 = arith.constant 0 : index
    %c0_42 = arith.constant 0 : index
    %34 = vector.load %arg3[%c0_41, %c0_42] : memref<1x256xf32, #tpu.memory_space<vmem>>, vector<1x256xf32>
    %35 = vector.broadcast %34 : vector<1x256xf32> to vector<128x256xf32>
    %36 = arith.addf %33, %35 : vector<128x256xf32>
    %cst_43 = arith.constant 0.000000e+00 : f32
    %37 = vector.broadcast %cst_43 : f32 to vector<128x256xf32>
    %38 = arith.maximumf %36, %37 : vector<128x256xf32>
    %39 = arith.truncf %38 : vector<128x256xf32> to vector<128x256xbf16>
    %c8_44 = arith.constant 8 : index
    %c0_45 = arith.constant 0 : index
    %40 = vector.load %arg23[%c8_44, %c0_45] : memref<144x256xbf16, #tpu.memory_space<vmem>>, vector<128x256xbf16>
    tpu.vector_store %arg23[%c8_44, %c0_45], %39 {strides = array<i32>} : memref<144x256xbf16, #tpu.memory_space<vmem>>, vector<128x256xbf16>,
    %c0_46 = arith.constant 0 : index
    %c0_47 = arith.constant 0 : index
    %41 = vector.load %arg23[%c0_46, %c0_47] : memref<144x256xbf16, #tpu.memory_space<vmem>>, vector<128x256xbf16>
    %c0_48 = arith.constant 0 : index
    %c0_49 = arith.constant 0 : index
    %c0_50 = arith.constant 0 : index
    %42 = vector.load %arg4[%c0_48, %c0_49, %c0_50] : memref<3x256x128xbf16, #tpu.memory_space<vmem>>, vector<1x256x128xbf16>
    %43 = vector.shape_cast %42 : vector<1x256x128xbf16> to vector<256x128xbf16>
    %cst_51 = arith.constant dense<0.000000e+00> : vector<128x128xf32>
    %44 = tpu.matmul %41, %43, %cst_51 {dimension_numbers = #tpu.dot_dimension_numbers<[1], [0], [0], [1], [0, 0, 1, 1], [], []>} : vector<128x256xbf16>, vector<256x128xbf16>, vector<128x128xf32> -> vector<128x128xf32>
    %c8_52 = arith.constant 8 : index
    %c0_53 = arith.constant 0 : index
    %45 = vector.load %arg23[%c8_52, %c0_53] : memref<144x256xbf16, #tpu.memory_space<vmem>>, vector<128x256xbf16>
    %c1_54 = arith.constant 1 : index
    %c0_55 = arith.constant 0 : index
    %c0_56 = arith.constant 0 : index
    %46 = vector.load %arg4[%c1_54, %c0_55, %c0_56] : memref<3x256x128xbf16, #tpu.memory_space<vmem>>, vector<1x256x128xbf16>
    %47 = vector.shape_cast %46 : vector<1x256x128xbf16> to vector<256x128xbf16>
    %cst_57 = arith.constant dense<0.000000e+00> : vector<128x128xf32>
    %48 = tpu.matmul %45, %47, %cst_57 {dimension_numbers = #tpu.dot_dimension_numbers<[1], [0], [0], [1], [0, 0, 1, 1], [], []>} : vector<128x256xbf16>, vector<256x128xbf16>, vector<128x128xf32> -> vector<128x128xf32>
    %49 = arith.addf %44, %48 : vector<128x128xf32>
    %c16_58 = arith.constant 16 : index
    %c0_59 = arith.constant 0 : index
    %50 = vector.load %arg23[%c16_58, %c0_59] : memref<144x256xbf16, #tpu.memory_space<vmem>>, vector<128x256xbf16>
    %c2_60 = arith.constant 2 : index
    %c0_61 = arith.constant 0 : index
    %c0_62 = arith.constant 0 : index
    %51 = vector.load %arg4[%c2_60, %c0_61, %c0_62] : memref<3x256x128xbf16, #tpu.memory_space<vmem>>, vector<1x256x128xbf16>
    %52 = vector.shape_cast %51 : vector<1x256x128xbf16> to vector<256x128xbf16>
    %cst_63 = arith.constant dense<0.000000e+00> : vector<128x128xf32>
    %53 = tpu.matmul %50, %52, %cst_63 {dimension_numbers = #tpu.dot_dimension_numbers<[1], [0], [0], [1], [0, 0, 1, 1], [], []>} : vector<128x256xbf16>, vector<256x128xbf16>, vector<128x128xf32> -> vector<128x128xf32>
    %54 = arith.addf %49, %53 : vector<128x128xf32>
    %c0_64 = arith.constant 0 : index
    %c0_65 = arith.constant 0 : index
    %55 = vector.load %arg5[%c0_64, %c0_65] : memref<1x128xf32, #tpu.memory_space<vmem>>, vector<1x128xf32>
    %56 = vector.broadcast %55 : vector<1x128xf32> to vector<128x128xf32>
    %57 = arith.addf %54, %56 : vector<128x128xf32>
    %cst_66 = arith.constant 0.000000e+00 : f32
    %58 = vector.broadcast %cst_66 : f32 to vector<128x128xf32>
    %59 = arith.maximumf %57, %58 : vector<128x128xf32>
    %60 = vector.extract_strided_slice %59 {offsets = [0, 0], sizes = [128, 64], strides = [1, 1]} : vector<128x128xf32> to vector<128x64xf32>
    %61 = vector.extract_strided_slice %59 {offsets = [0, 64], sizes = [128, 64], strides = [1, 1]} : vector<128x128xf32> to vector<128x64xf32>
    %62 = arith.maximumf %60, %61 : vector<128x64xf32>
    %63 = arith.truncf %62 : vector<128x64xf32> to vector<128x64xbf16>
    %c8_67 = arith.constant 8 : index
    %c0_68 = arith.constant 0 : index
    %64 = vector.load %arg24[%c8_67, %c0_68] : memref<144x64xbf16, #tpu.memory_space<vmem>>, vector<128x64xbf16>
    tpu.vector_store %arg24[%c8_67, %c0_68], %63 {strides = array<i32>} : memref<144x64xbf16, #tpu.memory_space<vmem>>, vector<128x64xbf16>,
    %c0_69 = arith.constant 0 : index
    %c0_70 = arith.constant 0 : index
    %65 = vector.load %arg24[%c0_69, %c0_70] : memref<144x64xbf16, #tpu.memory_space<vmem>>, vector<128x64xbf16>
    %c0_71 = arith.constant 0 : index
    %c0_72 = arith.constant 0 : index
    %c0_73 = arith.constant 0 : index
    %66 = vector.load %arg6[%c0_71, %c0_72, %c0_73] : memref<3x64x128xbf16, #tpu.memory_space<vmem>>, vector<1x64x128xbf16>
    %67 = vector.shape_cast %66 : vector<1x64x128xbf16> to vector<64x128xbf16>
    %cst_74 = arith.constant dense<0.000000e+00> : vector<128x128xf32>
    %68 = tpu.matmul %65, %67, %cst_74 {dimension_numbers = #tpu.dot_dimension_numbers<[1], [0], [0], [1], [0, 0, 1, 1], [], []>} : vector<128x64xbf16>, vector<64x128xbf16>, vector<128x128xf32> -> vector<128x128xf32>
    %c8_75 = arith.constant 8 : index
    %c0_76 = arith.constant 0 : index
    %69 = vector.load %arg24[%c8_75, %c0_76] : memref<144x64xbf16, #tpu.memory_space<vmem>>, vector<128x64xbf16>
    %c1_77 = arith.constant 1 : index
    %c0_78 = arith.constant 0 : index
    %c0_79 = arith.constant 0 : index
    %70 = vector.load %arg6[%c1_77, %c0_78, %c0_79] : memref<3x64x128xbf16, #tpu.memory_space<vmem>>, vector<1x64x128xbf16>
    %71 = vector.shape_cast %70 : vector<1x64x128xbf16> to vector<64x128xbf16>
    %cst_80 = arith.constant dense<0.000000e+00> : vector<128x128xf32>
    %72 = tpu.matmul %69, %71, %cst_80 {dimension_numbers = #tpu.dot_dimension_numbers<[1], [0], [0], [1], [0, 0, 1, 1], [], []>} : vector<128x64xbf16>, vector<64x128xbf16>, vector<128x128xf32> -> vector<128x128xf32>
    %73 = arith.addf %68, %72 : vector<128x128xf32>
    %c16_81 = arith.constant 16 : index
    %c0_82 = arith.constant 0 : index
    %74 = vector.load %arg24[%c16_81, %c0_82] : memref<144x64xbf16, #tpu.memory_space<vmem>>, vector<128x64xbf16>
    %c2_83 = arith.constant 2 : index
    %c0_84 = arith.constant 0 : index
    %c0_85 = arith.constant 0 : index
    %75 = vector.load %arg6[%c2_83, %c0_84, %c0_85] : memref<3x64x128xbf16, #tpu.memory_space<vmem>>, vector<1x64x128xbf16>
    %76 = vector.shape_cast %75 : vector<1x64x128xbf16> to vector<64x128xbf16>
    %cst_86 = arith.constant dense<0.000000e+00> : vector<128x128xf32>
    %77 = tpu.matmul %74, %76, %cst_86 {dimension_numbers = #tpu.dot_dimension_numbers<[1], [0], [0], [1], [0, 0, 1, 1], [], []>} : vector<128x64xbf16>, vector<64x128xbf16>, vector<128x128xf32> -> vector<128x128xf32>
    %78 = arith.addf %73, %77 : vector<128x128xf32>
    %c0_87 = arith.constant 0 : index
    %c0_88 = arith.constant 0 : index
    %79 = vector.load %arg7[%c0_87, %c0_88] : memref<1x128xf32, #tpu.memory_space<vmem>>, vector<1x128xf32>
    %80 = vector.broadcast %79 : vector<1x128xf32> to vector<128x128xf32>
    %81 = arith.addf %78, %80 : vector<128x128xf32>
    %cst_89 = arith.constant 0.000000e+00 : f32
    %82 = vector.broadcast %cst_89 : f32 to vector<128x128xf32>
    %83 = arith.maximumf %81, %82 : vector<128x128xf32>
    %84 = arith.truncf %83 : vector<128x128xf32> to vector<128x128xbf16>
    %c8_90 = arith.constant 8 : index
    %c0_91 = arith.constant 0 : index
    %85 = vector.load %arg25[%c8_90, %c0_91] : memref<144x128xbf16, #tpu.memory_space<vmem>>, vector<128x128xbf16>
    tpu.vector_store %arg25[%c8_90, %c0_91], %84 {strides = array<i32>} : memref<144x128xbf16, #tpu.memory_space<vmem>>, vector<128x128xbf16>,
    %c0_92 = arith.constant 0 : index
    %c0_93 = arith.constant 0 : index
    %86 = vector.load %arg25[%c0_92, %c0_93] : memref<144x128xbf16, #tpu.memory_space<vmem>>, vector<128x128xbf16>
    %c0_94 = arith.constant 0 : index
    %c0_95 = arith.constant 0 : index
    %c0_96 = arith.constant 0 : index
    %87 = vector.load %arg8[%c0_94, %c0_95, %c0_96] : memref<3x128x128xbf16, #tpu.memory_space<vmem>>, vector<1x128x128xbf16>
    %88 = vector.shape_cast %87 : vector<1x128x128xbf16> to vector<128x128xbf16>
    %cst_97 = arith.constant dense<0.000000e+00> : vector<128x128xf32>
    %89 = tpu.matmul %86, %88, %cst_97 {dimension_numbers = #tpu.dot_dimension_numbers<[1], [0], [0], [1], [0, 0, 1, 1], [], []>} : vector<128x128xbf16>, vector<128x128xbf16>, vector<128x128xf32> -> vector<128x128xf32>
    %c8_98 = arith.constant 8 : index
    %c0_99 = arith.constant 0 : index
    %90 = vector.load %arg25[%c8_98, %c0_99] : memref<144x128xbf16, #tpu.memory_space<vmem>>, vector<128x128xbf16>
    %c1_100 = arith.constant 1 : index
    %c0_101 = arith.constant 0 : index
    %c0_102 = arith.constant 0 : index
    %91 = vector.load %arg8[%c1_100, %c0_101, %c0_102] : memref<3x128x128xbf16, #tpu.memory_space<vmem>>, vector<1x128x128xbf16>
    %92 = vector.shape_cast %91 : vector<1x128x128xbf16> to vector<128x128xbf16>
    %cst_103 = arith.constant dense<0.000000e+00> : vector<128x128xf32>
    %93 = tpu.matmul %90, %92, %cst_103 {dimension_numbers = #tpu.dot_dimension_numbers<[1], [0], [0], [1], [0, 0, 1, 1], [], []>} : vector<128x128xbf16>, vector<128x128xbf16>, vector<128x128xf32> -> vector<128x128xf32>
    %94 = arith.addf %89, %93 : vector<128x128xf32>
    %c16_104 = arith.constant 16 : index
    %c0_105 = arith.constant 0 : index
    %95 = vector.load %arg25[%c16_104, %c0_105] : memref<144x128xbf16, #tpu.memory_space<vmem>>, vector<128x128xbf16>
    %c2_106 = arith.constant 2 : index
    %c0_107 = arith.constant 0 : index
    %c0_108 = arith.constant 0 : index
    %96 = vector.load %arg8[%c2_106, %c0_107, %c0_108] : memref<3x128x128xbf16, #tpu.memory_space<vmem>>, vector<1x128x128xbf16>
    %97 = vector.shape_cast %96 : vector<1x128x128xbf16> to vector<128x128xbf16>
    %cst_109 = arith.constant dense<0.000000e+00> : vector<128x128xf32>
    %98 = tpu.matmul %95, %97, %cst_109 {dimension_numbers = #tpu.dot_dimension_numbers<[1], [0], [0], [1], [0, 0, 1, 1], [], []>} : vector<128x128xbf16>, vector<128x128xbf16>, vector<128x128xf32> -> vector<128x128xf32>
    %99 = arith.addf %94, %98 : vector<128x128xf32>
    %c0_110 = arith.constant 0 : index
    %c0_111 = arith.constant 0 : index
    %100 = vector.load %arg9[%c0_110, %c0_111] : memref<1x128xf32, #tpu.memory_space<vmem>>, vector<1x128xf32>
    %101 = vector.broadcast %100 : vector<1x128xf32> to vector<128x128xf32>
    %102 = arith.addf %99, %101 : vector<128x128xf32>
    %cst_112 = arith.constant 0.000000e+00 : f32
    %103 = vector.broadcast %cst_112 : f32 to vector<128x128xf32>
    %104 = arith.maximumf %102, %103 : vector<128x128xf32>
    %105 = vector.extract_strided_slice %104 {offsets = [0, 0], sizes = [128, 64], strides = [1, 1]} : vector<128x128xf32> to vector<128x64xf32>
    %106 = vector.extract_strided_slice %104 {offsets = [0, 64], sizes = [128, 64], strides = [1, 1]} : vector<128x128xf32> to vector<128x64xf32>
    %107 = arith.maximumf %105, %106 : vector<128x64xf32>
    %108 = arith.truncf %107 : vector<128x64xf32> to vector<128x64xbf16>
    %c0_113 = arith.constant 0 : index
    %c0_114 = arith.constant 0 : index
    %c0_115 = arith.constant 0 : index
    %109 = vector.load %arg10[%c0_113, %c0_114, %c0_115] : memref<1x64x32xbf16, #tpu.memory_space<vmem>>, vector<1x64x32xbf16>
    %110 = vector.shape_cast %109 : vector<1x64x32xbf16> to vector<64x32xbf16>
    %cst_116 = arith.constant dense<0.000000e+00> : vector<128x32xf32>
    %111 = tpu.matmul %108, %110, %cst_116 {dimension_numbers = #tpu.dot_dimension_numbers<[1], [0], [0], [1], [0, 0, 1, 1], [], []>} : vector<128x64xbf16>, vector<64x32xbf16>, vector<128x32xf32> -> vector<128x32xf32>
    %c0_117 = arith.constant 0 : index
    %c0_118 = arith.constant 0 : index
    %112 = vector.load %arg11[%c0_117, %c0_118] : memref<1x32xf32, #tpu.memory_space<vmem>>, vector<1x32xf32>
    %113 = vector.broadcast %112 : vector<1x32xf32> to vector<128x32xf32>
    %114 = arith.addf %111, %113 : vector<128x32xf32>
    %cst_119 = arith.constant 0.000000e+00 : f32
    %115 = vector.broadcast %cst_119 : f32 to vector<128x32xf32>
    %116 = arith.maximumf %114, %115 : vector<128x32xf32>
    %117 = arith.truncf %116 : vector<128x32xf32> to vector<128x32xbf16>
    %c8_120 = arith.constant 8 : index
    %c0_121 = arith.constant 0 : index
    %118 = vector.load %arg26[%c8_120, %c0_121] : memref<144x32xbf16, #tpu.memory_space<vmem>>, vector<128x32xbf16>
    tpu.vector_store %arg26[%c8_120, %c0_121], %117 {strides = array<i32>} : memref<144x32xbf16, #tpu.memory_space<vmem>>, vector<128x32xbf16>,
    %c0_122 = arith.constant 0 : index
    %c0_123 = arith.constant 0 : index
    %119 = vector.load %arg26[%c0_122, %c0_123] : memref<144x32xbf16, #tpu.memory_space<vmem>>, vector<128x32xbf16>
    %c0_124 = arith.constant 0 : index
    %c0_125 = arith.constant 0 : index
    %c0_126 = arith.constant 0 : index
    %120 = vector.load %arg12[%c0_124, %c0_125, %c0_126] : memref<3x32x64xbf16, #tpu.memory_space<vmem>>, vector<1x32x64xbf16>
    %121 = vector.shape_cast %120 : vector<1x32x64xbf16> to vector<32x64xbf16>
    %cst_127 = arith.constant dense<0.000000e+00> : vector<128x64xf32>
    %122 = tpu.matmul %119, %121, %cst_127 {dimension_numbers = #tpu.dot_dimension_numbers<[1], [0], [0], [1], [0, 0, 1, 1], [], []>} : vector<128x32xbf16>, vector<32x64xbf16>, vector<128x64xf32> -> vector<128x64xf32>
    %c8_128 = arith.constant 8 : index
    %c0_129 = arith.constant 0 : index
    %123 = vector.load %arg26[%c8_128, %c0_129] : memref<144x32xbf16, #tpu.memory_space<vmem>>, vector<128x32xbf16>
    %c1_130 = arith.constant 1 : index
    %c0_131 = arith.constant 0 : index
    %c0_132 = arith.constant 0 : index
    %124 = vector.load %arg12[%c1_130, %c0_131, %c0_132] : memref<3x32x64xbf16, #tpu.memory_space<vmem>>, vector<1x32x64xbf16>
    %125 = vector.shape_cast %124 : vector<1x32x64xbf16> to vector<32x64xbf16>
    %cst_133 = arith.constant dense<0.000000e+00> : vector<128x64xf32>
    %126 = tpu.matmul %123, %125, %cst_133 {dimension_numbers = #tpu.dot_dimension_numbers<[1], [0], [0], [1], [0, 0, 1, 1], [], []>} : vector<128x32xbf16>, vector<32x64xbf16>, vector<128x64xf32> -> vector<128x64xf32>
    %127 = arith.addf %122, %126 : vector<128x64xf32>
    %c16_134 = arith.constant 16 : index
    %c0_135 = arith.constant 0 : index
    %128 = vector.load %arg26[%c16_134, %c0_135] : memref<144x32xbf16, #tpu.memory_space<vmem>>, vector<128x32xbf16>
    %c2_136 = arith.constant 2 : index
    %c0_137 = arith.constant 0 : index
    %c0_138 = arith.constant 0 : index
    %129 = vector.load %arg12[%c2_136, %c0_137, %c0_138] : memref<3x32x64xbf16, #tpu.memory_space<vmem>>, vector<1x32x64xbf16>
    %130 = vector.shape_cast %129 : vector<1x32x64xbf16> to vector<32x64xbf16>
    %cst_139 = arith.constant dense<0.000000e+00> : vector<128x64xf32>
    %131 = tpu.matmul %128, %130, %cst_139 {dimension_numbers = #tpu.dot_dimension_numbers<[1], [0], [0], [1], [0, 0, 1, 1], [], []>} : vector<128x32xbf16>, vector<32x64xbf16>, vector<128x64xf32> -> vector<128x64xf32>
    %132 = arith.addf %127, %131 : vector<128x64xf32>
    %c0_140 = arith.constant 0 : index
    %c0_141 = arith.constant 0 : index
    %133 = vector.load %arg13[%c0_140, %c0_141] : memref<1x64xf32, #tpu.memory_space<vmem>>, vector<1x64xf32>
    %134 = vector.broadcast %133 : vector<1x64xf32> to vector<128x64xf32>
    %135 = arith.addf %132, %134 : vector<128x64xf32>
    %cst_142 = arith.constant 0.000000e+00 : f32
    %136 = vector.broadcast %cst_142 : f32 to vector<128x64xf32>
    %137 = arith.maximumf %135, %136 : vector<128x64xf32>
    %138 = arith.truncf %137 : vector<128x64xf32> to vector<128x64xbf16>
    %c0_143 = arith.constant 0 : index
    %c0_144 = arith.constant 0 : index
    %c0_145 = arith.constant 0 : index
    %139 = vector.load %arg14[%c0_143, %c0_144, %c0_145] : memref<1x64x64xbf16, #tpu.memory_space<vmem>>, vector<1x64x64xbf16>
    %140 = vector.shape_cast %139 : vector<1x64x64xbf16> to vector<64x64xbf16>
    %cst_146 = arith.constant dense<0.000000e+00> : vector<128x64xf32>
    %141 = tpu.matmul %138, %140, %cst_146 {dimension_numbers = #tpu.dot_dimension_numbers<[1], [0], [0], [1], [0, 0, 1, 1], [], []>} : vector<128x64xbf16>, vector<64x64xbf16>, vector<128x64xf32> -> vector<128x64xf32>
    %c0_147 = arith.constant 0 : index
    %c0_148 = arith.constant 0 : index
    %142 = vector.load %arg15[%c0_147, %c0_148] : memref<1x64xf32, #tpu.memory_space<vmem>>, vector<1x64xf32>
    %143 = vector.broadcast %142 : vector<1x64xf32> to vector<128x64xf32>
    %144 = arith.addf %141, %143 : vector<128x64xf32>
    %cst_149 = arith.constant 0.000000e+00 : f32
    %145 = vector.broadcast %cst_149 : f32 to vector<128x64xf32>
    %146 = arith.maximumf %144, %145 : vector<128x64xf32>
    %147 = arith.truncf %146 : vector<128x64xf32> to vector<128x64xbf16>
    %c8_150 = arith.constant 8 : index
    %c0_151 = arith.constant 0 : index
    %148 = vector.load %arg27[%c8_150, %c0_151] : memref<144x64xbf16, #tpu.memory_space<vmem>>, vector<128x64xbf16>
    tpu.vector_store %arg27[%c8_150, %c0_151], %147 {strides = array<i32>} : memref<144x64xbf16, #tpu.memory_space<vmem>>, vector<128x64xbf16>,
    %c0_152 = arith.constant 0 : index
    %c0_153 = arith.constant 0 : index
    %149 = vector.load %arg27[%c0_152, %c0_153] : memref<144x64xbf16, #tpu.memory_space<vmem>>, vector<128x64xbf16>
    %c0_154 = arith.constant 0 : index
    %c0_155 = arith.constant 0 : index
    %c0_156 = arith.constant 0 : index
    %150 = vector.load %arg16[%c0_154, %c0_155, %c0_156] : memref<3x64x128xbf16, #tpu.memory_space<vmem>>, vector<1x64x128xbf16>
    %151 = vector.shape_cast %150 : vector<1x64x128xbf16> to vector<64x128xbf16>
    %cst_157 = arith.constant dense<0.000000e+00> : vector<128x128xf32>
    %152 = tpu.matmul %149, %151, %cst_157 {dimension_numbers = #tpu.dot_dimension_numbers<[1], [0], [0], [1], [0, 0, 1, 1], [], []>} : vector<128x64xbf16>, vector<64x128xbf16>, vector<128x128xf32> -> vector<128x128xf32>
    %c8_158 = arith.constant 8 : index
    %c0_159 = arith.constant 0 : index
    %153 = vector.load %arg27[%c8_158, %c0_159] : memref<144x64xbf16, #tpu.memory_space<vmem>>, vector<128x64xbf16>
    %c1_160 = arith.constant 1 : index
    %c0_161 = arith.constant 0 : index
    %c0_162 = arith.constant 0 : index
    %154 = vector.load %arg16[%c1_160, %c0_161, %c0_162] : memref<3x64x128xbf16, #tpu.memory_space<vmem>>, vector<1x64x128xbf16>
    %155 = vector.shape_cast %154 : vector<1x64x128xbf16> to vector<64x128xbf16>
    %cst_163 = arith.constant dense<0.000000e+00> : vector<128x128xf32>
    %156 = tpu.matmul %153, %155, %cst_163 {dimension_numbers = #tpu.dot_dimension_numbers<[1], [0], [0], [1], [0, 0, 1, 1], [], []>} : vector<128x64xbf16>, vector<64x128xbf16>, vector<128x128xf32> -> vector<128x128xf32>
    %157 = arith.addf %152, %156 : vector<128x128xf32>
    %c16_164 = arith.constant 16 : index
    %c0_165 = arith.constant 0 : index
    %158 = vector.load %arg27[%c16_164, %c0_165] : memref<144x64xbf16, #tpu.memory_space<vmem>>, vector<128x64xbf16>
    %c2_166 = arith.constant 2 : index
    %c0_167 = arith.constant 0 : index
    %c0_168 = arith.constant 0 : index
    %159 = vector.load %arg16[%c2_166, %c0_167, %c0_168] : memref<3x64x128xbf16, #tpu.memory_space<vmem>>, vector<1x64x128xbf16>
    %160 = vector.shape_cast %159 : vector<1x64x128xbf16> to vector<64x128xbf16>
    %cst_169 = arith.constant dense<0.000000e+00> : vector<128x128xf32>
    %161 = tpu.matmul %158, %160, %cst_169 {dimension_numbers = #tpu.dot_dimension_numbers<[1], [0], [0], [1], [0, 0, 1, 1], [], []>} : vector<128x64xbf16>, vector<64x128xbf16>, vector<128x128xf32> -> vector<128x128xf32>
    %162 = arith.addf %157, %161 : vector<128x128xf32>
    %c0_170 = arith.constant 0 : index
    %c0_171 = arith.constant 0 : index
    %163 = vector.load %arg17[%c0_170, %c0_171] : memref<1x128xf32, #tpu.memory_space<vmem>>, vector<1x128xf32>
    %164 = vector.broadcast %163 : vector<1x128xf32> to vector<128x128xf32>
    %165 = arith.addf %162, %164 : vector<128x128xf32>
    %cst_172 = arith.constant 0.000000e+00 : f32
    %166 = vector.broadcast %cst_172 : f32 to vector<128x128xf32>
    %167 = arith.maximumf %165, %166 : vector<128x128xf32>
    %168 = vector.extract_strided_slice %167 {offsets = [0, 0], sizes = [128, 64], strides = [1, 1]} : vector<128x128xf32> to vector<128x64xf32>
    %169 = vector.extract_strided_slice %167 {offsets = [0, 64], sizes = [128, 64], strides = [1, 1]} : vector<128x128xf32> to vector<128x64xf32>
    %170 = arith.maximumf %168, %169 : vector<128x64xf32>
    %171 = arith.truncf %170 : vector<128x64xf32> to vector<128x64xbf16>
    %172 = vector.extract_strided_slice %171 {offsets = [0, 0], sizes = [8, 64], strides = [1, 1]} : vector<128x64xbf16> to vector<8x64xbf16>
    %173 = vector.extract_strided_slice %171 {offsets = [8, 0], sizes = [8, 64], strides = [1, 1]} : vector<128x64xbf16> to vector<8x64xbf16>
    %174 = vector.extract_strided_slice %171 {offsets = [16, 0], sizes = [8, 64], strides = [1, 1]} : vector<128x64xbf16> to vector<8x64xbf16>
    %175 = vector.extract_strided_slice %171 {offsets = [24, 0], sizes = [8, 64], strides = [1, 1]} : vector<128x64xbf16> to vector<8x64xbf16>
    %176 = vector.extract_strided_slice %171 {offsets = [32, 0], sizes = [8, 64], strides = [1, 1]} : vector<128x64xbf16> to vector<8x64xbf16>
    %177 = vector.extract_strided_slice %171 {offsets = [40, 0], sizes = [8, 64], strides = [1, 1]} : vector<128x64xbf16> to vector<8x64xbf16>
    %178 = vector.extract_strided_slice %171 {offsets = [48, 0], sizes = [8, 64], strides = [1, 1]} : vector<128x64xbf16> to vector<8x64xbf16>
    %179 = vector.extract_strided_slice %171 {offsets = [56, 0], sizes = [8, 64], strides = [1, 1]} : vector<128x64xbf16> to vector<8x64xbf16>
    %180 = vector.extract_strided_slice %171 {offsets = [64, 0], sizes = [8, 64], strides = [1, 1]} : vector<128x64xbf16> to vector<8x64xbf16>
    %181 = vector.extract_strided_slice %171 {offsets = [72, 0], sizes = [8, 64], strides = [1, 1]} : vector<128x64xbf16> to vector<8x64xbf16>
    %182 = vector.extract_strided_slice %171 {offsets = [80, 0], sizes = [8, 64], strides = [1, 1]} : vector<128x64xbf16> to vector<8x64xbf16>
    %183 = vector.extract_strided_slice %171 {offsets = [88, 0], sizes = [8, 64], strides = [1, 1]} : vector<128x64xbf16> to vector<8x64xbf16>
    %184 = vector.extract_strided_slice %171 {offsets = [96, 0], sizes = [8, 64], strides = [1, 1]} : vector<128x64xbf16> to vector<8x64xbf16>
    %185 = vector.extract_strided_slice %171 {offsets = [104, 0], sizes = [8, 64], strides = [1, 1]} : vector<128x64xbf16> to vector<8x64xbf16>
    %186 = vector.extract_strided_slice %171 {offsets = [112, 0], sizes = [8, 64], strides = [1, 1]} : vector<128x64xbf16> to vector<8x64xbf16>
    %187 = vector.extract_strided_slice %171 {offsets = [120, 0], sizes = [8, 64], strides = [1, 1]} : vector<128x64xbf16> to vector<8x64xbf16>
    %188 = tpu.concatenate %172, %173, %174, %175, %176, %177, %178, %179, %180, %181, %182, %183, %184, %185, %186, %187 in 1 : vector<8x64xbf16>, vector<8x64xbf16>, vector<8x64xbf16>, vector<8x64xbf16>, vector<8x64xbf16>, vector<8x64xbf16>, vector<8x64xbf16>, vector<8x64xbf16>, vector<8x64xbf16>, vector<8x64xbf16>, vector<8x64xbf16>, vector<8x64xbf16>, vector<8x64xbf16>, vector<8x64xbf16>, vector<8x64xbf16>, vector<8x64xbf16> -> vector<8x1024xbf16>
    %c0_173 = arith.constant 0 : index
    %c0_174 = arith.constant 0 : index
    %189 = vector.load %arg18[%c0_173, %c0_174] : memref<1024x256xbf16, #tpu.memory_space<vmem>>, vector<1024x256xbf16>
    %cst_175 = arith.constant dense<0.000000e+00> : vector<8x256xf32>
    %190 = tpu.matmul %188, %189, %cst_175 {dimension_numbers = #tpu.dot_dimension_numbers<[1], [0], [0], [1], [0, 0, 1, 1], [], []>} : vector<8x1024xbf16>, vector<1024x256xbf16>, vector<8x256xf32> -> vector<8x256xf32>
    %c0_176 = arith.constant 0 : index
    %c0_177 = arith.constant 0 : index
    %191 = vector.load %arg19[%c0_176, %c0_177] : memref<1x256xf32, #tpu.memory_space<vmem>>, vector<1x256xf32>
    %192 = vector.broadcast %191 : vector<1x256xf32> to vector<8x256xf32>
    %193 = arith.addf %190, %192 : vector<8x256xf32>
    %cst_178 = arith.constant 0.000000e+00 : f32
    %194 = vector.broadcast %cst_178 : f32 to vector<8x256xf32>
    %195 = arith.maximumf %193, %194 : vector<8x256xf32>
    %196 = arith.truncf %195 : vector<8x256xf32> to vector<8x256xbf16>
    %c0_179 = arith.constant 0 : index
    %c0_180 = arith.constant 0 : index
    %197 = vector.load %arg20[%c0_179, %c0_180] : memref<256x128xbf16, #tpu.memory_space<vmem>>, vector<256x128xbf16>
    %cst_181 = arith.constant dense<0.000000e+00> : vector<8x128xf32>
    %198 = tpu.matmul %196, %197, %cst_181 {dimension_numbers = #tpu.dot_dimension_numbers<[1], [0], [0], [1], [0, 0, 1, 1], [], []>} : vector<8x256xbf16>, vector<256x128xbf16>, vector<8x128xf32> -> vector<8x128xf32>
    %c0_182 = arith.constant 0 : index
    %c0_183 = arith.constant 0 : index
    %199 = vector.load %arg21[%c0_182, %c0_183] : memref<1x128xf32, #tpu.memory_space<vmem>>, vector<1x128xf32>
    %200 = vector.broadcast %199 : vector<1x128xf32> to vector<8x128xf32>
    %201 = arith.addf %198, %200 : vector<8x128xf32>
    %cst_184 = arith.constant 0.000000e+00 : f32
    %202 = vector.broadcast %cst_184 : f32 to vector<8x128xf32>
    %203 = arith.subf %202, %201 : vector<8x128xf32>
    %204 = math.exp %203 : vector<8x128xf32>
    %cst_185 = arith.constant 1.000000e+00 : f32
    %205 = vector.broadcast %cst_185 : f32 to vector<8x128xf32>
    %206 = arith.addf %205, %204 : vector<8x128xf32>
    %207 = tpu.reciprocal %206 {approx = true} : vector<8x128xf32> -> vector<8x128xf32>
    %c0_186 = arith.constant 0 : index
    %c0_187 = arith.constant 0 : index
    %208 = vector.load %arg22[%c0_186, %c0_187] : memref<8x128xf32, #tpu.memory_space<vmem>>, vector<8x128xf32>
    tpu.vector_store %arg22[%c0_186, %c0_187], %207 {strides = array<i32>} : memref<8x128xf32, #tpu.memory_space<vmem>>, vector<8x128xf32>,
    return
  }
  func.func @transform_0(%arg0: i32) -> (i32, i32) {
    %c0_i32 = arith.constant 0 : i32
    %c0_i32_0 = arith.constant 0 : i32
    return %arg0, %c0_i32 : i32, i32
  }
  func.func @transform_1(%arg0: i32) -> (i32, i32, i32) {
    %c0_i32 = arith.constant 0 : i32
    %c0_i32_0 = arith.constant 0 : i32
    %c0_i32_1 = arith.constant 0 : i32
    %c0_i32_2 = arith.constant 0 : i32
    return %c0_i32, %c0_i32_0, %c0_i32_1 : i32, i32, i32
  }
  func.func @transform_2(%arg0: i32) -> (i32, i32) {
    %c0_i32 = arith.constant 0 : i32
    %c0_i32_0 = arith.constant 0 : i32
    %c0_i32_1 = arith.constant 0 : i32
    return %c0_i32, %c0_i32_0 : i32, i32
  }
  func.func @transform_3(%arg0: i32) -> (i32, i32, i32) {
    %c0_i32 = arith.constant 0 : i32
    %c0_i32_0 = arith.constant 0 : i32
    %c0_i32_1 = arith.constant 0 : i32
    %c0_i32_2 = arith.constant 0 : i32
    return %c0_i32, %c0_i32_0, %c0_i32_1 : i32, i32, i32
  }
  func.func @transform_4(%arg0: i32) -> (i32, i32) {
    %c0_i32 = arith.constant 0 : i32
    %c0_i32_0 = arith.constant 0 : i32
    %c0_i32_1 = arith.constant 0 : i32
    return %c0_i32, %c0_i32_0 : i32, i32
  }
  func.func @transform_5(%arg0: i32) -> (i32, i32, i32) {
    %c0_i32 = arith.constant 0 : i32
    %c0_i32_0 = arith.constant 0 : i32
    %c0_i32_1 = arith.constant 0 : i32
    %c0_i32_2 = arith.constant 0 : i32
    return %c0_i32, %c0_i32_0, %c0_i32_1 : i32, i32, i32
  }
  func.func @transform_6(%arg0: i32) -> (i32, i32) {
    %c0_i32 = arith.constant 0 : i32
    %c0_i32_0 = arith.constant 0 : i32
    %c0_i32_1 = arith.constant 0 : i32
    return %c0_i32, %c0_i32_0 : i32, i32
  }
  func.func @transform_7(%arg0: i32) -> (i32, i32, i32) {
    %c0_i32 = arith.constant 0 : i32
    %c0_i32_0 = arith.constant 0 : i32
    %c0_i32_1 = arith.constant 0 : i32
    %c0_i32_2 = arith.constant 0 : i32
    return %c0_i32, %c0_i32_0, %c0_i32_1 : i32, i32, i32
  }
  func.func @transform_8(%arg0: i32) -> (i32, i32) {
    %c0_i32 = arith.constant 0 : i32
    %c0_i32_0 = arith.constant 0 : i32
    %c0_i32_1 = arith.constant 0 : i32
    return %c0_i32, %c0_i32_0 : i32, i32
  }
  func.func @transform_9(%arg0: i32) -> (i32, i32, i32) {
    %c0_i32 = arith.constant 0 : i32
    %c0_i32_0 = arith.constant 0 : i32
    %c0_i32_1 = arith.constant 0 : i32
    %c0_i32_2 = arith.constant 0 : i32
    return %c0_i32, %c0_i32_0, %c0_i32_1 : i32, i32, i32
  }
  func.func @transform_10(%arg0: i32) -> (i32, i32) {
    %c0_i32 = arith.constant 0 : i32
    %c0_i32_0 = arith.constant 0 : i32
    %c0_i32_1 = arith.constant 0 : i32
    return %c0_i32, %c0_i32_0 : i32, i32
  }
  func.func @transform_11(%arg0: i32) -> (i32, i32, i32) {
    %c0_i32 = arith.constant 0 : i32
    %c0_i32_0 = arith.constant 0 : i32
    %c0_i32_1 = arith.constant 0 : i32
    %c0_i32_2 = arith.constant 0 : i32
    return %c0_i32, %c0_i32_0, %c0_i32_1 : i32, i32, i32
  }
  func.func @transform_12(%arg0: i32) -> (i32, i32) {
    %c0_i32 = arith.constant 0 : i32
    %c0_i32_0 = arith.constant 0 : i32
    %c0_i32_1 = arith.constant 0 : i32
    return %c0_i32, %c0_i32_0 : i32, i32
  }
  func.func @transform_13(%arg0: i32) -> (i32, i32, i32) {
    %c0_i32 = arith.constant 0 : i32
    %c0_i32_0 = arith.constant 0 : i32
    %c0_i32_1 = arith.constant 0 : i32
    %c0_i32_2 = arith.constant 0 : i32
    return %c0_i32, %c0_i32_0, %c0_i32_1 : i32, i32, i32
  }
  func.func @transform_14(%arg0: i32) -> (i32, i32) {
    %c0_i32 = arith.constant 0 : i32
    %c0_i32_0 = arith.constant 0 : i32
    %c0_i32_1 = arith.constant 0 : i32
    return %c0_i32, %c0_i32_0 : i32, i32
  }
  func.func @transform_15(%arg0: i32) -> (i32, i32, i32) {
    %c0_i32 = arith.constant 0 : i32
    %c0_i32_0 = arith.constant 0 : i32
    %c0_i32_1 = arith.constant 0 : i32
    %c0_i32_2 = arith.constant 0 : i32
    return %c0_i32, %c0_i32_0, %c0_i32_1 : i32, i32, i32
  }
  func.func @transform_16(%arg0: i32) -> (i32, i32) {
    %c0_i32 = arith.constant 0 : i32
    %c0_i32_0 = arith.constant 0 : i32
    %c0_i32_1 = arith.constant 0 : i32
    return %c0_i32, %c0_i32_0 : i32, i32
  }
  func.func @transform_17(%arg0: i32) -> (i32, i32) {
    %c0_i32 = arith.constant 0 : i32
    %c0_i32_0 = arith.constant 0 : i32
    %c0_i32_1 = arith.constant 0 : i32
    return %c0_i32, %c0_i32_0 : i32, i32
  }
  func.func @transform_18(%arg0: i32) -> (i32, i32) {
    %c0_i32 = arith.constant 0 : i32
    %c0_i32_0 = arith.constant 0 : i32
    %c0_i32_1 = arith.constant 0 : i32
    return %c0_i32, %c0_i32_0 : i32, i32
  }
  func.func @transform_19(%arg0: i32) -> (i32, i32) {
    %c0_i32 = arith.constant 0 : i32
    %c0_i32_0 = arith.constant 0 : i32
    %c0_i32_1 = arith.constant 0 : i32
    return %c0_i32, %c0_i32_0 : i32, i32
  }
  func.func @transform_20(%arg0: i32) -> (i32, i32) {
    %c0_i32 = arith.constant 0 : i32
    %c0_i32_0 = arith.constant 0 : i32
    %c0_i32_1 = arith.constant 0 : i32
    return %c0_i32, %c0_i32_0 : i32, i32
  }
  func.func @transform_21(%arg0: i32) -> (i32, i32) {
    %c0_i32 = arith.constant 0 : i32
    %c0_i32_0 = arith.constant 0 : i32
    return %arg0, %c0_i32 : i32, i32
  }
}

</mosaic_0001>

<llo_original>
// kernel: simple_detection_net.1
$region0: #{simple_detection_net.1}
  #allocation0 [shape = 'u32[]', space=smem, size = 0x4, offset = 0x4, fixed_abs, tag = 'smem constant byte address 0x4 - core index']
  #allocation1 [shape = 'u32[144,128]{1,0:T(1,128)}', space=vmem, size = 0x12000, scoped, tag = 'internal scratch']
  #allocation2 [shape = 'bf16[144,256]{1,0:T(16,128)(2,1)}', space=vmem, size = 0x12000, scoped, tag = 'scratch operand']
  #allocation3 [shape = 'bf16[144,64]{1,0:T(16,128)(2,1)}', space=vmem, size = 0x9000, scoped, tag = 'scratch operand']
  #allocation4 [shape = 'bf16[144,128]{1,0:T(16,128)(2,1)}', space=vmem, size = 0x9000, scoped, tag = 'scratch operand']
  #allocation5 [shape = 'bf16[144,32]{1,0:T(16,128)(2,1)}', space=vmem, size = 0x9000, scoped, tag = 'scratch operand']
  #allocation6 [shape = 'bf16[144,64]{1,0:T(16,128)(2,1)}', space=vmem, size = 0x9000, scoped, tag = 'scratch operand']
  %s0 = inlined_call_operand.vmem [shape: bf16[288,128], index: 0, kind: input, shape index: {}]
  %s1 = inlined_call_operand.vmem [shape: bf16[3,128,256], index: 1, kind: input, shape index: {}]
  %s2 = inlined_call_operand.vmem [shape: f32[1,256], index: 2, kind: input, shape index: {}]
  %s3 = inlined_call_operand.vmem [shape: bf16[3,256,128], index: 3, kind: input, shape index: {}]
  %s4 = inlined_call_operand.vmem [shape: f32[1,128], index: 4, kind: input, shape index: {}]
  %s5 = inlined_call_operand.vmem [shape: bf16[3,64,128], index: 5, kind: input, shape index: {}]
  %s6 = inlined_call_operand.vmem [shape: f32[1,128], index: 6, kind: input, shape index: {}]
  %s7 = inlined_call_operand.vmem [shape: bf16[3,128,128], index: 7, kind: input, shape index: {}]
  %s8 = inlined_call_operand.vmem [shape: f32[1,128], index: 8, kind: input, shape index: {}]
  %s9 = inlined_call_operand.vmem [shape: bf16[1,64,32], index: 9, kind: input, shape index: {}]
  %s10 = inlined_call_operand.vmem [shape: f32[1,32], index: 10, kind: input, shape index: {}]
  %s11 = inlined_call_operand.vmem [shape: bf16[3,32,64], index: 11, kind: input, shape index: {}]
  %s12 = inlined_call_operand.vmem [shape: f32[1,64], index: 12, kind: input, shape index: {}]
  %s13 = inlined_call_operand.vmem [shape: bf16[1,64,64], index: 13, kind: input, shape index: {}]
  %s14 = inlined_call_operand.vmem [shape: f32[1,64], index: 14, kind: input, shape index: {}]
  %s15 = inlined_call_operand.vmem [shape: bf16[3,64,128], index: 15, kind: input, shape index: {}]
  %s16 = inlined_call_operand.vmem [shape: f32[1,128], index: 16, kind: input, shape index: {}]
  %s17 = inlined_call_operand.vmem [shape: bf16[1024,256], index: 17, kind: input, shape index: {}]
  %s18 = inlined_call_operand.vmem [shape: f32[1,256], index: 18, kind: input, shape index: {}]
  %s19 = inlined_call_operand.vmem [shape: bf16[256,128], index: 19, kind: input, shape index: {}]
  %s20 = inlined_call_operand.vmem [shape: f32[1,128], index: 20, kind: input, shape index: {}]
  %s21 = inlined_call_operand.vmem [shape: f32[16,128], index: 21, kind: output, shape index: {}]
  %s22 = sld [smem:[#allocation0]]
  $region117: #{simple_detection_net.1} parent=0
    _
  %s24 = ssub.s32 1, %s22
  %s25 = scalar_select 0, %s24, %s22
  loop: start=0, step=1, limit=4
  $region2: #{simple_detection_net.1} parent=0 // loop_pre_header
    _
  $region3: #{simple_detection_net.1} parent=0 // loop_header
    %s27 = sphi 0, %s31
    %p28 = scmp.ge.s32.totalorder %s27, 4
    %s37 = sphi 0, %s39
    %s40 = sphi 0, %s37
    %s41 = sphi 0, %s40
    %s57 = sphi 0, %s41
    %s61 = sphi 0, %s61
    %s63 = sphi 0, %s61
    %s64 = sphi 0, %s63
    %s78 = sphi 0, %s64
    %s82 = sphi 0, %s82
    %s84 = sphi 0, %s82
    %s85 = sphi 0, %s84
    %s99 = sphi 0, %s85
    %s103 = sphi 0, %s103
    %s105 = sphi 0, %s103
    %s106 = sphi 0, %s105
    %s120 = sphi 0, %s106
    %s124 = sphi 0, %s124
    %s126 = sphi 0, %s124
    %s127 = sphi 0, %s126
    %s141 = sphi 0, %s127
    %s145 = sphi 0, %s145
    %s147 = sphi 0, %s145
    %s148 = sphi 0, %s147
    %s162 = sphi 0, %s148
    %s166 = sphi 0, %s166
    %s168 = sphi 0, %s166
    %s169 = sphi 0, %s168
    %s183 = sphi 0, %s169
    %s187 = sphi 0, %s187
    %s189 = sphi 0, %s187
    %s190 = sphi 0, %s189
    %s204 = sphi 0, %s190
    %s208 = sphi 0, %s208
    %s210 = sphi 0, %s208
    %s211 = sphi 0, %s210
    %s225 = sphi 0, %s211
    %s229 = sphi 0, %s229
    %s231 = sphi 0, %s229
    %s232 = sphi 0, %s231
    %s246 = sphi 0, %s232
    %s250 = sphi 0, %s250
    %s252 = sphi 0, %s250
    %s253 = sphi 0, %s252
    %s267 = sphi 0, %s253
    %s271 = sphi 0, %s271
    %s273 = sphi 0, %s271
    %s274 = sphi 0, %s273
    %s288 = sphi 0, %s274
    %s292 = sphi 0, %s292
    %s294 = sphi 0, %s292
    %s295 = sphi 0, %s294
    %s309 = sphi 0, %s295
    %s313 = sphi 0, %s313
    %s315 = sphi 0, %s313
    %s316 = sphi 0, %s315
    %s330 = sphi 0, %s316
    %s334 = sphi 0, %s334
    %s336 = sphi 0, %s334
    %s337 = sphi 0, %s336
    %s351 = sphi 0, %s337
    %s355 = sphi 0, %s355
    %s357 = sphi 0, %s355
    %s358 = sphi 0, %s357
    %s372 = sphi 0, %s358
    %s376 = sphi 0, %s376
    %s378 = sphi 0, %s376
    %s379 = sphi 0, %s378
    %s393 = sphi 0, %s379
    %s397 = sphi 0, %s397
    %s399 = sphi 0, %s397
    %s400 = sphi 0, %s399
    %s414 = sphi 0, %s400
    %s418 = sphi 0, %s418
    %s420 = sphi 0, %s418
    %s421 = sphi 0, %s420
    %s435 = sphi 0, %s421
    %s439 = sphi 0, %s439
    %s441 = sphi 0, %s439
    %s442 = sphi 0, %s441
    %s456 = sphi 0, %s442
    %s460 = sphi 0, %s460
    %s462 = sphi 0, %s460
    %s463 = sphi 0, %s462
    %s477 = sphi 0, %s463
    %s483 = sphi 0, %s485
    %s486 = sphi 0, %s483
    %s487 = sphi 0, %s486
    %s503 = sphi 0, %s487
  $region4: #{simple_detection_net.1} parent=0 // loop_header_branch
    %30 = sbr.rel (%p28) target = $region8
  $region5: #{simple_detection_net.1} parent=0 // loop_body
    %s32 = ssub.s32 %s27, 1
    %s33 = ssub.s32 %s27, 2
    %s34 = sadd.s32 %s27, 1
    %s35 = ssub.s32 %s27, %s34
    %p36 = scmp.eq.s32.totalorder %s35, 0
    %s38 = sadd.s32 %s37, 1
    %s39 = scalar_select %p36, %s37, %s38
    %p42 = pneg %p36
    %p43 = scmp.eq.s32.totalorder %s27, 1
    %p44 = por %p42, %p43
    %p45 = scmp.ne.s32.totalorder %s37, %s40
    %p46 = scmp.eq.s32.totalorder %s27, 0
    %p47 = por %p45, %p46
    %p48 = scmp.ne.s32.totalorder %s37, %s40
    %p49 = scmp.eq.s32.totalorder %s32, 1
    %p50 = por %p48, %p49
    %p51 = scmp.ne.s32.totalorder %s40, %s41
    %p52 = scmp.eq.s32.totalorder %s32, 0
    %p53 = por %p51, %p52
    %p54 = scmp.ne.s32.totalorder %s40, %s41
    %p55 = scmp.eq.s32.totalorder %s33, 1
    %p56 = por %p54, %p55
    %p58 = scmp.ne.s32.totalorder %s41, %s57
    %p59 = scmp.eq.s32.totalorder %s33, 0
    %p60 = por %p58, %p59
    %s62 = sadd.s32 %s61, 1
    %p65 = scmp.eq.s32.totalorder %s27, 1
    %p66 = scmp.ne.s32.totalorder %s61, %s63
    %p67 = scmp.eq.s32.totalorder %s27, 0
    %p68 = por %p66, %p67
    %p69 = scmp.ne.s32.totalorder %s61, %s63
    %p70 = scmp.eq.s32.totalorder %s32, 1
    %p71 = por %p69, %p70
    %p72 = scmp.ne.s32.totalorder %s63, %s64
    %p73 = scmp.eq.s32.totalorder %s32, 0
    %p74 = por %p72, %p73
    %p75 = scmp.ne.s32.totalorder %s63, %s64
    %p76 = scmp.eq.s32.totalorder %s33, 1
    %p77 = por %p75, %p76
    %p79 = scmp.ne.s32.totalorder %s64, %s78
    %p80 = scmp.eq.s32.totalorder %s33, 0
    %p81 = por %p79, %p80
    %s83 = sadd.s32 %s82, 1
    %p86 = scmp.eq.s32.totalorder %s27, 1
    %p87 = scmp.ne.s32.totalorder %s82, %s84
    %p88 = scmp.eq.s32.totalorder %s27, 0
    %p89 = por %p87, %p88
    %p90 = scmp.ne.s32.totalorder %s82, %s84
    %p91 = scmp.eq.s32.totalorder %s32, 1
    %p92 = por %p90, %p91
    %p93 = scmp.ne.s32.totalorder %s84, %s85
    %p94 = scmp.eq.s32.totalorder %s32, 0
    %p95 = por %p93, %p94
    %p96 = scmp.ne.s32.totalorder %s84, %s85
    %p97 = scmp.eq.s32.totalorder %s33, 1
    %p98 = por %p96, %p97
    %p100 = scmp.ne.s32.totalorder %s85, %s99
    %p101 = scmp.eq.s32.totalorder %s33, 0
    %p102 = por %p100, %p101
    %s104 = sadd.s32 %s103, 1
    %p107 = scmp.eq.s32.totalorder %s27, 1
    %p108 = scmp.ne.s32.totalorder %s103, %s105
    %p109 = scmp.eq.s32.totalorder %s27, 0
    %p110 = por %p108, %p109
    %p111 = scmp.ne.s32.totalorder %s103, %s105
    %p112 = scmp.eq.s32.totalorder %s32, 1
    %p113 = por %p111, %p112
    %p114 = scmp.ne.s32.totalorder %s105, %s106
    %p115 = scmp.eq.s32.totalorder %s32, 0
    %p116 = por %p114, %p115
    %p117 = scmp.ne.s32.totalorder %s105, %s106
    %p118 = scmp.eq.s32.totalorder %s33, 1
    %p119 = por %p117, %p118
    %p121 = scmp.ne.s32.totalorder %s106, %s120
    %p122 = scmp.eq.s32.totalorder %s33, 0
    %p123 = por %p121, %p122
    %s125 = sadd.s32 %s124, 1
    %p128 = scmp.eq.s32.totalorder %s27, 1
    %p129 = scmp.ne.s32.totalorder %s124, %s126
    %p130 = scmp.eq.s32.totalorder %s27, 0
    %p131 = por %p129, %p130
    %p132 = scmp.ne.s32.totalorder %s124, %s126
    %p133 = scmp.eq.s32.totalorder %s32, 1
    %p134 = por %p132, %p133
    %p135 = scmp.ne.s32.totalorder %s126, %s127
    %p136 = scmp.eq.s32.totalorder %s32, 0
    %p137 = por %p135, %p136
    %p138 = scmp.ne.s32.totalorder %s126, %s127
    %p139 = scmp.eq.s32.totalorder %s33, 1
    %p140 = por %p138, %p139
    %p142 = scmp.ne.s32.totalorder %s127, %s141
    %p143 = scmp.eq.s32.totalorder %s33, 0
    %p144 = por %p142, %p143
    %s146 = sadd.s32 %s145, 1
    %p149 = scmp.eq.s32.totalorder %s27, 1
    %p150 = scmp.ne.s32.totalorder %s145, %s147
    %p151 = scmp.eq.s32.totalorder %s27, 0
    %p152 = por %p150, %p151
    %p153 = scmp.ne.s32.totalorder %s145, %s147
    %p154 = scmp.eq.s32.totalorder %s32, 1
    %p155 = por %p153, %p154
    %p156 = scmp.ne.s32.totalorder %s147, %s148
    %p157 = scmp.eq.s32.totalorder %s32, 0
    %p158 = por %p156, %p157
    %p159 = scmp.ne.s32.totalorder %s147, %s148
    %p160 = scmp.eq.s32.totalorder %s33, 1
    %p161 = por %p159, %p160
    %p163 = scmp.ne.s32.totalorder %s148, %s162
    %p164 = scmp.eq.s32.totalorder %s33, 0
    %p165 = por %p163, %p164
    %s167 = sadd.s32 %s166, 1
    %p170 = scmp.eq.s32.totalorder %s27, 1
    %p171 = scmp.ne.s32.totalorder %s166, %s168
    %p172 = scmp.eq.s32.totalorder %s27, 0
    %p173 = por %p171, %p172
    %p174 = scmp.ne.s32.totalorder %s166, %s168
    %p175 = scmp.eq.s32.totalorder %s32, 1
    %p176 = por %p174, %p175
    %p177 = scmp.ne.s32.totalorder %s168, %s169
    %p178 = scmp.eq.s32.totalorder %s32, 0
    %p179 = por %p177, %p178
    %p180 = scmp.ne.s32.totalorder %s168, %s169
    %p181 = scmp.eq.s32.totalorder %s33, 1
    %p182 = por %p180, %p181
    %p184 = scmp.ne.s32.totalorder %s169, %s183
    %p185 = scmp.eq.s32.totalorder %s33, 0
    %p186 = por %p184, %p185
    %s188 = sadd.s32 %s187, 1
    %p191 = scmp.eq.s32.totalorder %s27, 1
    %p192 = scmp.ne.s32.totalorder %s187, %s189
    %p193 = scmp.eq.s32.totalorder %s27, 0
    %p194 = por %p192, %p193
    %p195 = scmp.ne.s32.totalorder %s187, %s189
    %p196 = scmp.eq.s32.totalorder %s32, 1
    %p197 = por %p195, %p196
    %p198 = scmp.ne.s32.totalorder %s189, %s190
    %p199 = scmp.eq.s32.totalorder %s32, 0
    %p200 = por %p198, %p199
    %p201 = scmp.ne.s32.totalorder %s189, %s190
    %p202 = scmp.eq.s32.totalorder %s33, 1
    %p203 = por %p201, %p202
    %p205 = scmp.ne.s32.totalorder %s190, %s204
    %p206 = scmp.eq.s32.totalorder %s33, 0
    %p207 = por %p205, %p206
    %s209 = sadd.s32 %s208, 1
    %p212 = scmp.eq.s32.totalorder %s27, 1
    %p213 = scmp.ne.s32.totalorder %s208, %s210
    %p214 = scmp.eq.s32.totalorder %s27, 0
    %p215 = por %p213, %p214
    %p216 = scmp.ne.s32.totalorder %s208, %s210
    %p217 = scmp.eq.s32.totalorder %s32, 1
    %p218 = por %p216, %p217
    %p219 = scmp.ne.s32.totalorder %s210, %s211
    %p220 = scmp.eq.s32.totalorder %s32, 0
    %p221 = por %p219, %p220
    %p222 = scmp.ne.s32.totalorder %s210, %s211
    %p223 = scmp.eq.s32.totalorder %s33, 1
    %p224 = por %p222, %p223
    %p226 = scmp.ne.s32.totalorder %s211, %s225
    %p227 = scmp.eq.s32.totalorder %s33, 0
    %p228 = por %p226, %p227
    %s230 = sadd.s32 %s229, 1
    %p233 = scmp.eq.s32.totalorder %s27, 1
    %p234 = scmp.ne.s32.totalorder %s229, %s231
    %p235 = scmp.eq.s32.totalorder %s27, 0
    %p236 = por %p234, %p235
    %p237 = scmp.ne.s32.totalorder %s229, %s231
    %p238 = scmp.eq.s32.totalorder %s32, 1
    %p239 = por %p237, %p238
    %p240 = scmp.ne.s32.totalorder %s231, %s232
    %p241 = scmp.eq.s32.totalorder %s32, 0
    %p242 = por %p240, %p241
    %p243 = scmp.ne.s32.totalorder %s231, %s232
    %p244 = scmp.eq.s32.totalorder %s33, 1
    %p245 = por %p243, %p244
    %p247 = scmp.ne.s32.totalorder %s232, %s246
    %p248 = scmp.eq.s32.totalorder %s33, 0
    %p249 = por %p247, %p248
    %s251 = sadd.s32 %s250, 1
    %p254 = scmp.eq.s32.totalorder %s27, 1
    %p255 = scmp.ne.s32.totalorder %s250, %s252
    %p256 = scmp.eq.s32.totalorder %s27, 0
    %p257 = por %p255, %p256
    %p258 = scmp.ne.s32.totalorder %s250, %s252
    %p259 = scmp.eq.s32.totalorder %s32, 1
    %p260 = por %p258, %p259
    %p261 = scmp.ne.s32.totalorder %s252, %s253
    %p262 = scmp.eq.s32.totalorder %s32, 0
    %p263 = por %p261, %p262
    %p264 = scmp.ne.s32.totalorder %s252, %s253
    %p265 = scmp.eq.s32.totalorder %s33, 1
    %p266 = por %p264, %p265
    %p268 = scmp.ne.s32.totalorder %s253, %s267
    %p269 = scmp.eq.s32.totalorder %s33, 0
    %p270 = por %p268, %p269
    %s272 = sadd.s32 %s271, 1
    %p275 = scmp.eq.s32.totalorder %s27, 1
    %p276 = scmp.ne.s32.totalorder %s271, %s273
    %p277 = scmp.eq.s32.totalorder %s27, 0
    %p278 = por %p276, %p277
    %p279 = scmp.ne.s32.totalorder %s271, %s273
    %p280 = scmp.eq.s32.totalorder %s32, 1
    %p281 = por %p279, %p280
    %p282 = scmp.ne.s32.totalorder %s273, %s274
    %p283 = scmp.eq.s32.totalorder %s32, 0
    %p284 = por %p282, %p283
    %p285 = scmp.ne.s32.totalorder %s273, %s274
    %p286 = scmp.eq.s32.totalorder %s33, 1
    %p287 = por %p285, %p286
    %p289 = scmp.ne.s32.totalorder %s274, %s288
    %p290 = scmp.eq.s32.totalorder %s33, 0
    %p291 = por %p289, %p290
    %s293 = sadd.s32 %s292, 1
    %p296 = scmp.eq.s32.totalorder %s27, 1
    %p297 = scmp.ne.s32.totalorder %s292, %s294
    %p298 = scmp.eq.s32.totalorder %s27, 0
    %p299 = por %p297, %p298
    %p300 = scmp.ne.s32.totalorder %s292, %s294
    %p301 = scmp.eq.s32.totalorder %s32, 1
    %p302 = por %p300, %p301
    %p303 = scmp.ne.s32.totalorder %s294, %s295
    %p304 = scmp.eq.s32.totalorder %s32, 0
    %p305 = por %p303, %p304
    %p306 = scmp.ne.s32.totalorder %s294, %s295
    %p307 = scmp.eq.s32.totalorder %s33, 1
    %p308 = por %p306, %p307
    %p310 = scmp.ne.s32.totalorder %s295, %s309
    %p311 = scmp.eq.s32.totalorder %s33, 0
    %p312 = por %p310, %p311
    %s314 = sadd.s32 %s313, 1
    %p317 = scmp.eq.s32.totalorder %s27, 1
    %p318 = scmp.ne.s32.totalorder %s313, %s315
    %p319 = scmp.eq.s32.totalorder %s27, 0
    %p320 = por %p318, %p319
    %p321 = scmp.ne.s32.totalorder %s313, %s315
    %p322 = scmp.eq.s32.totalorder %s32, 1
    %p323 = por %p321, %p322
    %p324 = scmp.ne.s32.totalorder %s315, %s316
    %p325 = scmp.eq.s32.totalorder %s32, 0
    %p326 = por %p324, %p325
    %p327 = scmp.ne.s32.totalorder %s315, %s316
    %p328 = scmp.eq.s32.totalorder %s33, 1
    %p329 = por %p327, %p328
    %p331 = scmp.ne.s32.totalorder %s316, %s330
    %p332 = scmp.eq.s32.totalorder %s33, 0
    %p333 = por %p331, %p332
    %s335 = sadd.s32 %s334, 1
    %p338 = scmp.eq.s32.totalorder %s27, 1
    %p339 = scmp.ne.s32.totalorder %s334, %s336
    %p340 = scmp.eq.s32.totalorder %s27, 0
    %p341 = por %p339, %p340
    %p342 = scmp.ne.s32.totalorder %s334, %s336
    %p343 = scmp.eq.s32.totalorder %s32, 1
    %p344 = por %p342, %p343
    %p345 = scmp.ne.s32.totalorder %s336, %s337
    %p346 = scmp.eq.s32.totalorder %s32, 0
    %p347 = por %p345, %p346
    %p348 = scmp.ne.s32.totalorder %s336, %s337
    %p349 = scmp.eq.s32.totalorder %s33, 1
    %p350 = por %p348, %p349
    %p352 = scmp.ne.s32.totalorder %s337, %s351
    %p353 = scmp.eq.s32.totalorder %s33, 0
    %p354 = por %p352, %p353
    %s356 = sadd.s32 %s355, 1
    %p359 = scmp.eq.s32.totalorder %s27, 1
    %p360 = scmp.ne.s32.totalorder %s355, %s357
    %p361 = scmp.eq.s32.totalorder %s27, 0
    %p362 = por %p360, %p361
    %p363 = scmp.ne.s32.totalorder %s355, %s357
    %p364 = scmp.eq.s32.totalorder %s32, 1
    %p365 = por %p363, %p364
    %p366 = scmp.ne.s32.totalorder %s357, %s358
    %p367 = scmp.eq.s32.totalorder %s32, 0
    %p368 = por %p366, %p367
    %p369 = scmp.ne.s32.totalorder %s357, %s358
    %p370 = scmp.eq.s32.totalorder %s33, 1
    %p371 = por %p369, %p370
    %p373 = scmp.ne.s32.totalorder %s358, %s372
    %p374 = scmp.eq.s32.totalorder %s33, 0
    %p375 = por %p373, %p374
    %s377 = sadd.s32 %s376, 1
    %p380 = scmp.eq.s32.totalorder %s27, 1
    %p381 = scmp.ne.s32.totalorder %s376, %s378
    %p382 = scmp.eq.s32.totalorder %s27, 0
    %p383 = por %p381, %p382
    %p384 = scmp.ne.s32.totalorder %s376, %s378
    %p385 = scmp.eq.s32.totalorder %s32, 1
    %p386 = por %p384, %p385
    %p387 = scmp.ne.s32.totalorder %s378, %s379
    %p388 = scmp.eq.s32.totalorder %s32, 0
    %p389 = por %p387, %p388
    %p390 = scmp.ne.s32.totalorder %s378, %s379
    %p391 = scmp.eq.s32.totalorder %s33, 1
    %p392 = por %p390, %p391
    %p394 = scmp.ne.s32.totalorder %s379, %s393
    %p395 = scmp.eq.s32.totalorder %s33, 0
    %p396 = por %p394, %p395
    %s398 = sadd.s32 %s397, 1
    %p401 = scmp.eq.s32.totalorder %s27, 1
    %p402 = scmp.ne.s32.totalorder %s397, %s399
    %p403 = scmp.eq.s32.totalorder %s27, 0
    %p404 = por %p402, %p403
    %p405 = scmp.ne.s32.totalorder %s397, %s399
    %p406 = scmp.eq.s32.totalorder %s32, 1
    %p407 = por %p405, %p406
    %p408 = scmp.ne.s32.totalorder %s399, %s400
    %p409 = scmp.eq.s32.totalorder %s32, 0
    %p410 = por %p408, %p409
    %p411 = scmp.ne.s32.totalorder %s399, %s400
    %p412 = scmp.eq.s32.totalorder %s33, 1
    %p413 = por %p411, %p412
    %p415 = scmp.ne.s32.totalorder %s400, %s414
    %p416 = scmp.eq.s32.totalorder %s33, 0
    %p417 = por %p415, %p416
    %s419 = sadd.s32 %s418, 1
    %p422 = scmp.eq.s32.totalorder %s27, 1
    %p423 = scmp.ne.s32.totalorder %s418, %s420
    %p424 = scmp.eq.s32.totalorder %s27, 0
    %p425 = por %p423, %p424
    %p426 = scmp.ne.s32.totalorder %s418, %s420
    %p427 = scmp.eq.s32.totalorder %s32, 1
    %p428 = por %p426, %p427
    %p429 = scmp.ne.s32.totalorder %s420, %s421
    %p430 = scmp.eq.s32.totalorder %s32, 0
    %p431 = por %p429, %p430
    %p432 = scmp.ne.s32.totalorder %s420, %s421
    %p433 = scmp.eq.s32.totalorder %s33, 1
    %p434 = por %p432, %p433
    %p436 = scmp.ne.s32.totalorder %s421, %s435
    %p437 = scmp.eq.s32.totalorder %s33, 0
    %p438 = por %p436, %p437
    %s440 = sadd.s32 %s439, 1
    %p443 = scmp.eq.s32.totalorder %s27, 1
    %p444 = scmp.ne.s32.totalorder %s439, %s441
    %p445 = scmp.eq.s32.totalorder %s27, 0
    %p446 = por %p444, %p445
    %p447 = scmp.ne.s32.totalorder %s439, %s441
    %p448 = scmp.eq.s32.totalorder %s32, 1
    %p449 = por %p447, %p448
    %p450 = scmp.ne.s32.totalorder %s441, %s442
    %p451 = scmp.eq.s32.totalorder %s32, 0
    %p452 = por %p450, %p451
    %p453 = scmp.ne.s32.totalorder %s441, %s442
    %p454 = scmp.eq.s32.totalorder %s33, 1
    %p455 = por %p453, %p454
    %p457 = scmp.ne.s32.totalorder %s442, %s456
    %p458 = scmp.eq.s32.totalorder %s33, 0
    %p459 = por %p457, %p458
    %s461 = sadd.s32 %s460, 1
    %p464 = scmp.eq.s32.totalorder %s27, 1
    %p465 = scmp.ne.s32.totalorder %s460, %s462
    %p466 = scmp.eq.s32.totalorder %s27, 0
    %p467 = por %p465, %p466
    %p468 = scmp.ne.s32.totalorder %s460, %s462
    %p469 = scmp.eq.s32.totalorder %s32, 1
    %p470 = por %p468, %p469
    %p471 = scmp.ne.s32.totalorder %s462, %s463
    %p472 = scmp.eq.s32.totalorder %s32, 0
    %p473 = por %p471, %p472
    %p474 = scmp.ne.s32.totalorder %s462, %s463
    %p475 = scmp.eq.s32.totalorder %s33, 1
    %p476 = por %p474, %p475
    %p478 = scmp.ne.s32.totalorder %s463, %s477
    %p479 = scmp.eq.s32.totalorder %s33, 0
    %p480 = por %p478, %p479
    %s481 = ssub.s32 %s27, %s34
    %p482 = scmp.eq.s32.totalorder %s481, 0
    %s484 = sadd.s32 %s483, 1
    %s485 = scalar_select %p482, %s483, %s484
    %p488 = pneg %p482
    %p489 = scmp.eq.s32.totalorder %s27, 1
    %p490 = por %p488, %p489
    %p491 = scmp.ne.s32.totalorder %s483, %s486
    %p492 = scmp.eq.s32.totalorder %s27, 0
    %p493 = por %p491, %p492
    %p494 = scmp.ne.s32.totalorder %s483, %s486
    %p495 = scmp.eq.s32.totalorder %s32, 1
    %p496 = por %p494, %p495
    %p497 = scmp.ne.s32.totalorder %s486, %s487
    %p498 = scmp.eq.s32.totalorder %s32, 0
    %p499 = por %p497, %p498
    %p500 = scmp.ne.s32.totalorder %s486, %s487
    %p501 = scmp.eq.s32.totalorder %s33, 1
    %p502 = por %p500, %p501
    %p504 = scmp.ne.s32.totalorder %s487, %s503
    %p505 = scmp.eq.s32.totalorder %s33, 0
    %p506 = por %p504, %p505
    %p507 = scmp.le.s32.totalorder 1, %s27
    %p508 = scmp.lt.s32.totalorder %s27, 3
    %p509 = pnand %p507, %p508
    %p510 = pneg %p509
    // Predicated region
    $region9: #{simple_detection_net.1} parent=5 // pred_check
      _
    $region10: #{simple_detection_net.1} parent=5 // pred_check_branch
      %512 = sbr.rel (%p509) target = $region12
    $region11: #{simple_detection_net.1} parent=5 // pred_region
      %s513 = ssub.s32 %s27, 1
      // Predicated region
      $region13: #{simple_detection_net.1} parent=11 // pred_check
        %p514 = pneg %p74
      $region14: #{simple_detection_net.1} parent=11 // pred_check_branch
        %516 = sbr.rel (%p514) target = $region16
      $region15: #{simple_detection_net.1} parent=11 // pred_region
        _
      $region16: #{simple_detection_net.1} parent=11 // pred_fallthru
        _
      // Predicated region
      $region17: #{simple_detection_net.1} parent=11 // pred_check
        %p517 = pneg %p95
      $region18: #{simple_detection_net.1} parent=11 // pred_check_branch
        %519 = sbr.rel (%p517) target = $region20
      $region19: #{simple_detection_net.1} parent=11 // pred_region
        _
      $region20: #{simple_detection_net.1} parent=11 // pred_fallthru
        _
      // Predicated region
      $region21: #{simple_detection_net.1} parent=11 // pred_check
        %p520 = pneg %p116
      $region22: #{simple_detection_net.1} parent=11 // pred_check_branch
        %522 = sbr.rel (%p520) target = $region24
      $region23: #{simple_detection_net.1} parent=11 // pred_region
        _
      $region24: #{simple_detection_net.1} parent=11 // pred_fallthru
        _
      // Predicated region
      $region25: #{simple_detection_net.1} parent=11 // pred_check
        %p523 = pneg %p137
      $region26: #{simple_detection_net.1} parent=11 // pred_check_branch
        %525 = sbr.rel (%p523) target = $region28
      $region27: #{simple_detection_net.1} parent=11 // pred_region
        _
      $region28: #{simple_detection_net.1} parent=11 // pred_fallthru
        _
      // Predicated region
      $region29: #{simple_detection_net.1} parent=11 // pred_check
        %p526 = pneg %p158
      $region30: #{simple_detection_net.1} parent=11 // pred_check_branch
        %528 = sbr.rel (%p526) target = $region32
      $region31: #{simple_detection_net.1} parent=11 // pred_region
        _
      $region32: #{simple_detection_net.1} parent=11 // pred_fallthru
        _
      // Predicated region
      $region33: #{simple_detection_net.1} parent=11 // pred_check
        %p529 = pneg %p179
      $region34: #{simple_detection_net.1} parent=11 // pred_check_branch
        %531 = sbr.rel (%p529) target = $region36
      $region35: #{simple_detection_net.1} parent=11 // pred_region
        _
      $region36: #{simple_detection_net.1} parent=11 // pred_fallthru
        _
      // Predicated region
      $region37: #{simple_detection_net.1} parent=11 // pred_check
        %p532 = pneg %p200
      $region38: #{simple_detection_net.1} parent=11 // pred_check_branch
        %534 = sbr.rel (%p532) target = $region40
      $region39: #{simple_detection_net.1} parent=11 // pred_region
        _
      $region40: #{simple_detection_net.1} parent=11 // pred_fallthru
        _
      // Predicated region
      $region41: #{simple_detection_net.1} parent=11 // pred_check
        %p535 = pneg %p221
      $region42: #{simple_detection_net.1} parent=11 // pred_check_branch
        %537 = sbr.rel (%p535) target = $region44
      $region43: #{simple_detection_net.1} parent=11 // pred_region
        _
      $region44: #{simple_detection_net.1} parent=11 // pred_fallthru
        _
      // Predicated region
      $region45: #{simple_detection_net.1} parent=11 // pred_check
        %p538 = pneg %p242
      $region46: #{simple_detection_net.1} parent=11 // pred_check_branch
        %540 = sbr.rel (%p538) target = $region48
      $region47: #{simple_detection_net.1} parent=11 // pred_region
        _
      $region48: #{simple_detection_net.1} parent=11 // pred_fallthru
        _
      // Predicated region
      $region49: #{simple_detection_net.1} parent=11 // pred_check
        %p541 = pneg %p263
      $region50: #{simple_detection_net.1} parent=11 // pred_check_branch
        %543 = sbr.rel (%p541) target = $region52
      $region51: #{simple_detection_net.1} parent=11 // pred_region
        _
      $region52: #{simple_detection_net.1} parent=11 // pred_fallthru
        _
      // Predicated region
      $region53: #{simple_detection_net.1} parent=11 // pred_check
        %p544 = pneg %p284
      $region54: #{simple_detection_net.1} parent=11 // pred_check_branch
        %546 = sbr.rel (%p544) target = $region56
      $region55: #{simple_detection_net.1} parent=11 // pred_region
        _
      $region56: #{simple_detection_net.1} parent=11 // pred_fallthru
        _
      // Predicated region
      $region57: #{simple_detection_net.1} parent=11 // pred_check
        %p547 = pneg %p305
      $region58: #{simple_detection_net.1} parent=11 // pred_check_branch
        %549 = sbr.rel (%p547) target = $region60
      $region59: #{simple_detection_net.1} parent=11 // pred_region
        _
      $region60: #{simple_detection_net.1} parent=11 // pred_fallthru
        _
      // Predicated region
      $region61: #{simple_detection_net.1} parent=11 // pred_check
        %p550 = pneg %p326
      $region62: #{simple_detection_net.1} parent=11 // pred_check_branch
        %552 = sbr.rel (%p550) target = $region64
      $region63: #{simple_detection_net.1} parent=11 // pred_region
        _
      $region64: #{simple_detection_net.1} parent=11 // pred_fallthru
        _
      // Predicated region
      $region65: #{simple_detection_net.1} parent=11 // pred_check
        %p553 = pneg %p347
      $region66: #{simple_detection_net.1} parent=11 // pred_check_branch
        %555 = sbr.rel (%p553) target = $region68
      $region67: #{simple_detection_net.1} parent=11 // pred_region
        _
      $region68: #{simple_detection_net.1} parent=11 // pred_fallthru
        _
      // Predicated region
      $region69: #{simple_detection_net.1} parent=11 // pred_check
        %p556 = pneg %p368
      $region70: #{simple_detection_net.1} parent=11 // pred_check_branch
        %558 = sbr.rel (%p556) target = $region72
      $region71: #{simple_detection_net.1} parent=11 // pred_region
        _
      $region72: #{simple_detection_net.1} parent=11 // pred_fallthru
        _
      // Predicated region
      $region73: #{simple_detection_net.1} parent=11 // pred_check
        %p559 = pneg %p389
      $region74: #{simple_detection_net.1} parent=11 // pred_check_branch
        %561 = sbr.rel (%p559) target = $region76
      $region75: #{simple_detection_net.1} parent=11 // pred_region
        _
      $region76: #{simple_detection_net.1} parent=11 // pred_fallthru
        _
      // Predicated region
      $region77: #{simple_detection_net.1} parent=11 // pred_check
        %p562 = pneg %p410
      $region78: #{simple_detection_net.1} parent=11 // pred_check_branch
        %564 = sbr.rel (%p562) target = $region80
      $region79: #{simple_detection_net.1} parent=11 // pred_region
        _
      $region80: #{simple_detection_net.1} parent=11 // pred_fallthru
        _
      // Predicated region
      $region81: #{simple_detection_net.1} parent=11 // pred_check
        %p565 = pneg %p431
      $region82: #{simple_detection_net.1} parent=11 // pred_check_branch
        %567 = sbr.rel (%p565) target = $region84
      $region83: #{simple_detection_net.1} parent=11 // pred_region
        _
      $region84: #{simple_detection_net.1} parent=11 // pred_fallthru
        _
      // Predicated region
      $region85: #{simple_detection_net.1} parent=11 // pred_check
        %p568 = pneg %p452
      $region86: #{simple_detection_net.1} parent=11 // pred_check_branch
        %570 = sbr.rel (%p568) target = $region88
      $region87: #{simple_detection_net.1} parent=11 // pred_region
        _
      $region88: #{simple_detection_net.1} parent=11 // pred_fallthru
        _
      // Predicated region
      $region89: #{simple_detection_net.1} parent=11 // pred_check
        %p571 = pneg %p473
      $region90: #{simple_detection_net.1} parent=11 // pred_check_branch
        %573 = sbr.rel (%p571) target = $region92
      $region91: #{simple_detection_net.1} parent=11 // pred_region
        _
      $region92: #{simple_detection_net.1} parent=11 // pred_fallthru
        _
    $region12: #{simple_detection_net.1} parent=5 // pred_fallthru
      _
    %p574 = scmp.lt.s32.totalorder %s27, 2
    // Predicated region
    $region93: #{simple_detection_net.1} parent=5 // pred_check
      %p575 = pneg %p574
    $region94: #{simple_detection_net.1} parent=5 // pred_check_branch
      %577 = sbr.rel (%p575) target = $region96
    $region95: #{simple_detection_net.1} parent=5 // pred_region
      // Predicated region
      $region97: #{simple_detection_net.1} parent=95 // pred_check
        %p578 = pneg %p47
      $region98: #{simple_detection_net.1} parent=95 // pred_check_branch
        %580 = sbr.rel (%p578) target = $region100
      $region99: #{simple_detection_net.1} parent=95 // pred_region
        %s581 = smul.u32 18, %s27
        %p582 = scmp.lt.s32.totalorder %s581, 35
        %s583 = scalar_select %p582, %s581, 35
        %s584 = smul.addr %s583, 4
        %s585 = scalar_lea.vmem %s0, %s584
        %s586 = smul.u32 18, %s27
      $region100: #{simple_detection_net.1} parent=95 // pred_fallthru
        _
    $region96: #{simple_detection_net.1} parent=5 // pred_fallthru
      _
    %p587 = scmp.le.s32.totalorder 1, %s27
    %p588 = scmp.lt.s32.totalorder %s27, 3
    %p589 = pnand %p587, %p588
    %p590 = pneg %p589
    // Predicated region
    $region101: #{simple_detection_net.1} parent=5 // pred_check
      _
    $region102: #{simple_detection_net.1} parent=5 // pred_check_branch
      %592 = sbr.rel (%p589) target = $region104
    $region103: #{simple_detection_net.1} parent=5 // pred_region
      %s593 = ssub.s32 %s27, 1
      %s594 = smul.u32 18, %s32
      %p595 = scmp.lt.s32.totalorder %s594, 35
      %s596 = scalar_select %p595, %s594, 35
      %s597 = smul.addr %s596, 4
      %s598 = scalar_lea.vmem %s0, %s597
      %p599 = pneg %p53
      %p600 = pneg %p50
      %p601 = pneg %p74
      %p602 = pneg %p71
      %p603 = pneg %p95
      %p604 = pneg %p92
      %p605 = pneg %p116
      %p606 = pneg %p113
      %p607 = pneg %p137
      %p608 = pneg %p134
      %p609 = pneg %p158
      %p610 = pneg %p155
      %p611 = pneg %p179
      %p612 = pneg %p176
      %p613 = pneg %p200
      %p614 = pneg %p197
      %p615 = pneg %p221
      %p616 = pneg %p218
      %p617 = pneg %p242
      %p618 = pneg %p239
      %p619 = pneg %p263
      %p620 = pneg %p260
      %p621 = pneg %p284
      %p622 = pneg %p281
      %p623 = pneg %p305
      %p624 = pneg %p302
      %p625 = pneg %p326
      %p626 = pneg %p323
      %p627 = pneg %p347
      %p628 = pneg %p344
      %p629 = pneg %p368
      %p630 = pneg %p365
      %p631 = pneg %p389
      %p632 = pneg %p386
      %p633 = pneg %p410
      %p634 = pneg %p407
      %p635 = pneg %p431
      %p636 = pneg %p428
      %p637 = pneg %p452
      %p638 = pneg %p449
      %p639 = pneg %p473
      %p640 = pneg %p470
      %p641 = pneg %p499
      %p642 = pneg %p496
      %p643 = scmp.lt.s32.totalorder %s32, 1
      %s644 = scalar_select %p643, %s32, 1
      %s645 = smul.addr %s644, 8
      %s646 = scalar_lea.vmem %s21, %s645
      %s647 = smul.u32 18, %s32
      %p648 = scmp.lt.s32.totalorder %s647, 35
      %s649 = scalar_select %p648, %s647, 35
      %s650 = smul.addr %s649, 4
      %s651 = scalar_lea.vmem %s0, %s650
      %s652 = smul.u32 18, %s32
      %p653 = scmp.lt.s32.totalorder %s32, 1
      %s654 = scalar_select %p653, %s32, 1
      %s655 = smul.addr %s654, 8
      %s656 = scalar_lea.vmem %s21, %s655
      %658 = vst [vmem:[#allocation2] sm:$0xf] 0
      %659 = vst [vmem:[#allocation2 + $0x8] sm:$0xf] 0
      %660 = vst [vmem:[#allocation2 + $0x80] sm:$0xf0] 0
      %661 = vst [vmem:[#allocation2 + $0x88] sm:$0xf0] 0
      %vm662 = vcmask 519168
      %663 = vst.msk [vmem:[#allocation3] sm:$0xf] %vm662, 0
      %vm664 = vcmask 523268
      %665 = vst.msk [vmem:[#allocation3 + $0x40] sm:$0xf0] %vm664, 0
      %666 = vst [vmem:[#allocation4] sm:$0xf] 0
      %667 = vst [vmem:[#allocation4 + $0x40] sm:$0xf0] 0
      %vm668 = vcmask 257024
      %669 = vst.msk [vmem:[#allocation5] sm:$0xf] %vm668, 0
      %vm670 = vcmask 261124
      %671 = vst.msk [vmem:[#allocation5 + $0x40] sm:$0xf0] %vm670, 0
      %672 = vst.msk [vmem:[#allocation6] sm:$0xf] %vm662, 0
      %673 = vst.msk [vmem:[#allocation6 + $0x40] sm:$0xf0] %vm664, 0
      %v674 = vld [vmem:[%s651] sm:$0xf]
      %v675 = vld [vmem:[%s651 + $0x4] sm:$0xf]
      %v676 = vld [vmem:[%s651 + $0x8] sm:$0xf]
      %v677 = vld [vmem:[%s651 + $0xc] sm:$0xf]
      %v678 = vld [vmem:[%s651 + $0x10] sm:$0xf]
      %v679 = vld [vmem:[%s651 + $0x14] sm:$0xf]
      %v680 = vld [vmem:[%s651 + $0x18] sm:$0xf]
      %v681 = vld [vmem:[%s651 + $0x1c] sm:$0xf]
      %v682 = vld [vmem:[%s651 + $0x20] sm:$0xf]
      %v683 = vld [vmem:[%s651 + $0x24] sm:$0xf]
      %v684 = vld [vmem:[%s651 + $0x28] sm:$0xf]
      %v685 = vld [vmem:[%s651 + $0x2c] sm:$0xf]
      %v686 = vld [vmem:[%s651 + $0x30] sm:$0xf]
      %v687 = vld [vmem:[%s651 + $0x34] sm:$0xf]
      %v688 = vld [vmem:[%s651 + $0x38] sm:$0xf]
      %v689 = vld [vmem:[%s651 + $0x3c] sm:$0xf]
      %v690 = vld [vmem:[%s1] sm:$0xff]
      %v691 = vld [vmem:[%s1 + $0x8] sm:$0xff]
      %v692 = vld [vmem:[%s1 + $0x10] sm:$0xff]
      %v693 = vld [vmem:[%s1 + $0x18] sm:$0xff]
      %v694 = vld [vmem:[%s1 + $0x20] sm:$0xff]
      %v695 = vld [vmem:[%s1 + $0x28] sm:$0xff]
      %v696 = vld [vmem:[%s1 + $0x30] sm:$0xff]
      %v697 = vld [vmem:[%s1 + $0x38] sm:$0xff]
      %v698 = vld [vmem:[%s1 + $0x40] sm:$0xff]
      %v699 = vld [vmem:[%s1 + $0x48] sm:$0xff]
      %v700 = vld [vmem:[%s1 + $0x50] sm:$0xff]
      %v701 = vld [vmem:[%s1 + $0x58] sm:$0xff]
      %v702 = vld [vmem:[%s1 + $0x60] sm:$0xff]
      %v703 = vld [vmem:[%s1 + $0x68] sm:$0xff]
      %v704 = vld [vmem:[%s1 + $0x70] sm:$0xff]
      %v705 = vld [vmem:[%s1 + $0x78] sm:$0xff]
      %v706 = vld [vmem:[%s651 + $0x40] sm:$0xf]
      %s707 = scalar_lea.vmem %s1, 128
      %v708 = vld [vmem:[%s707] sm:$0xff]
      %v709 = vld [vmem:[%s707 + $0x8] sm:$0xff]
      %v710 = vld [vmem:[%s707 + $0x10] sm:$0xff]
      %v711 = vld [vmem:[%s707 + $0x18] sm:$0xff]
      %v712 = vld [vmem:[%s707 + $0x20] sm:$0xff]
      %v713 = vld [vmem:[%s707 + $0x28] sm:$0xff]
      %v714 = vld [vmem:[%s707 + $0x30] sm:$0xff]
      %v715 = vld [vmem:[%s707 + $0x38] sm:$0xff]
      %v716 = vld [vmem:[%s707 + $0x40] sm:$0xff]
      %v717 = vld [vmem:[%s707 + $0x48] sm:$0xff]
      %v718 = vld [vmem:[%s707 + $0x50] sm:$0xff]
      %v719 = vld [vmem:[%s707 + $0x58] sm:$0xff]
      %v720 = vld [vmem:[%s707 + $0x60] sm:$0xff]
      %v721 = vld [vmem:[%s707 + $0x68] sm:$0xff]
      %v722 = vld [vmem:[%s707 + $0x70] sm:$0xff]
      %v723 = vld [vmem:[%s707 + $0x78] sm:$0xff]
      %v740 = vunpack.c.l.b16 %v675
      %v741 = vunpack.c.l.b16 %v676
      %v742 = vunpack.c.l.b16 %v677
      %v743 = vunpack.c.l.b16 %v678
      %v744 = vunpack.c.l.b16 %v679
      %v745 = vunpack.c.l.b16 %v680
      %v746 = vunpack.c.l.b16 %v681
      %v747 = vunpack.c.l.b16 %v682
      %v748 = vunpack.c.l.b16 %v683
      %v749 = vunpack.c.l.b16 %v684
      %v750 = vunpack.c.l.b16 %v685
      %v751 = vunpack.c.l.b16 %v686
      %v752 = vunpack.c.l.b16 %v687
      %v753 = vunpack.c.l.b16 %v688
      %v754 = vunpack.c.l.b16 %v689
      %v755 = vunpack.c.l.b16 %v706
      %v756 = vpack.c.b16 %v741, %v740
      %v757 = vpack.c.b16 %v743, %v742
      %v758 = vpack.c.b16 %v745, %v744
      %v759 = vpack.c.b16 %v747, %v746
      %v760 = vpack.c.b16 %v749, %v748
      %v761 = vpack.c.b16 %v751, %v750
      %v762 = vpack.c.b16 %v753, %v752
      %v763 = vpack.c.b16 %v755, %v754
      %v788 = vunpack.c.l.b16 %v708
      %v789 = vunpack.c.h.b16 %v708
      %v790 = vunpack.c.l.b16 %v709
      %v791 = vunpack.c.h.b16 %v709
      %v792 = vunpack.c.l.b16 %v710
      %v793 = vunpack.c.h.b16 %v710
      %v794 = vunpack.c.l.b16 %v711
      %v795 = vunpack.c.h.b16 %v711
      %v796 = vunpack.c.l.b16 %v712
      %v797 = vunpack.c.h.b16 %v712
      %v798 = vunpack.c.l.b16 %v713
      %v799 = vunpack.c.h.b16 %v713
      %v800 = vunpack.c.l.b16 %v714
      %v801 = vunpack.c.h.b16 %v714
      %v802 = vunpack.c.l.b16 %v715
      %v803 = vunpack.c.h.b16 %v715
      %v804 = vunpack.c.l.b16 %v716
      %v805 = vunpack.c.h.b16 %v716
      %v806 = vunpack.c.l.b16 %v717
      %v807 = vunpack.c.h.b16 %v717
      %v808 = vunpack.c.l.b16 %v718
      %v809 = vunpack.c.h.b16 %v718
      %v810 = vunpack.c.l.b16 %v719
      %v811 = vunpack.c.h.b16 %v719
      %v812 = vunpack.c.l.b16 %v720
      %v813 = vunpack.c.h.b16 %v720
      %v814 = vunpack.c.l.b16 %v721
      %v815 = vunpack.c.h.b16 %v721
      %v816 = vunpack.c.l.b16 %v722
      %v817 = vunpack.c.h.b16 %v722
      %v818 = vunpack.c.l.b16 %v723
      %v819 = vunpack.c.h.b16 %v723
      %v820 = vpack.c.b16 %v790, %v788
      %v821 = vpack.c.b16 %v791, %v789
      %v822 = vpack.c.b16 %v794, %v792
      %v823 = vpack.c.b16 %v795, %v793
      %v824 = vpack.c.b16 %v798, %v796
      %v825 = vpack.c.b16 %v799, %v797
      %v826 = vpack.c.b16 %v802, %v800
      %v827 = vpack.c.b16 %v803, %v801
      %v828 = vpack.c.b16 %v806, %v804
      %v829 = vpack.c.b16 %v807, %v805
      %v830 = vpack.c.b16 %v810, %v808
      %v831 = vpack.c.b16 %v811, %v809
      %v832 = vpack.c.b16 %v814, %v812
      %v833 = vpack.c.b16 %v815, %v813
      %v834 = vpack.c.b16 %v818, %v816
      %v835 = vpack.c.b16 %v819, %v817
      %852 = vmatprep.subr.bf16.mxu0 %v821
      %853 = vmatpush1.bf16.msra.mxu0 %v820
      %854 = vmatprep.subr.bf16.mxu0 %v823
      %855 = vmatpush1.bf16.msra.mxu0 %v822
      %856 = vmatprep.subr.bf16.mxu0 %v825
      %857 = vmatpush1.bf16.msra.mxu0 %v824
      %858 = vmatprep.subr.bf16.mxu0 %v827
      %859 = vmatpush1.bf16.msra.mxu0 %v826
      %860 = vmatprep.subr.bf16.mxu0 %v829
      %861 = vmatpush1.bf16.msra.mxu0 %v828
      %862 = vmatprep.subr.bf16.mxu0 %v831
      %863 = vmatpush1.bf16.msra.mxu0 %v830
      %864 = vmatprep.subr.bf16.mxu0 %v833
      %865 = vmatpush1.bf16.msra.mxu0 %v832
      %866 = vmatprep.subr.bf16.mxu0 %v835
      %867 = vmatpush1.bf16.msra.mxu0 %v834
      %868 = vmatprep.subr.bf16.mxu0 0
      %869 = vmatpush1.bf16.msra.mxu0 0
      %870 = vmatprep.subr.bf16.mxu0 0
      %871 = vmatpush1.bf16.msra.mxu0 0
      %872 = vmatprep.subr.bf16.mxu0 0
      %873 = vmatpush1.bf16.msra.mxu0 0
      %874 = vmatprep.subr.bf16.mxu0 0
      %875 = vmatpush1.bf16.msra.mxu0 0
      %876 = vmatprep.subr.bf16.mxu0 0
      %877 = vmatpush1.bf16.msra.mxu0 0
      %878 = vmatprep.subr.bf16.mxu0 0
      %879 = vmatpush1.bf16.msra.mxu0 0
      %880 = vmatprep.subr.bf16.mxu0 0
      %881 = vmatpush1.bf16.msra.mxu0 0
      %882 = vmatprep.subr.bf16.mxu0 0
      %883 = vmatpush1.bf16.msra.mxu0 0
      %884 = vmatprep.mubr.bf16.mxu0 0
      %885 = vmatmul.mubr.bf16.gmra.mrb[0].mxu0 %v756
      %v886 = vpop.f32.mrb[0].mxu0
      %v887 = vadd.f32 0.0, %v886
      %v888 = vpop.f32.mrb[0].mxu0
      %v889 = vadd.f32 0.0, %v888
      %v890 = vpop.f32.mrb[0].mxu0
      %v891 = vadd.f32 0.0, %v890
      %v892 = vpop.f32.mrb[0].mxu0
      %v893 = vadd.f32 0.0, %v892
      %894 = vmatprep.mubr.bf16.mxu0 0
      %895 = vmatmul.mubr.bf16.gmra.mrb[0].mxu0 %v757
      %v896 = vpop.f32.mrb[0].mxu0
      %v897 = vadd.f32 0.0, %v896
      %v898 = vpop.f32.mrb[0].mxu0
      %v899 = vadd.f32 0.0, %v898
      %v900 = vpop.f32.mrb[0].mxu0
      %v901 = vadd.f32 0.0, %v900
      %v902 = vpop.f32.mrb[0].mxu0
      %v903 = vadd.f32 0.0, %v902
      %904 = vmatprep.mubr.bf16.mxu0 0
      %905 = vmatmul.mubr.bf16.gmra.mrb[0].mxu0 %v758
      %v906 = vpop.f32.mrb[0].mxu0
      %v907 = vadd.f32 0.0, %v906
      %v908 = vpop.f32.mrb[0].mxu0
      %v909 = vadd.f32 0.0, %v908
      %v910 = vpop.f32.mrb[0].mxu0
      %v911 = vadd.f32 0.0, %v910
      %v912 = vpop.f32.mrb[0].mxu0
      %v913 = vadd.f32 0.0, %v912
      %914 = vmatprep.mubr.bf16.mxu0 0
      %915 = vmatmul.mubr.bf16.gmra.mrb[0].mxu0 %v759
      %v916 = vpop.f32.mrb[0].mxu0
      %v917 = vadd.f32 0.0, %v916
      %v918 = vpop.f32.mrb[0].mxu0
      %v919 = vadd.f32 0.0, %v918
      %v920 = vpop.f32.mrb[0].mxu0
      %v921 = vadd.f32 0.0, %v920
      %v922 = vpop.f32.mrb[0].mxu0
      %v923 = vadd.f32 0.0, %v922
      %924 = vmatprep.mubr.bf16.mxu0 0
      %925 = vmatmul.mubr.bf16.gmra.mrb[0].mxu0 %v760
      %v926 = vpop.f32.mrb[0].mxu0
      %v927 = vadd.f32 0.0, %v926
      %v928 = vpop.f32.mrb[0].mxu0
      %v929 = vadd.f32 0.0, %v928
      %v930 = vpop.f32.mrb[0].mxu0
      %v931 = vadd.f32 0.0, %v930
      %v932 = vpop.f32.mrb[0].mxu0
      %v933 = vadd.f32 0.0, %v932
      %934 = vmatprep.mubr.bf16.mxu0 0
      %935 = vmatmul.mubr.bf16.gmra.mrb[0].mxu0 %v761
      %v936 = vpop.f32.mrb[0].mxu0
      %v937 = vadd.f32 0.0, %v936
      %v938 = vpop.f32.mrb[0].mxu0
      %v939 = vadd.f32 0.0, %v938
      %v940 = vpop.f32.mrb[0].mxu0
      %v941 = vadd.f32 0.0, %v940
      %v942 = vpop.f32.mrb[0].mxu0
      %v943 = vadd.f32 0.0, %v942
      %944 = vmatprep.mubr.bf16.mxu0 0
      %945 = vmatmul.mubr.bf16.gmra.mrb[0].mxu0 %v762
      %v946 = vpop.f32.mrb[0].mxu0
      %v947 = vadd.f32 0.0, %v946
      %v948 = vpop.f32.mrb[0].mxu0
      %v949 = vadd.f32 0.0, %v948
      %v950 = vpop.f32.mrb[0].mxu0
      %v951 = vadd.f32 0.0, %v950
      %v952 = vpop.f32.mrb[0].mxu0
      %v953 = vadd.f32 0.0, %v952
      %954 = vmatprep.mubr.bf16.mxu0 0
      %955 = vmatmul.mubr.bf16.gmra.mrb[0].mxu0 %v763
      %v956 = vpop.f32.mrb[0].mxu0
      %v957 = vadd.f32 0.0, %v956
      %v958 = vpop.f32.mrb[0].mxu0
      %v959 = vadd.f32 0.0, %v958
      %v960 = vpop.f32.mrb[0].mxu0
      %v961 = vadd.f32 0.0, %v960
      %v962 = vpop.f32.mrb[0].mxu0
      %v963 = vadd.f32 0.0, %v962
      %964 = vdwg.mxu0
      %v966 = vunpack.c.l.b16 %v674
      %v967 = vpack.c.b16 %v740, %v966
      %v968 = vpack.c.b16 %v742, %v741
      %v969 = vpack.c.b16 %v744, %v743
      %v970 = vpack.c.b16 %v746, %v745
      %v971 = vpack.c.b16 %v748, %v747
      %v972 = vpack.c.b16 %v750, %v749
      %v973 = vpack.c.b16 %v752, %v751
      %v974 = vpack.c.b16 %v754, %v753
      %v999 = vunpack.c.l.b16 %v690
      %v1000 = vunpack.c.h.b16 %v690
      %v1001 = vunpack.c.l.b16 %v691
      %v1002 = vunpack.c.h.b16 %v691
      %v1003 = vunpack.c.l.b16 %v692
      %v1004 = vunpack.c.h.b16 %v692
      %v1005 = vunpack.c.l.b16 %v693
      %v1006 = vunpack.c.h.b16 %v693
      %v1007 = vunpack.c.l.b16 %v694
      %v1008 = vunpack.c.h.b16 %v694
      %v1009 = vunpack.c.l.b16 %v695
      %v1010 = vunpack.c.h.b16 %v695
      %v1011 = vunpack.c.l.b16 %v696
      %v1012 = vunpack.c.h.b16 %v696
      %v1013 = vunpack.c.l.b16 %v697
      %v1014 = vunpack.c.h.b16 %v697
      %v1015 = vunpack.c.l.b16 %v698
      %v1016 = vunpack.c.h.b16 %v698
      %v1017 = vunpack.c.l.b16 %v699
      %v1018 = vunpack.c.h.b16 %v699
      %v1019 = vunpack.c.l.b16 %v700
      %v1020 = vunpack.c.h.b16 %v700
      %v1021 = vunpack.c.l.b16 %v701
      %v1022 = vunpack.c.h.b16 %v701
      %v1023 = vunpack.c.l.b16 %v702
      %v1024 = vunpack.c.h.b16 %v702
      %v1025 = vunpack.c.l.b16 %v703
      %v1026 = vunpack.c.h.b16 %v703
      %v1027 = vunpack.c.l.b16 %v704
      %v1028 = vunpack.c.h.b16 %v704
      %v1029 = vunpack.c.l.b16 %v705
      %v1030 = vunpack.c.h.b16 %v705
      %v1031 = vpack.c.b16 %v1001, %v999
      %v1032 = vpack.c.b16 %v1002, %v1000
      %v1033 = vpack.c.b16 %v1005, %v1003
      %v1034 = vpack.c.b16 %v1006, %v1004
      %v1035 = vpack.c.b16 %v1009, %v1007
      %v1036 = vpack.c.b16 %v1010, %v1008
      %v1037 = vpack.c.b16 %v1013, %v1011
      %v1038 = vpack.c.b16 %v1014, %v1012
      %v1039 = vpack.c.b16 %v1017, %v1015
      %v1040 = vpack.c.b16 %v1018, %v1016
      %v1041 = vpack.c.b16 %v1021, %v1019
      %v1042 = vpack.c.b16 %v1022, %v1020
      %v1043 = vpack.c.b16 %v1025, %v1023
      %v1044 = vpack.c.b16 %v1026, %v1024
      %v1045 = vpack.c.b16 %v1029, %v1027
      %v1046 = vpack.c.b16 %v1030, %v1028
      %1063 = vmatprep.subr.bf16.mxu0 %v1032
      %1064 = vmatpush1.bf16.msra.mxu0 %v1031
      %1065 = vmatprep.subr.bf16.mxu0 %v1034
      %1066 = vmatpush1.bf16.msra.mxu0 %v1033
      %1067 = vmatprep.subr.bf16.mxu0 %v1036
      %1068 = vmatpush1.bf16.msra.mxu0 %v1035
      %1069 = vmatprep.subr.bf16.mxu0 %v1038
      %1070 = vmatpush1.bf16.msra.mxu0 %v1037
      %1071 = vmatprep.subr.bf16.mxu0 %v1040
      %1072 = vmatpush1.bf16.msra.mxu0 %v1039
      %1073 = vmatprep.subr.bf16.mxu0 %v1042
      %1074 = vmatpush1.bf16.msra.mxu0 %v1041
      %1075 = vmatprep.subr.bf16.mxu0 %v1044
      %1076 = vmatpush1.bf16.msra.mxu0 %v1043
      %1077 = vmatprep.subr.bf16.mxu0 %v1046
      %1078 = vmatpush1.bf16.msra.mxu0 %v1045
      %1079 = vmatprep.subr.bf16.mxu0 0
      %1080 = vmatpush1.bf16.msra.mxu0 0
      %1081 = vmatprep.subr.bf16.mxu0 0
      %1082 = vmatpush1.bf16.msra.mxu0 0
      %1083 = vmatprep.subr.bf16.mxu0 0
      %1084 = vmatpush1.bf16.msra.mxu0 0
      %1085 = vmatprep.subr.bf16.mxu0 0
      %1086 = vmatpush1.bf16.msra.mxu0 0
      %1087 = vmatprep.subr.bf16.mxu0 0
      %1088 = vmatpush1.bf16.msra.mxu0 0
      %1089 = vmatprep.subr.bf16.mxu0 0
      %1090 = vmatpush1.bf16.msra.mxu0 0
      %1091 = vmatprep.subr.bf16.mxu0 0
      %1092 = vmatpush1.bf16.msra.mxu0 0
      %1093 = vmatprep.subr.bf16.mxu0 0
      %1094 = vmatpush1.bf16.msra.mxu0 0
      %1095 = vmatprep.mubr.bf16.mxu0 0
      %1096 = vmatmul.mubr.bf16.gmra.mrb[0].mxu0 %v967
      %v1097 = vpop.f32.mrb[0].mxu0
      %v1098 = vadd.f32 %v887, %v1097
      %v1099 = vpop.f32.mrb[0].mxu0
      %v1100 = vadd.f32 %v889, %v1099
      %v1101 = vpop.f32.mrb[0].mxu0
      %v1102 = vadd.f32 %v891, %v1101
      %v1103 = vpop.f32.mrb[0].mxu0
      %v1104 = vadd.f32 %v893, %v1103
      %1105 = vmatprep.mubr.bf16.mxu0 0
      %1106 = vmatmul.mubr.bf16.gmra.mrb[0].mxu0 %v968
      %v1107 = vpop.f32.mrb[0].mxu0
      %v1108 = vadd.f32 %v897, %v1107
      %v1109 = vpop.f32.mrb[0].mxu0
      %v1110 = vadd.f32 %v899, %v1109
      %v1111 = vpop.f32.mrb[0].mxu0
      %v1112 = vadd.f32 %v901, %v1111
      %v1113 = vpop.f32.mrb[0].mxu0
      %v1114 = vadd.f32 %v903, %v1113
      %1115 = vmatprep.mubr.bf16.mxu0 0
      %1116 = vmatmul.mubr.bf16.gmra.mrb[0].mxu0 %v969
      %v1117 = vpop.f32.mrb[0].mxu0
      %v1118 = vadd.f32 %v907, %v1117
      %v1119 = vpop.f32.mrb[0].mxu0
      %v1120 = vadd.f32 %v909, %v1119
      %v1121 = vpop.f32.mrb[0].mxu0
      %v1122 = vadd.f32 %v911, %v1121
      %v1123 = vpop.f32.mrb[0].mxu0
      %v1124 = vadd.f32 %v913, %v1123
      %1125 = vmatprep.mubr.bf16.mxu0 0
      %1126 = vmatmul.mubr.bf16.gmra.mrb[0].mxu0 %v970
      %v1127 = vpop.f32.mrb[0].mxu0
      %v1128 = vadd.f32 %v917, %v1127
      %v1129 = vpop.f32.mrb[0].mxu0
      %v1130 = vadd.f32 %v919, %v1129
      %v1131 = vpop.f32.mrb[0].mxu0
      %v1132 = vadd.f32 %v921, %v1131
      %v1133 = vpop.f32.mrb[0].mxu0
      %v1134 = vadd.f32 %v923, %v1133
      %1135 = vmatprep.mubr.bf16.mxu0 0
      %1136 = vmatmul.mubr.bf16.gmra.mrb[0].mxu0 %v971
      %v1137 = vpop.f32.mrb[0].mxu0
      %v1138 = vadd.f32 %v927, %v1137
      %v1139 = vpop.f32.mrb[0].mxu0
      %v1140 = vadd.f32 %v929, %v1139
      %v1141 = vpop.f32.mrb[0].mxu0
      %v1142 = vadd.f32 %v931, %v1141
      %v1143 = vpop.f32.mrb[0].mxu0
      %v1144 = vadd.f32 %v933, %v1143
      %1145 = vmatprep.mubr.bf16.mxu0 0
      %1146 = vmatmul.mubr.bf16.gmra.mrb[0].mxu0 %v972
      %v1147 = vpop.f32.mrb[0].mxu0
      %v1148 = vadd.f32 %v937, %v1147
      %v1149 = vpop.f32.mrb[0].mxu0
      %v1150 = vadd.f32 %v939, %v1149
      %v1151 = vpop.f32.mrb[0].mxu0
      %v1152 = vadd.f32 %v941, %v1151
      %v1153 = vpop.f32.mrb[0].mxu0
      %v1154 = vadd.f32 %v943, %v1153
      %1155 = vmatprep.mubr.bf16.mxu0 0
      %1156 = vmatmul.mubr.bf16.gmra.mrb[0].mxu0 %v973
      %v1157 = vpop.f32.mrb[0].mxu0
      %v1158 = vadd.f32 %v947, %v1157
      %v1159 = vpop.f32.mrb[0].mxu0
      %v1160 = vadd.f32 %v949, %v1159
      %v1161 = vpop.f32.mrb[0].mxu0
      %v1162 = vadd.f32 %v951, %v1161
      %v1163 = vpop.f32.mrb[0].mxu0
      %v1164 = vadd.f32 %v953, %v1163
      %1165 = vmatprep.mubr.bf16.mxu0 0
      %1166 = vmatmul.mubr.bf16.gmra.mrb[0].mxu0 %v974
      %v1167 = vpop.f32.mrb[0].mxu0
      %v1168 = vadd.f32 %v957, %v1167
      %v1169 = vpop.f32.mrb[0].mxu0
      %v1170 = vadd.f32 %v959, %v1169
      %v1171 = vpop.f32.mrb[0].mxu0
      %v1172 = vadd.f32 %v961, %v1171
      %v1173 = vpop.f32.mrb[0].mxu0
      %v1174 = vadd.f32 %v963, %v1173
      %1175 = vdwg.mxu0
      %v1176 = vld [vmem:[%s651 + $0x8] sm:$0xf]
      %v1177 = vld [vmem:[%s651 + $0xc] sm:$0xf]
      %v1178 = vld [vmem:[%s651 + $0x10] sm:$0xf]
      %v1179 = vld [vmem:[%s651 + $0x14] sm:$0xf]
      %v1180 = vld [vmem:[%s651 + $0x18] sm:$0xf]
      %v1181 = vld [vmem:[%s651 + $0x1c] sm:$0xf]
      %v1182 = vld [vmem:[%s651 + $0x20] sm:$0xf]
      %v1183 = vld [vmem:[%s651 + $0x24] sm:$0xf]
      %v1184 = vld [vmem:[%s651 + $0x28] sm:$0xf]
      %v1185 = vld [vmem:[%s651 + $0x2c] sm:$0xf]
      %v1186 = vld [vmem:[%s651 + $0x30] sm:$0xf]
      %v1187 = vld [vmem:[%s651 + $0x34] sm:$0xf]
      %v1188 = vld [vmem:[%s651 + $0x38] sm:$0xf]
      %v1189 = vld [vmem:[%s651 + $0x3c] sm:$0xf]
      %v1190 = vld [vmem:[%s651 + $0x40] sm:$0xf]
      %v1191 = vld [vmem:[%s651 + $0x44] sm:$0xf]
      %s1192 = scalar_lea.vmem %s1, 256
      %v1193 = vld [vmem:[%s1192] sm:$0xff]
      %v1194 = vld [vmem:[%s1192 + $0x8] sm:$0xff]
      %v1195 = vld [vmem:[%s1192 + $0x10] sm:$0xff]
      %v1196 = vld [vmem:[%s1192 + $0x18] sm:$0xff]
      %v1197 = vld [vmem:[%s1192 + $0x20] sm:$0xff]
      %v1198 = vld [vmem:[%s1192 + $0x28] sm:$0xff]
      %v1199 = vld [vmem:[%s1192 + $0x30] sm:$0xff]
      %v1200 = vld [vmem:[%s1192 + $0x38] sm:$0xff]
      %v1201 = vld [vmem:[%s1192 + $0x40] sm:$0xff]
      %v1202 = vld [vmem:[%s1192 + $0x48] sm:$0xff]
      %v1203 = vld [vmem:[%s1192 + $0x50] sm:$0xff]
      %v1204 = vld [vmem:[%s1192 + $0x58] sm:$0xff]
      %v1205 = vld [vmem:[%s1192 + $0x60] sm:$0xff]
      %v1206 = vld [vmem:[%s1192 + $0x68] sm:$0xff]
      %v1207 = vld [vmem:[%s1192 + $0x70] sm:$0xff]
      %v1208 = vld [vmem:[%s1192 + $0x78] sm:$0xff]
      %v1225 = vunpack.c.l.b16 %v1176
      %v1226 = vunpack.c.l.b16 %v1177
      %v1227 = vunpack.c.l.b16 %v1178
      %v1228 = vunpack.c.l.b16 %v1179
      %v1229 = vunpack.c.l.b16 %v1180
      %v1230 = vunpack.c.l.b16 %v1181
      %v1231 = vunpack.c.l.b16 %v1182
      %v1232 = vunpack.c.l.b16 %v1183
      %v1233 = vunpack.c.l.b16 %v1184
      %v1234 = vunpack.c.l.b16 %v1185
      %v1235 = vunpack.c.l.b16 %v1186
      %v1236 = vunpack.c.l.b16 %v1187
      %v1237 = vunpack.c.l.b16 %v1188
      %v1238 = vunpack.c.l.b16 %v1189
      %v1239 = vunpack.c.l.b16 %v1190
      %v1240 = vunpack.c.l.b16 %v1191
      %v1241 = vpack.c.b16 %v1226, %v1225
      %v1242 = vpack.c.b16 %v1228, %v1227
      %v1243 = vpack.c.b16 %v1230, %v1229
      %v1244 = vpack.c.b16 %v1232, %v1231
      %v1245 = vpack.c.b16 %v1234, %v1233
      %v1246 = vpack.c.b16 %v1236, %v1235
      %v1247 = vpack.c.b16 %v1238, %v1237
      %v1248 = vpack.c.b16 %v1240, %v1239
      %v1273 = vunpack.c.l.b16 %v1193
      %v1274 = vunpack.c.h.b16 %v1193
      %v1275 = vunpack.c.l.b16 %v1194
      %v1276 = vunpack.c.h.b16 %v1194
      %v1277 = vunpack.c.l.b16 %v1195
      %v1278 = vunpack.c.h.b16 %v1195
      %v1279 = vunpack.c.l.b16 %v1196
      %v1280 = vunpack.c.h.b16 %v1196
      %v1281 = vunpack.c.l.b16 %v1197
      %v1282 = vunpack.c.h.b16 %v1197
      %v1283 = vunpack.c.l.b16 %v1198
      %v1284 = vunpack.c.h.b16 %v1198
      %v1285 = vunpack.c.l.b16 %v1199
      %v1286 = vunpack.c.h.b16 %v1199
      %v1287 = vunpack.c.l.b16 %v1200
      %v1288 = vunpack.c.h.b16 %v1200
      %v1289 = vunpack.c.l.b16 %v1201
      %v1290 = vunpack.c.h.b16 %v1201
      %v1291 = vunpack.c.l.b16 %v1202
      %v1292 = vunpack.c.h.b16 %v1202
      %v1293 = vunpack.c.l.b16 %v1203
      %v1294 = vunpack.c.h.b16 %v1203
      %v1295 = vunpack.c.l.b16 %v1204
      %v1296 = vunpack.c.h.b16 %v1204
      %v1297 = vunpack.c.l.b16 %v1205
      %v1298 = vunpack.c.h.b16 %v1205
      %v1299 = vunpack.c.l.b16 %v1206
      %v1300 = vunpack.c.h.b16 %v1206
      %v1301 = vunpack.c.l.b16 %v1207
      %v1302 = vunpack.c.h.b16 %v1207
      %v1303 = vunpack.c.l.b16 %v1208
      %v1304 = vunpack.c.h.b16 %v1208
      %v1305 = vpack.c.b16 %v1275, %v1273
      %v1306 = vpack.c.b16 %v1276, %v1274
      %v1307 = vpack.c.b16 %v1279, %v1277
      %v1308 = vpack.c.b16 %v1280, %v1278
      %v1309 = vpack.c.b16 %v1283, %v1281
      %v1310 = vpack.c.b16 %v1284, %v1282
      %v1311 = vpack.c.b16 %v1287, %v1285
      %v1312 = vpack.c.b16 %v1288, %v1286
      %v1313 = vpack.c.b16 %v1291, %v1289
      %v1314 = vpack.c.b16 %v1292, %v1290
      %v1315 = vpack.c.b16 %v1295, %v1293
      %v1316 = vpack.c.b16 %v1296, %v1294
      %v1317 = vpack.c.b16 %v1299, %v1297
      %v1318 = vpack.c.b16 %v1300, %v1298
      %v1319 = vpack.c.b16 %v1303, %v1301
      %v1320 = vpack.c.b16 %v1304, %v1302
      %1337 = vmatprep.subr.bf16.mxu0 %v1306
      %1338 = vmatpush1.bf16.msra.mxu0 %v1305
      %1339 = vmatprep.subr.bf16.mxu0 %v1308
      %1340 = vmatpush1.bf16.msra.mxu0 %v1307
      %1341 = vmatprep.subr.bf16.mxu0 %v1310
      %1342 = vmatpush1.bf16.msra.mxu0 %v1309
      %1343 = vmatprep.subr.bf16.mxu0 %v1312
      %1344 = vmatpush1.bf16.msra.mxu0 %v1311
      %1345 = vmatprep.subr.bf16.mxu0 %v1314
      %1346 = vmatpush1.bf16.msra.mxu0 %v1313
      %1347 = vmatprep.subr.bf16.mxu0 %v1316
      %1348 = vmatpush1.bf16.msra.mxu0 %v1315
      %1349 = vmatprep.subr.bf16.mxu0 %v1318
      %1350 = vmatpush1.bf16.msra.mxu0 %v1317
      %1351 = vmatprep.subr.bf16.mxu0 %v1320
      %1352 = vmatpush1.bf16.msra.mxu0 %v1319
      %1353 = vmatprep.subr.bf16.mxu0 0
      %1354 = vmatpush1.bf16.msra.mxu0 0
      %1355 = vmatprep.subr.bf16.mxu0 0
      %1356 = vmatpush1.bf16.msra.mxu0 0
      %1357 = vmatprep.subr.bf16.mxu0 0
      %1358 = vmatpush1.bf16.msra.mxu0 0
      %1359 = vmatprep.subr.bf16.mxu0 0
      %1360 = vmatpush1.bf16.msra.mxu0 0
      %1361 = vmatprep.subr.bf16.mxu0 0
      %1362 = vmatpush1.bf16.msra.mxu0 0
      %1363 = vmatprep.subr.bf16.mxu0 0
      %1364 = vmatpush1.bf16.msra.mxu0 0
      %1365 = vmatprep.subr.bf16.mxu0 0
      %1366 = vmatpush1.bf16.msra.mxu0 0
      %1367 = vmatprep.subr.bf16.mxu0 0
      %1368 = vmatpush1.bf16.msra.mxu0 0
      %1369 = vmatprep.mubr.bf16.mxu0 0
      %1370 = vmatmul.mubr.bf16.gmra.mrb[0].mxu0 %v1241
      %v1371 = vpop.f32.mrb[0].mxu0
      %v1372 = vadd.f32 0.0, %v1371
      %v1373 = vpop.f32.mrb[0].mxu0
      %v1374 = vadd.f32 0.0, %v1373
      %v1375 = vpop.f32.mrb[0].mxu0
      %v1376 = vadd.f32 0.0, %v1375
      %v1377 = vpop.f32.mrb[0].mxu0
      %v1378 = vadd.f32 0.0, %v1377
      %1379 = vmatprep.mubr.bf16.mxu0 0
      %1380 = vmatmul.mubr.bf16.gmra.mrb[0].mxu0 %v1242
      %v1381 = vpop.f32.mrb[0].mxu0
      %v1382 = vadd.f32 0.0, %v1381
      %v1383 = vpop.f32.mrb[0].mxu0
      %v1384 = vadd.f32 0.0, %v1383
      %v1385 = vpop.f32.mrb[0].mxu0
      %v1386 = vadd.f32 0.0, %v1385
      %v1387 = vpop.f32.mrb[0].mxu0
      %v1388 = vadd.f32 0.0, %v1387
      %1389 = vmatprep.mubr.bf16.mxu0 0
      %1390 = vmatmul.mubr.bf16.gmra.mrb[0].mxu0 %v1243
      %v1391 = vpop.f32.mrb[0].mxu0
      %v1392 = vadd.f32 0.0, %v1391
      %v1393 = vpop.f32.mrb[0].mxu0
      %v1394 = vadd.f32 0.0, %v1393
      %v1395 = vpop.f32.mrb[0].mxu0
      %v1396 = vadd.f32 0.0, %v1395
      %v1397 = vpop.f32.mrb[0].mxu0
      %v1398 = vadd.f32 0.0, %v1397
      %1399 = vmatprep.mubr.bf16.mxu0 0
      %1400 = vmatmul.mubr.bf16.gmra.mrb[0].mxu0 %v1244
      %v1401 = vpop.f32.mrb[0].mxu0
      %v1402 = vadd.f32 0.0, %v1401
      %v1403 = vpop.f32.mrb[0].mxu0
      %v1404 = vadd.f32 0.0, %v1403
      %v1405 = vpop.f32.mrb[0].mxu0
      %v1406 = vadd.f32 0.0, %v1405
      %v1407 = vpop.f32.mrb[0].mxu0
      %v1408 = vadd.f32 0.0, %v1407
      %1409 = vmatprep.mubr.bf16.mxu0 0
      %1410 = vmatmul.mubr.bf16.gmra.mrb[0].mxu0 %v1245
      %v1411 = vpop.f32.mrb[0].mxu0
      %v1412 = vadd.f32 0.0, %v1411
      %v1413 = vpop.f32.mrb[0].mxu0
      %v1414 = vadd.f32 0.0, %v1413
      %v1415 = vpop.f32.mrb[0].mxu0
      %v1416 = vadd.f32 0.0, %v1415
      %v1417 = vpop.f32.mrb[0].mxu0
      %v1418 = vadd.f32 0.0, %v1417
      %1419 = vmatprep.mubr.bf16.mxu0 0
      %1420 = vmatmul.mubr.bf16.gmra.mrb[0].mxu0 %v1246
      %v1421 = vpop.f32.mrb[0].mxu0
      %v1422 = vadd.f32 0.0, %v1421
      %v1423 = vpop.f32.mrb[0].mxu0
      %v1424 = vadd.f32 0.0, %v1423
      %v1425 = vpop.f32.mrb[0].mxu0
      %v1426 = vadd.f32 0.0, %v1425
      %v1427 = vpop.f32.mrb[0].mxu0
      %v1428 = vadd.f32 0.0, %v1427
      %1429 = vmatprep.mubr.bf16.mxu0 0
      %1430 = vmatmul.mubr.bf16.gmra.mrb[0].mxu0 %v1247
      %v1431 = vpop.f32.mrb[0].mxu0
      %v1432 = vadd.f32 0.0, %v1431
      %v1433 = vpop.f32.mrb[0].mxu0
      %v1434 = vadd.f32 0.0, %v1433
      %v1435 = vpop.f32.mrb[0].mxu0
      %v1436 = vadd.f32 0.0, %v1435
      %v1437 = vpop.f32.mrb[0].mxu0
      %v1438 = vadd.f32 0.0, %v1437
      %1439 = vmatprep.mubr.bf16.mxu0 0
      %1440 = vmatmul.mubr.bf16.gmra.mrb[0].mxu0 %v1248
      %v1441 = vpop.f32.mrb[0].mxu0
      %v1442 = vadd.f32 0.0, %v1441
      %v1443 = vpop.f32.mrb[0].mxu0
      %v1444 = vadd.f32 0.0, %v1443
      %v1445 = vpop.f32.mrb[0].mxu0
      %v1446 = vadd.f32 0.0, %v1445
      %v1447 = vpop.f32.mrb[0].mxu0
      %v1448 = vadd.f32 0.0, %v1447
      %1449 = vdwg.mxu0
      %v1450 = vadd.f32 %v1098, %v1372
      %v1451 = vadd.f32 %v1100, %v1374
      %v1452 = vadd.f32 %v1102, %v1376
      %v1453 = vadd.f32 %v1104, %v1378
      %v1454 = vadd.f32 %v1108, %v1382
      %v1455 = vadd.f32 %v1110, %v1384
      %v1456 = vadd.f32 %v1112, %v1386
      %v1457 = vadd.f32 %v1114, %v1388
      %v1458 = vadd.f32 %v1118, %v1392
      %v1459 = vadd.f32 %v1120, %v1394
      %v1460 = vadd.f32 %v1122, %v1396
      %v1461 = vadd.f32 %v1124, %v1398
      %v1462 = vadd.f32 %v1128, %v1402
      %v1463 = vadd.f32 %v1130, %v1404
      %v1464 = vadd.f32 %v1132, %v1406
      %v1465 = vadd.f32 %v1134, %v1408
      %v1466 = vadd.f32 %v1138, %v1412
      %v1467 = vadd.f32 %v1140, %v1414
      %v1468 = vadd.f32 %v1142, %v1416
      %v1469 = vadd.f32 %v1144, %v1418
      %v1470 = vadd.f32 %v1148, %v1422
      %v1471 = vadd.f32 %v1150, %v1424
      %v1472 = vadd.f32 %v1152, %v1426
      %v1473 = vadd.f32 %v1154, %v1428
      %v1474 = vadd.f32 %v1158, %v1432
      %v1475 = vadd.f32 %v1160, %v1434
      %v1476 = vadd.f32 %v1162, %v1436
      %v1477 = vadd.f32 %v1164, %v1438
      %v1478 = vadd.f32 %v1168, %v1442
      %v1479 = vadd.f32 %v1170, %v1444
      %v1480 = vadd.f32 %v1172, %v1446
      %v1481 = vadd.f32 %v1174, %v1448
      %v1482 = vld [vmem:[%s2] sm:$0x3]
      %v1484 = vlaneseq
      %v1485 = vshrl.u32 %v1484, 7
      %v1486 = vsub.s32 0, %v1485
      %v1487 = vrot.slane %v1482, %v1486
      %v1488 = vlaneseq
      %v1489 = vshrl.u32 %v1488, 7
      %v1490 = vsub.s32 1, %v1489
      %v1491 = vrot.slane %v1482, %v1490
      %v1494 = vadd.f32 %v1450, %v1487
      %v1495 = vadd.f32 %v1451, %v1491
      %v1496 = vadd.f32 %v1452, %v1487
      %v1497 = vadd.f32 %v1453, %v1491
      %v1498 = vadd.f32 %v1454, %v1487
      %v1499 = vadd.f32 %v1455, %v1491
      %v1500 = vadd.f32 %v1456, %v1487
      %v1501 = vadd.f32 %v1457, %v1491
      %v1502 = vadd.f32 %v1458, %v1487
      %v1503 = vadd.f32 %v1459, %v1491
      %v1504 = vadd.f32 %v1460, %v1487
      %v1505 = vadd.f32 %v1461, %v1491
      %v1506 = vadd.f32 %v1462, %v1487
      %v1507 = vadd.f32 %v1463, %v1491
      %v1508 = vadd.f32 %v1464, %v1487
      %v1509 = vadd.f32 %v1465, %v1491
      %v1510 = vadd.f32 %v1466, %v1487
      %v1511 = vadd.f32 %v1467, %v1491
      %v1512 = vadd.f32 %v1468, %v1487
      %v1513 = vadd.f32 %v1469, %v1491
      %v1514 = vadd.f32 %v1470, %v1487
      %v1515 = vadd.f32 %v1471, %v1491
      %v1516 = vadd.f32 %v1472, %v1487
      %v1517 = vadd.f32 %v1473, %v1491
      %v1518 = vadd.f32 %v1474, %v1487
      %v1519 = vadd.f32 %v1475, %v1491
      %v1520 = vadd.f32 %v1476, %v1487
      %v1521 = vadd.f32 %v1477, %v1491
      %v1522 = vadd.f32 %v1478, %v1487
      %v1523 = vadd.f32 %v1479, %v1491
      %v1524 = vadd.f32 %v1480, %v1487
      %v1525 = vadd.f32 %v1481, %v1491
      %v1526 = vmax.f32 %v1494, 0.0
      %v1527 = vmax.f32 %v1495, 0.0
      %v1528 = vmax.f32 %v1496, 0.0
      %v1529 = vmax.f32 %v1497, 0.0
      %v1530 = vmax.f32 %v1498, 0.0
      %v1531 = vmax.f32 %v1499, 0.0
      %v1532 = vmax.f32 %v1500, 0.0
      %v1533 = vmax.f32 %v1501, 0.0
      %v1534 = vmax.f32 %v1502, 0.0
      %v1535 = vmax.f32 %v1503, 0.0
      %v1536 = vmax.f32 %v1504, 0.0
      %v1537 = vmax.f32 %v1505, 0.0
      %v1538 = vmax.f32 %v1506, 0.0
      %v1539 = vmax.f32 %v1507, 0.0
      %v1540 = vmax.f32 %v1508, 0.0
      %v1541 = vmax.f32 %v1509, 0.0
      %v1542 = vmax.f32 %v1510, 0.0
      %v1543 = vmax.f32 %v1511, 0.0
      %v1544 = vmax.f32 %v1512, 0.0
      %v1545 = vmax.f32 %v1513, 0.0
      %v1546 = vmax.f32 %v1514, 0.0
      %v1547 = vmax.f32 %v1515, 0.0
      %v1548 = vmax.f32 %v1516, 0.0
      %v1549 = vmax.f32 %v1517, 0.0
      %v1550 = vmax.f32 %v1518, 0.0
      %v1551 = vmax.f32 %v1519, 0.0
      %v1552 = vmax.f32 %v1520, 0.0
      %v1553 = vmax.f32 %v1521, 0.0
      %v1554 = vmax.f32 %v1522, 0.0
      %v1555 = vmax.f32 %v1523, 0.0
      %v1556 = vmax.f32 %v1524, 0.0
      %v1557 = vmax.f32 %v1525, 0.0
      %v1558 = vpack.c.bf16 %v1528, %v1526
      %v1559 = vpack.c.bf16 %v1529, %v1527
      %v1560 = vpack.c.bf16 %v1532, %v1530
      %v1561 = vpack.c.bf16 %v1533, %v1531
      %v1562 = vpack.c.bf16 %v1536, %v1534
      %v1563 = vpack.c.bf16 %v1537, %v1535
      %v1564 = vpack.c.bf16 %v1540, %v1538
      %v1565 = vpack.c.bf16 %v1541, %v1539
      %v1566 = vpack.c.bf16 %v1544, %v1542
      %v1567 = vpack.c.bf16 %v1545, %v1543
      %v1568 = vpack.c.bf16 %v1548, %v1546
      %v1569 = vpack.c.bf16 %v1549, %v1547
      %v1570 = vpack.c.bf16 %v1552, %v1550
      %v1571 = vpack.c.bf16 %v1553, %v1551
      %v1572 = vpack.c.bf16 %v1556, %v1554
      %v1573 = vpack.c.bf16 %v1557, %v1555
      %vm1590 = vcmask 1043456
      %v1591 = vrot.slane %v1558, 4
      %v1592 = vrot.slane %v1559, 4
      %v1593 = vrot.slane %v1560, 4
      %v1594 = vsel %vm1590, %v1591, %v1593
      %v1595 = vrot.slane %v1561, 4
      %v1596 = vsel %vm1590, %v1592, %v1595
      %v1597 = vrot.slane %v1562, 4
      %v1598 = vsel %vm1590, %v1593, %v1597
      %v1599 = vrot.slane %v1563, 4
      %v1600 = vsel %vm1590, %v1595, %v1599
      %v1601 = vrot.slane %v1564, 4
      %v1602 = vsel %vm1590, %v1597, %v1601
      %v1603 = vrot.slane %v1565, 4
      %v1604 = vsel %vm1590, %v1599, %v1603
      %v1605 = vrot.slane %v1566, 4
      %v1606 = vsel %vm1590, %v1601, %v1605
      %v1607 = vrot.slane %v1567, 4
      %v1608 = vsel %vm1590, %v1603, %v1607
      %v1609 = vrot.slane %v1568, 4
      %v1610 = vsel %vm1590, %v1605, %v1609
      %v1611 = vrot.slane %v1569, 4
      %v1612 = vsel %vm1590, %v1607, %v1611
      %v1613 = vrot.slane %v1570, 4
      %v1614 = vsel %vm1590, %v1609, %v1613
      %v1615 = vrot.slane %v1571, 4
      %v1616 = vsel %vm1590, %v1611, %v1615
      %v1617 = vrot.slane %v1572, 4
      %v1618 = vsel %vm1590, %v1613, %v1617
      %v1619 = vrot.slane %v1573, 4
      %v1620 = vsel %vm1590, %v1615, %v1619
      %1639 = vst [vmem:[#allocation2] sm:$0xf0] %v1591
      %1640 = vst [vmem:[#allocation2 + $0x8] sm:$0xf0] %v1592
      %1641 = vst [vmem:[#allocation2 + $0x10] sm:$0xff] %v1594
      %1642 = vst [vmem:[#allocation2 + $0x18] sm:$0xff] %v1596
      %1643 = vst [vmem:[#allocation2 + $0x20] sm:$0xff] %v1598
      %1644 = vst [vmem:[#allocation2 + $0x28] sm:$0xff] %v1600
      %1645 = vst [vmem:[#allocation2 + $0x30] sm:$0xff] %v1602
      %1646 = vst [vmem:[#allocation2 + $0x38] sm:$0xff] %v1604
      %1647 = vst [vmem:[#allocation2 + $0x40] sm:$0xff] %v1606
      %1648 = vst [vmem:[#allocation2 + $0x48] sm:$0xff] %v1608
      %1649 = vst [vmem:[#allocation2 + $0x50] sm:$0xff] %v1610
      %1650 = vst [vmem:[#allocation2 + $0x58] sm:$0xff] %v1612
      %1651 = vst [vmem:[#allocation2 + $0x60] sm:$0xff] %v1614
      %1652 = vst [vmem:[#allocation2 + $0x68] sm:$0xff] %v1616
      %1653 = vst [vmem:[#allocation2 + $0x70] sm:$0xff] %v1618
      %1654 = vst [vmem:[#allocation2 + $0x78] sm:$0xff] %v1620
      %1655 = vst [vmem:[#allocation2 + $0x80] sm:$0xf] %v1617
      %1656 = vst [vmem:[#allocation2 + $0x88] sm:$0xf] %v1619
      %v1657 = vld [vmem:[#allocation2] sm:$0xff]
      %v1658 = vld [vmem:[#allocation2 + $0x8] sm:$0xff]
      %v1659 = vld [vmem:[#allocation2 + $0x10] sm:$0xff]
      %v1660 = vld [vmem:[#allocation2 + $0x18] sm:$0xff]
      %v1661 = vld [vmem:[#allocation2 + $0x20] sm:$0xff]
      %v1662 = vld [vmem:[#allocation2 + $0x28] sm:$0xff]
      %v1663 = vld [vmem:[#allocation2 + $0x30] sm:$0xff]
      %v1664 = vld [vmem:[#allocation2 + $0x38] sm:$0xff]
      %v1665 = vld [vmem:[#allocation2 + $0x40] sm:$0xff]
      %v1666 = vld [vmem:[#allocation2 + $0x48] sm:$0xff]
      %v1667 = vld [vmem:[#allocation2 + $0x50] sm:$0xff]
      %v1668 = vld [vmem:[#allocation2 + $0x58] sm:$0xff]
      %v1669 = vld [vmem:[#allocation2 + $0x60] sm:$0xff]
      %v1670 = vld [vmem:[#allocation2 + $0x68] sm:$0xff]
      %v1671 = vld [vmem:[#allocation2 + $0x70] sm:$0xff]
      %v1672 = vld [vmem:[#allocation2 + $0x78] sm:$0xff]
      %v1673 = vld [vmem:[%s3] sm:$0xf]
      %v1674 = vld [vmem:[%s3 + $0x4] sm:$0xf]
      %v1675 = vld [vmem:[%s3 + $0x8] sm:$0xf]
      %v1676 = vld [vmem:[%s3 + $0xc] sm:$0xf]
      %v1677 = vld [vmem:[%s3 + $0x10] sm:$0xf]
      %v1678 = vld [vmem:[%s3 + $0x14] sm:$0xf]
      %v1679 = vld [vmem:[%s3 + $0x18] sm:$0xf]
      %v1680 = vld [vmem:[%s3 + $0x1c] sm:$0xf]
      %v1681 = vld [vmem:[%s3 + $0x20] sm:$0xf]
      %v1682 = vld [vmem:[%s3 + $0x24] sm:$0xf]
      %v1683 = vld [vmem:[%s3 + $0x28] sm:$0xf]
      %v1684 = vld [vmem:[%s3 + $0x2c] sm:$0xf]
      %v1685 = vld [vmem:[%s3 + $0x30] sm:$0xf]
      %v1686 = vld [vmem:[%s3 + $0x34] sm:$0xf]
      %v1687 = vld [vmem:[%s3 + $0x38] sm:$0xf]
      %v1688 = vld [vmem:[%s3 + $0x3c] sm:$0xf]
      %v1689 = vld [vmem:[%s3 + $0x40] sm:$0xf]
      %v1690 = vld [vmem:[%s3 + $0x44] sm:$0xf]
      %v1691 = vld [vmem:[%s3 + $0x48] sm:$0xf]
      %v1692 = vld [vmem:[%s3 + $0x4c] sm:$0xf]
      %v1693 = vld [vmem:[%s3 + $0x50] sm:$0xf]
      %v1694 = vld [vmem:[%s3 + $0x54] sm:$0xf]
      %v1695 = vld [vmem:[%s3 + $0x58] sm:$0xf]
      %v1696 = vld [vmem:[%s3 + $0x5c] sm:$0xf]
      %v1697 = vld [vmem:[%s3 + $0x60] sm:$0xf]
      %v1698 = vld [vmem:[%s3 + $0x64] sm:$0xf]
      %v1699 = vld [vmem:[%s3 + $0x68] sm:$0xf]
      %v1700 = vld [vmem:[%s3 + $0x6c] sm:$0xf]
      %v1701 = vld [vmem:[%s3 + $0x70] sm:$0xf]
      %v1702 = vld [vmem:[%s3 + $0x74] sm:$0xf]
      %v1703 = vld [vmem:[%s3 + $0x78] sm:$0xf]
      %v1704 = vld [vmem:[%s3 + $0x7c] sm:$0xf]
      %v1705 = vld [vmem:[#allocation2] sm:$0xf0]
      %v1706 = vld [vmem:[#allocation2 + $0x8] sm:$0xf0]
      %v1707 = vld [vmem:[#allocation2 + $0x10] sm:$0xff]
      %v1708 = vld [vmem:[#allocation2 + $0x18] sm:$0xff]
      %v1709 = vld [vmem:[#allocation2 + $0x20] sm:$0xff]
      %v1710 = vld [vmem:[#allocation2 + $0x28] sm:$0xff]
      %v1711 = vld [vmem:[#allocation2 + $0x30] sm:$0xff]
      %v1712 = vld [vmem:[#allocation2 + $0x38] sm:$0xff]
      %v1713 = vld [vmem:[#allocation2 + $0x40] sm:$0xff]
      %v1714 = vld [vmem:[#allocation2 + $0x48] sm:$0xff]
      %v1715 = vld [vmem:[#allocation2 + $0x50] sm:$0xff]
      %v1716 = vld [vmem:[#allocation2 + $0x58] sm:$0xff]
      %v1717 = vld [vmem:[#allocation2 + $0x60] sm:$0xff]
      %v1718 = vld [vmem:[#allocation2 + $0x68] sm:$0xff]
      %v1719 = vld [vmem:[#allocation2 + $0x70] sm:$0xff]
      %v1720 = vld [vmem:[#allocation2 + $0x78] sm:$0xff]
      %v1721 = vld [vmem:[#allocation2 + $0x80] sm:$0xf]
      %v1722 = vld [vmem:[#allocation2 + $0x88] sm:$0xf]
      %s1723 = scalar_lea.vmem %s3, 128
      %v1724 = vld [vmem:[%s1723] sm:$0xf]
      %v1725 = vld [vmem:[%s1723 + $0x4] sm:$0xf]
      %v1726 = vld [vmem:[%s1723 + $0x8] sm:$0xf]
      %v1727 = vld [vmem:[%s1723 + $0xc] sm:$0xf]
      %v1728 = vld [vmem:[%s1723 + $0x10] sm:$0xf]
      %v1729 = vld [vmem:[%s1723 + $0x14] sm:$0xf]
      %v1730 = vld [vmem:[%s1723 + $0x18] sm:$0xf]
      %v1731 = vld [vmem:[%s1723 + $0x1c] sm:$0xf]
      %v1732 = vld [vmem:[%s1723 + $0x20] sm:$0xf]
      %v1733 = vld [vmem:[%s1723 + $0x24] sm:$0xf]
      %v1734 = vld [vmem:[%s1723 + $0x28] sm:$0xf]
      %v1735 = vld [vmem:[%s1723 + $0x2c] sm:$0xf]
      %v1736 = vld [vmem:[%s1723 + $0x30] sm:$0xf]
      %v1737 = vld [vmem:[%s1723 + $0x34] sm:$0xf]
      %v1738 = vld [vmem:[%s1723 + $0x38] sm:$0xf]
      %v1739 = vld [vmem:[%s1723 + $0x3c] sm:$0xf]
      %v1740 = vld [vmem:[%s1723 + $0x40] sm:$0xf]
      %v1741 = vld [vmem:[%s1723 + $0x44] sm:$0xf]
      %v1742 = vld [vmem:[%s1723 + $0x48] sm:$0xf]
      %v1743 = vld [vmem:[%s1723 + $0x4c] sm:$0xf]
      %v1744 = vld [vmem:[%s1723 + $0x50] sm:$0xf]
      %v1745 = vld [vmem:[%s1723 + $0x54] sm:$0xf]
      %v1746 = vld [vmem:[%s1723 + $0x58] sm:$0xf]
      %v1747 = vld [vmem:[%s1723 + $0x5c] sm:$0xf]
      %v1748 = vld [vmem:[%s1723 + $0x60] sm:$0xf]
      %v1749 = vld [vmem:[%s1723 + $0x64] sm:$0xf]
      %v1750 = vld [vmem:[%s1723 + $0x68] sm:$0xf]
      %v1751 = vld [vmem:[%s1723 + $0x6c] sm:$0xf]
      %v1752 = vld [vmem:[%s1723 + $0x70] sm:$0xf]
      %v1753 = vld [vmem:[%s1723 + $0x74] sm:$0xf]
      %v1754 = vld [vmem:[%s1723 + $0x78] sm:$0xf]
      %v1755 = vld [vmem:[%s1723 + $0x7c] sm:$0xf]
      %v1774 = vrot.slane %v1705, 4
      %v1775 = vrot.slane %v1707, 4
      %v1776 = vsel %vm1590, %v1774, %v1775
      %v1777 = vrot.slane %v1706, 4
      %v1778 = vrot.slane %v1708, 4
      %v1779 = vsel %vm1590, %v1777, %v1778
      %v1780 = vrot.slane %v1709, 4
      %v1781 = vsel %vm1590, %v1775, %v1780
      %v1782 = vrot.slane %v1710, 4
      %v1783 = vsel %vm1590, %v1778, %v1782
      %v1784 = vrot.slane %v1711, 4
      %v1785 = vsel %vm1590, %v1780, %v1784
      %v1786 = vrot.slane %v1712, 4
      %v1787 = vsel %vm1590, %v1782, %v1786
      %v1788 = vrot.slane %v1713, 4
      %v1789 = vsel %vm1590, %v1784, %v1788
      %v1790 = vrot.slane %v1714, 4
      %v1791 = vsel %vm1590, %v1786, %v1790
      %v1792 = vrot.slane %v1715, 4
      %v1793 = vsel %vm1590, %v1788, %v1792
      %v1794 = vrot.slane %v1716, 4
      %v1795 = vsel %vm1590, %v1790, %v1794
      %v1796 = vrot.slane %v1717, 4
      %v1797 = vsel %vm1590, %v1792, %v1796
      %v1798 = vrot.slane %v1718, 4
      %v1799 = vsel %vm1590, %v1794, %v1798
      %v1800 = vrot.slane %v1719, 4
      %v1801 = vsel %vm1590, %v1796, %v1800
      %v1802 = vrot.slane %v1720, 4
      %v1803 = vsel %vm1590, %v1798, %v1802
      %v1804 = vrot.slane %v1721, 4
      %v1805 = vsel %vm1590, %v1800, %v1804
      %v1806 = vrot.slane %v1722, 4
      %v1807 = vsel %vm1590, %v1802, %v1806
      %v1856 = vunpack.c.l.b16 %v1724
      %v1857 = vunpack.c.l.b16 %v1725
      %v1858 = vunpack.c.l.b16 %v1726
      %v1859 = vunpack.c.l.b16 %v1727
      %v1860 = vunpack.c.l.b16 %v1728
      %v1861 = vunpack.c.l.b16 %v1729
      %v1862 = vunpack.c.l.b16 %v1730
      %v1863 = vunpack.c.l.b16 %v1731
      %v1864 = vunpack.c.l.b16 %v1732
      %v1865 = vunpack.c.l.b16 %v1733
      %v1866 = vunpack.c.l.b16 %v1734
      %v1867 = vunpack.c.l.b16 %v1735
      %v1868 = vunpack.c.l.b16 %v1736
      %v1869 = vunpack.c.l.b16 %v1737
      %v1870 = vunpack.c.l.b16 %v1738
      %v1871 = vunpack.c.l.b16 %v1739
      %v1872 = vunpack.c.l.b16 %v1740
      %v1873 = vunpack.c.l.b16 %v1741
      %v1874 = vunpack.c.l.b16 %v1742
      %v1875 = vunpack.c.l.b16 %v1743
      %v1876 = vunpack.c.l.b16 %v1744
      %v1877 = vunpack.c.l.b16 %v1745
      %v1878 = vunpack.c.l.b16 %v1746
      %v1879 = vunpack.c.l.b16 %v1747
      %v1880 = vunpack.c.l.b16 %v1748
      %v1881 = vunpack.c.l.b16 %v1749
      %v1882 = vunpack.c.l.b16 %v1750
      %v1883 = vunpack.c.l.b16 %v1751
      %v1884 = vunpack.c.l.b16 %v1752
      %v1885 = vunpack.c.l.b16 %v1753
      %v1886 = vunpack.c.l.b16 %v1754
      %v1887 = vunpack.c.l.b16 %v1755
      %v1888 = vpack.c.b16 %v1857, %v1856
      %v1889 = vpack.c.b16 %v1859, %v1858
      %v1890 = vpack.c.b16 %v1861, %v1860
      %v1891 = vpack.c.b16 %v1863, %v1862
      %v1892 = vpack.c.b16 %v1865, %v1864
      %v1893 = vpack.c.b16 %v1867, %v1866
      %v1894 = vpack.c.b16 %v1869, %v1868
      %v1895 = vpack.c.b16 %v1871, %v1870
      %v1896 = vpack.c.b16 %v1873, %v1872
      %v1897 = vpack.c.b16 %v1875, %v1874
      %v1898 = vpack.c.b16 %v1877, %v1876
      %v1899 = vpack.c.b16 %v1879, %v1878
      %v1900 = vpack.c.b16 %v1881, %v1880
      %v1901 = vpack.c.b16 %v1883, %v1882
      %v1902 = vpack.c.b16 %v1885, %v1884
      %v1903 = vpack.c.b16 %v1887, %v1886
      %1920 = vmatprep.subr.bf16.mxu0 0
      %1921 = vmatpush1.bf16.msra.mxu0 %v1888
      %1922 = vmatprep.subr.bf16.mxu0 0
      %1923 = vmatpush1.bf16.msra.mxu0 %v1889
      %1924 = vmatprep.subr.bf16.mxu0 0
      %1925 = vmatpush1.bf16.msra.mxu0 %v1890
      %1926 = vmatprep.subr.bf16.mxu0 0
      %1927 = vmatpush1.bf16.msra.mxu0 %v1891
      %1928 = vmatprep.subr.bf16.mxu0 0
      %1929 = vmatpush1.bf16.msra.mxu0 %v1892
      %1930 = vmatprep.subr.bf16.mxu0 0
      %1931 = vmatpush1.bf16.msra.mxu0 %v1893
      %1932 = vmatprep.subr.bf16.mxu0 0
      %1933 = vmatpush1.bf16.msra.mxu0 %v1894
      %1934 = vmatprep.subr.bf16.mxu0 0
      %1935 = vmatpush1.bf16.msra.mxu0 %v1895
      %1936 = vmatprep.subr.bf16.mxu0 0
      %1937 = vmatpush1.bf16.msra.mxu0 %v1896
      %1938 = vmatprep.subr.bf16.mxu0 0
      %1939 = vmatpush1.bf16.msra.mxu0 %v1897
      %1940 = vmatprep.subr.bf16.mxu0 0
      %1941 = vmatpush1.bf16.msra.mxu0 %v1898
      %1942 = vmatprep.subr.bf16.mxu0 0
      %1943 = vmatpush1.bf16.msra.mxu0 %v1899
      %1944 = vmatprep.subr.bf16.mxu0 0
      %1945 = vmatpush1.bf16.msra.mxu0 %v1900
      %1946 = vmatprep.subr.bf16.mxu0 0
      %1947 = vmatpush1.bf16.msra.mxu0 %v1901
      %1948 = vmatprep.subr.bf16.mxu0 0
      %1949 = vmatpush1.bf16.msra.mxu0 %v1902
      %1950 = vmatprep.subr.bf16.mxu0 0
      %1951 = vmatpush1.bf16.msra.mxu0 %v1903
      %1952 = vmatprep.mubr.bf16.mxu0 %v1779
      %1953 = vmatmul.mubr.bf16.gmra.mrb[0].mxu0 %v1776
      %v1954 = vpop.f32.mrb[0].mxu0
      %v1955 = vadd.f32 0.0, %v1954
      %v1956 = vpop.f32.mrb[0].mxu0
      %v1957 = vpop.f32.mrb[0].mxu0
      %v1958 = vadd.f32 0.0, %v1957
      %v1959 = vpop.f32.mrb[0].mxu0
      %1960 = vmatprep.mubr.bf16.mxu0 %v1783
      %1961 = vmatmul.mubr.bf16.gmra.mrb[0].mxu0 %v1781
      %v1962 = vpop.f32.mrb[0].mxu0
      %v1963 = vadd.f32 0.0, %v1962
      %v1964 = vpop.f32.mrb[0].mxu0
      %v1965 = vpop.f32.mrb[0].mxu0
      %v1966 = vadd.f32 0.0, %v1965
      %v1967 = vpop.f32.mrb[0].mxu0
      %1968 = vmatprep.mubr.bf16.mxu0 %v1787
      %1969 = vmatmul.mubr.bf16.gmra.mrb[0].mxu0 %v1785
      %v1970 = vpop.f32.mrb[0].mxu0
      %v1971 = vadd.f32 0.0, %v1970
      %v1972 = vpop.f32.mrb[0].mxu0
      %v1973 = vpop.f32.mrb[0].mxu0
      %v1974 = vadd.f32 0.0, %v1973
      %v1975 = vpop.f32.mrb[0].mxu0
      %1976 = vmatprep.mubr.bf16.mxu0 %v1791
      %1977 = vmatmul.mubr.bf16.gmra.mrb[0].mxu0 %v1789
      %v1978 = vpop.f32.mrb[0].mxu0
      %v1979 = vadd.f32 0.0, %v1978
      %v1980 = vpop.f32.mrb[0].mxu0
      %v1981 = vpop.f32.mrb[0].mxu0
      %v1982 = vadd.f32 0.0, %v1981
      %v1983 = vpop.f32.mrb[0].mxu0
      %1984 = vmatprep.mubr.bf16.mxu0 %v1795
      %1985 = vmatmul.mubr.bf16.gmra.mrb[0].mxu0 %v1793
      %v1986 = vpop.f32.mrb[0].mxu0
      %v1987 = vadd.f32 0.0, %v1986
      %v1988 = vpop.f32.mrb[0].mxu0
      %v1989 = vpop.f32.mrb[0].mxu0
      %v1990 = vadd.f32 0.0, %v1989
      %v1991 = vpop.f32.mrb[0].mxu0
      %1992 = vmatprep.mubr.bf16.mxu0 %v1799
      %1993 = vmatmul.mubr.bf16.gmra.mrb[0].mxu0 %v1797
      %v1994 = vpop.f32.mrb[0].mxu0
      %v1995 = vadd.f32 0.0, %v1994
      %v1996 = vpop.f32.mrb[0].mxu0
      %v1997 = vpop.f32.mrb[0].mxu0
      %v1998 = vadd.f32 0.0, %v1997
      %v1999 = vpop.f32.mrb[0].mxu0
      %2000 = vmatprep.mubr.bf16.mxu0 %v1803
      %2001 = vmatmul.mubr.bf16.gmra.mrb[0].mxu0 %v1801
      %v2002 = vpop.f32.mrb[0].mxu0
      %v2003 = vadd.f32 0.0, %v2002
      %v2004 = vpop.f32.mrb[0].mxu0
      %v2005 = vpop.f32.mrb[0].mxu0
      %v2006 = vadd.f32 0.0, %v2005
      %v2007 = vpop.f32.mrb[0].mxu0
      %2008 = vmatprep.mubr.bf16.mxu0 %v1807
      %2009 = vmatmul.mubr.bf16.gmra.mrb[0].mxu0 %v1805
      %v2010 = vpop.f32.mrb[0].mxu0
      %v2011 = vadd.f32 0.0, %v2010
      %v2012 = vpop.f32.mrb[0].mxu0
      %v2013 = vpop.f32.mrb[0].mxu0
      %v2014 = vadd.f32 0.0, %v2013
      %v2015 = vpop.f32.mrb[0].mxu0
      %2016 = vdwg.mxu0
      %v2049 = vunpack.c.l.b16 %v1673
      %v2050 = vunpack.c.l.b16 %v1674
      %v2051 = vunpack.c.l.b16 %v1675
      %v2052 = vunpack.c.l.b16 %v1676
      %v2053 = vunpack.c.l.b16 %v1677
      %v2054 = vunpack.c.l.b16 %v1678
      %v2055 = vunpack.c.l.b16 %v1679
      %v2056 = vunpack.c.l.b16 %v1680
      %v2057 = vunpack.c.l.b16 %v1681
      %v2058 = vunpack.c.l.b16 %v1682
      %v2059 = vunpack.c.l.b16 %v1683
      %v2060 = vunpack.c.l.b16 %v1684
      %v2061 = vunpack.c.l.b16 %v1685
      %v2062 = vunpack.c.l.b16 %v1686
      %v2063 = vunpack.c.l.b16 %v1687
      %v2064 = vunpack.c.l.b16 %v1688
      %v2065 = vunpack.c.l.b16 %v1689
      %v2066 = vunpack.c.l.b16 %v1690
      %v2067 = vunpack.c.l.b16 %v1691
      %v2068 = vunpack.c.l.b16 %v1692
      %v2069 = vunpack.c.l.b16 %v1693
      %v2070 = vunpack.c.l.b16 %v1694
      %v2071 = vunpack.c.l.b16 %v1695
      %v2072 = vunpack.c.l.b16 %v1696
      %v2073 = vunpack.c.l.b16 %v1697
      %v2074 = vunpack.c.l.b16 %v1698
      %v2075 = vunpack.c.l.b16 %v1699
      %v2076 = vunpack.c.l.b16 %v1700
      %v2077 = vunpack.c.l.b16 %v1701
      %v2078 = vunpack.c.l.b16 %v1702
      %v2079 = vunpack.c.l.b16 %v1703
      %v2080 = vunpack.c.l.b16 %v1704
      %v2081 = vpack.c.b16 %v2050, %v2049
      %v2082 = vpack.c.b16 %v2052, %v2051
      %v2083 = vpack.c.b16 %v2054, %v2053
      %v2084 = vpack.c.b16 %v2056, %v2055
      %v2085 = vpack.c.b16 %v2058, %v2057
      %v2086 = vpack.c.b16 %v2060, %v2059
      %v2087 = vpack.c.b16 %v2062, %v2061
      %v2088 = vpack.c.b16 %v2064, %v2063
      %v2089 = vpack.c.b16 %v2066, %v2065
      %v2090 = vpack.c.b16 %v2068, %v2067
      %v2091 = vpack.c.b16 %v2070, %v2069
      %v2092 = vpack.c.b16 %v2072, %v2071
      %v2093 = vpack.c.b16 %v2074, %v2073
      %v2094 = vpack.c.b16 %v2076, %v2075
      %v2095 = vpack.c.b16 %v2078, %v2077
      %v2096 = vpack.c.b16 %v2080, %v2079
      %2113 = vmatprep.subr.bf16.mxu0 0
      %2114 = vmatpush1.bf16.msra.mxu0 %v2081
      %2115 = vmatprep.subr.bf16.mxu0 0
      %2116 = vmatpush1.bf16.msra.mxu0 %v2082
      %2117 = vmatprep.subr.bf16.mxu0 0
      %2118 = vmatpush1.bf16.msra.mxu0 %v2083
      %2119 = vmatprep.subr.bf16.mxu0 0
      %2120 = vmatpush1.bf16.msra.mxu0 %v2084
      %2121 = vmatprep.subr.bf16.mxu0 0
      %2122 = vmatpush1.bf16.msra.mxu0 %v2085
      %2123 = vmatprep.subr.bf16.mxu0 0
      %2124 = vmatpush1.bf16.msra.mxu0 %v2086
      %2125 = vmatprep.subr.bf16.mxu0 0
      %2126 = vmatpush1.bf16.msra.mxu0 %v2087
      %2127 = vmatprep.subr.bf16.mxu0 0
      %2128 = vmatpush1.bf16.msra.mxu0 %v2088
      %2129 = vmatprep.subr.bf16.mxu0 0
      %2130 = vmatpush1.bf16.msra.mxu0 %v2089
      %2131 = vmatprep.subr.bf16.mxu0 0
      %2132 = vmatpush1.bf16.msra.mxu0 %v2090
      %2133 = vmatprep.subr.bf16.mxu0 0
      %2134 = vmatpush1.bf16.msra.mxu0 %v2091
      %2135 = vmatprep.subr.bf16.mxu0 0
      %2136 = vmatpush1.bf16.msra.mxu0 %v2092
      %2137 = vmatprep.subr.bf16.mxu0 0
      %2138 = vmatpush1.bf16.msra.mxu0 %v2093
      %2139 = vmatprep.subr.bf16.mxu0 0
      %2140 = vmatpush1.bf16.msra.mxu0 %v2094
      %2141 = vmatprep.subr.bf16.mxu0 0
      %2142 = vmatpush1.bf16.msra.mxu0 %v2095
      %2143 = vmatprep.subr.bf16.mxu0 0
      %2144 = vmatpush1.bf16.msra.mxu0 %v2096
      %2145 = vmatprep.mubr.bf16.mxu0 %v1658
      %2146 = vmatmul.mubr.bf16.gmra.mrb[0].mxu0 %v1657
      %v2147 = vpop.f32.mrb[0].mxu0
      %v2148 = vadd.f32 %v1955, %v2147
      %v2149 = vpop.f32.mrb[0].mxu0
      %v2150 = vpop.f32.mrb[0].mxu0
      %v2151 = vadd.f32 %v1958, %v2150
      %v2152 = vpop.f32.mrb[0].mxu0
      %2153 = vmatprep.mubr.bf16.mxu0 %v1660
      %2154 = vmatmul.mubr.bf16.gmra.mrb[0].mxu0 %v1659
      %v2155 = vpop.f32.mrb[0].mxu0
      %v2156 = vadd.f32 %v1963, %v2155
      %v2157 = vpop.f32.mrb[0].mxu0
      %v2158 = vpop.f32.mrb[0].mxu0
      %v2159 = vadd.f32 %v1966, %v2158
      %v2160 = vpop.f32.mrb[0].mxu0
      %2161 = vmatprep.mubr.bf16.mxu0 %v1662
      %2162 = vmatmul.mubr.bf16.gmra.mrb[0].mxu0 %v1661
      %v2163 = vpop.f32.mrb[0].mxu0
      %v2164 = vadd.f32 %v1971, %v2163
      %v2165 = vpop.f32.mrb[0].mxu0
      %v2166 = vpop.f32.mrb[0].mxu0
      %v2167 = vadd.f32 %v1974, %v2166
      %v2168 = vpop.f32.mrb[0].mxu0
      %2169 = vmatprep.mubr.bf16.mxu0 %v1664
      %2170 = vmatmul.mubr.bf16.gmra.mrb[0].mxu0 %v1663
      %v2171 = vpop.f32.mrb[0].mxu0
      %v2172 = vadd.f32 %v1979, %v2171
      %v2173 = vpop.f32.mrb[0].mxu0
      %v2174 = vpop.f32.mrb[0].mxu0
      %v2175 = vadd.f32 %v1982, %v2174
      %v2176 = vpop.f32.mrb[0].mxu0
      %2177 = vmatprep.mubr.bf16.mxu0 %v1666
      %2178 = vmatmul.mubr.bf16.gmra.mrb[0].mxu0 %v1665
      %v2179 = vpop.f32.mrb[0].mxu0
      %v2180 = vadd.f32 %v1987, %v2179
      %v2181 = vpop.f32.mrb[0].mxu0
      %v2182 = vpop.f32.mrb[0].mxu0
      %v2183 = vadd.f32 %v1990, %v2182
      %v2184 = vpop.f32.mrb[0].mxu0
      %2185 = vmatprep.mubr.bf16.mxu0 %v1668
      %2186 = vmatmul.mubr.bf16.gmra.mrb[0].mxu0 %v1667
      %v2187 = vpop.f32.mrb[0].mxu0
      %v2188 = vadd.f32 %v1995, %v2187
      %v2189 = vpop.f32.mrb[0].mxu0
      %v2190 = vpop.f32.mrb[0].mxu0
      %v2191 = vadd.f32 %v1998, %v2190
      %v2192 = vpop.f32.mrb[0].mxu0
      %2193 = vmatprep.mubr.bf16.mxu0 %v1670
      %2194 = vmatmul.mubr.bf16.gmra.mrb[0].mxu0 %v1669
      %v2195 = vpop.f32.mrb[0].mxu0
      %v2196 = vadd.f32 %v2003, %v2195
      %v2197 = vpop.f32.mrb[0].mxu0
      %v2198 = vpop.f32.mrb[0].mxu0
      %v2199 = vadd.f32 %v2006, %v2198
      %v2200 = vpop.f32.mrb[0].mxu0
      %2201 = vmatprep.mubr.bf16.mxu0 %v1672
      %2202 = vmatmul.mubr.bf16.gmra.mrb[0].mxu0 %v1671
      %v2203 = vpop.f32.mrb[0].mxu0
      %v2204 = vadd.f32 %v2011, %v2203
      %v2205 = vpop.f32.mrb[0].mxu0
      %v2206 = vpop.f32.mrb[0].mxu0
      %v2207 = vadd.f32 %v2014, %v2206
      %v2208 = vpop.f32.mrb[0].mxu0
      %2209 = vdwg.mxu0
      %v2210 = vld [vmem:[#allocation2 + $0x80] sm:$0xff]
      %v2211 = vld [vmem:[#allocation2 + $0x88] sm:$0xff]
      %s2212 = scalar_lea.vmem %s3, 256
      %v2213 = vld [vmem:[%s2212] sm:$0xf]
      %v2214 = vld [vmem:[%s2212 + $0x4] sm:$0xf]
      %v2215 = vld [vmem:[%s2212 + $0x8] sm:$0xf]
      %v2216 = vld [vmem:[%s2212 + $0xc] sm:$0xf]
      %v2217 = vld [vmem:[%s2212 + $0x10] sm:$0xf]
      %v2218 = vld [vmem:[%s2212 + $0x14] sm:$0xf]
      %v2219 = vld [vmem:[%s2212 + $0x18] sm:$0xf]
      %v2220 = vld [vmem:[%s2212 + $0x1c] sm:$0xf]
      %v2221 = vld [vmem:[%s2212 + $0x20] sm:$0xf]
      %v2222 = vld [vmem:[%s2212 + $0x24] sm:$0xf]
      %v2223 = vld [vmem:[%s2212 + $0x28] sm:$0xf]
      %v2224 = vld [vmem:[%s2212 + $0x2c] sm:$0xf]
      %v2225 = vld [vmem:[%s2212 + $0x30] sm:$0xf]
      %v2226 = vld [vmem:[%s2212 + $0x34] sm:$0xf]
      %v2227 = vld [vmem:[%s2212 + $0x38] sm:$0xf]
      %v2228 = vld [vmem:[%s2212 + $0x3c] sm:$0xf]
      %v2229 = vld [vmem:[%s2212 + $0x40] sm:$0xf]
      %v2230 = vld [vmem:[%s2212 + $0x44] sm:$0xf]
      %v2231 = vld [vmem:[%s2212 + $0x48] sm:$0xf]
      %v2232 = vld [vmem:[%s2212 + $0x4c] sm:$0xf]
      %v2233 = vld [vmem:[%s2212 + $0x50] sm:$0xf]
      %v2234 = vld [vmem:[%s2212 + $0x54] sm:$0xf]
      %v2235 = vld [vmem:[%s2212 + $0x58] sm:$0xf]
      %v2236 = vld [vmem:[%s2212 + $0x5c] sm:$0xf]
      %v2237 = vld [vmem:[%s2212 + $0x60] sm:$0xf]
      %v2238 = vld [vmem:[%s2212 + $0x64] sm:$0xf]
      %v2239 = vld [vmem:[%s2212 + $0x68] sm:$0xf]
      %v2240 = vld [vmem:[%s2212 + $0x6c] sm:$0xf]
      %v2241 = vld [vmem:[%s2212 + $0x70] sm:$0xf]
      %v2242 = vld [vmem:[%s2212 + $0x74] sm:$0xf]
      %v2243 = vld [vmem:[%s2212 + $0x78] sm:$0xf]
      %v2244 = vld [vmem:[%s2212 + $0x7c] sm:$0xf]
      %v2277 = vunpack.c.l.b16 %v2213
      %v2278 = vunpack.c.l.b16 %v2214
      %v2279 = vunpack.c.l.b16 %v2215
      %v2280 = vunpack.c.l.b16 %v2216
      %v2281 = vunpack.c.l.b16 %v2217
      %v2282 = vunpack.c.l.b16 %v2218
      %v2283 = vunpack.c.l.b16 %v2219
      %v2284 = vunpack.c.l.b16 %v2220
      %v2285 = vunpack.c.l.b16 %v2221
      %v2286 = vunpack.c.l.b16 %v2222
      %v2287 = vunpack.c.l.b16 %v2223
      %v2288 = vunpack.c.l.b16 %v2224
      %v2289 = vunpack.c.l.b16 %v2225
      %v2290 = vunpack.c.l.b16 %v2226
      %v2291 = vunpack.c.l.b16 %v2227
      %v2292 = vunpack.c.l.b16 %v2228
      %v2293 = vunpack.c.l.b16 %v2229
      %v2294 = vunpack.c.l.b16 %v2230
      %v2295 = vunpack.c.l.b16 %v2231
      %v2296 = vunpack.c.l.b16 %v2232
      %v2297 = vunpack.c.l.b16 %v2233
      %v2298 = vunpack.c.l.b16 %v2234
      %v2299 = vunpack.c.l.b16 %v2235
      %v2300 = vunpack.c.l.b16 %v2236
      %v2301 = vunpack.c.l.b16 %v2237
      %v2302 = vunpack.c.l.b16 %v2238
      %v2303 = vunpack.c.l.b16 %v2239
      %v2304 = vunpack.c.l.b16 %v2240
      %v2305 = vunpack.c.l.b16 %v2241
      %v2306 = vunpack.c.l.b16 %v2242
      %v2307 = vunpack.c.l.b16 %v2243
      %v2308 = vunpack.c.l.b16 %v2244
      %v2309 = vpack.c.b16 %v2278, %v2277
      %v2310 = vpack.c.b16 %v2280, %v2279
      %v2311 = vpack.c.b16 %v2282, %v2281
      %v2312 = vpack.c.b16 %v2284, %v2283
      %v2313 = vpack.c.b16 %v2286, %v2285
      %v2314 = vpack.c.b16 %v2288, %v2287
      %v2315 = vpack.c.b16 %v2290, %v2289
      %v2316 = vpack.c.b16 %v2292, %v2291
      %v2317 = vpack.c.b16 %v2294, %v2293
      %v2318 = vpack.c.b16 %v2296, %v2295
      %v2319 = vpack.c.b16 %v2298, %v2297
      %v2320 = vpack.c.b16 %v2300, %v2299
      %v2321 = vpack.c.b16 %v2302, %v2301
      %v2322 = vpack.c.b16 %v2304, %v2303
      %v2323 = vpack.c.b16 %v2306, %v2305
      %v2324 = vpack.c.b16 %v2308, %v2307
      %2341 = vmatprep.subr.bf16.mxu0 0
      %2342 = vmatpush1.bf16.msra.mxu0 %v2309
      %2343 = vmatprep.subr.bf16.mxu0 0
      %2344 = vmatpush1.bf16.msra.mxu0 %v2310
      %2345 = vmatprep.subr.bf16.mxu0 0
      %2346 = vmatpush1.bf16.msra.mxu0 %v2311
      %2347 = vmatprep.subr.bf16.mxu0 0
      %2348 = vmatpush1.bf16.msra.mxu0 %v2312
      %2349 = vmatprep.subr.bf16.mxu0 0
      %2350 = vmatpush1.bf16.msra.mxu0 %v2313
      %2351 = vmatprep.subr.bf16.mxu0 0
      %2352 = vmatpush1.bf16.msra.mxu0 %v2314
      %2353 = vmatprep.subr.bf16.mxu0 0
      %2354 = vmatpush1.bf16.msra.mxu0 %v2315
      %2355 = vmatprep.subr.bf16.mxu0 0
      %2356 = vmatpush1.bf16.msra.mxu0 %v2316
      %2357 = vmatprep.subr.bf16.mxu0 0
      %2358 = vmatpush1.bf16.msra.mxu0 %v2317
      %2359 = vmatprep.subr.bf16.mxu0 0
      %2360 = vmatpush1.bf16.msra.mxu0 %v2318
      %2361 = vmatprep.subr.bf16.mxu0 0
      %2362 = vmatpush1.bf16.msra.mxu0 %v2319
      %2363 = vmatprep.subr.bf16.mxu0 0
      %2364 = vmatpush1.bf16.msra.mxu0 %v2320
      %2365 = vmatprep.subr.bf16.mxu0 0
      %2366 = vmatpush1.bf16.msra.mxu0 %v2321
      %2367 = vmatprep.subr.bf16.mxu0 0
      %2368 = vmatpush1.bf16.msra.mxu0 %v2322
      %2369 = vmatprep.subr.bf16.mxu0 0
      %2370 = vmatpush1.bf16.msra.mxu0 %v2323
      %2371 = vmatprep.subr.bf16.mxu0 0
      %2372 = vmatpush1.bf16.msra.mxu0 %v2324
      %2373 = vmatprep.mubr.bf16.mxu0 %v1708
      %2374 = vmatmul.mubr.bf16.gmra.mrb[0].mxu0 %v1707
      %v2375 = vpop.f32.mrb[0].mxu0
      %v2376 = vadd.f32 0.0, %v2375
      %v2377 = vpop.f32.mrb[0].mxu0
      %v2378 = vpop.f32.mrb[0].mxu0
      %v2379 = vadd.f32 0.0, %v2378
      %v2380 = vpop.f32.mrb[0].mxu0
      %2381 = vmatprep.mubr.bf16.mxu0 %v1710
      %2382 = vmatmul.mubr.bf16.gmra.mrb[0].mxu0 %v1709
      %v2383 = vpop.f32.mrb[0].mxu0
      %v2384 = vadd.f32 0.0, %v2383
      %v2385 = vpop.f32.mrb[0].mxu0
      %v2386 = vpop.f32.mrb[0].mxu0
      %v2387 = vadd.f32 0.0, %v2386
      %v2388 = vpop.f32.mrb[0].mxu0
      %2389 = vmatprep.mubr.bf16.mxu0 %v1712
      %2390 = vmatmul.mubr.bf16.gmra.mrb[0].mxu0 %v1711
      %v2391 = vpop.f32.mrb[0].mxu0
      %v2392 = vadd.f32 0.0, %v2391
      %v2393 = vpop.f32.mrb[0].mxu0
      %v2394 = vpop.f32.mrb[0].mxu0
      %v2395 = vadd.f32 0.0, %v2394
      %v2396 = vpop.f32.mrb[0].mxu0
      %2397 = vmatprep.mubr.bf16.mxu0 %v1714
      %2398 = vmatmul.mubr.bf16.gmra.mrb[0].mxu0 %v1713
      %v2399 = vpop.f32.mrb[0].mxu0
      %v2400 = vadd.f32 0.0, %v2399
      %v2401 = vpop.f32.mrb[0].mxu0
      %v2402 = vpop.f32.mrb[0].mxu0
      %v2403 = vadd.f32 0.0, %v2402
      %v2404 = vpop.f32.mrb[0].mxu0
      %2405 = vmatprep.mubr.bf16.mxu0 %v1716
      %2406 = vmatmul.mubr.bf16.gmra.mrb[0].mxu0 %v1715
      %v2407 = vpop.f32.mrb[0].mxu0
      %v2408 = vadd.f32 0.0, %v2407
      %v2409 = vpop.f32.mrb[0].mxu0
      %v2410 = vpop.f32.mrb[0].mxu0
      %v2411 = vadd.f32 0.0, %v2410
      %v2412 = vpop.f32.mrb[0].mxu0
      %2413 = vmatprep.mubr.bf16.mxu0 %v1718
      %2414 = vmatmul.mubr.bf16.gmra.mrb[0].mxu0 %v1717
      %v2415 = vpop.f32.mrb[0].mxu0
      %v2416 = vadd.f32 0.0, %v2415
      %v2417 = vpop.f32.mrb[0].mxu0
      %v2418 = vpop.f32.mrb[0].mxu0
      %v2419 = vadd.f32 0.0, %v2418
      %v2420 = vpop.f32.mrb[0].mxu0
      %2421 = vmatprep.mubr.bf16.mxu0 %v1720
      %2422 = vmatmul.mubr.bf16.gmra.mrb[0].mxu0 %v1719
      %v2423 = vpop.f32.mrb[0].mxu0
      %v2424 = vadd.f32 0.0, %v2423
      %v2425 = vpop.f32.mrb[0].mxu0
      %v2426 = vpop.f32.mrb[0].mxu0
      %v2427 = vadd.f32 0.0, %v2426
      %v2428 = vpop.f32.mrb[0].mxu0
      %2429 = vmatprep.mubr.bf16.mxu0 %v2211
      %2430 = vmatmul.mubr.bf16.gmra.mrb[0].mxu0 %v2210
      %v2431 = vpop.f32.mrb[0].mxu0
      %v2432 = vadd.f32 0.0, %v2431
      %v2433 = vpop.f32.mrb[0].mxu0
      %v2434 = vpop.f32.mrb[0].mxu0
      %v2435 = vadd.f32 0.0, %v2434
      %v2436 = vpop.f32.mrb[0].mxu0
      %2437 = vdwg.mxu0
      %v2438 = vadd.f32 %v2148, %v2376
      %v2439 = vadd.f32 %v2151, %v2379
      %v2440 = vadd.f32 %v2156, %v2384
      %v2441 = vadd.f32 %v2159, %v2387
      %v2442 = vadd.f32 %v2164, %v2392
      %v2443 = vadd.f32 %v2167, %v2395
      %v2444 = vadd.f32 %v2172, %v2400
      %v2445 = vadd.f32 %v2175, %v2403
      %v2446 = vadd.f32 %v2180, %v2408
      %v2447 = vadd.f32 %v2183, %v2411
      %v2448 = vadd.f32 %v2188, %v2416
      %v2449 = vadd.f32 %v2191, %v2419
      %v2450 = vadd.f32 %v2196, %v2424
      %v2451 = vadd.f32 %v2199, %v2427
      %v2452 = vadd.f32 %v2204, %v2432
      %v2453 = vadd.f32 %v2207, %v2435
      %v2454 = vld [vmem:[%s4] sm:$0x1]
      %v2456 = vlaneseq
      %v2457 = vshrl.u32 %v2456, 7
      %v2458 = vsub.s32 0, %v2457
      %v2459 = vrot.slane %v2454, %v2458
      %v2461 = vadd.f32 %v2438, %v2459
      %v2462 = vadd.f32 %v2439, %v2459
      %v2463 = vadd.f32 %v2440, %v2459
      %v2464 = vadd.f32 %v2441, %v2459
      %v2465 = vadd.f32 %v2442, %v2459
      %v2466 = vadd.f32 %v2443, %v2459
      %v2467 = vadd.f32 %v2444, %v2459
      %v2468 = vadd.f32 %v2445, %v2459
      %v2469 = vadd.f32 %v2446, %v2459
      %v2470 = vadd.f32 %v2447, %v2459
      %v2471 = vadd.f32 %v2448, %v2459
      %v2472 = vadd.f32 %v2449, %v2459
      %v2473 = vadd.f32 %v2450, %v2459
      %v2474 = vadd.f32 %v2451, %v2459
      %v2475 = vadd.f32 %v2452, %v2459
      %v2476 = vadd.f32 %v2453, %v2459
      %v2477 = vmax.f32 %v2461, 0.0
      %v2478 = vmax.f32 %v2462, 0.0
      %v2479 = vmax.f32 %v2463, 0.0
      %v2480 = vmax.f32 %v2464, 0.0
      %v2481 = vmax.f32 %v2465, 0.0
      %v2482 = vmax.f32 %v2466, 0.0
      %v2483 = vmax.f32 %v2467, 0.0
      %v2484 = vmax.f32 %v2468, 0.0
      %v2485 = vmax.f32 %v2469, 0.0
      %v2486 = vmax.f32 %v2470, 0.0
      %v2487 = vmax.f32 %v2471, 0.0
      %v2488 = vmax.f32 %v2472, 0.0
      %v2489 = vmax.f32 %v2473, 0.0
      %v2490 = vmax.f32 %v2474, 0.0
      %v2491 = vmax.f32 %v2475, 0.0
      %v2492 = vmax.f32 %v2476, 0.0
      %2509 = vrot.lane.b32.xlu0 %v2477, 64
      %v2510 = vpop.permute.xlu0 %2509
      %2511 = vrot.lane.b32.xlu0 %v2478, 64
      %v2512 = vpop.permute.xlu0 %2511
      %2513 = vrot.lane.b32.xlu0 %v2479, 64
      %v2514 = vpop.permute.xlu0 %2513
      %2515 = vrot.lane.b32.xlu0 %v2480, 64
      %v2516 = vpop.permute.xlu0 %2515
      %2517 = vrot.lane.b32.xlu0 %v2481, 64
      %v2518 = vpop.permute.xlu0 %2517
      %2519 = vrot.lane.b32.xlu0 %v2482, 64
      %v2520 = vpop.permute.xlu0 %2519
      %2521 = vrot.lane.b32.xlu0 %v2483, 64
      %v2522 = vpop.permute.xlu0 %2521
      %2523 = vrot.lane.b32.xlu0 %v2484, 64
      %v2524 = vpop.permute.xlu0 %2523
      %2525 = vrot.lane.b32.xlu0 %v2485, 64
      %v2526 = vpop.permute.xlu0 %2525
      %2527 = vrot.lane.b32.xlu0 %v2486, 64
      %v2528 = vpop.permute.xlu0 %2527
      %2529 = vrot.lane.b32.xlu0 %v2487, 64
      %v2530 = vpop.permute.xlu0 %2529
      %2531 = vrot.lane.b32.xlu0 %v2488, 64
      %v2532 = vpop.permute.xlu0 %2531
      %2533 = vrot.lane.b32.xlu0 %v2489, 64
      %v2534 = vpop.permute.xlu0 %2533
      %2535 = vrot.lane.b32.xlu0 %v2490, 64
      %v2536 = vpop.permute.xlu0 %2535
      %2537 = vrot.lane.b32.xlu0 %v2491, 64
      %v2538 = vpop.permute.xlu0 %2537
      %2539 = vrot.lane.b32.xlu0 %v2492, 64
      %v2540 = vpop.permute.xlu0 %2539
      %v2557 = vmax.f32 %v2477, %v2510
      %v2558 = vmax.f32 %v2478, %v2512
      %v2559 = vmax.f32 %v2479, %v2514
      %v2560 = vmax.f32 %v2480, %v2516
      %v2561 = vmax.f32 %v2481, %v2518
      %v2562 = vmax.f32 %v2482, %v2520
      %v2563 = vmax.f32 %v2483, %v2522
      %v2564 = vmax.f32 %v2484, %v2524
      %v2565 = vmax.f32 %v2485, %v2526
      %v2566 = vmax.f32 %v2486, %v2528
      %v2567 = vmax.f32 %v2487, %v2530
      %v2568 = vmax.f32 %v2488, %v2532
      %v2569 = vmax.f32 %v2489, %v2534
      %v2570 = vmax.f32 %v2490, %v2536
      %v2571 = vmax.f32 %v2491, %v2538
      %v2572 = vmax.f32 %v2492, %v2540
      %v2573 = vpack.c.bf16 %v2558, %v2557
      %v2574 = vpack.c.bf16 %v2560, %v2559
      %v2575 = vpack.c.bf16 %v2562, %v2561
      %v2576 = vpack.c.bf16 %v2564, %v2563
      %v2577 = vpack.c.bf16 %v2566, %v2565
      %v2578 = vpack.c.bf16 %v2568, %v2567
      %v2579 = vpack.c.bf16 %v2570, %v2569
      %v2580 = vpack.c.bf16 %v2572, %v2571
      %v2589 = vrot.slane %v2573, 4
      %v2590 = vrot.slane %v2574, 4
      %v2591 = vsel %vm1590, %v2589, %v2590
      %v2592 = vrot.slane %v2575, 4
      %v2593 = vsel %vm1590, %v2590, %v2592
      %v2594 = vrot.slane %v2576, 4
      %v2595 = vsel %vm1590, %v2592, %v2594
      %v2596 = vrot.slane %v2577, 4
      %v2597 = vsel %vm1590, %v2594, %v2596
      %v2598 = vrot.slane %v2578, 4
      %v2599 = vsel %vm1590, %v2596, %v2598
      %v2600 = vrot.slane %v2579, 4
      %v2601 = vsel %vm1590, %v2598, %v2600
      %v2602 = vrot.slane %v2580, 4
      %v2603 = vsel %vm1590, %v2600, %v2602
      %2613 = vst.msk [vmem:[#allocation3] sm:$0xf0] %vm664, %v2589
      %vm2614 = vcmask 523264
      %2615 = vst.msk [vmem:[#allocation3 + $0x8] sm:$0xff] %vm2614, %v2591
      %2616 = vst.msk [vmem:[#allocation3 + $0x10] sm:$0xff] %vm2614, %v2593
      %2617 = vst.msk [vmem:[#allocation3 + $0x18] sm:$0xff] %vm2614, %v2595
      %2618 = vst.msk [vmem:[#allocation3 + $0x20] sm:$0xff] %vm2614, %v2597
      %2619 = vst.msk [vmem:[#allocation3 + $0x28] sm:$0xff] %vm2614, %v2599
      %2620 = vst.msk [vmem:[#allocation3 + $0x30] sm:$0xff] %vm2614, %v2601
      %2621 = vst.msk [vmem:[#allocation3 + $0x38] sm:$0xff] %vm2614, %v2603
      %2622 = vst.msk [vmem:[#allocation3 + $0x40] sm:$0xf] %vm662, %v2602
      %v2623 = vld [vmem:[#allocation3] sm:$0xff]
      %v2624 = vld [vmem:[#allocation3 + $0x8] sm:$0xff]
      %v2625 = vld [vmem:[#allocation3 + $0x10] sm:$0xff]
      %v2626 = vld [vmem:[#allocation3 + $0x18] sm:$0xff]
      %v2627 = vld [vmem:[#allocation3 + $0x20] sm:$0xff]
      %v2628 = vld [vmem:[#allocation3 + $0x28] sm:$0xff]
      %v2629 = vld [vmem:[#allocation3 + $0x30] sm:$0xff]
      %v2630 = vld [vmem:[#allocation3 + $0x38] sm:$0xff]
      %v2631 = vld [vmem:[%s5] sm:$0xf]
      %v2632 = vld [vmem:[%s5 + $0x4] sm:$0xf]
      %v2633 = vld [vmem:[%s5 + $0x8] sm:$0xf]
      %v2634 = vld [vmem:[%s5 + $0xc] sm:$0xf]
      %v2635 = vld [vmem:[%s5 + $0x10] sm:$0xf]
      %v2636 = vld [vmem:[%s5 + $0x14] sm:$0xf]
      %v2637 = vld [vmem:[%s5 + $0x18] sm:$0xf]
      %v2638 = vld [vmem:[%s5 + $0x1c] sm:$0xf]
      %v2639 = vld [vmem:[#allocation3] sm:$0xf0]
      %v2640 = vld [vmem:[#allocation3 + $0x40] sm:$0xf]
      %s2641 = scalar_lea.vmem %s5, 32
      %v2642 = vld [vmem:[%s2641] sm:$0xf]
      %v2643 = vld [vmem:[%s2641 + $0x4] sm:$0xf]
      %v2644 = vld [vmem:[%s2641 + $0x8] sm:$0xf]
      %v2645 = vld [vmem:[%s2641 + $0xc] sm:$0xf]
      %v2646 = vld [vmem:[%s2641 + $0x10] sm:$0xf]
      %v2647 = vld [vmem:[%s2641 + $0x14] sm:$0xf]
      %v2648 = vld [vmem:[%s2641 + $0x18] sm:$0xf]
      %v2649 = vld [vmem:[%s2641 + $0x1c] sm:$0xf]
      %v2659 = vrot.slane %v2639, 4
      %v2660 = vrot.slane %v2624, 4
      %v2661 = vsel %vm1590, %v2659, %v2660
      %v2662 = vrot.slane %v2625, 4
      %v2663 = vsel %vm1590, %v2660, %v2662
      %v2664 = vrot.slane %v2626, 4
      %v2665 = vsel %vm1590, %v2662, %v2664
      %v2666 = vrot.slane %v2627, 4
      %v2667 = vsel %vm1590, %v2664, %v2666
      %v2668 = vrot.slane %v2628, 4
      %v2669 = vsel %vm1590, %v2666, %v2668
      %v2670 = vrot.slane %v2629, 4
      %v2671 = vsel %vm1590, %v2668, %v2670
      %v2672 = vrot.slane %v2630, 4
      %v2673 = vsel %vm1590, %v2670, %v2672
      %v2674 = vrot.slane %v2640, 4
      %v2675 = vsel %vm1590, %v2672, %v2674
      %v2684 = vunpack.c.l.b16 %v2642
      %v2685 = vunpack.c.l.b16 %v2643
      %v2686 = vunpack.c.l.b16 %v2644
      %v2687 = vunpack.c.l.b16 %v2645
      %v2688 = vunpack.c.l.b16 %v2646
      %v2689 = vunpack.c.l.b16 %v2647
      %v2690 = vunpack.c.l.b16 %v2648
      %v2691 = vunpack.c.l.b16 %v2649
      %v2692 = vpack.c.b16 %v2685, %v2684
      %v2693 = vpack.c.b16 %v2687, %v2686
      %v2694 = vpack.c.b16 %v2689, %v2688
      %v2695 = vpack.c.b16 %v2691, %v2690
      %v2701 = vsel %vm2614, %v2661, 0
      %v2704 = vsel %vm2614, %v2663, 0
      %v2707 = vsel %vm2614, %v2665, 0
      %v2710 = vsel %vm2614, %v2667, 0
      %v2713 = vsel %vm2614, %v2669, 0
      %v2716 = vsel %vm2614, %v2671, 0
      %v2719 = vsel %vm2614, %v2673, 0
      %v2722 = vsel %vm2614, %v2675, 0
      %2724 = vmatprep.subr.bf16.mxu0 0
      %2725 = vmatpush1.bf16.msra.mxu0 %v2692
      %2726 = vmatprep.subr.bf16.mxu0 0
      %2727 = vmatpush1.bf16.msra.mxu0 %v2693
      %2728 = vmatprep.subr.bf16.mxu0 0
      %2729 = vmatpush1.bf16.msra.mxu0 %v2694
      %2730 = vmatprep.subr.bf16.mxu0 0
      %2731 = vmatpush1.bf16.msra.mxu0 %v2695
      %2732 = vmatprep.subr.bf16.mxu0 0
      %2733 = vmatpush1.bf16.msra.mxu0 0
      %2734 = vmatprep.subr.bf16.mxu0 0
      %2735 = vmatpush1.bf16.msra.mxu0 0
      %2736 = vmatprep.subr.bf16.mxu0 0
      %2737 = vmatpush1.bf16.msra.mxu0 0
      %2738 = vmatprep.subr.bf16.mxu0 0
      %2739 = vmatpush1.bf16.msra.mxu0 0
      %2740 = vmatprep.subr.bf16.mxu0 0
      %2741 = vmatpush1.bf16.msra.mxu0 0
      %2742 = vmatprep.subr.bf16.mxu0 0
      %2743 = vmatpush1.bf16.msra.mxu0 0
      %2744 = vmatprep.subr.bf16.mxu0 0
      %2745 = vmatpush1.bf16.msra.mxu0 0
      %2746 = vmatprep.subr.bf16.mxu0 0
      %2747 = vmatpush1.bf16.msra.mxu0 0
      %2748 = vmatprep.subr.bf16.mxu0 0
      %2749 = vmatpush1.bf16.msra.mxu0 0
      %2750 = vmatprep.subr.bf16.mxu0 0
      %2751 = vmatpush1.bf16.msra.mxu0 0
      %2752 = vmatprep.subr.bf16.mxu0 0
      %2753 = vmatpush1.bf16.msra.mxu0 0
      %2754 = vmatprep.subr.bf16.mxu0 0
      %2755 = vmatpush1.bf16.msra.mxu0 0
      %2756 = vmatprep.mubr.bf16.mxu0 0
      %2757 = vmatmul.mubr.bf16.gmra.mrb[0].mxu0 %v2701
      %v2758 = vpop.f32.mrb[0].mxu0
      %v2759 = vadd.f32 0.0, %v2758
      %v2760 = vpop.f32.mrb[0].mxu0
      %v2761 = vpop.f32.mrb[0].mxu0
      %v2762 = vadd.f32 0.0, %v2761
      %v2763 = vpop.f32.mrb[0].mxu0
      %2764 = vmatprep.mubr.bf16.mxu0 0
      %2765 = vmatmul.mubr.bf16.gmra.mrb[0].mxu0 %v2704
      %v2766 = vpop.f32.mrb[0].mxu0
      %v2767 = vadd.f32 0.0, %v2766
      %v2768 = vpop.f32.mrb[0].mxu0
      %v2769 = vpop.f32.mrb[0].mxu0
      %v2770 = vadd.f32 0.0, %v2769
      %v2771 = vpop.f32.mrb[0].mxu0
      %2772 = vmatprep.mubr.bf16.mxu0 0
      %2773 = vmatmul.mubr.bf16.gmra.mrb[0].mxu0 %v2707
      %v2774 = vpop.f32.mrb[0].mxu0
      %v2775 = vadd.f32 0.0, %v2774
      %v2776 = vpop.f32.mrb[0].mxu0
      %v2777 = vpop.f32.mrb[0].mxu0
      %v2778 = vadd.f32 0.0, %v2777
      %v2779 = vpop.f32.mrb[0].mxu0
      %2780 = vmatprep.mubr.bf16.mxu0 0
      %2781 = vmatmul.mubr.bf16.gmra.mrb[0].mxu0 %v2710
      %v2782 = vpop.f32.mrb[0].mxu0
      %v2783 = vadd.f32 0.0, %v2782
      %v2784 = vpop.f32.mrb[0].mxu0
      %v2785 = vpop.f32.mrb[0].mxu0
      %v2786 = vadd.f32 0.0, %v2785
      %v2787 = vpop.f32.mrb[0].mxu0
      %2788 = vmatprep.mubr.bf16.mxu0 0
      %2789 = vmatmul.mubr.bf16.gmra.mrb[0].mxu0 %v2713
      %v2790 = vpop.f32.mrb[0].mxu0
      %v2791 = vadd.f32 0.0, %v2790
      %v2792 = vpop.f32.mrb[0].mxu0
      %v2793 = vpop.f32.mrb[0].mxu0
      %v2794 = vadd.f32 0.0, %v2793
      %v2795 = vpop.f32.mrb[0].mxu0
      %2796 = vmatprep.mubr.bf16.mxu0 0
      %2797 = vmatmul.mubr.bf16.gmra.mrb[0].mxu0 %v2716
      %v2798 = vpop.f32.mrb[0].mxu0
      %v2799 = vadd.f32 0.0, %v2798
      %v2800 = vpop.f32.mrb[0].mxu0
      %v2801 = vpop.f32.mrb[0].mxu0
      %v2802 = vadd.f32 0.0, %v2801
      %v2803 = vpop.f32.mrb[0].mxu0
      %2804 = vmatprep.mubr.bf16.mxu0 0
      %2805 = vmatmul.mubr.bf16.gmra.mrb[0].mxu0 %v2719
      %v2806 = vpop.f32.mrb[0].mxu0
      %v2807 = vadd.f32 0.0, %v2806
      %v2808 = vpop.f32.mrb[0].mxu0
      %v2809 = vpop.f32.mrb[0].mxu0
      %v2810 = vadd.f32 0.0, %v2809
      %v2811 = vpop.f32.mrb[0].mxu0
      %2812 = vmatprep.mubr.bf16.mxu0 0
      %2813 = vmatmul.mubr.bf16.gmra.mrb[0].mxu0 %v2722
      %v2814 = vpop.f32.mrb[0].mxu0
      %v2815 = vadd.f32 0.0, %v2814
      %v2816 = vpop.f32.mrb[0].mxu0
      %v2817 = vpop.f32.mrb[0].mxu0
      %v2818 = vadd.f32 0.0, %v2817
      %v2819 = vpop.f32.mrb[0].mxu0
      %2820 = vdwg.mxu0
      %v2829 = vunpack.c.l.b16 %v2631
      %v2830 = vunpack.c.l.b16 %v2632
      %v2831 = vunpack.c.l.b16 %v2633
      %v2832 = vunpack.c.l.b16 %v2634
      %v2833 = vunpack.c.l.b16 %v2635
      %v2834 = vunpack.c.l.b16 %v2636
      %v2835 = vunpack.c.l.b16 %v2637
      %v2836 = vunpack.c.l.b16 %v2638
      %v2837 = vpack.c.b16 %v2830, %v2829
      %v2838 = vpack.c.b16 %v2832, %v2831
      %v2839 = vpack.c.b16 %v2834, %v2833
      %v2840 = vpack.c.b16 %v2836, %v2835
      %v2846 = vsel %vm2614, %v2623, 0
      %v2849 = vsel %vm2614, %v2624, 0
      %v2852 = vsel %vm2614, %v2625, 0
      %v2855 = vsel %vm2614, %v2626, 0
      %v2858 = vsel %vm2614, %v2627, 0
      %v2861 = vsel %vm2614, %v2628, 0
      %v2864 = vsel %vm2614, %v2629, 0
      %v2867 = vsel %vm2614, %v2630, 0
      %2869 = vmatprep.subr.bf16.mxu0 0
      %2870 = vmatpush1.bf16.msra.mxu0 %v2837
      %2871 = vmatprep.subr.bf16.mxu0 0
      %2872 = vmatpush1.bf16.msra.mxu0 %v2838
      %2873 = vmatprep.subr.bf16.mxu0 0
      %2874 = vmatpush1.bf16.msra.mxu0 %v2839
      %2875 = vmatprep.subr.bf16.mxu0 0
      %2876 = vmatpush1.bf16.msra.mxu0 %v2840
      %2877 = vmatprep.subr.bf16.mxu0 0
      %2878 = vmatpush1.bf16.msra.mxu0 0
      %2879 = vmatprep.subr.bf16.mxu0 0
      %2880 = vmatpush1.bf16.msra.mxu0 0
      %2881 = vmatprep.subr.bf16.mxu0 0
      %2882 = vmatpush1.bf16.msra.mxu0 0
      %2883 = vmatprep.subr.bf16.mxu0 0
      %2884 = vmatpush1.bf16.msra.mxu0 0
      %2885 = vmatprep.subr.bf16.mxu0 0
      %2886 = vmatpush1.bf16.msra.mxu0 0
      %2887 = vmatprep.subr.bf16.mxu0 0
      %2888 = vmatpush1.bf16.msra.mxu0 0
      %2889 = vmatprep.subr.bf16.mxu0 0
      %2890 = vmatpush1.bf16.msra.mxu0 0
      %2891 = vmatprep.subr.bf16.mxu0 0
      %2892 = vmatpush1.bf16.msra.mxu0 0
      %2893 = vmatprep.subr.bf16.mxu0 0
      %2894 = vmatpush1.bf16.msra.mxu0 0
      %2895 = vmatprep.subr.bf16.mxu0 0
      %2896 = vmatpush1.bf16.msra.mxu0 0
      %2897 = vmatprep.subr.bf16.mxu0 0
      %2898 = vmatpush1.bf16.msra.mxu0 0
      %2899 = vmatprep.subr.bf16.mxu0 0
      %2900 = vmatpush1.bf16.msra.mxu0 0
      %2901 = vmatprep.mubr.bf16.mxu0 0
      %2902 = vmatmul.mubr.bf16.gmra.mrb[0].mxu0 %v2846
      %v2903 = vpop.f32.mrb[0].mxu0
      %v2904 = vadd.f32 %v2759, %v2903
      %v2905 = vpop.f32.mrb[0].mxu0
      %v2906 = vpop.f32.mrb[0].mxu0
      %v2907 = vadd.f32 %v2762, %v2906
      %v2908 = vpop.f32.mrb[0].mxu0
      %2909 = vmatprep.mubr.bf16.mxu0 0
      %2910 = vmatmul.mubr.bf16.gmra.mrb[0].mxu0 %v2849
      %v2911 = vpop.f32.mrb[0].mxu0
      %v2912 = vadd.f32 %v2767, %v2911
      %v2913 = vpop.f32.mrb[0].mxu0
      %v2914 = vpop.f32.mrb[0].mxu0
      %v2915 = vadd.f32 %v2770, %v2914
      %v2916 = vpop.f32.mrb[0].mxu0
      %2917 = vmatprep.mubr.bf16.mxu0 0
      %2918 = vmatmul.mubr.bf16.gmra.mrb[0].mxu0 %v2852
      %v2919 = vpop.f32.mrb[0].mxu0
      %v2920 = vadd.f32 %v2775, %v2919
      %v2921 = vpop.f32.mrb[0].mxu0
      %v2922 = vpop.f32.mrb[0].mxu0
      %v2923 = vadd.f32 %v2778, %v2922
      %v2924 = vpop.f32.mrb[0].mxu0
      %2925 = vmatprep.mubr.bf16.mxu0 0
      %2926 = vmatmul.mubr.bf16.gmra.mrb[0].mxu0 %v2855
      %v2927 = vpop.f32.mrb[0].mxu0
      %v2928 = vadd.f32 %v2783, %v2927
      %v2929 = vpop.f32.mrb[0].mxu0
      %v2930 = vpop.f32.mrb[0].mxu0
      %v2931 = vadd.f32 %v2786, %v2930
      %v2932 = vpop.f32.mrb[0].mxu0
      %2933 = vmatprep.mubr.bf16.mxu0 0
      %2934 = vmatmul.mubr.bf16.gmra.mrb[0].mxu0 %v2858
      %v2935 = vpop.f32.mrb[0].mxu0
      %v2936 = vadd.f32 %v2791, %v2935
      %v2937 = vpop.f32.mrb[0].mxu0
      %v2938 = vpop.f32.mrb[0].mxu0
      %v2939 = vadd.f32 %v2794, %v2938
      %v2940 = vpop.f32.mrb[0].mxu0
      %2941 = vmatprep.mubr.bf16.mxu0 0
      %2942 = vmatmul.mubr.bf16.gmra.mrb[0].mxu0 %v2861
      %v2943 = vpop.f32.mrb[0].mxu0
      %v2944 = vadd.f32 %v2799, %v2943
      %v2945 = vpop.f32.mrb[0].mxu0
      %v2946 = vpop.f32.mrb[0].mxu0
      %v2947 = vadd.f32 %v2802, %v2946
      %v2948 = vpop.f32.mrb[0].mxu0
      %2949 = vmatprep.mubr.bf16.mxu0 0
      %2950 = vmatmul.mubr.bf16.gmra.mrb[0].mxu0 %v2864
      %v2951 = vpop.f32.mrb[0].mxu0
      %v2952 = vadd.f32 %v2807, %v2951
      %v2953 = vpop.f32.mrb[0].mxu0
      %v2954 = vpop.f32.mrb[0].mxu0
      %v2955 = vadd.f32 %v2810, %v2954
      %v2956 = vpop.f32.mrb[0].mxu0
      %2957 = vmatprep.mubr.bf16.mxu0 0
      %2958 = vmatmul.mubr.bf16.gmra.mrb[0].mxu0 %v2867
      %v2959 = vpop.f32.mrb[0].mxu0
      %v2960 = vadd.f32 %v2815, %v2959
      %v2961 = vpop.f32.mrb[0].mxu0
      %v2962 = vpop.f32.mrb[0].mxu0
      %v2963 = vadd.f32 %v2818, %v2962
      %v2964 = vpop.f32.mrb[0].mxu0
      %2965 = vdwg.mxu0
      %v2966 = vld [vmem:[#allocation3 + $0x40] sm:$0xff]
      %s2967 = scalar_lea.vmem %s5, 64
      %v2968 = vld [vmem:[%s2967] sm:$0xf]
      %v2969 = vld [vmem:[%s2967 + $0x4] sm:$0xf]
      %v2970 = vld [vmem:[%s2967 + $0x8] sm:$0xf]
      %v2971 = vld [vmem:[%s2967 + $0xc] sm:$0xf]
      %v2972 = vld [vmem:[%s2967 + $0x10] sm:$0xf]
      %v2973 = vld [vmem:[%s2967 + $0x14] sm:$0xf]
      %v2974 = vld [vmem:[%s2967 + $0x18] sm:$0xf]
      %v2975 = vld [vmem:[%s2967 + $0x1c] sm:$0xf]
      %v2984 = vunpack.c.l.b16 %v2968
      %v2985 = vunpack.c.l.b16 %v2969
      %v2986 = vunpack.c.l.b16 %v2970
      %v2987 = vunpack.c.l.b16 %v2971
      %v2988 = vunpack.c.l.b16 %v2972
      %v2989 = vunpack.c.l.b16 %v2973
      %v2990 = vunpack.c.l.b16 %v2974
      %v2991 = vunpack.c.l.b16 %v2975
      %v2992 = vpack.c.b16 %v2985, %v2984
      %v2993 = vpack.c.b16 %v2987, %v2986
      %v2994 = vpack.c.b16 %v2989, %v2988
      %v2995 = vpack.c.b16 %v2991, %v2990
      %v3001 = vsel %vm2614, %v2966, 0
      %3003 = vmatprep.subr.bf16.mxu0 0
      %3004 = vmatpush1.bf16.msra.mxu0 %v2992
      %3005 = vmatprep.subr.bf16.mxu0 0
      %3006 = vmatpush1.bf16.msra.mxu0 %v2993
      %3007 = vmatprep.subr.bf16.mxu0 0
      %3008 = vmatpush1.bf16.msra.mxu0 %v2994
      %3009 = vmatprep.subr.bf16.mxu0 0
      %3010 = vmatpush1.bf16.msra.mxu0 %v2995
      %3011 = vmatprep.subr.bf16.mxu0 0
      %3012 = vmatpush1.bf16.msra.mxu0 0
      %3013 = vmatprep.subr.bf16.mxu0 0
      %3014 = vmatpush1.bf16.msra.mxu0 0
      %3015 = vmatprep.subr.bf16.mxu0 0
      %3016 = vmatpush1.bf16.msra.mxu0 0
      %3017 = vmatprep.subr.bf16.mxu0 0
      %3018 = vmatpush1.bf16.msra.mxu0 0
      %3019 = vmatprep.subr.bf16.mxu0 0
      %3020 = vmatpush1.bf16.msra.mxu0 0
      %3021 = vmatprep.subr.bf16.mxu0 0
      %3022 = vmatpush1.bf16.msra.mxu0 0
      %3023 = vmatprep.subr.bf16.mxu0 0
      %3024 = vmatpush1.bf16.msra.mxu0 0
      %3025 = vmatprep.subr.bf16.mxu0 0
      %3026 = vmatpush1.bf16.msra.mxu0 0
      %3027 = vmatprep.subr.bf16.mxu0 0
      %3028 = vmatpush1.bf16.msra.mxu0 0
      %3029 = vmatprep.subr.bf16.mxu0 0
      %3030 = vmatpush1.bf16.msra.mxu0 0
      %3031 = vmatprep.subr.bf16.mxu0 0
      %3032 = vmatpush1.bf16.msra.mxu0 0
      %3033 = vmatprep.subr.bf16.mxu0 0
      %3034 = vmatpush1.bf16.msra.mxu0 0
      %3035 = vmatprep.mubr.bf16.mxu0 0
      %3036 = vmatmul.mubr.bf16.gmra.mrb[0].mxu0 %v2849
      %v3037 = vpop.f32.mrb[0].mxu0
      %v3038 = vadd.f32 0.0, %v3037
      %v3039 = vpop.f32.mrb[0].mxu0
      %v3040 = vpop.f32.mrb[0].mxu0
      %v3041 = vadd.f32 0.0, %v3040
      %v3042 = vpop.f32.mrb[0].mxu0
      %3043 = vmatprep.mubr.bf16.mxu0 0
      %3044 = vmatmul.mubr.bf16.gmra.mrb[0].mxu0 %v2852
      %v3045 = vpop.f32.mrb[0].mxu0
      %v3046 = vadd.f32 0.0, %v3045
      %v3047 = vpop.f32.mrb[0].mxu0
      %v3048 = vpop.f32.mrb[0].mxu0
      %v3049 = vadd.f32 0.0, %v3048
      %v3050 = vpop.f32.mrb[0].mxu0
      %3051 = vmatprep.mubr.bf16.mxu0 0
      %3052 = vmatmul.mubr.bf16.gmra.mrb[0].mxu0 %v2855
      %v3053 = vpop.f32.mrb[0].mxu0
      %v3054 = vadd.f32 0.0, %v3053
      %v3055 = vpop.f32.mrb[0].mxu0
      %v3056 = vpop.f32.mrb[0].mxu0
      %v3057 = vadd.f32 0.0, %v3056
      %v3058 = vpop.f32.mrb[0].mxu0
      %3059 = vmatprep.mubr.bf16.mxu0 0
      %3060 = vmatmul.mubr.bf16.gmra.mrb[0].mxu0 %v2858
      %v3061 = vpop.f32.mrb[0].mxu0
      %v3062 = vadd.f32 0.0, %v3061
      %v3063 = vpop.f32.mrb[0].mxu0
      %v3064 = vpop.f32.mrb[0].mxu0
      %v3065 = vadd.f32 0.0, %v3064
      %v3066 = vpop.f32.mrb[0].mxu0
      %3067 = vmatprep.mubr.bf16.mxu0 0
      %3068 = vmatmul.mubr.bf16.gmra.mrb[0].mxu0 %v2861
      %v3069 = vpop.f32.mrb[0].mxu0
      %v3070 = vadd.f32 0.0, %v3069
      %v3071 = vpop.f32.mrb[0].mxu0
      %v3072 = vpop.f32.mrb[0].mxu0
      %v3073 = vadd.f32 0.0, %v3072
      %v3074 = vpop.f32.mrb[0].mxu0
      %3075 = vmatprep.mubr.bf16.mxu0 0
      %3076 = vmatmul.mubr.bf16.gmra.mrb[0].mxu0 %v2864
      %v3077 = vpop.f32.mrb[0].mxu0
      %v3078 = vadd.f32 0.0, %v3077
      %v3079 = vpop.f32.mrb[0].mxu0
      %v3080 = vpop.f32.mrb[0].mxu0
      %v3081 = vadd.f32 0.0, %v3080
      %v3082 = vpop.f32.mrb[0].mxu0
      %3083 = vmatprep.mubr.bf16.mxu0 0
      %3084 = vmatmul.mubr.bf16.gmra.mrb[0].mxu0 %v2867
      %v3085 = vpop.f32.mrb[0].mxu0
      %v3086 = vadd.f32 0.0, %v3085
      %v3087 = vpop.f32.mrb[0].mxu0
      %v3088 = vpop.f32.mrb[0].mxu0
      %v3089 = vadd.f32 0.0, %v3088
      %v3090 = vpop.f32.mrb[0].mxu0
      %3091 = vmatprep.mubr.bf16.mxu0 0
      %3092 = vmatmul.mubr.bf16.gmra.mrb[0].mxu0 %v3001
      %v3093 = vpop.f32.mrb[0].mxu0
      %v3094 = vadd.f32 0.0, %v3093
      %v3095 = vpop.f32.mrb[0].mxu0
      %v3096 = vpop.f32.mrb[0].mxu0
      %v3097 = vadd.f32 0.0, %v3096
      %v3098 = vpop.f32.mrb[0].mxu0
      %3099 = vdwg.mxu0
      %v3100 = vadd.f32 %v2904, %v3038
      %v3101 = vadd.f32 %v2907, %v3041
      %v3102 = vadd.f32 %v2912, %v3046
      %v3103 = vadd.f32 %v2915, %v3049
      %v3104 = vadd.f32 %v2920, %v3054
      %v3105 = vadd.f32 %v2923, %v3057
      %v3106 = vadd.f32 %v2928, %v3062
      %v3107 = vadd.f32 %v2931, %v3065
      %v3108 = vadd.f32 %v2936, %v3070
      %v3109 = vadd.f32 %v2939, %v3073
      %v3110 = vadd.f32 %v2944, %v3078
      %v3111 = vadd.f32 %v2947, %v3081
      %v3112 = vadd.f32 %v2952, %v3086
      %v3113 = vadd.f32 %v2955, %v3089
      %v3114 = vadd.f32 %v2960, %v3094
      %v3115 = vadd.f32 %v2963, %v3097
      %v3116 = vld [vmem:[%s6] sm:$0x1]
      %v3118 = vlaneseq
      %v3119 = vshrl.u32 %v3118, 7
      %v3120 = vsub.s32 0, %v3119
      %v3121 = vrot.slane %v3116, %v3120
      %v3123 = vadd.f32 %v3100, %v3121
      %v3124 = vadd.f32 %v3101, %v3121
      %v3125 = vadd.f32 %v3102, %v3121
      %v3126 = vadd.f32 %v3103, %v3121
      %v3127 = vadd.f32 %v3104, %v3121
      %v3128 = vadd.f32 %v3105, %v3121
      %v3129 = vadd.f32 %v3106, %v3121
      %v3130 = vadd.f32 %v3107, %v3121
      %v3131 = vadd.f32 %v3108, %v3121
      %v3132 = vadd.f32 %v3109, %v3121
      %v3133 = vadd.f32 %v3110, %v3121
      %v3134 = vadd.f32 %v3111, %v3121
      %v3135 = vadd.f32 %v3112, %v3121
      %v3136 = vadd.f32 %v3113, %v3121
      %v3137 = vadd.f32 %v3114, %v3121
      %v3138 = vadd.f32 %v3115, %v3121
      %v3139 = vmax.f32 %v3123, 0.0
      %v3140 = vmax.f32 %v3124, 0.0
      %v3141 = vmax.f32 %v3125, 0.0
      %v3142 = vmax.f32 %v3126, 0.0
      %v3143 = vmax.f32 %v3127, 0.0
      %v3144 = vmax.f32 %v3128, 0.0
      %v3145 = vmax.f32 %v3129, 0.0
      %v3146 = vmax.f32 %v3130, 0.0
      %v3147 = vmax.f32 %v3131, 0.0
      %v3148 = vmax.f32 %v3132, 0.0
      %v3149 = vmax.f32 %v3133, 0.0
      %v3150 = vmax.f32 %v3134, 0.0
      %v3151 = vmax.f32 %v3135, 0.0
      %v3152 = vmax.f32 %v3136, 0.0
      %v3153 = vmax.f32 %v3137, 0.0
      %v3154 = vmax.f32 %v3138, 0.0
      %v3155 = vpack.c.bf16 %v3140, %v3139
      %v3156 = vpack.c.bf16 %v3142, %v3141
      %v3157 = vpack.c.bf16 %v3144, %v3143
      %v3158 = vpack.c.bf16 %v3146, %v3145
      %v3159 = vpack.c.bf16 %v3148, %v3147
      %v3160 = vpack.c.bf16 %v3150, %v3149
      %v3161 = vpack.c.bf16 %v3152, %v3151
      %v3162 = vpack.c.bf16 %v3154, %v3153
      %v3171 = vrot.slane %v3155, 4
      %v3172 = vrot.slane %v3156, 4
      %v3173 = vsel %vm1590, %v3171, %v3172
      %v3174 = vrot.slane %v3157, 4
      %v3175 = vsel %vm1590, %v3172, %v3174
      %v3176 = vrot.slane %v3158, 4
      %v3177 = vsel %vm1590, %v3174, %v3176
      %v3178 = vrot.slane %v3159, 4
      %v3179 = vsel %vm1590, %v3176, %v3178
      %v3180 = vrot.slane %v3160, 4
      %v3181 = vsel %vm1590, %v3178, %v3180
      %v3182 = vrot.slane %v3161, 4
      %v3183 = vsel %vm1590, %v3180, %v3182
      %v3184 = vrot.slane %v3162, 4
      %v3185 = vsel %vm1590, %v3182, %v3184
      %3195 = vst [vmem:[#allocation4] sm:$0xf0] %v3171
      %3196 = vst [vmem:[#allocation4 + $0x8] sm:$0xff] %v3173
      %3197 = vst [vmem:[#allocation4 + $0x10] sm:$0xff] %v3175
      %3198 = vst [vmem:[#allocation4 + $0x18] sm:$0xff] %v3177
      %3199 = vst [vmem:[#allocation4 + $0x20] sm:$0xff] %v3179
      %3200 = vst [vmem:[#allocation4 + $0x28] sm:$0xff] %v3181
      %3201 = vst [vmem:[#allocation4 + $0x30] sm:$0xff] %v3183
      %3202 = vst [vmem:[#allocation4 + $0x38] sm:$0xff] %v3185
      %3203 = vst [vmem:[#allocation4 + $0x40] sm:$0xf] %v3184
      %v3204 = vld [vmem:[#allocation4] sm:$0xff]
      %v3205 = vld [vmem:[#allocation4 + $0x8] sm:$0xff]
      %v3206 = vld [vmem:[#allocation4 + $0x10] sm:$0xff]
      %v3207 = vld [vmem:[#allocation4 + $0x18] sm:$0xff]
      %v3208 = vld [vmem:[#allocation4 + $0x20] sm:$0xff]
      %v3209 = vld [vmem:[#allocation4 + $0x28] sm:$0xff]
      %v3210 = vld [vmem:[#allocation4 + $0x30] sm:$0xff]
      %v3211 = vld [vmem:[#allocation4 + $0x38] sm:$0xff]
      %v3212 = vld [vmem:[%s7] sm:$0xf]
      %v3213 = vld [vmem:[%s7 + $0x4] sm:$0xf]
      %v3214 = vld [vmem:[%s7 + $0x8] sm:$0xf]
      %v3215 = vld [vmem:[%s7 + $0xc] sm:$0xf]
      %v3216 = vld [vmem:[%s7 + $0x10] sm:$0xf]
      %v3217 = vld [vmem:[%s7 + $0x14] sm:$0xf]
      %v3218 = vld [vmem:[%s7 + $0x18] sm:$0xf]
      %v3219 = vld [vmem:[%s7 + $0x1c] sm:$0xf]
      %v3220 = vld [vmem:[%s7 + $0x20] sm:$0xf]
      %v3221 = vld [vmem:[%s7 + $0x24] sm:$0xf]
      %v3222 = vld [vmem:[%s7 + $0x28] sm:$0xf]
      %v3223 = vld [vmem:[%s7 + $0x2c] sm:$0xf]
      %v3224 = vld [vmem:[%s7 + $0x30] sm:$0xf]
      %v3225 = vld [vmem:[%s7 + $0x34] sm:$0xf]
      %v3226 = vld [vmem:[%s7 + $0x38] sm:$0xf]
      %v3227 = vld [vmem:[%s7 + $0x3c] sm:$0xf]
      %v3228 = vld [vmem:[#allocation4] sm:$0xf0]
      %v3229 = vld [vmem:[#allocation4 + $0x8] sm:$0xff]
      %v3230 = vld [vmem:[#allocation4 + $0x10] sm:$0xff]
      %v3231 = vld [vmem:[#allocation4 + $0x18] sm:$0xff]
      %v3232 = vld [vmem:[#allocation4 + $0x20] sm:$0xff]
      %v3233 = vld [vmem:[#allocation4 + $0x28] sm:$0xff]
      %v3234 = vld [vmem:[#allocation4 + $0x30] sm:$0xff]
      %v3235 = vld [vmem:[#allocation4 + $0x38] sm:$0xff]
      %v3236 = vld [vmem:[#allocation4 + $0x40] sm:$0xf]
      %s3237 = scalar_lea.vmem %s7, 64
      %v3238 = vld [vmem:[%s3237] sm:$0xf]
      %v3239 = vld [vmem:[%s3237 + $0x4] sm:$0xf]
      %v3240 = vld [vmem:[%s3237 + $0x8] sm:$0xf]
      %v3241 = vld [vmem:[%s3237 + $0xc] sm:$0xf]
      %v3242 = vld [vmem:[%s3237 + $0x10] sm:$0xf]
      %v3243 = vld [vmem:[%s3237 + $0x14] sm:$0xf]
      %v3244 = vld [vmem:[%s3237 + $0x18] sm:$0xf]
      %v3245 = vld [vmem:[%s3237 + $0x1c] sm:$0xf]
      %v3246 = vld [vmem:[%s3237 + $0x20] sm:$0xf]
      %v3247 = vld [vmem:[%s3237 + $0x24] sm:$0xf]
      %v3248 = vld [vmem:[%s3237 + $0x28] sm:$0xf]
      %v3249 = vld [vmem:[%s3237 + $0x2c] sm:$0xf]
      %v3250 = vld [vmem:[%s3237 + $0x30] sm:$0xf]
      %v3251 = vld [vmem:[%s3237 + $0x34] sm:$0xf]
      %v3252 = vld [vmem:[%s3237 + $0x38] sm:$0xf]
      %v3253 = vld [vmem:[%s3237 + $0x3c] sm:$0xf]
      %v3263 = vrot.slane %v3228, 4
      %v3264 = vrot.slane %v3229, 4
      %v3265 = vsel %vm1590, %v3263, %v3264
      %v3266 = vrot.slane %v3230, 4
      %v3267 = vsel %vm1590, %v3264, %v3266
      %v3268 = vrot.slane %v3231, 4
      %v3269 = vsel %vm1590, %v3266, %v3268
      %v3270 = vrot.slane %v3232, 4
      %v3271 = vsel %vm1590, %v3268, %v3270
      %v3272 = vrot.slane %v3233, 4
      %v3273 = vsel %vm1590, %v3270, %v3272
      %v3274 = vrot.slane %v3234, 4
      %v3275 = vsel %vm1590, %v3272, %v3274
      %v3276 = vrot.slane %v3235, 4
      %v3277 = vsel %vm1590, %v3274, %v3276
      %v3278 = vrot.slane %v3236, 4
      %v3279 = vsel %vm1590, %v3276, %v3278
      %v3304 = vunpack.c.l.b16 %v3238
      %v3305 = vunpack.c.l.b16 %v3239
      %v3306 = vunpack.c.l.b16 %v3240
      %v3307 = vunpack.c.l.b16 %v3241
      %v3308 = vunpack.c.l.b16 %v3242
      %v3309 = vunpack.c.l.b16 %v3243
      %v3310 = vunpack.c.l.b16 %v3244
      %v3311 = vunpack.c.l.b16 %v3245
      %v3312 = vunpack.c.l.b16 %v3246
      %v3313 = vunpack.c.l.b16 %v3247
      %v3314 = vunpack.c.l.b16 %v3248
      %v3315 = vunpack.c.l.b16 %v3249
      %v3316 = vunpack.c.l.b16 %v3250
      %v3317 = vunpack.c.l.b16 %v3251
      %v3318 = vunpack.c.l.b16 %v3252
      %v3319 = vunpack.c.l.b16 %v3253
      %v3320 = vpack.c.b16 %v3305, %v3304
      %v3321 = vpack.c.b16 %v3307, %v3306
      %v3322 = vpack.c.b16 %v3309, %v3308
      %v3323 = vpack.c.b16 %v3311, %v3310
      %v3324 = vpack.c.b16 %v3313, %v3312
      %v3325 = vpack.c.b16 %v3315, %v3314
      %v3326 = vpack.c.b16 %v3317, %v3316
      %v3327 = vpack.c.b16 %v3319, %v3318
      %3336 = vmatprep.subr.bf16.mxu0 0
      %3337 = vmatpush1.bf16.msra.mxu0 %v3320
      %3338 = vmatprep.subr.bf16.mxu0 0
      %3339 = vmatpush1.bf16.msra.mxu0 %v3321
      %3340 = vmatprep.subr.bf16.mxu0 0
      %3341 = vmatpush1.bf16.msra.mxu0 %v3322
      %3342 = vmatprep.subr.bf16.mxu0 0
      %3343 = vmatpush1.bf16.msra.mxu0 %v3323
      %3344 = vmatprep.subr.bf16.mxu0 0
      %3345 = vmatpush1.bf16.msra.mxu0 %v3324
      %3346 = vmatprep.subr.bf16.mxu0 0
      %3347 = vmatpush1.bf16.msra.mxu0 %v3325
      %3348 = vmatprep.subr.bf16.mxu0 0
      %3349 = vmatpush1.bf16.msra.mxu0 %v3326
      %3350 = vmatprep.subr.bf16.mxu0 0
      %3351 = vmatpush1.bf16.msra.mxu0 %v3327
      %3352 = vmatprep.subr.bf16.mxu0 0
      %3353 = vmatpush1.bf16.msra.mxu0 0
      %3354 = vmatprep.subr.bf16.mxu0 0
      %3355 = vmatpush1.bf16.msra.mxu0 0
      %3356 = vmatprep.subr.bf16.mxu0 0
      %3357 = vmatpush1.bf16.msra.mxu0 0
      %3358 = vmatprep.subr.bf16.mxu0 0
      %3359 = vmatpush1.bf16.msra.mxu0 0
      %3360 = vmatprep.subr.bf16.mxu0 0
      %3361 = vmatpush1.bf16.msra.mxu0 0
      %3362 = vmatprep.subr.bf16.mxu0 0
      %3363 = vmatpush1.bf16.msra.mxu0 0
      %3364 = vmatprep.subr.bf16.mxu0 0
      %3365 = vmatpush1.bf16.msra.mxu0 0
      %3366 = vmatprep.subr.bf16.mxu0 0
      %3367 = vmatpush1.bf16.msra.mxu0 0
      %3368 = vmatprep.mubr.bf16.mxu0 0
      %3369 = vmatmul.mubr.bf16.gmra.mrb[0].mxu0 %v3265
      %v3370 = vpop.f32.mrb[0].mxu0
      %v3371 = vadd.f32 0.0, %v3370
      %v3372 = vpop.f32.mrb[0].mxu0
      %v3373 = vpop.f32.mrb[0].mxu0
      %v3374 = vadd.f32 0.0, %v3373
      %v3375 = vpop.f32.mrb[0].mxu0
      %3376 = vmatprep.mubr.bf16.mxu0 0
      %3377 = vmatmul.mubr.bf16.gmra.mrb[0].mxu0 %v3267
      %v3378 = vpop.f32.mrb[0].mxu0
      %v3379 = vadd.f32 0.0, %v3378
      %v3380 = vpop.f32.mrb[0].mxu0
      %v3381 = vpop.f32.mrb[0].mxu0
      %v3382 = vadd.f32 0.0, %v3381
      %v3383 = vpop.f32.mrb[0].mxu0
      %3384 = vmatprep.mubr.bf16.mxu0 0
      %3385 = vmatmul.mubr.bf16.gmra.mrb[0].mxu0 %v3269
      %v3386 = vpop.f32.mrb[0].mxu0
      %v3387 = vadd.f32 0.0, %v3386
      %v3388 = vpop.f32.mrb[0].mxu0
      %v3389 = vpop.f32.mrb[0].mxu0
      %v3390 = vadd.f32 0.0, %v3389
      %v3391 = vpop.f32.mrb[0].mxu0
      %3392 = vmatprep.mubr.bf16.mxu0 0
      %3393 = vmatmul.mubr.bf16.gmra.mrb[0].mxu0 %v3271
      %v3394 = vpop.f32.mrb[0].mxu0
      %v3395 = vadd.f32 0.0, %v3394
      %v3396 = vpop.f32.mrb[0].mxu0
      %v3397 = vpop.f32.mrb[0].mxu0
      %v3398 = vadd.f32 0.0, %v3397
      %v3399 = vpop.f32.mrb[0].mxu0
      %3400 = vmatprep.mubr.bf16.mxu0 0
      %3401 = vmatmul.mubr.bf16.gmra.mrb[0].mxu0 %v3273
      %v3402 = vpop.f32.mrb[0].mxu0
      %v3403 = vadd.f32 0.0, %v3402
      %v3404 = vpop.f32.mrb[0].mxu0
      %v3405 = vpop.f32.mrb[0].mxu0
      %v3406 = vadd.f32 0.0, %v3405
      %v3407 = vpop.f32.mrb[0].mxu0
      %3408 = vmatprep.mubr.bf16.mxu0 0
      %3409 = vmatmul.mubr.bf16.gmra.mrb[0].mxu0 %v3275
      %v3410 = vpop.f32.mrb[0].mxu0
      %v3411 = vadd.f32 0.0, %v3410
      %v3412 = vpop.f32.mrb[0].mxu0
      %v3413 = vpop.f32.mrb[0].mxu0
      %v3414 = vadd.f32 0.0, %v3413
      %v3415 = vpop.f32.mrb[0].mxu0
      %3416 = vmatprep.mubr.bf16.mxu0 0
      %3417 = vmatmul.mubr.bf16.gmra.mrb[0].mxu0 %v3277
      %v3418 = vpop.f32.mrb[0].mxu0
      %v3419 = vadd.f32 0.0, %v3418
      %v3420 = vpop.f32.mrb[0].mxu0
      %v3421 = vpop.f32.mrb[0].mxu0
      %v3422 = vadd.f32 0.0, %v3421
      %v3423 = vpop.f32.mrb[0].mxu0
      %3424 = vmatprep.mubr.bf16.mxu0 0
      %3425 = vmatmul.mubr.bf16.gmra.mrb[0].mxu0 %v3279
      %v3426 = vpop.f32.mrb[0].mxu0
      %v3427 = vadd.f32 0.0, %v3426
      %v3428 = vpop.f32.mrb[0].mxu0
      %v3429 = vpop.f32.mrb[0].mxu0
      %v3430 = vadd.f32 0.0, %v3429
      %v3431 = vpop.f32.mrb[0].mxu0
      %3432 = vdwg.mxu0
      %v3449 = vunpack.c.l.b16 %v3212
      %v3450 = vunpack.c.l.b16 %v3213
      %v3451 = vunpack.c.l.b16 %v3214
      %v3452 = vunpack.c.l.b16 %v3215
      %v3453 = vunpack.c.l.b16 %v3216
      %v3454 = vunpack.c.l.b16 %v3217
      %v3455 = vunpack.c.l.b16 %v3218
      %v3456 = vunpack.c.l.b16 %v3219
      %v3457 = vunpack.c.l.b16 %v3220
      %v3458 = vunpack.c.l.b16 %v3221
      %v3459 = vunpack.c.l.b16 %v3222
      %v3460 = vunpack.c.l.b16 %v3223
      %v3461 = vunpack.c.l.b16 %v3224
      %v3462 = vunpack.c.l.b16 %v3225
      %v3463 = vunpack.c.l.b16 %v3226
      %v3464 = vunpack.c.l.b16 %v3227
      %v3465 = vpack.c.b16 %v3450, %v3449
      %v3466 = vpack.c.b16 %v3452, %v3451
      %v3467 = vpack.c.b16 %v3454, %v3453
      %v3468 = vpack.c.b16 %v3456, %v3455
      %v3469 = vpack.c.b16 %v3458, %v3457
      %v3470 = vpack.c.b16 %v3460, %v3459
      %v3471 = vpack.c.b16 %v3462, %v3461
      %v3472 = vpack.c.b16 %v3464, %v3463
      %3481 = vmatprep.subr.bf16.mxu0 0
      %3482 = vmatpush1.bf16.msra.mxu0 %v3465
      %3483 = vmatprep.subr.bf16.mxu0 0
      %3484 = vmatpush1.bf16.msra.mxu0 %v3466
      %3485 = vmatprep.subr.bf16.mxu0 0
      %3486 = vmatpush1.bf16.msra.mxu0 %v3467
      %3487 = vmatprep.subr.bf16.mxu0 0
      %3488 = vmatpush1.bf16.msra.mxu0 %v3468
      %3489 = vmatprep.subr.bf16.mxu0 0
      %3490 = vmatpush1.bf16.msra.mxu0 %v3469
      %3491 = vmatprep.subr.bf16.mxu0 0
      %3492 = vmatpush1.bf16.msra.mxu0 %v3470
      %3493 = vmatprep.subr.bf16.mxu0 0
      %3494 = vmatpush1.bf16.msra.mxu0 %v3471
      %3495 = vmatprep.subr.bf16.mxu0 0
      %3496 = vmatpush1.bf16.msra.mxu0 %v3472
      %3497 = vmatprep.subr.bf16.mxu0 0
      %3498 = vmatpush1.bf16.msra.mxu0 0
      %3499 = vmatprep.subr.bf16.mxu0 0
      %3500 = vmatpush1.bf16.msra.mxu0 0
      %3501 = vmatprep.subr.bf16.mxu0 0
      %3502 = vmatpush1.bf16.msra.mxu0 0
      %3503 = vmatprep.subr.bf16.mxu0 0
      %3504 = vmatpush1.bf16.msra.mxu0 0
      %3505 = vmatprep.subr.bf16.mxu0 0
      %3506 = vmatpush1.bf16.msra.mxu0 0
      %3507 = vmatprep.subr.bf16.mxu0 0
      %3508 = vmatpush1.bf16.msra.mxu0 0
      %3509 = vmatprep.subr.bf16.mxu0 0
      %3510 = vmatpush1.bf16.msra.mxu0 0
      %3511 = vmatprep.subr.bf16.mxu0 0
      %3512 = vmatpush1.bf16.msra.mxu0 0
      %3513 = vmatprep.mubr.bf16.mxu0 0
      %3514 = vmatmul.mubr.bf16.gmra.mrb[0].mxu0 %v3204
      %v3515 = vpop.f32.mrb[0].mxu0
      %v3516 = vadd.f32 %v3371, %v3515
      %v3517 = vpop.f32.mrb[0].mxu0
      %v3518 = vpop.f32.mrb[0].mxu0
      %v3519 = vadd.f32 %v3374, %v3518
      %v3520 = vpop.f32.mrb[0].mxu0
      %3521 = vmatprep.mubr.bf16.mxu0 0
      %3522 = vmatmul.mubr.bf16.gmra.mrb[0].mxu0 %v3205
      %v3523 = vpop.f32.mrb[0].mxu0
      %v3524 = vadd.f32 %v3379, %v3523
      %v3525 = vpop.f32.mrb[0].mxu0
      %v3526 = vpop.f32.mrb[0].mxu0
      %v3527 = vadd.f32 %v3382, %v3526
      %v3528 = vpop.f32.mrb[0].mxu0
      %3529 = vmatprep.mubr.bf16.mxu0 0
      %3530 = vmatmul.mubr.bf16.gmra.mrb[0].mxu0 %v3206
      %v3531 = vpop.f32.mrb[0].mxu0
      %v3532 = vadd.f32 %v3387, %v3531
      %v3533 = vpop.f32.mrb[0].mxu0
      %v3534 = vpop.f32.mrb[0].mxu0
      %v3535 = vadd.f32 %v3390, %v3534
      %v3536 = vpop.f32.mrb[0].mxu0
      %3537 = vmatprep.mubr.bf16.mxu0 0
      %3538 = vmatmul.mubr.bf16.gmra.mrb[0].mxu0 %v3207
      %v3539 = vpop.f32.mrb[0].mxu0
      %v3540 = vadd.f32 %v3395, %v3539
      %v3541 = vpop.f32.mrb[0].mxu0
      %v3542 = vpop.f32.mrb[0].mxu0
      %v3543 = vadd.f32 %v3398, %v3542
      %v3544 = vpop.f32.mrb[0].mxu0
      %3545 = vmatprep.mubr.bf16.mxu0 0
      %3546 = vmatmul.mubr.bf16.gmra.mrb[0].mxu0 %v3208
      %v3547 = vpop.f32.mrb[0].mxu0
      %v3548 = vadd.f32 %v3403, %v3547
      %v3549 = vpop.f32.mrb[0].mxu0
      %v3550 = vpop.f32.mrb[0].mxu0
      %v3551 = vadd.f32 %v3406, %v3550
      %v3552 = vpop.f32.mrb[0].mxu0
      %3553 = vmatprep.mubr.bf16.mxu0 0
      %3554 = vmatmul.mubr.bf16.gmra.mrb[0].mxu0 %v3209
      %v3555 = vpop.f32.mrb[0].mxu0
      %v3556 = vadd.f32 %v3411, %v3555
      %v3557 = vpop.f32.mrb[0].mxu0
      %v3558 = vpop.f32.mrb[0].mxu0
      %v3559 = vadd.f32 %v3414, %v3558
      %v3560 = vpop.f32.mrb[0].mxu0
      %3561 = vmatprep.mubr.bf16.mxu0 0
      %3562 = vmatmul.mubr.bf16.gmra.mrb[0].mxu0 %v3210
      %v3563 = vpop.f32.mrb[0].mxu0
      %v3564 = vadd.f32 %v3419, %v3563
      %v3565 = vpop.f32.mrb[0].mxu0
      %v3566 = vpop.f32.mrb[0].mxu0
      %v3567 = vadd.f32 %v3422, %v3566
      %v3568 = vpop.f32.mrb[0].mxu0
      %3569 = vmatprep.mubr.bf16.mxu0 0
      %3570 = vmatmul.mubr.bf16.gmra.mrb[0].mxu0 %v3211
      %v3571 = vpop.f32.mrb[0].mxu0
      %v3572 = vadd.f32 %v3427, %v3571
      %v3573 = vpop.f32.mrb[0].mxu0
      %v3574 = vpop.f32.mrb[0].mxu0
      %v3575 = vadd.f32 %v3430, %v3574
      %v3576 = vpop.f32.mrb[0].mxu0
      %3577 = vdwg.mxu0
      %v3578 = vld [vmem:[#allocation4 + $0x40] sm:$0xff]
      %s3579 = scalar_lea.vmem %s7, 128
      %v3580 = vld [vmem:[%s3579] sm:$0xf]
      %v3581 = vld [vmem:[%s3579 + $0x4] sm:$0xf]
      %v3582 = vld [vmem:[%s3579 + $0x8] sm:$0xf]
      %v3583 = vld [vmem:[%s3579 + $0xc] sm:$0xf]
      %v3584 = vld [vmem:[%s3579 + $0x10] sm:$0xf]
      %v3585 = vld [vmem:[%s3579 + $0x14] sm:$0xf]
      %v3586 = vld [vmem:[%s3579 + $0x18] sm:$0xf]
      %v3587 = vld [vmem:[%s3579 + $0x1c] sm:$0xf]
      %v3588 = vld [vmem:[%s3579 + $0x20] sm:$0xf]
      %v3589 = vld [vmem:[%s3579 + $0x24] sm:$0xf]
      %v3590 = vld [vmem:[%s3579 + $0x28] sm:$0xf]
      %v3591 = vld [vmem:[%s3579 + $0x2c] sm:$0xf]
      %v3592 = vld [vmem:[%s3579 + $0x30] sm:$0xf]
      %v3593 = vld [vmem:[%s3579 + $0x34] sm:$0xf]
      %v3594 = vld [vmem:[%s3579 + $0x38] sm:$0xf]
      %v3595 = vld [vmem:[%s3579 + $0x3c] sm:$0xf]
      %v3612 = vunpack.c.l.b16 %v3580
      %v3613 = vunpack.c.l.b16 %v3581
      %v3614 = vunpack.c.l.b16 %v3582
      %v3615 = vunpack.c.l.b16 %v3583
      %v3616 = vunpack.c.l.b16 %v3584
      %v3617 = vunpack.c.l.b16 %v3585
      %v3618 = vunpack.c.l.b16 %v3586
      %v3619 = vunpack.c.l.b16 %v3587
      %v3620 = vunpack.c.l.b16 %v3588
      %v3621 = vunpack.c.l.b16 %v3589
      %v3622 = vunpack.c.l.b16 %v3590
      %v3623 = vunpack.c.l.b16 %v3591
      %v3624 = vunpack.c.l.b16 %v3592
      %v3625 = vunpack.c.l.b16 %v3593
      %v3626 = vunpack.c.l.b16 %v3594
      %v3627 = vunpack.c.l.b16 %v3595
      %v3628 = vpack.c.b16 %v3613, %v3612
      %v3629 = vpack.c.b16 %v3615, %v3614
      %v3630 = vpack.c.b16 %v3617, %v3616
      %v3631 = vpack.c.b16 %v3619, %v3618
      %v3632 = vpack.c.b16 %v3621, %v3620
      %v3633 = vpack.c.b16 %v3623, %v3622
      %v3634 = vpack.c.b16 %v3625, %v3624
      %v3635 = vpack.c.b16 %v3627, %v3626
      %3644 = vmatprep.subr.bf16.mxu0 0
      %3645 = vmatpush1.bf16.msra.mxu0 %v3628
      %3646 = vmatprep.subr.bf16.mxu0 0
      %3647 = vmatpush1.bf16.msra.mxu0 %v3629
      %3648 = vmatprep.subr.bf16.mxu0 0
      %3649 = vmatpush1.bf16.msra.mxu0 %v3630
      %3650 = vmatprep.subr.bf16.mxu0 0
      %3651 = vmatpush1.bf16.msra.mxu0 %v3631
      %3652 = vmatprep.subr.bf16.mxu0 0
      %3653 = vmatpush1.bf16.msra.mxu0 %v3632
      %3654 = vmatprep.subr.bf16.mxu0 0
      %3655 = vmatpush1.bf16.msra.mxu0 %v3633
      %3656 = vmatprep.subr.bf16.mxu0 0
      %3657 = vmatpush1.bf16.msra.mxu0 %v3634
      %3658 = vmatprep.subr.bf16.mxu0 0
      %3659 = vmatpush1.bf16.msra.mxu0 %v3635
      %3660 = vmatprep.subr.bf16.mxu0 0
      %3661 = vmatpush1.bf16.msra.mxu0 0
      %3662 = vmatprep.subr.bf16.mxu0 0
      %3663 = vmatpush1.bf16.msra.mxu0 0
      %3664 = vmatprep.subr.bf16.mxu0 0
      %3665 = vmatpush1.bf16.msra.mxu0 0
      %3666 = vmatprep.subr.bf16.mxu0 0
      %3667 = vmatpush1.bf16.msra.mxu0 0
      %3668 = vmatprep.subr.bf16.mxu0 0
      %3669 = vmatpush1.bf16.msra.mxu0 0
      %3670 = vmatprep.subr.bf16.mxu0 0
      %3671 = vmatpush1.bf16.msra.mxu0 0
      %3672 = vmatprep.subr.bf16.mxu0 0
      %3673 = vmatpush1.bf16.msra.mxu0 0
      %3674 = vmatprep.subr.bf16.mxu0 0
      %3675 = vmatpush1.bf16.msra.mxu0 0
      %3676 = vmatprep.mubr.bf16.mxu0 0
      %3677 = vmatmul.mubr.bf16.gmra.mrb[0].mxu0 %v3229
      %v3678 = vpop.f32.mrb[0].mxu0
      %v3679 = vadd.f32 0.0, %v3678
      %v3680 = vpop.f32.mrb[0].mxu0
      %v3681 = vpop.f32.mrb[0].mxu0
      %v3682 = vadd.f32 0.0, %v3681
      %v3683 = vpop.f32.mrb[0].mxu0
      %3684 = vmatprep.mubr.bf16.mxu0 0
      %3685 = vmatmul.mubr.bf16.gmra.mrb[0].mxu0 %v3230
      %v3686 = vpop.f32.mrb[0].mxu0
      %v3687 = vadd.f32 0.0, %v3686
      %v3688 = vpop.f32.mrb[0].mxu0
      %v3689 = vpop.f32.mrb[0].mxu0
      %v3690 = vadd.f32 0.0, %v3689
      %v3691 = vpop.f32.mrb[0].mxu0
      %3692 = vmatprep.mubr.bf16.mxu0 0
      %3693 = vmatmul.mubr.bf16.gmra.mrb[0].mxu0 %v3231
      %v3694 = vpop.f32.mrb[0].mxu0
      %v3695 = vadd.f32 0.0, %v3694
      %v3696 = vpop.f32.mrb[0].mxu0
      %v3697 = vpop.f32.mrb[0].mxu0
      %v3698 = vadd.f32 0.0, %v3697
      %v3699 = vpop.f32.mrb[0].mxu0
      %3700 = vmatprep.mubr.bf16.mxu0 0
      %3701 = vmatmul.mubr.bf16.gmra.mrb[0].mxu0 %v3232
      %v3702 = vpop.f32.mrb[0].mxu0
      %v3703 = vadd.f32 0.0, %v3702
      %v3704 = vpop.f32.mrb[0].mxu0
      %v3705 = vpop.f32.mrb[0].mxu0
      %v3706 = vadd.f32 0.0, %v3705
      %v3707 = vpop.f32.mrb[0].mxu0
      %3708 = vmatprep.mubr.bf16.mxu0 0
      %3709 = vmatmul.mubr.bf16.gmra.mrb[0].mxu0 %v3233
      %v3710 = vpop.f32.mrb[0].mxu0
      %v3711 = vadd.f32 0.0, %v3710
      %v3712 = vpop.f32.mrb[0].mxu0
      %v3713 = vpop.f32.mrb[0].mxu0
      %v3714 = vadd.f32 0.0, %v3713
      %v3715 = vpop.f32.mrb[0].mxu0
      %3716 = vmatprep.mubr.bf16.mxu0 0
      %3717 = vmatmul.mubr.bf16.gmra.mrb[0].mxu0 %v3234
      %v3718 = vpop.f32.mrb[0].mxu0
      %v3719 = vadd.f32 0.0, %v3718
      %v3720 = vpop.f32.mrb[0].mxu0
      %v3721 = vpop.f32.mrb[0].mxu0
      %v3722 = vadd.f32 0.0, %v3721
      %v3723 = vpop.f32.mrb[0].mxu0
      %3724 = vmatprep.mubr.bf16.mxu0 0
      %3725 = vmatmul.mubr.bf16.gmra.mrb[0].mxu0 %v3235
      %v3726 = vpop.f32.mrb[0].mxu0
      %v3727 = vadd.f32 0.0, %v3726
      %v3728 = vpop.f32.mrb[0].mxu0
      %v3729 = vpop.f32.mrb[0].mxu0
      %v3730 = vadd.f32 0.0, %v3729
      %v3731 = vpop.f32.mrb[0].mxu0
      %3732 = vmatprep.mubr.bf16.mxu0 0
      %3733 = vmatmul.mubr.bf16.gmra.mrb[0].mxu0 %v3578
      %v3734 = vpop.f32.mrb[0].mxu0
      %v3735 = vadd.f32 0.0, %v3734
      %v3736 = vpop.f32.mrb[0].mxu0
      %v3737 = vpop.f32.mrb[0].mxu0
      %v3738 = vadd.f32 0.0, %v3737
      %v3739 = vpop.f32.mrb[0].mxu0
      %3740 = vdwg.mxu0
      %v3741 = vadd.f32 %v3516, %v3679
      %v3742 = vadd.f32 %v3519, %v3682
      %v3743 = vadd.f32 %v3524, %v3687
      %v3744 = vadd.f32 %v3527, %v3690
      %v3745 = vadd.f32 %v3532, %v3695
      %v3746 = vadd.f32 %v3535, %v3698
      %v3747 = vadd.f32 %v3540, %v3703
      %v3748 = vadd.f32 %v3543, %v3706
      %v3749 = vadd.f32 %v3548, %v3711
      %v3750 = vadd.f32 %v3551, %v3714
      %v3751 = vadd.f32 %v3556, %v3719
      %v3752 = vadd.f32 %v3559, %v3722
      %v3753 = vadd.f32 %v3564, %v3727
      %v3754 = vadd.f32 %v3567, %v3730
      %v3755 = vadd.f32 %v3572, %v3735
      %v3756 = vadd.f32 %v3575, %v3738
      %v3757 = vld [vmem:[%s8] sm:$0x1]
      %v3759 = vlaneseq
      %v3760 = vshrl.u32 %v3759, 7
      %v3761 = vsub.s32 0, %v3760
      %v3762 = vrot.slane %v3757, %v3761
      %v3764 = vadd.f32 %v3741, %v3762
      %v3765 = vadd.f32 %v3742, %v3762
      %v3766 = vadd.f32 %v3743, %v3762
      %v3767 = vadd.f32 %v3744, %v3762
      %v3768 = vadd.f32 %v3745, %v3762
      %v3769 = vadd.f32 %v3746, %v3762
      %v3770 = vadd.f32 %v3747, %v3762
      %v3771 = vadd.f32 %v3748, %v3762
      %v3772 = vadd.f32 %v3749, %v3762
      %v3773 = vadd.f32 %v3750, %v3762
      %v3774 = vadd.f32 %v3751, %v3762
      %v3775 = vadd.f32 %v3752, %v3762
      %v3776 = vadd.f32 %v3753, %v3762
      %v3777 = vadd.f32 %v3754, %v3762
      %v3778 = vadd.f32 %v3755, %v3762
      %v3779 = vadd.f32 %v3756, %v3762
      %v3780 = vmax.f32 %v3764, 0.0
      %v3781 = vmax.f32 %v3765, 0.0
      %v3782 = vmax.f32 %v3766, 0.0
      %v3783 = vmax.f32 %v3767, 0.0
      %v3784 = vmax.f32 %v3768, 0.0
      %v3785 = vmax.f32 %v3769, 0.0
      %v3786 = vmax.f32 %v3770, 0.0
      %v3787 = vmax.f32 %v3771, 0.0
      %v3788 = vmax.f32 %v3772, 0.0
      %v3789 = vmax.f32 %v3773, 0.0
      %v3790 = vmax.f32 %v3774, 0.0
      %v3791 = vmax.f32 %v3775, 0.0
      %v3792 = vmax.f32 %v3776, 0.0
      %v3793 = vmax.f32 %v3777, 0.0
      %v3794 = vmax.f32 %v3778, 0.0
      %v3795 = vmax.f32 %v3779, 0.0
      %3812 = vrot.lane.b32.xlu0 %v3780, 64
      %v3813 = vpop.permute.xlu0 %3812
      %3814 = vrot.lane.b32.xlu0 %v3781, 64
      %v3815 = vpop.permute.xlu0 %3814
      %3816 = vrot.lane.b32.xlu0 %v3782, 64
      %v3817 = vpop.permute.xlu0 %3816
      %3818 = vrot.lane.b32.xlu0 %v3783, 64
      %v3819 = vpop.permute.xlu0 %3818
      %3820 = vrot.lane.b32.xlu0 %v3784, 64
      %v3821 = vpop.permute.xlu0 %3820
      %3822 = vrot.lane.b32.xlu0 %v3785, 64
      %v3823 = vpop.permute.xlu0 %3822
      %3824 = vrot.lane.b32.xlu0 %v3786, 64
      %v3825 = vpop.permute.xlu0 %3824
      %3826 = vrot.lane.b32.xlu0 %v3787, 64
      %v3827 = vpop.permute.xlu0 %3826
      %3828 = vrot.lane.b32.xlu0 %v3788, 64
      %v3829 = vpop.permute.xlu0 %3828
      %3830 = vrot.lane.b32.xlu0 %v3789, 64
      %v3831 = vpop.permute.xlu0 %3830
      %3832 = vrot.lane.b32.xlu0 %v3790, 64
      %v3833 = vpop.permute.xlu0 %3832
      %3834 = vrot.lane.b32.xlu0 %v3791, 64
      %v3835 = vpop.permute.xlu0 %3834
      %3836 = vrot.lane.b32.xlu0 %v3792, 64
      %v3837 = vpop.permute.xlu0 %3836
      %3838 = vrot.lane.b32.xlu0 %v3793, 64
      %v3839 = vpop.permute.xlu0 %3838
      %3840 = vrot.lane.b32.xlu0 %v3794, 64
      %v3841 = vpop.permute.xlu0 %3840
      %3842 = vrot.lane.b32.xlu0 %v3795, 64
      %v3843 = vpop.permute.xlu0 %3842
      %v3860 = vmax.f32 %v3780, %v3813
      %v3861 = vmax.f32 %v3781, %v3815
      %v3862 = vmax.f32 %v3782, %v3817
      %v3863 = vmax.f32 %v3783, %v3819
      %v3864 = vmax.f32 %v3784, %v3821
      %v3865 = vmax.f32 %v3785, %v3823
      %v3866 = vmax.f32 %v3786, %v3825
      %v3867 = vmax.f32 %v3787, %v3827
      %v3868 = vmax.f32 %v3788, %v3829
      %v3869 = vmax.f32 %v3789, %v3831
      %v3870 = vmax.f32 %v3790, %v3833
      %v3871 = vmax.f32 %v3791, %v3835
      %v3872 = vmax.f32 %v3792, %v3837
      %v3873 = vmax.f32 %v3793, %v3839
      %v3874 = vmax.f32 %v3794, %v3841
      %v3875 = vmax.f32 %v3795, %v3843
      %v3876 = vpack.c.bf16 %v3861, %v3860
      %v3877 = vpack.c.bf16 %v3863, %v3862
      %v3878 = vpack.c.bf16 %v3865, %v3864
      %v3879 = vpack.c.bf16 %v3867, %v3866
      %v3880 = vpack.c.bf16 %v3869, %v3868
      %v3881 = vpack.c.bf16 %v3871, %v3870
      %v3882 = vpack.c.bf16 %v3873, %v3872
      %v3883 = vpack.c.bf16 %v3875, %v3874
      %v3884 = vld [vmem:[%s9] sm:$0xf]
      %v3885 = vld [vmem:[%s9 + $0x4] sm:$0xf]
      %v3886 = vld [vmem:[%s9 + $0x8] sm:$0xf]
      %v3887 = vld [vmem:[%s9 + $0xc] sm:$0xf]
      %v3888 = vld [vmem:[%s9 + $0x10] sm:$0xf]
      %v3889 = vld [vmem:[%s9 + $0x14] sm:$0xf]
      %v3890 = vld [vmem:[%s9 + $0x18] sm:$0xf]
      %v3891 = vld [vmem:[%s9 + $0x1c] sm:$0xf]
      %v3892 = vld [vmem:[%s10] sm:$0x1]
      %v3894 = vlaneseq
      %v3895 = vshrl.u32 %v3894, 7
      %v3896 = vsub.s32 0, %v3895
      %v3897 = vrot.slane %v3892, %v3896
      %v3907 = vunpack.c.l.b16 %v3884
      %v3908 = vunpack.c.l.b16 %v3885
      %v3909 = vunpack.c.l.b16 %v3886
      %v3910 = vunpack.c.l.b16 %v3887
      %v3911 = vunpack.c.l.b16 %v3888
      %v3912 = vunpack.c.l.b16 %v3889
      %v3913 = vunpack.c.l.b16 %v3890
      %v3914 = vunpack.c.l.b16 %v3891
      %v3915 = vpack.c.b16 %v3908, %v3907
      %v3916 = vpack.c.b16 %v3910, %v3909
      %v3917 = vpack.c.b16 %v3912, %v3911
      %v3918 = vpack.c.b16 %v3914, %v3913
      %v3924 = vsel %vm2614, %v3876, 0
      %v3927 = vsel %vm2614, %v3877, 0
      %v3930 = vsel %vm2614, %v3878, 0
      %v3933 = vsel %vm2614, %v3879, 0
      %v3936 = vsel %vm2614, %v3880, 0
      %v3939 = vsel %vm2614, %v3881, 0
      %v3942 = vsel %vm2614, %v3882, 0
      %v3945 = vsel %vm2614, %v3883, 0
      %3947 = vmatprep.subr.bf16.mxu0 0
      %3948 = vmatpush1.bf16.msra.mxu0 %v3915
      %3949 = vmatprep.subr.bf16.mxu0 0
      %3950 = vmatpush1.bf16.msra.mxu0 %v3916
      %3951 = vmatprep.subr.bf16.mxu0 0
      %3952 = vmatpush1.bf16.msra.mxu0 %v3917
      %3953 = vmatprep.subr.bf16.mxu0 0
      %3954 = vmatpush1.bf16.msra.mxu0 %v3918
      %3955 = vmatprep.subr.bf16.mxu0 0
      %3956 = vmatpush1.bf16.msra.mxu0 0
      %3957 = vmatprep.subr.bf16.mxu0 0
      %3958 = vmatpush1.bf16.msra.mxu0 0
      %3959 = vmatprep.subr.bf16.mxu0 0
      %3960 = vmatpush1.bf16.msra.mxu0 0
      %3961 = vmatprep.subr.bf16.mxu0 0
      %3962 = vmatpush1.bf16.msra.mxu0 0
      %3963 = vmatprep.subr.bf16.mxu0 0
      %3964 = vmatpush1.bf16.msra.mxu0 0
      %3965 = vmatprep.subr.bf16.mxu0 0
      %3966 = vmatpush1.bf16.msra.mxu0 0
      %3967 = vmatprep.subr.bf16.mxu0 0
      %3968 = vmatpush1.bf16.msra.mxu0 0
      %3969 = vmatprep.subr.bf16.mxu0 0
      %3970 = vmatpush1.bf16.msra.mxu0 0
      %3971 = vmatprep.subr.bf16.mxu0 0
      %3972 = vmatpush1.bf16.msra.mxu0 0
      %3973 = vmatprep.subr.bf16.mxu0 0
      %3974 = vmatpush1.bf16.msra.mxu0 0
      %3975 = vmatprep.subr.bf16.mxu0 0
      %3976 = vmatpush1.bf16.msra.mxu0 0
      %3977 = vmatprep.subr.bf16.mxu0 0
      %3978 = vmatpush1.bf16.msra.mxu0 0
      %3979 = vmatprep.mubr.bf16.mxu0 0
      %3980 = vmatmul.mubr.bf16.gmra.mrb[0].mxu0 %v3924
      %v3981 = vpop.f32.mrb[0].mxu0
      %v3982 = vadd.f32 %v3897, %v3981
      %v3983 = vpop.f32.mrb[0].mxu0
      %v3984 = vpop.f32.mrb[0].mxu0
      %v3985 = vadd.f32 %v3897, %v3984
      %v3986 = vpop.f32.mrb[0].mxu0
      %3987 = vmatprep.mubr.bf16.mxu0 0
      %3988 = vmatmul.mubr.bf16.gmra.mrb[0].mxu0 %v3927
      %v3989 = vpop.f32.mrb[0].mxu0
      %v3990 = vadd.f32 %v3897, %v3989
      %v3991 = vpop.f32.mrb[0].mxu0
      %v3992 = vpop.f32.mrb[0].mxu0
      %v3993 = vadd.f32 %v3897, %v3992
      %v3994 = vpop.f32.mrb[0].mxu0
      %3995 = vmatprep.mubr.bf16.mxu0 0
      %3996 = vmatmul.mubr.bf16.gmra.mrb[0].mxu0 %v3930
      %v3997 = vpop.f32.mrb[0].mxu0
      %v3998 = vadd.f32 %v3897, %v3997
      %v3999 = vpop.f32.mrb[0].mxu0
      %v4000 = vpop.f32.mrb[0].mxu0
      %v4001 = vadd.f32 %v3897, %v4000
      %v4002 = vpop.f32.mrb[0].mxu0
      %4003 = vmatprep.mubr.bf16.mxu0 0
      %4004 = vmatmul.mubr.bf16.gmra.mrb[0].mxu0 %v3933
      %v4005 = vpop.f32.mrb[0].mxu0
      %v4006 = vadd.f32 %v3897, %v4005
      %v4007 = vpop.f32.mrb[0].mxu0
      %v4008 = vpop.f32.mrb[0].mxu0
      %v4009 = vadd.f32 %v3897, %v4008
      %v4010 = vpop.f32.mrb[0].mxu0
      %4011 = vmatprep.mubr.bf16.mxu0 0
      %4012 = vmatmul.mubr.bf16.gmra.mrb[0].mxu0 %v3936
      %v4013 = vpop.f32.mrb[0].mxu0
      %v4014 = vadd.f32 %v3897, %v4013
      %v4015 = vpop.f32.mrb[0].mxu0
      %v4016 = vpop.f32.mrb[0].mxu0
      %v4017 = vadd.f32 %v3897, %v4016
      %v4018 = vpop.f32.mrb[0].mxu0
      %4019 = vmatprep.mubr.bf16.mxu0 0
      %4020 = vmatmul.mubr.bf16.gmra.mrb[0].mxu0 %v3939
      %v4021 = vpop.f32.mrb[0].mxu0
      %v4022 = vadd.f32 %v3897, %v4021
      %v4023 = vpop.f32.mrb[0].mxu0
      %v4024 = vpop.f32.mrb[0].mxu0
      %v4025 = vadd.f32 %v3897, %v4024
      %v4026 = vpop.f32.mrb[0].mxu0
      %4027 = vmatprep.mubr.bf16.mxu0 0
      %4028 = vmatmul.mubr.bf16.gmra.mrb[0].mxu0 %v3942
      %v4029 = vpop.f32.mrb[0].mxu0
      %v4030 = vadd.f32 %v3897, %v4029
      %v4031 = vpop.f32.mrb[0].mxu0
      %v4032 = vpop.f32.mrb[0].mxu0
      %v4033 = vadd.f32 %v3897, %v4032
      %v4034 = vpop.f32.mrb[0].mxu0
      %4035 = vmatprep.mubr.bf16.mxu0 0
      %4036 = vmatmul.mubr.bf16.gmra.mrb[0].mxu0 %v3945
      %v4037 = vpop.f32.mrb[0].mxu0
      %v4038 = vadd.f32 %v3897, %v4037
      %v4039 = vpop.f32.mrb[0].mxu0
      %v4040 = vpop.f32.mrb[0].mxu0
      %v4041 = vadd.f32 %v3897, %v4040
      %v4042 = vpop.f32.mrb[0].mxu0
      %4043 = vdwg.mxu0
      %v4044 = vmax.f32 %v3982, 0.0
      %v4045 = vmax.f32 %v3985, 0.0
      %v4046 = vmax.f32 %v3990, 0.0
      %v4047 = vmax.f32 %v3993, 0.0
      %v4048 = vmax.f32 %v3998, 0.0
      %v4049 = vmax.f32 %v4001, 0.0
      %v4050 = vmax.f32 %v4006, 0.0
      %v4051 = vmax.f32 %v4009, 0.0
      %v4052 = vmax.f32 %v4014, 0.0
      %v4053 = vmax.f32 %v4017, 0.0
      %v4054 = vmax.f32 %v4022, 0.0
      %v4055 = vmax.f32 %v4025, 0.0
      %v4056 = vmax.f32 %v4030, 0.0
      %v4057 = vmax.f32 %v4033, 0.0
      %v4058 = vmax.f32 %v4038, 0.0
      %v4059 = vmax.f32 %v4041, 0.0
      %v4060 = vpack.c.bf16 %v4045, %v4044
      %v4061 = vpack.c.bf16 %v4047, %v4046
      %v4062 = vpack.c.bf16 %v4049, %v4048
      %v4063 = vpack.c.bf16 %v4051, %v4050
      %v4064 = vpack.c.bf16 %v4053, %v4052
      %v4065 = vpack.c.bf16 %v4055, %v4054
      %v4066 = vpack.c.bf16 %v4057, %v4056
      %v4067 = vpack.c.bf16 %v4059, %v4058
      %v4076 = vrot.slane %v4060, 4
      %v4077 = vrot.slane %v4061, 4
      %v4078 = vsel %vm1590, %v4076, %v4077
      %v4079 = vrot.slane %v4062, 4
      %v4080 = vsel %vm1590, %v4077, %v4079
      %v4081 = vrot.slane %v4063, 4
      %v4082 = vsel %vm1590, %v4079, %v4081
      %v4083 = vrot.slane %v4064, 4
      %v4084 = vsel %vm1590, %v4081, %v4083
      %v4085 = vrot.slane %v4065, 4
      %v4086 = vsel %vm1590, %v4083, %v4085
      %v4087 = vrot.slane %v4066, 4
      %v4088 = vsel %vm1590, %v4085, %v4087
      %v4089 = vrot.slane %v4067, 4
      %v4090 = vsel %vm1590, %v4087, %v4089
      %4100 = vst.msk [vmem:[#allocation5] sm:$0xf0] %vm670, %v4076
      %vm4101 = vcmask 261120
      %4102 = vst.msk [vmem:[#allocation5 + $0x8] sm:$0xff] %vm4101, %v4078
      %4103 = vst.msk [vmem:[#allocation5 + $0x10] sm:$0xff] %vm4101, %v4080
      %4104 = vst.msk [vmem:[#allocation5 + $0x18] sm:$0xff] %vm4101, %v4082
      %4105 = vst.msk [vmem:[#allocation5 + $0x20] sm:$0xff] %vm4101, %v4084
      %4106 = vst.msk [vmem:[#allocation5 + $0x28] sm:$0xff] %vm4101, %v4086
      %4107 = vst.msk [vmem:[#allocation5 + $0x30] sm:$0xff] %vm4101, %v4088
      %4108 = vst.msk [vmem:[#allocation5 + $0x38] sm:$0xff] %vm4101, %v4090
      %4109 = vst.msk [vmem:[#allocation5 + $0x40] sm:$0xf] %vm668, %v4089
      %v4110 = vld [vmem:[#allocation5] sm:$0xff]
      %v4111 = vld [vmem:[#allocation5 + $0x8] sm:$0xff]
      %v4112 = vld [vmem:[#allocation5 + $0x10] sm:$0xff]
      %v4113 = vld [vmem:[#allocation5 + $0x18] sm:$0xff]
      %v4114 = vld [vmem:[#allocation5 + $0x20] sm:$0xff]
      %v4115 = vld [vmem:[#allocation5 + $0x28] sm:$0xff]
      %v4116 = vld [vmem:[#allocation5 + $0x30] sm:$0xff]
      %v4117 = vld [vmem:[#allocation5 + $0x38] sm:$0xff]
      %v4118 = vld [vmem:[%s11] sm:$0xf]
      %v4119 = vld [vmem:[%s11 + $0x4] sm:$0xf]
      %v4120 = vld [vmem:[%s11 + $0x8] sm:$0xf]
      %v4121 = vld [vmem:[%s11 + $0xc] sm:$0xf]
      %v4122 = vld [vmem:[#allocation5] sm:$0xf0]
      %v4123 = vld [vmem:[#allocation5 + $0x40] sm:$0xf]
      %s4124 = scalar_lea.vmem %s11, 16
      %v4125 = vld [vmem:[%s4124] sm:$0xf]
      %v4126 = vld [vmem:[%s4124 + $0x4] sm:$0xf]
      %v4127 = vld [vmem:[%s4124 + $0x8] sm:$0xf]
      %v4128 = vld [vmem:[%s4124 + $0xc] sm:$0xf]
      %v4138 = vrot.slane %v4122, 4
      %v4139 = vrot.slane %v4111, 4
      %v4140 = vsel %vm1590, %v4138, %v4139
      %v4141 = vrot.slane %v4112, 4
      %v4142 = vsel %vm1590, %v4139, %v4141
      %v4143 = vrot.slane %v4113, 4
      %v4144 = vsel %vm1590, %v4141, %v4143
      %v4145 = vrot.slane %v4114, 4
      %v4146 = vsel %vm1590, %v4143, %v4145
      %v4147 = vrot.slane %v4115, 4
      %v4148 = vsel %vm1590, %v4145, %v4147
      %v4149 = vrot.slane %v4116, 4
      %v4150 = vsel %vm1590, %v4147, %v4149
      %v4151 = vrot.slane %v4117, 4
      %v4152 = vsel %vm1590, %v4149, %v4151
      %v4153 = vrot.slane %v4123, 4
      %v4154 = vsel %vm1590, %v4151, %v4153
      %v4159 = vunpack.c.l.b16 %v4125
      %v4160 = vunpack.c.l.b16 %v4126
      %v4161 = vunpack.c.l.b16 %v4127
      %v4162 = vunpack.c.l.b16 %v4128
      %v4163 = vpack.c.b16 %v4160, %v4159
      %v4164 = vpack.c.b16 %v4162, %v4161
      %v4168 = vsel %vm4101, %v4140, 0
      %v4171 = vsel %vm4101, %v4142, 0
      %v4174 = vsel %vm4101, %v4144, 0
      %v4177 = vsel %vm4101, %v4146, 0
      %v4180 = vsel %vm4101, %v4148, 0
      %v4183 = vsel %vm4101, %v4150, 0
      %v4186 = vsel %vm4101, %v4152, 0
      %v4189 = vsel %vm4101, %v4154, 0
      %4191 = vmatprep.subr.bf16.mxu0 0
      %4192 = vmatpush1.bf16.msra.mxu0 %v4163
      %4193 = vmatprep.subr.bf16.mxu0 0
      %4194 = vmatpush1.bf16.msra.mxu0 %v4164
      %4195 = vmatprep.subr.bf16.mxu0 0
      %4196 = vmatpush1.bf16.msra.mxu0 0
      %4197 = vmatprep.subr.bf16.mxu0 0
      %4198 = vmatpush1.bf16.msra.mxu0 0
      %4199 = vmatprep.subr.bf16.mxu0 0
      %4200 = vmatpush1.bf16.msra.mxu0 0
      %4201 = vmatprep.subr.bf16.mxu0 0
      %4202 = vmatpush1.bf16.msra.mxu0 0
      %4203 = vmatprep.subr.bf16.mxu0 0
      %4204 = vmatpush1.bf16.msra.mxu0 0
      %4205 = vmatprep.subr.bf16.mxu0 0
      %4206 = vmatpush1.bf16.msra.mxu0 0
      %4207 = vmatprep.subr.bf16.mxu0 0
      %4208 = vmatpush1.bf16.msra.mxu0 0
      %4209 = vmatprep.subr.bf16.mxu0 0
      %4210 = vmatpush1.bf16.msra.mxu0 0
      %4211 = vmatprep.subr.bf16.mxu0 0
      %4212 = vmatpush1.bf16.msra.mxu0 0
      %4213 = vmatprep.subr.bf16.mxu0 0
      %4214 = vmatpush1.bf16.msra.mxu0 0
      %4215 = vmatprep.subr.bf16.mxu0 0
      %4216 = vmatpush1.bf16.msra.mxu0 0
      %4217 = vmatprep.subr.bf16.mxu0 0
      %4218 = vmatpush1.bf16.msra.mxu0 0
      %4219 = vmatprep.subr.bf16.mxu0 0
      %4220 = vmatpush1.bf16.msra.mxu0 0
      %4221 = vmatprep.subr.bf16.mxu0 0
      %4222 = vmatpush1.bf16.msra.mxu0 0
      %4223 = vmatprep.mubr.bf16.mxu0 0
      %4224 = vmatmul.mubr.bf16.gmra.mrb[0].mxu0 %v4168
      %v4225 = vpop.f32.mrb[0].mxu0
      %v4226 = vadd.f32 0.0, %v4225
      %v4227 = vpop.f32.mrb[0].mxu0
      %v4228 = vpop.f32.mrb[0].mxu0
      %v4229 = vadd.f32 0.0, %v4228
      %v4230 = vpop.f32.mrb[0].mxu0
      %4231 = vmatprep.mubr.bf16.mxu0 0
      %4232 = vmatmul.mubr.bf16.gmra.mrb[0].mxu0 %v4171
      %v4233 = vpop.f32.mrb[0].mxu0
      %v4234 = vadd.f32 0.0, %v4233
      %v4235 = vpop.f32.mrb[0].mxu0
      %v4236 = vpop.f32.mrb[0].mxu0
      %v4237 = vadd.f32 0.0, %v4236
      %v4238 = vpop.f32.mrb[0].mxu0
      %4239 = vmatprep.mubr.bf16.mxu0 0
      %4240 = vmatmul.mubr.bf16.gmra.mrb[0].mxu0 %v4174
      %v4241 = vpop.f32.mrb[0].mxu0
      %v4242 = vadd.f32 0.0, %v4241
      %v4243 = vpop.f32.mrb[0].mxu0
      %v4244 = vpop.f32.mrb[0].mxu0
      %v4245 = vadd.f32 0.0, %v4244
      %v4246 = vpop.f32.mrb[0].mxu0
      %4247 = vmatprep.mubr.bf16.mxu0 0
      %4248 = vmatmul.mubr.bf16.gmra.mrb[0].mxu0 %v4177
      %v4249 = vpop.f32.mrb[0].mxu0
      %v4250 = vadd.f32 0.0, %v4249
      %v4251 = vpop.f32.mrb[0].mxu0
      %v4252 = vpop.f32.mrb[0].mxu0
      %v4253 = vadd.f32 0.0, %v4252
      %v4254 = vpop.f32.mrb[0].mxu0
      %4255 = vmatprep.mubr.bf16.mxu0 0
      %4256 = vmatmul.mubr.bf16.gmra.mrb[0].mxu0 %v4180
      %v4257 = vpop.f32.mrb[0].mxu0
      %v4258 = vadd.f32 0.0, %v4257
      %v4259 = vpop.f32.mrb[0].mxu0
      %v4260 = vpop.f32.mrb[0].mxu0
      %v4261 = vadd.f32 0.0, %v4260
      %v4262 = vpop.f32.mrb[0].mxu0
      %4263 = vmatprep.mubr.bf16.mxu0 0
      %4264 = vmatmul.mubr.bf16.gmra.mrb[0].mxu0 %v4183
      %v4265 = vpop.f32.mrb[0].mxu0
      %v4266 = vadd.f32 0.0, %v4265
      %v4267 = vpop.f32.mrb[0].mxu0
      %v4268 = vpop.f32.mrb[0].mxu0
      %v4269 = vadd.f32 0.0, %v4268
      %v4270 = vpop.f32.mrb[0].mxu0
      %4271 = vmatprep.mubr.bf16.mxu0 0
      %4272 = vmatmul.mubr.bf16.gmra.mrb[0].mxu0 %v4186
      %v4273 = vpop.f32.mrb[0].mxu0
      %v4274 = vadd.f32 0.0, %v4273
      %v4275 = vpop.f32.mrb[0].mxu0
      %v4276 = vpop.f32.mrb[0].mxu0
      %v4277 = vadd.f32 0.0, %v4276
      %v4278 = vpop.f32.mrb[0].mxu0
      %4279 = vmatprep.mubr.bf16.mxu0 0
      %4280 = vmatmul.mubr.bf16.gmra.mrb[0].mxu0 %v4189
      %v4281 = vpop.f32.mrb[0].mxu0
      %v4282 = vadd.f32 0.0, %v4281
      %v4283 = vpop.f32.mrb[0].mxu0
      %v4284 = vpop.f32.mrb[0].mxu0
      %v4285 = vadd.f32 0.0, %v4284
      %v4286 = vpop.f32.mrb[0].mxu0
      %4287 = vdwg.mxu0
      %v4292 = vunpack.c.l.b16 %v4118
      %v4293 = vunpack.c.l.b16 %v4119
      %v4294 = vunpack.c.l.b16 %v4120
      %v4295 = vunpack.c.l.b16 %v4121
      %v4296 = vpack.c.b16 %v4293, %v4292
      %v4297 = vpack.c.b16 %v4295, %v4294
      %v4301 = vsel %vm4101, %v4110, 0
      %v4304 = vsel %vm4101, %v4111, 0
      %v4307 = vsel %vm4101, %v4112, 0
      %v4310 = vsel %vm4101, %v4113, 0
      %v4313 = vsel %vm4101, %v4114, 0
      %v4316 = vsel %vm4101, %v4115, 0
      %v4319 = vsel %vm4101, %v4116, 0
      %v4322 = vsel %vm4101, %v4117, 0
      %4324 = vmatprep.subr.bf16.mxu0 0
      %4325 = vmatpush1.bf16.msra.mxu0 %v4296
      %4326 = vmatprep.subr.bf16.mxu0 0
      %4327 = vmatpush1.bf16.msra.mxu0 %v4297
      %4328 = vmatprep.subr.bf16.mxu0 0
      %4329 = vmatpush1.bf16.msra.mxu0 0
      %4330 = vmatprep.subr.bf16.mxu0 0
      %4331 = vmatpush1.bf16.msra.mxu0 0
      %4332 = vmatprep.subr.bf16.mxu0 0
      %4333 = vmatpush1.bf16.msra.mxu0 0
      %4334 = vmatprep.subr.bf16.mxu0 0
      %4335 = vmatpush1.bf16.msra.mxu0 0
      %4336 = vmatprep.subr.bf16.mxu0 0
      %4337 = vmatpush1.bf16.msra.mxu0 0
      %4338 = vmatprep.subr.bf16.mxu0 0
      %4339 = vmatpush1.bf16.msra.mxu0 0
      %4340 = vmatprep.subr.bf16.mxu0 0
      %4341 = vmatpush1.bf16.msra.mxu0 0
      %4342 = vmatprep.subr.bf16.mxu0 0
      %4343 = vmatpush1.bf16.msra.mxu0 0
      %4344 = vmatprep.subr.bf16.mxu0 0
      %4345 = vmatpush1.bf16.msra.mxu0 0
      %4346 = vmatprep.subr.bf16.mxu0 0
      %4347 = vmatpush1.bf16.msra.mxu0 0
      %4348 = vmatprep.subr.bf16.mxu0 0
      %4349 = vmatpush1.bf16.msra.mxu0 0
      %4350 = vmatprep.subr.bf16.mxu0 0
      %4351 = vmatpush1.bf16.msra.mxu0 0
      %4352 = vmatprep.subr.bf16.mxu0 0
      %4353 = vmatpush1.bf16.msra.mxu0 0
      %4354 = vmatprep.subr.bf16.mxu0 0
      %4355 = vmatpush1.bf16.msra.mxu0 0
      %4356 = vmatprep.mubr.bf16.mxu0 0
      %4357 = vmatmul.mubr.bf16.gmra.mrb[0].mxu0 %v4301
      %v4358 = vpop.f32.mrb[0].mxu0
      %v4359 = vadd.f32 %v4226, %v4358
      %v4360 = vpop.f32.mrb[0].mxu0
      %v4361 = vpop.f32.mrb[0].mxu0
      %v4362 = vadd.f32 %v4229, %v4361
      %v4363 = vpop.f32.mrb[0].mxu0
      %4364 = vmatprep.mubr.bf16.mxu0 0
      %4365 = vmatmul.mubr.bf16.gmra.mrb[0].mxu0 %v4304
      %v4366 = vpop.f32.mrb[0].mxu0
      %v4367 = vadd.f32 %v4234, %v4366
      %v4368 = vpop.f32.mrb[0].mxu0
      %v4369 = vpop.f32.mrb[0].mxu0
      %v4370 = vadd.f32 %v4237, %v4369
      %v4371 = vpop.f32.mrb[0].mxu0
      %4372 = vmatprep.mubr.bf16.mxu0 0
      %4373 = vmatmul.mubr.bf16.gmra.mrb[0].mxu0 %v4307
      %v4374 = vpop.f32.mrb[0].mxu0
      %v4375 = vadd.f32 %v4242, %v4374
      %v4376 = vpop.f32.mrb[0].mxu0
      %v4377 = vpop.f32.mrb[0].mxu0
      %v4378 = vadd.f32 %v4245, %v4377
      %v4379 = vpop.f32.mrb[0].mxu0
      %4380 = vmatprep.mubr.bf16.mxu0 0
      %4381 = vmatmul.mubr.bf16.gmra.mrb[0].mxu0 %v4310
      %v4382 = vpop.f32.mrb[0].mxu0
      %v4383 = vadd.f32 %v4250, %v4382
      %v4384 = vpop.f32.mrb[0].mxu0
      %v4385 = vpop.f32.mrb[0].mxu0
      %v4386 = vadd.f32 %v4253, %v4385
      %v4387 = vpop.f32.mrb[0].mxu0
      %4388 = vmatprep.mubr.bf16.mxu0 0
      %4389 = vmatmul.mubr.bf16.gmra.mrb[0].mxu0 %v4313
      %v4390 = vpop.f32.mrb[0].mxu0
      %v4391 = vadd.f32 %v4258, %v4390
      %v4392 = vpop.f32.mrb[0].mxu0
      %v4393 = vpop.f32.mrb[0].mxu0
      %v4394 = vadd.f32 %v4261, %v4393
      %v4395 = vpop.f32.mrb[0].mxu0
      %4396 = vmatprep.mubr.bf16.mxu0 0
      %4397 = vmatmul.mubr.bf16.gmra.mrb[0].mxu0 %v4316
      %v4398 = vpop.f32.mrb[0].mxu0
      %v4399 = vadd.f32 %v4266, %v4398
      %v4400 = vpop.f32.mrb[0].mxu0
      %v4401 = vpop.f32.mrb[0].mxu0
      %v4402 = vadd.f32 %v4269, %v4401
      %v4403 = vpop.f32.mrb[0].mxu0
      %4404 = vmatprep.mubr.bf16.mxu0 0
      %4405 = vmatmul.mubr.bf16.gmra.mrb[0].mxu0 %v4319
      %v4406 = vpop.f32.mrb[0].mxu0
      %v4407 = vadd.f32 %v4274, %v4406
      %v4408 = vpop.f32.mrb[0].mxu0
      %v4409 = vpop.f32.mrb[0].mxu0
      %v4410 = vadd.f32 %v4277, %v4409
      %v4411 = vpop.f32.mrb[0].mxu0
      %4412 = vmatprep.mubr.bf16.mxu0 0
      %4413 = vmatmul.mubr.bf16.gmra.mrb[0].mxu0 %v4322
      %v4414 = vpop.f32.mrb[0].mxu0
      %v4415 = vadd.f32 %v4282, %v4414
      %v4416 = vpop.f32.mrb[0].mxu0
      %v4417 = vpop.f32.mrb[0].mxu0
      %v4418 = vadd.f32 %v4285, %v4417
      %v4419 = vpop.f32.mrb[0].mxu0
      %4420 = vdwg.mxu0
      %v4421 = vld [vmem:[#allocation5 + $0x40] sm:$0xff]
      %s4422 = scalar_lea.vmem %s11, 32
      %v4423 = vld [vmem:[%s4422] sm:$0xf]
      %v4424 = vld [vmem:[%s4422 + $0x4] sm:$0xf]
      %v4425 = vld [vmem:[%s4422 + $0x8] sm:$0xf]
      %v4426 = vld [vmem:[%s4422 + $0xc] sm:$0xf]
      %v4431 = vunpack.c.l.b16 %v4423
      %v4432 = vunpack.c.l.b16 %v4424
      %v4433 = vunpack.c.l.b16 %v4425
      %v4434 = vunpack.c.l.b16 %v4426
      %v4435 = vpack.c.b16 %v4432, %v4431
      %v4436 = vpack.c.b16 %v4434, %v4433
      %v4440 = vsel %vm4101, %v4421, 0
      %4442 = vmatprep.subr.bf16.mxu0 0
      %4443 = vmatpush1.bf16.msra.mxu0 %v4435
      %4444 = vmatprep.subr.bf16.mxu0 0
      %4445 = vmatpush1.bf16.msra.mxu0 %v4436
      %4446 = vmatprep.subr.bf16.mxu0 0
      %4447 = vmatpush1.bf16.msra.mxu0 0
      %4448 = vmatprep.subr.bf16.mxu0 0
      %4449 = vmatpush1.bf16.msra.mxu0 0
      %4450 = vmatprep.subr.bf16.mxu0 0
      %4451 = vmatpush1.bf16.msra.mxu0 0
      %4452 = vmatprep.subr.bf16.mxu0 0
      %4453 = vmatpush1.bf16.msra.mxu0 0
      %4454 = vmatprep.subr.bf16.mxu0 0
      %4455 = vmatpush1.bf16.msra.mxu0 0
      %4456 = vmatprep.subr.bf16.mxu0 0
      %4457 = vmatpush1.bf16.msra.mxu0 0
      %4458 = vmatprep.subr.bf16.mxu0 0
      %4459 = vmatpush1.bf16.msra.mxu0 0
      %4460 = vmatprep.subr.bf16.mxu0 0
      %4461 = vmatpush1.bf16.msra.mxu0 0
      %4462 = vmatprep.subr.bf16.mxu0 0
      %4463 = vmatpush1.bf16.msra.mxu0 0
      %4464 = vmatprep.subr.bf16.mxu0 0
      %4465 = vmatpush1.bf16.msra.mxu0 0
      %4466 = vmatprep.subr.bf16.mxu0 0
      %4467 = vmatpush1.bf16.msra.mxu0 0
      %4468 = vmatprep.subr.bf16.mxu0 0
      %4469 = vmatpush1.bf16.msra.mxu0 0
      %4470 = vmatprep.subr.bf16.mxu0 0
      %4471 = vmatpush1.bf16.msra.mxu0 0
      %4472 = vmatprep.subr.bf16.mxu0 0
      %4473 = vmatpush1.bf16.msra.mxu0 0
      %4474 = vmatprep.mubr.bf16.mxu0 0
      %4475 = vmatmul.mubr.bf16.gmra.mrb[0].mxu0 %v4304
      %v4476 = vpop.f32.mrb[0].mxu0
      %v4477 = vadd.f32 0.0, %v4476
      %v4478 = vpop.f32.mrb[0].mxu0
      %v4479 = vpop.f32.mrb[0].mxu0
      %v4480 = vadd.f32 0.0, %v4479
      %v4481 = vpop.f32.mrb[0].mxu0
      %4482 = vmatprep.mubr.bf16.mxu0 0
      %4483 = vmatmul.mubr.bf16.gmra.mrb[0].mxu0 %v4307
      %v4484 = vpop.f32.mrb[0].mxu0
      %v4485 = vadd.f32 0.0, %v4484
      %v4486 = vpop.f32.mrb[0].mxu0
      %v4487 = vpop.f32.mrb[0].mxu0
      %v4488 = vadd.f32 0.0, %v4487
      %v4489 = vpop.f32.mrb[0].mxu0
      %4490 = vmatprep.mubr.bf16.mxu0 0
      %4491 = vmatmul.mubr.bf16.gmra.mrb[0].mxu0 %v4310
      %v4492 = vpop.f32.mrb[0].mxu0
      %v4493 = vadd.f32 0.0, %v4492
      %v4494 = vpop.f32.mrb[0].mxu0
      %v4495 = vpop.f32.mrb[0].mxu0
      %v4496 = vadd.f32 0.0, %v4495
      %v4497 = vpop.f32.mrb[0].mxu0
      %4498 = vmatprep.mubr.bf16.mxu0 0
      %4499 = vmatmul.mubr.bf16.gmra.mrb[0].mxu0 %v4313
      %v4500 = vpop.f32.mrb[0].mxu0
      %v4501 = vadd.f32 0.0, %v4500
      %v4502 = vpop.f32.mrb[0].mxu0
      %v4503 = vpop.f32.mrb[0].mxu0
      %v4504 = vadd.f32 0.0, %v4503
      %v4505 = vpop.f32.mrb[0].mxu0
      %4506 = vmatprep.mubr.bf16.mxu0 0
      %4507 = vmatmul.mubr.bf16.gmra.mrb[0].mxu0 %v4316
      %v4508 = vpop.f32.mrb[0].mxu0
      %v4509 = vadd.f32 0.0, %v4508
      %v4510 = vpop.f32.mrb[0].mxu0
      %v4511 = vpop.f32.mrb[0].mxu0
      %v4512 = vadd.f32 0.0, %v4511
      %v4513 = vpop.f32.mrb[0].mxu0
      %4514 = vmatprep.mubr.bf16.mxu0 0
      %4515 = vmatmul.mubr.bf16.gmra.mrb[0].mxu0 %v4319
      %v4516 = vpop.f32.mrb[0].mxu0
      %v4517 = vadd.f32 0.0, %v4516
      %v4518 = vpop.f32.mrb[0].mxu0
      %v4519 = vpop.f32.mrb[0].mxu0
      %v4520 = vadd.f32 0.0, %v4519
      %v4521 = vpop.f32.mrb[0].mxu0
      %4522 = vmatprep.mubr.bf16.mxu0 0
      %4523 = vmatmul.mubr.bf16.gmra.mrb[0].mxu0 %v4322
      %v4524 = vpop.f32.mrb[0].mxu0
      %v4525 = vadd.f32 0.0, %v4524
      %v4526 = vpop.f32.mrb[0].mxu0
      %v4527 = vpop.f32.mrb[0].mxu0
      %v4528 = vadd.f32 0.0, %v4527
      %v4529 = vpop.f32.mrb[0].mxu0
      %4530 = vmatprep.mubr.bf16.mxu0 0
      %4531 = vmatmul.mubr.bf16.gmra.mrb[0].mxu0 %v4440
      %v4532 = vpop.f32.mrb[0].mxu0
      %v4533 = vadd.f32 0.0, %v4532
      %v4534 = vpop.f32.mrb[0].mxu0
      %v4535 = vpop.f32.mrb[0].mxu0
      %v4536 = vadd.f32 0.0, %v4535
      %v4537 = vpop.f32.mrb[0].mxu0
      %4538 = vdwg.mxu0
      %v4539 = vadd.f32 %v4359, %v4477
      %v4540 = vadd.f32 %v4362, %v4480
      %v4541 = vadd.f32 %v4367, %v4485
      %v4542 = vadd.f32 %v4370, %v4488
      %v4543 = vadd.f32 %v4375, %v4493
      %v4544 = vadd.f32 %v4378, %v4496
      %v4545 = vadd.f32 %v4383, %v4501
      %v4546 = vadd.f32 %v4386, %v4504
      %v4547 = vadd.f32 %v4391, %v4509
      %v4548 = vadd.f32 %v4394, %v4512
      %v4549 = vadd.f32 %v4399, %v4517
      %v4550 = vadd.f32 %v4402, %v4520
      %v4551 = vadd.f32 %v4407, %v4525
      %v4552 = vadd.f32 %v4410, %v4528
      %v4553 = vadd.f32 %v4415, %v4533
      %v4554 = vadd.f32 %v4418, %v4536
      %v4555 = vld [vmem:[%s12] sm:$0x1]
      %v4557 = vlaneseq
      %v4558 = vshrl.u32 %v4557, 7
      %v4559 = vsub.s32 0, %v4558
      %v4560 = vrot.slane %v4555, %v4559
      %v4562 = vadd.f32 %v4539, %v4560
      %v4563 = vadd.f32 %v4540, %v4560
      %v4564 = vadd.f32 %v4541, %v4560
      %v4565 = vadd.f32 %v4542, %v4560
      %v4566 = vadd.f32 %v4543, %v4560
      %v4567 = vadd.f32 %v4544, %v4560
      %v4568 = vadd.f32 %v4545, %v4560
      %v4569 = vadd.f32 %v4546, %v4560
      %v4570 = vadd.f32 %v4547, %v4560
      %v4571 = vadd.f32 %v4548, %v4560
      %v4572 = vadd.f32 %v4549, %v4560
      %v4573 = vadd.f32 %v4550, %v4560
      %v4574 = vadd.f32 %v4551, %v4560
      %v4575 = vadd.f32 %v4552, %v4560
      %v4576 = vadd.f32 %v4553, %v4560
      %v4577 = vadd.f32 %v4554, %v4560
      %v4578 = vmax.f32 %v4562, 0.0
      %v4579 = vmax.f32 %v4563, 0.0
      %v4580 = vmax.f32 %v4564, 0.0
      %v4581 = vmax.f32 %v4565, 0.0
      %v4582 = vmax.f32 %v4566, 0.0
      %v4583 = vmax.f32 %v4567, 0.0
      %v4584 = vmax.f32 %v4568, 0.0
      %v4585 = vmax.f32 %v4569, 0.0
      %v4586 = vmax.f32 %v4570, 0.0
      %v4587 = vmax.f32 %v4571, 0.0
      %v4588 = vmax.f32 %v4572, 0.0
      %v4589 = vmax.f32 %v4573, 0.0
      %v4590 = vmax.f32 %v4574, 0.0
      %v4591 = vmax.f32 %v4575, 0.0
      %v4592 = vmax.f32 %v4576, 0.0
      %v4593 = vmax.f32 %v4577, 0.0
      %v4594 = vpack.c.bf16 %v4579, %v4578
      %v4595 = vpack.c.bf16 %v4581, %v4580
      %v4596 = vpack.c.bf16 %v4583, %v4582
      %v4597 = vpack.c.bf16 %v4585, %v4584
      %v4598 = vpack.c.bf16 %v4587, %v4586
      %v4599 = vpack.c.bf16 %v4589, %v4588
      %v4600 = vpack.c.bf16 %v4591, %v4590
      %v4601 = vpack.c.bf16 %v4593, %v4592
      %v4602 = vld [vmem:[%s13] sm:$0xf]
      %v4603 = vld [vmem:[%s13 + $0x4] sm:$0xf]
      %v4604 = vld [vmem:[%s13 + $0x8] sm:$0xf]
      %v4605 = vld [vmem:[%s13 + $0xc] sm:$0xf]
      %v4606 = vld [vmem:[%s13 + $0x10] sm:$0xf]
      %v4607 = vld [vmem:[%s13 + $0x14] sm:$0xf]
      %v4608 = vld [vmem:[%s13 + $0x18] sm:$0xf]
      %v4609 = vld [vmem:[%s13 + $0x1c] sm:$0xf]
      %v4610 = vld [vmem:[%s14] sm:$0x1]
      %v4612 = vlaneseq
      %v4613 = vshrl.u32 %v4612, 7
      %v4614 = vsub.s32 0, %v4613
      %v4615 = vrot.slane %v4610, %v4614
      %v4625 = vunpack.c.l.b16 %v4602
      %v4626 = vunpack.c.l.b16 %v4603
      %v4627 = vunpack.c.l.b16 %v4604
      %v4628 = vunpack.c.l.b16 %v4605
      %v4629 = vunpack.c.l.b16 %v4606
      %v4630 = vunpack.c.l.b16 %v4607
      %v4631 = vunpack.c.l.b16 %v4608
      %v4632 = vunpack.c.l.b16 %v4609
      %v4633 = vpack.c.b16 %v4626, %v4625
      %v4634 = vpack.c.b16 %v4628, %v4627
      %v4635 = vpack.c.b16 %v4630, %v4629
      %v4636 = vpack.c.b16 %v4632, %v4631
      %v4642 = vsel %vm2614, %v4594, 0
      %v4645 = vsel %vm2614, %v4595, 0
      %v4648 = vsel %vm2614, %v4596, 0
      %v4651 = vsel %vm2614, %v4597, 0
      %v4654 = vsel %vm2614, %v4598, 0
      %v4657 = vsel %vm2614, %v4599, 0
      %v4660 = vsel %vm2614, %v4600, 0
      %v4663 = vsel %vm2614, %v4601, 0
      %4665 = vmatprep.subr.bf16.mxu0 0
      %4666 = vmatpush1.bf16.msra.mxu0 %v4633
      %4667 = vmatprep.subr.bf16.mxu0 0
      %4668 = vmatpush1.bf16.msra.mxu0 %v4634
      %4669 = vmatprep.subr.bf16.mxu0 0
      %4670 = vmatpush1.bf16.msra.mxu0 %v4635
      %4671 = vmatprep.subr.bf16.mxu0 0
      %4672 = vmatpush1.bf16.msra.mxu0 %v4636
      %4673 = vmatprep.subr.bf16.mxu0 0
      %4674 = vmatpush1.bf16.msra.mxu0 0
      %4675 = vmatprep.subr.bf16.mxu0 0
      %4676 = vmatpush1.bf16.msra.mxu0 0
      %4677 = vmatprep.subr.bf16.mxu0 0
      %4678 = vmatpush1.bf16.msra.mxu0 0
      %4679 = vmatprep.subr.bf16.mxu0 0
      %4680 = vmatpush1.bf16.msra.mxu0 0
      %4681 = vmatprep.subr.bf16.mxu0 0
      %4682 = vmatpush1.bf16.msra.mxu0 0
      %4683 = vmatprep.subr.bf16.mxu0 0
      %4684 = vmatpush1.bf16.msra.mxu0 0
      %4685 = vmatprep.subr.bf16.mxu0 0
      %4686 = vmatpush1.bf16.msra.mxu0 0
      %4687 = vmatprep.subr.bf16.mxu0 0
      %4688 = vmatpush1.bf16.msra.mxu0 0
      %4689 = vmatprep.subr.bf16.mxu0 0
      %4690 = vmatpush1.bf16.msra.mxu0 0
      %4691 = vmatprep.subr.bf16.mxu0 0
      %4692 = vmatpush1.bf16.msra.mxu0 0
      %4693 = vmatprep.subr.bf16.mxu0 0
      %4694 = vmatpush1.bf16.msra.mxu0 0
      %4695 = vmatprep.subr.bf16.mxu0 0
      %4696 = vmatpush1.bf16.msra.mxu0 0
      %4697 = vmatprep.mubr.bf16.mxu0 0
      %4698 = vmatmul.mubr.bf16.gmra.mrb[0].mxu0 %v4642
      %v4699 = vpop.f32.mrb[0].mxu0
      %v4700 = vadd.f32 %v4615, %v4699
      %v4701 = vpop.f32.mrb[0].mxu0
      %v4702 = vpop.f32.mrb[0].mxu0
      %v4703 = vadd.f32 %v4615, %v4702
      %v4704 = vpop.f32.mrb[0].mxu0
      %4705 = vmatprep.mubr.bf16.mxu0 0
      %4706 = vmatmul.mubr.bf16.gmra.mrb[0].mxu0 %v4645
      %v4707 = vpop.f32.mrb[0].mxu0
      %v4708 = vadd.f32 %v4615, %v4707
      %v4709 = vpop.f32.mrb[0].mxu0
      %v4710 = vpop.f32.mrb[0].mxu0
      %v4711 = vadd.f32 %v4615, %v4710
      %v4712 = vpop.f32.mrb[0].mxu0
      %4713 = vmatprep.mubr.bf16.mxu0 0
      %4714 = vmatmul.mubr.bf16.gmra.mrb[0].mxu0 %v4648
      %v4715 = vpop.f32.mrb[0].mxu0
      %v4716 = vadd.f32 %v4615, %v4715
      %v4717 = vpop.f32.mrb[0].mxu0
      %v4718 = vpop.f32.mrb[0].mxu0
      %v4719 = vadd.f32 %v4615, %v4718
      %v4720 = vpop.f32.mrb[0].mxu0
      %4721 = vmatprep.mubr.bf16.mxu0 0
      %4722 = vmatmul.mubr.bf16.gmra.mrb[0].mxu0 %v4651
      %v4723 = vpop.f32.mrb[0].mxu0
      %v4724 = vadd.f32 %v4615, %v4723
      %v4725 = vpop.f32.mrb[0].mxu0
      %v4726 = vpop.f32.mrb[0].mxu0
      %v4727 = vadd.f32 %v4615, %v4726
      %v4728 = vpop.f32.mrb[0].mxu0
      %4729 = vmatprep.mubr.bf16.mxu0 0
      %4730 = vmatmul.mubr.bf16.gmra.mrb[0].mxu0 %v4654
      %v4731 = vpop.f32.mrb[0].mxu0
      %v4732 = vadd.f32 %v4615, %v4731
      %v4733 = vpop.f32.mrb[0].mxu0
      %v4734 = vpop.f32.mrb[0].mxu0
      %v4735 = vadd.f32 %v4615, %v4734
      %v4736 = vpop.f32.mrb[0].mxu0
      %4737 = vmatprep.mubr.bf16.mxu0 0
      %4738 = vmatmul.mubr.bf16.gmra.mrb[0].mxu0 %v4657
      %v4739 = vpop.f32.mrb[0].mxu0
      %v4740 = vadd.f32 %v4615, %v4739
      %v4741 = vpop.f32.mrb[0].mxu0
      %v4742 = vpop.f32.mrb[0].mxu0
      %v4743 = vadd.f32 %v4615, %v4742
      %v4744 = vpop.f32.mrb[0].mxu0
      %4745 = vmatprep.mubr.bf16.mxu0 0
      %4746 = vmatmul.mubr.bf16.gmra.mrb[0].mxu0 %v4660
      %v4747 = vpop.f32.mrb[0].mxu0
      %v4748 = vadd.f32 %v4615, %v4747
      %v4749 = vpop.f32.mrb[0].mxu0
      %v4750 = vpop.f32.mrb[0].mxu0
      %v4751 = vadd.f32 %v4615, %v4750
      %v4752 = vpop.f32.mrb[0].mxu0
      %4753 = vmatprep.mubr.bf16.mxu0 0
      %4754 = vmatmul.mubr.bf16.gmra.mrb[0].mxu0 %v4663
      %v4755 = vpop.f32.mrb[0].mxu0
      %v4756 = vadd.f32 %v4615, %v4755
      %v4757 = vpop.f32.mrb[0].mxu0
      %v4758 = vpop.f32.mrb[0].mxu0
      %v4759 = vadd.f32 %v4615, %v4758
      %v4760 = vpop.f32.mrb[0].mxu0
      %4761 = vdwg.mxu0
      %v4762 = vmax.f32 %v4700, 0.0
      %v4763 = vmax.f32 %v4703, 0.0
      %v4764 = vmax.f32 %v4708, 0.0
      %v4765 = vmax.f32 %v4711, 0.0
      %v4766 = vmax.f32 %v4716, 0.0
      %v4767 = vmax.f32 %v4719, 0.0
      %v4768 = vmax.f32 %v4724, 0.0
      %v4769 = vmax.f32 %v4727, 0.0
      %v4770 = vmax.f32 %v4732, 0.0
      %v4771 = vmax.f32 %v4735, 0.0
      %v4772 = vmax.f32 %v4740, 0.0
      %v4773 = vmax.f32 %v4743, 0.0
      %v4774 = vmax.f32 %v4748, 0.0
      %v4775 = vmax.f32 %v4751, 0.0
      %v4776 = vmax.f32 %v4756, 0.0
      %v4777 = vmax.f32 %v4759, 0.0
      %v4778 = vpack.c.bf16 %v4763, %v4762
      %v4779 = vpack.c.bf16 %v4765, %v4764
      %v4780 = vpack.c.bf16 %v4767, %v4766
      %v4781 = vpack.c.bf16 %v4769, %v4768
      %v4782 = vpack.c.bf16 %v4771, %v4770
      %v4783 = vpack.c.bf16 %v4773, %v4772
      %v4784 = vpack.c.bf16 %v4775, %v4774
      %v4785 = vpack.c.bf16 %v4777, %v4776
      %v4794 = vrot.slane %v4778, 4
      %v4795 = vrot.slane %v4779, 4
      %v4796 = vsel %vm1590, %v4794, %v4795
      %v4797 = vrot.slane %v4780, 4
      %v4798 = vsel %vm1590, %v4795, %v4797
      %v4799 = vrot.slane %v4781, 4
      %v4800 = vsel %vm1590, %v4797, %v4799
      %v4801 = vrot.slane %v4782, 4
      %v4802 = vsel %vm1590, %v4799, %v4801
      %v4803 = vrot.slane %v4783, 4
      %v4804 = vsel %vm1590, %v4801, %v4803
      %v4805 = vrot.slane %v4784, 4
      %v4806 = vsel %vm1590, %v4803, %v4805
      %v4807 = vrot.slane %v4785, 4
      %v4808 = vsel %vm1590, %v4805, %v4807
      %4818 = vst.msk [vmem:[#allocation6] sm:$0xf0] %vm664, %v4794
      %4819 = vst.msk [vmem:[#allocation6 + $0x8] sm:$0xff] %vm2614, %v4796
      %4820 = vst.msk [vmem:[#allocation6 + $0x10] sm:$0xff] %vm2614, %v4798
      %4821 = vst.msk [vmem:[#allocation6 + $0x18] sm:$0xff] %vm2614, %v4800
      %4822 = vst.msk [vmem:[#allocation6 + $0x20] sm:$0xff] %vm2614, %v4802
      %4823 = vst.msk [vmem:[#allocation6 + $0x28] sm:$0xff] %vm2614, %v4804
      %4824 = vst.msk [vmem:[#allocation6 + $0x30] sm:$0xff] %vm2614, %v4806
      %4825 = vst.msk [vmem:[#allocation6 + $0x38] sm:$0xff] %vm2614, %v4808
      %4826 = vst.msk [vmem:[#allocation6 + $0x40] sm:$0xf] %vm662, %v4807
      %v4827 = vld [vmem:[#allocation6] sm:$0xff]
      %v4828 = vld [vmem:[#allocation6 + $0x8] sm:$0xff]
      %v4829 = vld [vmem:[#allocation6 + $0x10] sm:$0xff]
      %v4830 = vld [vmem:[#allocation6 + $0x18] sm:$0xff]
      %v4831 = vld [vmem:[#allocation6 + $0x20] sm:$0xff]
      %v4832 = vld [vmem:[#allocation6 + $0x28] sm:$0xff]
      %v4833 = vld [vmem:[#allocation6 + $0x30] sm:$0xff]
      %v4834 = vld [vmem:[#allocation6 + $0x38] sm:$0xff]
      %v4835 = vld [vmem:[%s15] sm:$0xf]
      %v4836 = vld [vmem:[%s15 + $0x4] sm:$0xf]
      %v4837 = vld [vmem:[%s15 + $0x8] sm:$0xf]
      %v4838 = vld [vmem:[%s15 + $0xc] sm:$0xf]
      %v4839 = vld [vmem:[%s15 + $0x10] sm:$0xf]
      %v4840 = vld [vmem:[%s15 + $0x14] sm:$0xf]
      %v4841 = vld [vmem:[%s15 + $0x18] sm:$0xf]
      %v4842 = vld [vmem:[%s15 + $0x1c] sm:$0xf]
      %v4843 = vld [vmem:[#allocation6] sm:$0xf0]
      %v4844 = vld [vmem:[#allocation6 + $0x40] sm:$0xf]
      %s4845 = scalar_lea.vmem %s15, 32
      %v4846 = vld [vmem:[%s4845] sm:$0xf]
      %v4847 = vld [vmem:[%s4845 + $0x4] sm:$0xf]
      %v4848 = vld [vmem:[%s4845 + $0x8] sm:$0xf]
      %v4849 = vld [vmem:[%s4845 + $0xc] sm:$0xf]
      %v4850 = vld [vmem:[%s4845 + $0x10] sm:$0xf]
      %v4851 = vld [vmem:[%s4845 + $0x14] sm:$0xf]
      %v4852 = vld [vmem:[%s4845 + $0x18] sm:$0xf]
      %v4853 = vld [vmem:[%s4845 + $0x1c] sm:$0xf]
      %v4863 = vrot.slane %v4843, 4
      %v4864 = vrot.slane %v4828, 4
      %v4865 = vsel %vm1590, %v4863, %v4864
      %v4866 = vrot.slane %v4829, 4
      %v4867 = vsel %vm1590, %v4864, %v4866
      %v4868 = vrot.slane %v4830, 4
      %v4869 = vsel %vm1590, %v4866, %v4868
      %v4870 = vrot.slane %v4831, 4
      %v4871 = vsel %vm1590, %v4868, %v4870
      %v4872 = vrot.slane %v4832, 4
      %v4873 = vsel %vm1590, %v4870, %v4872
      %v4874 = vrot.slane %v4833, 4
      %v4875 = vsel %vm1590, %v4872, %v4874
      %v4876 = vrot.slane %v4834, 4
      %v4877 = vsel %vm1590, %v4874, %v4876
      %v4878 = vrot.slane %v4844, 4
      %v4879 = vsel %vm1590, %v4876, %v4878
      %v4888 = vunpack.c.l.b16 %v4846
      %v4889 = vunpack.c.l.b16 %v4847
      %v4890 = vunpack.c.l.b16 %v4848
      %v4891 = vunpack.c.l.b16 %v4849
      %v4892 = vunpack.c.l.b16 %v4850
      %v4893 = vunpack.c.l.b16 %v4851
      %v4894 = vunpack.c.l.b16 %v4852
      %v4895 = vunpack.c.l.b16 %v4853
      %v4896 = vpack.c.b16 %v4889, %v4888
      %v4897 = vpack.c.b16 %v4891, %v4890
      %v4898 = vpack.c.b16 %v4893, %v4892
      %v4899 = vpack.c.b16 %v4895, %v4894
      %v4905 = vsel %vm2614, %v4865, 0
      %v4908 = vsel %vm2614, %v4867, 0
      %v4911 = vsel %vm2614, %v4869, 0
      %v4914 = vsel %vm2614, %v4871, 0
      %v4917 = vsel %vm2614, %v4873, 0
      %v4920 = vsel %vm2614, %v4875, 0
      %v4923 = vsel %vm2614, %v4877, 0
      %v4926 = vsel %vm2614, %v4879, 0
      %4928 = vmatprep.subr.bf16.mxu0 0
      %4929 = vmatpush1.bf16.msra.mxu0 %v4896
      %4930 = vmatprep.subr.bf16.mxu0 0
      %4931 = vmatpush1.bf16.msra.mxu0 %v4897
      %4932 = vmatprep.subr.bf16.mxu0 0
      %4933 = vmatpush1.bf16.msra.mxu0 %v4898
      %4934 = vmatprep.subr.bf16.mxu0 0
      %4935 = vmatpush1.bf16.msra.mxu0 %v4899
      %4936 = vmatprep.subr.bf16.mxu0 0
      %4937 = vmatpush1.bf16.msra.mxu0 0
      %4938 = vmatprep.subr.bf16.mxu0 0
      %4939 = vmatpush1.bf16.msra.mxu0 0
      %4940 = vmatprep.subr.bf16.mxu0 0
      %4941 = vmatpush1.bf16.msra.mxu0 0
      %4942 = vmatprep.subr.bf16.mxu0 0
      %4943 = vmatpush1.bf16.msra.mxu0 0
      %4944 = vmatprep.subr.bf16.mxu0 0
      %4945 = vmatpush1.bf16.msra.mxu0 0
      %4946 = vmatprep.subr.bf16.mxu0 0
      %4947 = vmatpush1.bf16.msra.mxu0 0
      %4948 = vmatprep.subr.bf16.mxu0 0
      %4949 = vmatpush1.bf16.msra.mxu0 0
      %4950 = vmatprep.subr.bf16.mxu0 0
      %4951 = vmatpush1.bf16.msra.mxu0 0
      %4952 = vmatprep.subr.bf16.mxu0 0
      %4953 = vmatpush1.bf16.msra.mxu0 0
      %4954 = vmatprep.subr.bf16.mxu0 0
      %4955 = vmatpush1.bf16.msra.mxu0 0
      %4956 = vmatprep.subr.bf16.mxu0 0
      %4957 = vmatpush1.bf16.msra.mxu0 0
      %4958 = vmatprep.subr.bf16.mxu0 0
      %4959 = vmatpush1.bf16.msra.mxu0 0
      %4960 = vmatprep.mubr.bf16.mxu0 0
      %4961 = vmatmul.mubr.bf16.gmra.mrb[0].mxu0 %v4905
      %v4962 = vpop.f32.mrb[0].mxu0
      %v4963 = vadd.f32 0.0, %v4962
      %v4964 = vpop.f32.mrb[0].mxu0
      %v4965 = vpop.f32.mrb[0].mxu0
      %v4966 = vadd.f32 0.0, %v4965
      %v4967 = vpop.f32.mrb[0].mxu0
      %4968 = vmatprep.mubr.bf16.mxu0 0
      %4969 = vmatmul.mubr.bf16.gmra.mrb[0].mxu0 %v4908
      %v4970 = vpop.f32.mrb[0].mxu0
      %v4971 = vadd.f32 0.0, %v4970
      %v4972 = vpop.f32.mrb[0].mxu0
      %v4973 = vpop.f32.mrb[0].mxu0
      %v4974 = vadd.f32 0.0, %v4973
      %v4975 = vpop.f32.mrb[0].mxu0
      %4976 = vmatprep.mubr.bf16.mxu0 0
      %4977 = vmatmul.mubr.bf16.gmra.mrb[0].mxu0 %v4911
      %v4978 = vpop.f32.mrb[0].mxu0
      %v4979 = vadd.f32 0.0, %v4978
      %v4980 = vpop.f32.mrb[0].mxu0
      %v4981 = vpop.f32.mrb[0].mxu0
      %v4982 = vadd.f32 0.0, %v4981
      %v4983 = vpop.f32.mrb[0].mxu0
      %4984 = vmatprep.mubr.bf16.mxu0 0
      %4985 = vmatmul.mubr.bf16.gmra.mrb[0].mxu0 %v4914
      %v4986 = vpop.f32.mrb[0].mxu0
      %v4987 = vadd.f32 0.0, %v4986
      %v4988 = vpop.f32.mrb[0].mxu0
      %v4989 = vpop.f32.mrb[0].mxu0
      %v4990 = vadd.f32 0.0, %v4989
      %v4991 = vpop.f32.mrb[0].mxu0
      %4992 = vmatprep.mubr.bf16.mxu0 0
      %4993 = vmatmul.mubr.bf16.gmra.mrb[0].mxu0 %v4917
      %v4994 = vpop.f32.mrb[0].mxu0
      %v4995 = vadd.f32 0.0, %v4994
      %v4996 = vpop.f32.mrb[0].mxu0
      %v4997 = vpop.f32.mrb[0].mxu0
      %v4998 = vadd.f32 0.0, %v4997
      %v4999 = vpop.f32.mrb[0].mxu0
      %5000 = vmatprep.mubr.bf16.mxu0 0
      %5001 = vmatmul.mubr.bf16.gmra.mrb[0].mxu0 %v4920
      %v5002 = vpop.f32.mrb[0].mxu0
      %v5003 = vadd.f32 0.0, %v5002
      %v5004 = vpop.f32.mrb[0].mxu0
      %v5005 = vpop.f32.mrb[0].mxu0
      %v5006 = vadd.f32 0.0, %v5005
      %v5007 = vpop.f32.mrb[0].mxu0
      %5008 = vmatprep.mubr.bf16.mxu0 0
      %5009 = vmatmul.mubr.bf16.gmra.mrb[0].mxu0 %v4923
      %v5010 = vpop.f32.mrb[0].mxu0
      %v5011 = vadd.f32 0.0, %v5010
      %v5012 = vpop.f32.mrb[0].mxu0
      %v5013 = vpop.f32.mrb[0].mxu0
      %v5014 = vadd.f32 0.0, %v5013
      %v5015 = vpop.f32.mrb[0].mxu0
      %5016 = vmatprep.mubr.bf16.mxu0 0
      %5017 = vmatmul.mubr.bf16.gmra.mrb[0].mxu0 %v4926
      %v5018 = vpop.f32.mrb[0].mxu0
      %v5019 = vadd.f32 0.0, %v5018
      %v5020 = vpop.f32.mrb[0].mxu0
      %v5021 = vpop.f32.mrb[0].mxu0
      %v5022 = vadd.f32 0.0, %v5021
      %v5023 = vpop.f32.mrb[0].mxu0
      %5024 = vdwg.mxu0
      %v5033 = vunpack.c.l.b16 %v4835
      %v5034 = vunpack.c.l.b16 %v4836
      %v5035 = vunpack.c.l.b16 %v4837
      %v5036 = vunpack.c.l.b16 %v4838
      %v5037 = vunpack.c.l.b16 %v4839
      %v5038 = vunpack.c.l.b16 %v4840
      %v5039 = vunpack.c.l.b16 %v4841
      %v5040 = vunpack.c.l.b16 %v4842
      %v5041 = vpack.c.b16 %v5034, %v5033
      %v5042 = vpack.c.b16 %v5036, %v5035
      %v5043 = vpack.c.b16 %v5038, %v5037
      %v5044 = vpack.c.b16 %v5040, %v5039
      %v5050 = vsel %vm2614, %v4827, 0
      %v5053 = vsel %vm2614, %v4828, 0
      %v5056 = vsel %vm2614, %v4829, 0
      %v5059 = vsel %vm2614, %v4830, 0
      %v5062 = vsel %vm2614, %v4831, 0
      %v5065 = vsel %vm2614, %v4832, 0
      %v5068 = vsel %vm2614, %v4833, 0
      %v5071 = vsel %vm2614, %v4834, 0
      %5073 = vmatprep.subr.bf16.mxu0 0
      %5074 = vmatpush1.bf16.msra.mxu0 %v5041
      %5075 = vmatprep.subr.bf16.mxu0 0
      %5076 = vmatpush1.bf16.msra.mxu0 %v5042
      %5077 = vmatprep.subr.bf16.mxu0 0
      %5078 = vmatpush1.bf16.msra.mxu0 %v5043
      %5079 = vmatprep.subr.bf16.mxu0 0
      %5080 = vmatpush1.bf16.msra.mxu0 %v5044
      %5081 = vmatprep.subr.bf16.mxu0 0
      %5082 = vmatpush1.bf16.msra.mxu0 0
      %5083 = vmatprep.subr.bf16.mxu0 0
      %5084 = vmatpush1.bf16.msra.mxu0 0
      %5085 = vmatprep.subr.bf16.mxu0 0
      %5086 = vmatpush1.bf16.msra.mxu0 0
      %5087 = vmatprep.subr.bf16.mxu0 0
      %5088 = vmatpush1.bf16.msra.mxu0 0
      %5089 = vmatprep.subr.bf16.mxu0 0
      %5090 = vmatpush1.bf16.msra.mxu0 0
      %5091 = vmatprep.subr.bf16.mxu0 0
      %5092 = vmatpush1.bf16.msra.mxu0 0
      %5093 = vmatprep.subr.bf16.mxu0 0
      %5094 = vmatpush1.bf16.msra.mxu0 0
      %5095 = vmatprep.subr.bf16.mxu0 0
      %5096 = vmatpush1.bf16.msra.mxu0 0
      %5097 = vmatprep.subr.bf16.mxu0 0
      %5098 = vmatpush1.bf16.msra.mxu0 0
      %5099 = vmatprep.subr.bf16.mxu0 0
      %5100 = vmatpush1.bf16.msra.mxu0 0
      %5101 = vmatprep.subr.bf16.mxu0 0
      %5102 = vmatpush1.bf16.msra.mxu0 0
      %5103 = vmatprep.subr.bf16.mxu0 0
      %5104 = vmatpush1.bf16.msra.mxu0 0
      %5105 = vmatprep.mubr.bf16.mxu0 0
      %5106 = vmatmul.mubr.bf16.gmra.mrb[0].mxu0 %v5050
      %v5107 = vpop.f32.mrb[0].mxu0
      %v5108 = vadd.f32 %v4963, %v5107
      %v5109 = vpop.f32.mrb[0].mxu0
      %v5110 = vpop.f32.mrb[0].mxu0
      %v5111 = vadd.f32 %v4966, %v5110
      %v5112 = vpop.f32.mrb[0].mxu0
      %5113 = vmatprep.mubr.bf16.mxu0 0
      %5114 = vmatmul.mubr.bf16.gmra.mrb[0].mxu0 %v5053
      %v5115 = vpop.f32.mrb[0].mxu0
      %v5116 = vadd.f32 %v4971, %v5115
      %v5117 = vpop.f32.mrb[0].mxu0
      %v5118 = vpop.f32.mrb[0].mxu0
      %v5119 = vadd.f32 %v4974, %v5118
      %v5120 = vpop.f32.mrb[0].mxu0
      %5121 = vmatprep.mubr.bf16.mxu0 0
      %5122 = vmatmul.mubr.bf16.gmra.mrb[0].mxu0 %v5056
      %v5123 = vpop.f32.mrb[0].mxu0
      %v5124 = vadd.f32 %v4979, %v5123
      %v5125 = vpop.f32.mrb[0].mxu0
      %v5126 = vpop.f32.mrb[0].mxu0
      %v5127 = vadd.f32 %v4982, %v5126
      %v5128 = vpop.f32.mrb[0].mxu0
      %5129 = vmatprep.mubr.bf16.mxu0 0
      %5130 = vmatmul.mubr.bf16.gmra.mrb[0].mxu0 %v5059
      %v5131 = vpop.f32.mrb[0].mxu0
      %v5132 = vadd.f32 %v4987, %v5131
      %v5133 = vpop.f32.mrb[0].mxu0
      %v5134 = vpop.f32.mrb[0].mxu0
      %v5135 = vadd.f32 %v4990, %v5134
      %v5136 = vpop.f32.mrb[0].mxu0
      %5137 = vmatprep.mubr.bf16.mxu0 0
      %5138 = vmatmul.mubr.bf16.gmra.mrb[0].mxu0 %v5062
      %v5139 = vpop.f32.mrb[0].mxu0
      %v5140 = vadd.f32 %v4995, %v5139
      %v5141 = vpop.f32.mrb[0].mxu0
      %v5142 = vpop.f32.mrb[0].mxu0
      %v5143 = vadd.f32 %v4998, %v5142
      %v5144 = vpop.f32.mrb[0].mxu0
      %5145 = vmatprep.mubr.bf16.mxu0 0
      %5146 = vmatmul.mubr.bf16.gmra.mrb[0].mxu0 %v5065
      %v5147 = vpop.f32.mrb[0].mxu0
      %v5148 = vadd.f32 %v5003, %v5147
      %v5149 = vpop.f32.mrb[0].mxu0
      %v5150 = vpop.f32.mrb[0].mxu0
      %v5151 = vadd.f32 %v5006, %v5150
      %v5152 = vpop.f32.mrb[0].mxu0
      %5153 = vmatprep.mubr.bf16.mxu0 0
      %5154 = vmatmul.mubr.bf16.gmra.mrb[0].mxu0 %v5068
      %v5155 = vpop.f32.mrb[0].mxu0
      %v5156 = vadd.f32 %v5011, %v5155
      %v5157 = vpop.f32.mrb[0].mxu0
      %v5158 = vpop.f32.mrb[0].mxu0
      %v5159 = vadd.f32 %v5014, %v5158
      %v5160 = vpop.f32.mrb[0].mxu0
      %5161 = vmatprep.mubr.bf16.mxu0 0
      %5162 = vmatmul.mubr.bf16.gmra.mrb[0].mxu0 %v5071
      %v5163 = vpop.f32.mrb[0].mxu0
      %v5164 = vadd.f32 %v5019, %v5163
      %v5165 = vpop.f32.mrb[0].mxu0
      %v5166 = vpop.f32.mrb[0].mxu0
      %v5167 = vadd.f32 %v5022, %v5166
      %v5168 = vpop.f32.mrb[0].mxu0
      %5169 = vdwg.mxu0
      %v5170 = vld [vmem:[#allocation6 + $0x40] sm:$0xff]
      %s5171 = scalar_lea.vmem %s15, 64
      %v5172 = vld [vmem:[%s5171] sm:$0xf]
      %v5173 = vld [vmem:[%s5171 + $0x4] sm:$0xf]
      %v5174 = vld [vmem:[%s5171 + $0x8] sm:$0xf]
      %v5175 = vld [vmem:[%s5171 + $0xc] sm:$0xf]
      %v5176 = vld [vmem:[%s5171 + $0x10] sm:$0xf]
      %v5177 = vld [vmem:[%s5171 + $0x14] sm:$0xf]
      %v5178 = vld [vmem:[%s5171 + $0x18] sm:$0xf]
      %v5179 = vld [vmem:[%s5171 + $0x1c] sm:$0xf]
      %v5188 = vunpack.c.l.b16 %v5172
      %v5189 = vunpack.c.l.b16 %v5173
      %v5190 = vunpack.c.l.b16 %v5174
      %v5191 = vunpack.c.l.b16 %v5175
      %v5192 = vunpack.c.l.b16 %v5176
      %v5193 = vunpack.c.l.b16 %v5177
      %v5194 = vunpack.c.l.b16 %v5178
      %v5195 = vunpack.c.l.b16 %v5179
      %v5196 = vpack.c.b16 %v5189, %v5188
      %v5197 = vpack.c.b16 %v5191, %v5190
      %v5198 = vpack.c.b16 %v5193, %v5192
      %v5199 = vpack.c.b16 %v5195, %v5194
      %v5205 = vsel %vm2614, %v5170, 0
      %5207 = vmatprep.subr.bf16.mxu0 0
      %5208 = vmatpush1.bf16.msra.mxu0 %v5196
      %5209 = vmatprep.subr.bf16.mxu0 0
      %5210 = vmatpush1.bf16.msra.mxu0 %v5197
      %5211 = vmatprep.subr.bf16.mxu0 0
      %5212 = vmatpush1.bf16.msra.mxu0 %v5198
      %5213 = vmatprep.subr.bf16.mxu0 0
      %5214 = vmatpush1.bf16.msra.mxu0 %v5199
      %5215 = vmatprep.subr.bf16.mxu0 0
      %5216 = vmatpush1.bf16.msra.mxu0 0
      %5217 = vmatprep.subr.bf16.mxu0 0
      %5218 = vmatpush1.bf16.msra.mxu0 0
      %5219 = vmatprep.subr.bf16.mxu0 0
      %5220 = vmatpush1.bf16.msra.mxu0 0
      %5221 = vmatprep.subr.bf16.mxu0 0
      %5222 = vmatpush1.bf16.msra.mxu0 0
      %5223 = vmatprep.subr.bf16.mxu0 0
      %5224 = vmatpush1.bf16.msra.mxu0 0
      %5225 = vmatprep.subr.bf16.mxu0 0
      %5226 = vmatpush1.bf16.msra.mxu0 0
      %5227 = vmatprep.subr.bf16.mxu0 0
      %5228 = vmatpush1.bf16.msra.mxu0 0
      %5229 = vmatprep.subr.bf16.mxu0 0
      %5230 = vmatpush1.bf16.msra.mxu0 0
      %5231 = vmatprep.subr.bf16.mxu0 0
      %5232 = vmatpush1.bf16.msra.mxu0 0
      %5233 = vmatprep.subr.bf16.mxu0 0
      %5234 = vmatpush1.bf16.msra.mxu0 0
      %5235 = vmatprep.subr.bf16.mxu0 0
      %5236 = vmatpush1.bf16.msra.mxu0 0
      %5237 = vmatprep.subr.bf16.mxu0 0
      %5238 = vmatpush1.bf16.msra.mxu0 0
      %5239 = vmatprep.mubr.bf16.mxu0 0
      %5240 = vmatmul.mubr.bf16.gmra.mrb[0].mxu0 %v5053
      %v5241 = vpop.f32.mrb[0].mxu0
      %v5242 = vadd.f32 0.0, %v5241
      %v5243 = vpop.f32.mrb[0].mxu0
      %v5244 = vpop.f32.mrb[0].mxu0
      %v5245 = vadd.f32 0.0, %v5244
      %v5246 = vpop.f32.mrb[0].mxu0
      %5247 = vmatprep.mubr.bf16.mxu0 0
      %5248 = vmatmul.mubr.bf16.gmra.mrb[0].mxu0 %v5056
      %v5249 = vpop.f32.mrb[0].mxu0
      %v5250 = vadd.f32 0.0, %v5249
      %v5251 = vpop.f32.mrb[0].mxu0
      %v5252 = vpop.f32.mrb[0].mxu0
      %v5253 = vadd.f32 0.0, %v5252
      %v5254 = vpop.f32.mrb[0].mxu0
      %5255 = vmatprep.mubr.bf16.mxu0 0
      %5256 = vmatmul.mubr.bf16.gmra.mrb[0].mxu0 %v5059
      %v5257 = vpop.f32.mrb[0].mxu0
      %v5258 = vadd.f32 0.0, %v5257
      %v5259 = vpop.f32.mrb[0].mxu0
      %v5260 = vpop.f32.mrb[0].mxu0
      %v5261 = vadd.f32 0.0, %v5260
      %v5262 = vpop.f32.mrb[0].mxu0
      %5263 = vmatprep.mubr.bf16.mxu0 0
      %5264 = vmatmul.mubr.bf16.gmra.mrb[0].mxu0 %v5062
      %v5265 = vpop.f32.mrb[0].mxu0
      %v5266 = vadd.f32 0.0, %v5265
      %v5267 = vpop.f32.mrb[0].mxu0
      %v5268 = vpop.f32.mrb[0].mxu0
      %v5269 = vadd.f32 0.0, %v5268
      %v5270 = vpop.f32.mrb[0].mxu0
      %5271 = vmatprep.mubr.bf16.mxu0 0
      %5272 = vmatmul.mubr.bf16.gmra.mrb[0].mxu0 %v5065
      %v5273 = vpop.f32.mrb[0].mxu0
      %v5274 = vadd.f32 0.0, %v5273
      %v5275 = vpop.f32.mrb[0].mxu0
      %v5276 = vpop.f32.mrb[0].mxu0
      %v5277 = vadd.f32 0.0, %v5276
      %v5278 = vpop.f32.mrb[0].mxu0
      %5279 = vmatprep.mubr.bf16.mxu0 0
      %5280 = vmatmul.mubr.bf16.gmra.mrb[0].mxu0 %v5068
      %v5281 = vpop.f32.mrb[0].mxu0
      %v5282 = vadd.f32 0.0, %v5281
      %v5283 = vpop.f32.mrb[0].mxu0
      %v5284 = vpop.f32.mrb[0].mxu0
      %v5285 = vadd.f32 0.0, %v5284
      %v5286 = vpop.f32.mrb[0].mxu0
      %5287 = vmatprep.mubr.bf16.mxu0 0
      %5288 = vmatmul.mubr.bf16.gmra.mrb[0].mxu0 %v5071
      %v5289 = vpop.f32.mrb[0].mxu0
      %v5290 = vadd.f32 0.0, %v5289
      %v5291 = vpop.f32.mrb[0].mxu0
      %v5292 = vpop.f32.mrb[0].mxu0
      %v5293 = vadd.f32 0.0, %v5292
      %v5294 = vpop.f32.mrb[0].mxu0
      %5295 = vmatprep.mubr.bf16.mxu0 0
      %5296 = vmatmul.mubr.bf16.gmra.mrb[0].mxu0 %v5205
      %v5297 = vpop.f32.mrb[0].mxu0
      %v5298 = vadd.f32 0.0, %v5297
      %v5299 = vpop.f32.mrb[0].mxu0
      %v5300 = vpop.f32.mrb[0].mxu0
      %v5301 = vadd.f32 0.0, %v5300
      %v5302 = vpop.f32.mrb[0].mxu0
      %5303 = vdwg.mxu0
      %v5304 = vadd.f32 %v5108, %v5242
      %v5305 = vadd.f32 %v5111, %v5245
      %v5306 = vadd.f32 %v5116, %v5250
      %v5307 = vadd.f32 %v5119, %v5253
      %v5308 = vadd.f32 %v5124, %v5258
      %v5309 = vadd.f32 %v5127, %v5261
      %v5310 = vadd.f32 %v5132, %v5266
      %v5311 = vadd.f32 %v5135, %v5269
      %v5312 = vadd.f32 %v5140, %v5274
      %v5313 = vadd.f32 %v5143, %v5277
      %v5314 = vadd.f32 %v5148, %v5282
      %v5315 = vadd.f32 %v5151, %v5285
      %v5316 = vadd.f32 %v5156, %v5290
      %v5317 = vadd.f32 %v5159, %v5293
      %v5318 = vadd.f32 %v5164, %v5298
      %v5319 = vadd.f32 %v5167, %v5301
      %v5320 = vld [vmem:[%s16] sm:$0x1]
      %v5322 = vlaneseq
      %v5323 = vshrl.u32 %v5322, 7
      %v5324 = vsub.s32 0, %v5323
      %v5325 = vrot.slane %v5320, %v5324
      %v5327 = vadd.f32 %v5304, %v5325
      %v5328 = vadd.f32 %v5305, %v5325
      %v5329 = vadd.f32 %v5306, %v5325
      %v5330 = vadd.f32 %v5307, %v5325
      %v5331 = vadd.f32 %v5308, %v5325
      %v5332 = vadd.f32 %v5309, %v5325
      %v5333 = vadd.f32 %v5310, %v5325
      %v5334 = vadd.f32 %v5311, %v5325
      %v5335 = vadd.f32 %v5312, %v5325
      %v5336 = vadd.f32 %v5313, %v5325
      %v5337 = vadd.f32 %v5314, %v5325
      %v5338 = vadd.f32 %v5315, %v5325
      %v5339 = vadd.f32 %v5316, %v5325
      %v5340 = vadd.f32 %v5317, %v5325
      %v5341 = vadd.f32 %v5318, %v5325
      %v5342 = vadd.f32 %v5319, %v5325
      %v5343 = vmax.f32 %v5327, 0.0
      %v5344 = vmax.f32 %v5328, 0.0
      %v5345 = vmax.f32 %v5329, 0.0
      %v5346 = vmax.f32 %v5330, 0.0
      %v5347 = vmax.f32 %v5331, 0.0
      %v5348 = vmax.f32 %v5332, 0.0
      %v5349 = vmax.f32 %v5333, 0.0
      %v5350 = vmax.f32 %v5334, 0.0
      %v5351 = vmax.f32 %v5335, 0.0
      %v5352 = vmax.f32 %v5336, 0.0
      %v5353 = vmax.f32 %v5337, 0.0
      %v5354 = vmax.f32 %v5338, 0.0
      %v5355 = vmax.f32 %v5339, 0.0
      %v5356 = vmax.f32 %v5340, 0.0
      %v5357 = vmax.f32 %v5341, 0.0
      %v5358 = vmax.f32 %v5342, 0.0
      %5375 = vrot.lane.b32.xlu0 %v5343, 64
      %v5376 = vpop.permute.xlu0 %5375
      %5377 = vrot.lane.b32.xlu0 %v5344, 64
      %v5378 = vpop.permute.xlu0 %5377
      %5379 = vrot.lane.b32.xlu0 %v5345, 64
      %v5380 = vpop.permute.xlu0 %5379
      %5381 = vrot.lane.b32.xlu0 %v5346, 64
      %v5382 = vpop.permute.xlu0 %5381
      %5383 = vrot.lane.b32.xlu0 %v5347, 64
      %v5384 = vpop.permute.xlu0 %5383
      %5385 = vrot.lane.b32.xlu0 %v5348, 64
      %v5386 = vpop.permute.xlu0 %5385
      %5387 = vrot.lane.b32.xlu0 %v5349, 64
      %v5388 = vpop.permute.xlu0 %5387
      %5389 = vrot.lane.b32.xlu0 %v5350, 64
      %v5390 = vpop.permute.xlu0 %5389
      %5391 = vrot.lane.b32.xlu0 %v5351, 64
      %v5392 = vpop.permute.xlu0 %5391
      %5393 = vrot.lane.b32.xlu0 %v5352, 64
      %v5394 = vpop.permute.xlu0 %5393
      %5395 = vrot.lane.b32.xlu0 %v5353, 64
      %v5396 = vpop.permute.xlu0 %5395
      %5397 = vrot.lane.b32.xlu0 %v5354, 64
      %v5398 = vpop.permute.xlu0 %5397
      %5399 = vrot.lane.b32.xlu0 %v5355, 64
      %v5400 = vpop.permute.xlu0 %5399
      %5401 = vrot.lane.b32.xlu0 %v5356, 64
      %v5402 = vpop.permute.xlu0 %5401
      %5403 = vrot.lane.b32.xlu0 %v5357, 64
      %v5404 = vpop.permute.xlu0 %5403
      %5405 = vrot.lane.b32.xlu0 %v5358, 64
      %v5406 = vpop.permute.xlu0 %5405
      %v5423 = vmax.f32 %v5343, %v5376
      %v5424 = vmax.f32 %v5344, %v5378
      %v5425 = vmax.f32 %v5345, %v5380
      %v5426 = vmax.f32 %v5346, %v5382
      %v5427 = vmax.f32 %v5347, %v5384
      %v5428 = vmax.f32 %v5348, %v5386
      %v5429 = vmax.f32 %v5349, %v5388
      %v5430 = vmax.f32 %v5350, %v5390
      %v5431 = vmax.f32 %v5351, %v5392
      %v5432 = vmax.f32 %v5352, %v5394
      %v5433 = vmax.f32 %v5353, %v5396
      %v5434 = vmax.f32 %v5354, %v5398
      %v5435 = vmax.f32 %v5355, %v5400
      %v5436 = vmax.f32 %v5356, %v5402
      %v5437 = vmax.f32 %v5357, %v5404
      %v5438 = vmax.f32 %v5358, %v5406
      %v5439 = vpack.c.bf16 %v5424, %v5423
      %v5440 = vpack.c.bf16 %v5426, %v5425
      %v5441 = vpack.c.bf16 %v5428, %v5427
      %v5442 = vpack.c.bf16 %v5430, %v5429
      %v5443 = vpack.c.bf16 %v5432, %v5431
      %v5444 = vpack.c.bf16 %v5434, %v5433
      %v5445 = vpack.c.bf16 %v5436, %v5435
      %v5446 = vpack.c.bf16 %v5438, %v5437
      %v5448 = vrot.slane %v5439, 4
      %5449 = vrot.lane.b32.xlu0 %v5448, 64
      %v5450 = vpop.permute.xlu0 %5449
      %v5452 = vrot.slane %v5440, 4
      %5453 = vrot.lane.b32.xlu0 %v5452, 64
      %v5454 = vpop.permute.xlu0 %5453
      %v5456 = vrot.slane %v5441, 4
      %5457 = vrot.lane.b32.xlu0 %v5456, 64
      %v5458 = vpop.permute.xlu0 %5457
      %v5460 = vrot.slane %v5442, 4
      %5461 = vrot.lane.b32.xlu0 %v5460, 64
      %v5462 = vpop.permute.xlu0 %5461
      %v5464 = vrot.slane %v5443, 4
      %5465 = vrot.lane.b32.xlu0 %v5464, 64
      %v5466 = vpop.permute.xlu0 %5465
      %v5468 = vrot.slane %v5444, 4
      %5469 = vrot.lane.b32.xlu0 %v5468, 64
      %v5470 = vpop.permute.xlu0 %5469
      %v5472 = vrot.slane %v5445, 4
      %5473 = vrot.lane.b32.xlu0 %v5472, 64
      %v5474 = vpop.permute.xlu0 %5473
      %v5476 = vrot.slane %v5446, 4
      %5477 = vrot.lane.b32.xlu0 %v5476, 64
      %v5478 = vpop.permute.xlu0 %5477
      %v5481 = vsel %vm2614, %v5439, %v5450
      %v5485 = vsel %vm2614, %v5440, %v5454
      %v5489 = vsel %vm2614, %v5441, %v5458
      %v5493 = vsel %vm2614, %v5442, %v5462
      %v5497 = vsel %vm2614, %v5443, %v5466
      %v5501 = vsel %vm2614, %v5444, %v5470
      %v5505 = vsel %vm2614, %v5445, %v5474
      %v5509 = vsel %vm2614, %v5446, %v5478
      %v5511 = vld [vmem:[%s17] sm:$0xff]
      %v5512 = vld [vmem:[%s17 + $0x8] sm:$0xff]
      %v5513 = vld [vmem:[%s17 + $0x10] sm:$0xff]
      %v5514 = vld [vmem:[%s17 + $0x18] sm:$0xff]
      %v5515 = vld [vmem:[%s17 + $0x20] sm:$0xff]
      %v5516 = vld [vmem:[%s17 + $0x28] sm:$0xff]
      %v5517 = vld [vmem:[%s17 + $0x30] sm:$0xff]
      %v5518 = vld [vmem:[%s17 + $0x38] sm:$0xff]
      %v5519 = vld [vmem:[%s17 + $0x40] sm:$0xff]
      %v5520 = vld [vmem:[%s17 + $0x48] sm:$0xff]
      %v5521 = vld [vmem:[%s17 + $0x50] sm:$0xff]
      %v5522 = vld [vmem:[%s17 + $0x58] sm:$0xff]
      %v5523 = vld [vmem:[%s17 + $0x60] sm:$0xff]
      %v5524 = vld [vmem:[%s17 + $0x68] sm:$0xff]
      %v5525 = vld [vmem:[%s17 + $0x70] sm:$0xff]
      %v5526 = vld [vmem:[%s17 + $0x78] sm:$0xff]
      %v5527 = vld [vmem:[%s17 + $0x80] sm:$0xff]
      %v5528 = vld [vmem:[%s17 + $0x88] sm:$0xff]
      %v5529 = vld [vmem:[%s17 + $0x90] sm:$0xff]
      %v5530 = vld [vmem:[%s17 + $0x98] sm:$0xff]
      %v5531 = vld [vmem:[%s17 + $0xa0] sm:$0xff]
      %v5532 = vld [vmem:[%s17 + $0xa8] sm:$0xff]
      %v5533 = vld [vmem:[%s17 + $0xb0] sm:$0xff]
      %v5534 = vld [vmem:[%s17 + $0xb8] sm:$0xff]
      %v5535 = vld [vmem:[%s17 + $0xc0] sm:$0xff]
      %v5536 = vld [vmem:[%s17 + $0xc8] sm:$0xff]
      %v5537 = vld [vmem:[%s17 + $0xd0] sm:$0xff]
      %v5538 = vld [vmem:[%s17 + $0xd8] sm:$0xff]
      %v5539 = vld [vmem:[%s17 + $0xe0] sm:$0xff]
      %v5540 = vld [vmem:[%s17 + $0xe8] sm:$0xff]
      %v5541 = vld [vmem:[%s17 + $0xf0] sm:$0xff]
      %v5542 = vld [vmem:[%s17 + $0xf8] sm:$0xff]
      %v5543 = vld [vmem:[%s17 + $0x100] sm:$0xff]
      %v5544 = vld [vmem:[%s17 + $0x108] sm:$0xff]
      %v5545 = vld [vmem:[%s17 + $0x110] sm:$0xff]
      %v5546 = vld [vmem:[%s17 + $0x118] sm:$0xff]
      %v5547 = vld [vmem:[%s17 + $0x120] sm:$0xff]
      %v5548 = vld [vmem:[%s17 + $0x128] sm:$0xff]
      %v5549 = vld [vmem:[%s17 + $0x130] sm:$0xff]
      %v5550 = vld [vmem:[%s17 + $0x138] sm:$0xff]
      %v5551 = vld [vmem:[%s17 + $0x140] sm:$0xff]
      %v5552 = vld [vmem:[%s17 + $0x148] sm:$0xff]
      %v5553 = vld [vmem:[%s17 + $0x150] sm:$0xff]
      %v5554 = vld [vmem:[%s17 + $0x158] sm:$0xff]
      %v5555 = vld [vmem:[%s17 + $0x160] sm:$0xff]
      %v5556 = vld [vmem:[%s17 + $0x168] sm:$0xff]
      %v5557 = vld [vmem:[%s17 + $0x170] sm:$0xff]
      %v5558 = vld [vmem:[%s17 + $0x178] sm:$0xff]
      %v5559 = vld [vmem:[%s17 + $0x180] sm:$0xff]
      %v5560 = vld [vmem:[%s17 + $0x188] sm:$0xff]
      %v5561 = vld [vmem:[%s17 + $0x190] sm:$0xff]
      %v5562 = vld [vmem:[%s17 + $0x198] sm:$0xff]
      %v5563 = vld [vmem:[%s17 + $0x1a0] sm:$0xff]
      %v5564 = vld [vmem:[%s17 + $0x1a8] sm:$0xff]
      %v5565 = vld [vmem:[%s17 + $0x1b0] sm:$0xff]
      %v5566 = vld [vmem:[%s17 + $0x1b8] sm:$0xff]
      %v5567 = vld [vmem:[%s17 + $0x1c0] sm:$0xff]
      %v5568 = vld [vmem:[%s17 + $0x1c8] sm:$0xff]
      %v5569 = vld [vmem:[%s17 + $0x1d0] sm:$0xff]
      %v5570 = vld [vmem:[%s17 + $0x1d8] sm:$0xff]
      %v5571 = vld [vmem:[%s17 + $0x1e0] sm:$0xff]
      %v5572 = vld [vmem:[%s17 + $0x1e8] sm:$0xff]
      %v5573 = vld [vmem:[%s17 + $0x1f0] sm:$0xff]
      %v5574 = vld [vmem:[%s17 + $0x1f8] sm:$0xff]
      %v5575 = vld [vmem:[%s17 + $0x200] sm:$0xff]
      %v5576 = vld [vmem:[%s17 + $0x208] sm:$0xff]
      %v5577 = vld [vmem:[%s17 + $0x210] sm:$0xff]
      %v5578 = vld [vmem:[%s17 + $0x218] sm:$0xff]
      %v5579 = vld [vmem:[%s17 + $0x220] sm:$0xff]
      %v5580 = vld [vmem:[%s17 + $0x228] sm:$0xff]
      %v5581 = vld [vmem:[%s17 + $0x230] sm:$0xff]
      %v5582 = vld [vmem:[%s17 + $0x238] sm:$0xff]
      %v5583 = vld [vmem:[%s17 + $0x240] sm:$0xff]
      %v5584 = vld [vmem:[%s17 + $0x248] sm:$0xff]
      %v5585 = vld [vmem:[%s17 + $0x250] sm:$0xff]
      %v5586 = vld [vmem:[%s17 + $0x258] sm:$0xff]
      %v5587 = vld [vmem:[%s17 + $0x260] sm:$0xff]
      %v5588 = vld [vmem:[%s17 + $0x268] sm:$0xff]
      %v5589 = vld [vmem:[%s17 + $0x270] sm:$0xff]
      %v5590 = vld [vmem:[%s17 + $0x278] sm:$0xff]
      %v5591 = vld [vmem:[%s17 + $0x280] sm:$0xff]
      %v5592 = vld [vmem:[%s17 + $0x288] sm:$0xff]
      %v5593 = vld [vmem:[%s17 + $0x290] sm:$0xff]
      %v5594 = vld [vmem:[%s17 + $0x298] sm:$0xff]
      %v5595 = vld [vmem:[%s17 + $0x2a0] sm:$0xff]
      %v5596 = vld [vmem:[%s17 + $0x2a8] sm:$0xff]
      %v5597 = vld [vmem:[%s17 + $0x2b0] sm:$0xff]
      %v5598 = vld [vmem:[%s17 + $0x2b8] sm:$0xff]
      %v5599 = vld [vmem:[%s17 + $0x2c0] sm:$0xff]
      %v5600 = vld [vmem:[%s17 + $0x2c8] sm:$0xff]
      %v5601 = vld [vmem:[%s17 + $0x2d0] sm:$0xff]
      %v5602 = vld [vmem:[%s17 + $0x2d8] sm:$0xff]
      %v5603 = vld [vmem:[%s17 + $0x2e0] sm:$0xff]
      %v5604 = vld [vmem:[%s17 + $0x2e8] sm:$0xff]
      %v5605 = vld [vmem:[%s17 + $0x2f0] sm:$0xff]
      %v5606 = vld [vmem:[%s17 + $0x2f8] sm:$0xff]
      %v5607 = vld [vmem:[%s17 + $0x300] sm:$0xff]
      %v5608 = vld [vmem:[%s17 + $0x308] sm:$0xff]
      %v5609 = vld [vmem:[%s17 + $0x310] sm:$0xff]
      %v5610 = vld [vmem:[%s17 + $0x318] sm:$0xff]
      %v5611 = vld [vmem:[%s17 + $0x320] sm:$0xff]
      %v5612 = vld [vmem:[%s17 + $0x328] sm:$0xff]
      %v5613 = vld [vmem:[%s17 + $0x330] sm:$0xff]
      %v5614 = vld [vmem:[%s17 + $0x338] sm:$0xff]
      %v5615 = vld [vmem:[%s17 + $0x340] sm:$0xff]
      %v5616 = vld [vmem:[%s17 + $0x348] sm:$0xff]
      %v5617 = vld [vmem:[%s17 + $0x350] sm:$0xff]
      %v5618 = vld [vmem:[%s17 + $0x358] sm:$0xff]
      %v5619 = vld [vmem:[%s17 + $0x360] sm:$0xff]
      %v5620 = vld [vmem:[%s17 + $0x368] sm:$0xff]
      %v5621 = vld [vmem:[%s17 + $0x370] sm:$0xff]
      %v5622 = vld [vmem:[%s17 + $0x378] sm:$0xff]
      %v5623 = vld [vmem:[%s17 + $0x380] sm:$0xff]
      %v5624 = vld [vmem:[%s17 + $0x388] sm:$0xff]
      %v5625 = vld [vmem:[%s17 + $0x390] sm:$0xff]
      %v5626 = vld [vmem:[%s17 + $0x398] sm:$0xff]
      %v5627 = vld [vmem:[%s17 + $0x3a0] sm:$0xff]
      %v5628 = vld [vmem:[%s17 + $0x3a8] sm:$0xff]
      %v5629 = vld [vmem:[%s17 + $0x3b0] sm:$0xff]
      %v5630 = vld [vmem:[%s17 + $0x3b8] sm:$0xff]
      %v5631 = vld [vmem:[%s17 + $0x3c0] sm:$0xff]
      %v5632 = vld [vmem:[%s17 + $0x3c8] sm:$0xff]
      %v5633 = vld [vmem:[%s17 + $0x3d0] sm:$0xff]
      %v5634 = vld [vmem:[%s17 + $0x3d8] sm:$0xff]
      %v5635 = vld [vmem:[%s17 + $0x3e0] sm:$0xff]
      %v5636 = vld [vmem:[%s17 + $0x3e8] sm:$0xff]
      %v5637 = vld [vmem:[%s17 + $0x3f0] sm:$0xff]
      %v5638 = vld [vmem:[%s17 + $0x3f8] sm:$0xff]
      %v5639 = vld [vmem:[%s18] sm:$0x3]
      %v5641 = vlaneseq
      %v5642 = vshrl.u32 %v5641, 7
      %v5643 = vsub.s32 0, %v5642
      %v5644 = vrot.slane %v5639, %v5643
      %v5645 = vlaneseq
      %v5646 = vshrl.u32 %v5645, 7
      %v5647 = vsub.s32 1, %v5646
      %v5648 = vrot.slane %v5639, %v5647
      %v5779 = vunpack.c.l.b16 %v5511
      %v5780 = vunpack.c.h.b16 %v5511
      %v5781 = vunpack.c.l.b16 %v5512
      %v5782 = vunpack.c.h.b16 %v5512
      %v5783 = vunpack.c.l.b16 %v5513
      %v5784 = vunpack.c.h.b16 %v5513
      %v5785 = vunpack.c.l.b16 %v5514
      %v5786 = vunpack.c.h.b16 %v5514
      %v5787 = vunpack.c.l.b16 %v5515
      %v5788 = vunpack.c.h.b16 %v5515
      %v5789 = vunpack.c.l.b16 %v5516
      %v5790 = vunpack.c.h.b16 %v5516
      %v5791 = vunpack.c.l.b16 %v5517
      %v5792 = vunpack.c.h.b16 %v5517
      %v5793 = vunpack.c.l.b16 %v5518
      %v5794 = vunpack.c.h.b16 %v5518
      %v5795 = vunpack.c.l.b16 %v5519
      %v5796 = vunpack.c.h.b16 %v5519
      %v5797 = vunpack.c.l.b16 %v5520
      %v5798 = vunpack.c.h.b16 %v5520
      %v5799 = vunpack.c.l.b16 %v5521
      %v5800 = vunpack.c.h.b16 %v5521
      %v5801 = vunpack.c.l.b16 %v5522
      %v5802 = vunpack.c.h.b16 %v5522
      %v5803 = vunpack.c.l.b16 %v5523
      %v5804 = vunpack.c.h.b16 %v5523
      %v5805 = vunpack.c.l.b16 %v5524
      %v5806 = vunpack.c.h.b16 %v5524
      %v5807 = vunpack.c.l.b16 %v5525
      %v5808 = vunpack.c.h.b16 %v5525
      %v5809 = vunpack.c.l.b16 %v5526
      %v5810 = vunpack.c.h.b16 %v5526
      %v5811 = vunpack.c.l.b16 %v5527
      %v5812 = vunpack.c.h.b16 %v5527
      %v5813 = vunpack.c.l.b16 %v5528
      %v5814 = vunpack.c.h.b16 %v5528
      %v5815 = vunpack.c.l.b16 %v5529
      %v5816 = vunpack.c.h.b16 %v5529
      %v5817 = vunpack.c.l.b16 %v5530
      %v5818 = vunpack.c.h.b16 %v5530
      %v5819 = vunpack.c.l.b16 %v5531
      %v5820 = vunpack.c.h.b16 %v5531
      %v5821 = vunpack.c.l.b16 %v5532
      %v5822 = vunpack.c.h.b16 %v5532
      %v5823 = vunpack.c.l.b16 %v5533
      %v5824 = vunpack.c.h.b16 %v5533
      %v5825 = vunpack.c.l.b16 %v5534
      %v5826 = vunpack.c.h.b16 %v5534
      %v5827 = vunpack.c.l.b16 %v5535
      %v5828 = vunpack.c.h.b16 %v5535
      %v5829 = vunpack.c.l.b16 %v5536
      %v5830 = vunpack.c.h.b16 %v5536
      %v5831 = vunpack.c.l.b16 %v5537
      %v5832 = vunpack.c.h.b16 %v5537
      %v5833 = vunpack.c.l.b16 %v5538
      %v5834 = vunpack.c.h.b16 %v5538
      %v5835 = vunpack.c.l.b16 %v5539
      %v5836 = vunpack.c.h.b16 %v5539
      %v5837 = vunpack.c.l.b16 %v5540
      %v5838 = vunpack.c.h.b16 %v5540
      %v5839 = vunpack.c.l.b16 %v5541
      %v5840 = vunpack.c.h.b16 %v5541
      %v5841 = vunpack.c.l.b16 %v5542
      %v5842 = vunpack.c.h.b16 %v5542
      %v5843 = vunpack.c.l.b16 %v5543
      %v5844 = vunpack.c.h.b16 %v5543
      %v5845 = vunpack.c.l.b16 %v5544
      %v5846 = vunpack.c.h.b16 %v5544
      %v5847 = vunpack.c.l.b16 %v5545
      %v5848 = vunpack.c.h.b16 %v5545
      %v5849 = vunpack.c.l.b16 %v5546
      %v5850 = vunpack.c.h.b16 %v5546
      %v5851 = vunpack.c.l.b16 %v5547
      %v5852 = vunpack.c.h.b16 %v5547
      %v5853 = vunpack.c.l.b16 %v5548
      %v5854 = vunpack.c.h.b16 %v5548
      %v5855 = vunpack.c.l.b16 %v5549
      %v5856 = vunpack.c.h.b16 %v5549
      %v5857 = vunpack.c.l.b16 %v5550
      %v5858 = vunpack.c.h.b16 %v5550
      %v5859 = vunpack.c.l.b16 %v5551
      %v5860 = vunpack.c.h.b16 %v5551
      %v5861 = vunpack.c.l.b16 %v5552
      %v5862 = vunpack.c.h.b16 %v5552
      %v5863 = vunpack.c.l.b16 %v5553
      %v5864 = vunpack.c.h.b16 %v5553
      %v5865 = vunpack.c.l.b16 %v5554
      %v5866 = vunpack.c.h.b16 %v5554
      %v5867 = vunpack.c.l.b16 %v5555
      %v5868 = vunpack.c.h.b16 %v5555
      %v5869 = vunpack.c.l.b16 %v5556
      %v5870 = vunpack.c.h.b16 %v5556
      %v5871 = vunpack.c.l.b16 %v5557
      %v5872 = vunpack.c.h.b16 %v5557
      %v5873 = vunpack.c.l.b16 %v5558
      %v5874 = vunpack.c.h.b16 %v5558
      %v5875 = vunpack.c.l.b16 %v5559
      %v5876 = vunpack.c.h.b16 %v5559
      %v5877 = vunpack.c.l.b16 %v5560
      %v5878 = vunpack.c.h.b16 %v5560
      %v5879 = vunpack.c.l.b16 %v5561
      %v5880 = vunpack.c.h.b16 %v5561
      %v5881 = vunpack.c.l.b16 %v5562
      %v5882 = vunpack.c.h.b16 %v5562
      %v5883 = vunpack.c.l.b16 %v5563
      %v5884 = vunpack.c.h.b16 %v5563
      %v5885 = vunpack.c.l.b16 %v5564
      %v5886 = vunpack.c.h.b16 %v5564
      %v5887 = vunpack.c.l.b16 %v5565
      %v5888 = vunpack.c.h.b16 %v5565
      %v5889 = vunpack.c.l.b16 %v5566
      %v5890 = vunpack.c.h.b16 %v5566
      %v5891 = vunpack.c.l.b16 %v5567
      %v5892 = vunpack.c.h.b16 %v5567
      %v5893 = vunpack.c.l.b16 %v5568
      %v5894 = vunpack.c.h.b16 %v5568
      %v5895 = vunpack.c.l.b16 %v5569
      %v5896 = vunpack.c.h.b16 %v5569
      %v5897 = vunpack.c.l.b16 %v5570
      %v5898 = vunpack.c.h.b16 %v5570
      %v5899 = vunpack.c.l.b16 %v5571
      %v5900 = vunpack.c.h.b16 %v5571
      %v5901 = vunpack.c.l.b16 %v5572
      %v5902 = vunpack.c.h.b16 %v5572
      %v5903 = vunpack.c.l.b16 %v5573
      %v5904 = vunpack.c.h.b16 %v5573
      %v5905 = vunpack.c.l.b16 %v5574
      %v5906 = vunpack.c.h.b16 %v5574
      %v5907 = vunpack.c.l.b16 %v5575
      %v5908 = vunpack.c.h.b16 %v5575
      %v5909 = vunpack.c.l.b16 %v5576
      %v5910 = vunpack.c.h.b16 %v5576
      %v5911 = vunpack.c.l.b16 %v5577
      %v5912 = vunpack.c.h.b16 %v5577
      %v5913 = vunpack.c.l.b16 %v5578
      %v5914 = vunpack.c.h.b16 %v5578
      %v5915 = vunpack.c.l.b16 %v5579
      %v5916 = vunpack.c.h.b16 %v5579
      %v5917 = vunpack.c.l.b16 %v5580
      %v5918 = vunpack.c.h.b16 %v5580
      %v5919 = vunpack.c.l.b16 %v5581
      %v5920 = vunpack.c.h.b16 %v5581
      %v5921 = vunpack.c.l.b16 %v5582
      %v5922 = vunpack.c.h.b16 %v5582
      %v5923 = vunpack.c.l.b16 %v5583
      %v5924 = vunpack.c.h.b16 %v5583
      %v5925 = vunpack.c.l.b16 %v5584
      %v5926 = vunpack.c.h.b16 %v5584
      %v5927 = vunpack.c.l.b16 %v5585
      %v5928 = vunpack.c.h.b16 %v5585
      %v5929 = vunpack.c.l.b16 %v5586
      %v5930 = vunpack.c.h.b16 %v5586
      %v5931 = vunpack.c.l.b16 %v5587
      %v5932 = vunpack.c.h.b16 %v5587
      %v5933 = vunpack.c.l.b16 %v5588
      %v5934 = vunpack.c.h.b16 %v5588
      %v5935 = vunpack.c.l.b16 %v5589
      %v5936 = vunpack.c.h.b16 %v5589
      %v5937 = vunpack.c.l.b16 %v5590
      %v5938 = vunpack.c.h.b16 %v5590
      %v5939 = vunpack.c.l.b16 %v5591
      %v5940 = vunpack.c.h.b16 %v5591
      %v5941 = vunpack.c.l.b16 %v5592
      %v5942 = vunpack.c.h.b16 %v5592
      %v5943 = vunpack.c.l.b16 %v5593
      %v5944 = vunpack.c.h.b16 %v5593
      %v5945 = vunpack.c.l.b16 %v5594
      %v5946 = vunpack.c.h.b16 %v5594
      %v5947 = vunpack.c.l.b16 %v5595
      %v5948 = vunpack.c.h.b16 %v5595
      %v5949 = vunpack.c.l.b16 %v5596
      %v5950 = vunpack.c.h.b16 %v5596
      %v5951 = vunpack.c.l.b16 %v5597
      %v5952 = vunpack.c.h.b16 %v5597
      %v5953 = vunpack.c.l.b16 %v5598
      %v5954 = vunpack.c.h.b16 %v5598
      %v5955 = vunpack.c.l.b16 %v5599
      %v5956 = vunpack.c.h.b16 %v5599
      %v5957 = vunpack.c.l.b16 %v5600
      %v5958 = vunpack.c.h.b16 %v5600
      %v5959 = vunpack.c.l.b16 %v5601
      %v5960 = vunpack.c.h.b16 %v5601
      %v5961 = vunpack.c.l.b16 %v5602
      %v5962 = vunpack.c.h.b16 %v5602
      %v5963 = vunpack.c.l.b16 %v5603
      %v5964 = vunpack.c.h.b16 %v5603
      %v5965 = vunpack.c.l.b16 %v5604
      %v5966 = vunpack.c.h.b16 %v5604
      %v5967 = vunpack.c.l.b16 %v5605
      %v5968 = vunpack.c.h.b16 %v5605
      %v5969 = vunpack.c.l.b16 %v5606
      %v5970 = vunpack.c.h.b16 %v5606
      %v5971 = vunpack.c.l.b16 %v5607
      %v5972 = vunpack.c.h.b16 %v5607
      %v5973 = vunpack.c.l.b16 %v5608
      %v5974 = vunpack.c.h.b16 %v5608
      %v5975 = vunpack.c.l.b16 %v5609
      %v5976 = vunpack.c.h.b16 %v5609
      %v5977 = vunpack.c.l.b16 %v5610
      %v5978 = vunpack.c.h.b16 %v5610
      %v5979 = vunpack.c.l.b16 %v5611
      %v5980 = vunpack.c.h.b16 %v5611
      %v5981 = vunpack.c.l.b16 %v5612
      %v5982 = vunpack.c.h.b16 %v5612
      %v5983 = vunpack.c.l.b16 %v5613
      %v5984 = vunpack.c.h.b16 %v5613
      %v5985 = vunpack.c.l.b16 %v5614
      %v5986 = vunpack.c.h.b16 %v5614
      %v5987 = vunpack.c.l.b16 %v5615
      %v5988 = vunpack.c.h.b16 %v5615
      %v5989 = vunpack.c.l.b16 %v5616
      %v5990 = vunpack.c.h.b16 %v5616
      %v5991 = vunpack.c.l.b16 %v5617
      %v5992 = vunpack.c.h.b16 %v5617
      %v5993 = vunpack.c.l.b16 %v5618
      %v5994 = vunpack.c.h.b16 %v5618
      %v5995 = vunpack.c.l.b16 %v5619
      %v5996 = vunpack.c.h.b16 %v5619
      %v5997 = vunpack.c.l.b16 %v5620
      %v5998 = vunpack.c.h.b16 %v5620
      %v5999 = vunpack.c.l.b16 %v5621
      %v6000 = vunpack.c.h.b16 %v5621
      %v6001 = vunpack.c.l.b16 %v5622
      %v6002 = vunpack.c.h.b16 %v5622
      %v6003 = vunpack.c.l.b16 %v5623
      %v6004 = vunpack.c.h.b16 %v5623
      %v6005 = vunpack.c.l.b16 %v5624
      %v6006 = vunpack.c.h.b16 %v5624
      %v6007 = vunpack.c.l.b16 %v5625
      %v6008 = vunpack.c.h.b16 %v5625
      %v6009 = vunpack.c.l.b16 %v5626
      %v6010 = vunpack.c.h.b16 %v5626
      %v6011 = vunpack.c.l.b16 %v5627
      %v6012 = vunpack.c.h.b16 %v5627
      %v6013 = vunpack.c.l.b16 %v5628
      %v6014 = vunpack.c.h.b16 %v5628
      %v6015 = vunpack.c.l.b16 %v5629
      %v6016 = vunpack.c.h.b16 %v5629
      %v6017 = vunpack.c.l.b16 %v5630
      %v6018 = vunpack.c.h.b16 %v5630
      %v6019 = vunpack.c.l.b16 %v5631
      %v6020 = vunpack.c.h.b16 %v5631
      %v6021 = vunpack.c.l.b16 %v5632
      %v6022 = vunpack.c.h.b16 %v5632
      %v6023 = vunpack.c.l.b16 %v5633
      %v6024 = vunpack.c.h.b16 %v5633
      %v6025 = vunpack.c.l.b16 %v5634
      %v6026 = vunpack.c.h.b16 %v5634
      %v6027 = vunpack.c.l.b16 %v5635
      %v6028 = vunpack.c.h.b16 %v5635
      %v6029 = vunpack.c.l.b16 %v5636
      %v6030 = vunpack.c.h.b16 %v5636
      %v6031 = vunpack.c.l.b16 %v5637
      %v6032 = vunpack.c.h.b16 %v5637
      %v6033 = vunpack.c.l.b16 %v5638
      %v6034 = vunpack.c.h.b16 %v5638
      %v6035 = vpack.c.b16 %v5781, %v5779
      %v6036 = vpack.c.b16 %v5782, %v5780
      %v6037 = vpack.c.b16 %v5785, %v5783
      %v6038 = vpack.c.b16 %v5786, %v5784
      %v6039 = vpack.c.b16 %v5789, %v5787
      %v6040 = vpack.c.b16 %v5790, %v5788
      %v6041 = vpack.c.b16 %v5793, %v5791
      %v6042 = vpack.c.b16 %v5794, %v5792
      %v6043 = vpack.c.b16 %v5797, %v5795
      %v6044 = vpack.c.b16 %v5798, %v5796
      %v6045 = vpack.c.b16 %v5801, %v5799
      %v6046 = vpack.c.b16 %v5802, %v5800
      %v6047 = vpack.c.b16 %v5805, %v5803
      %v6048 = vpack.c.b16 %v5806, %v5804
      %v6049 = vpack.c.b16 %v5809, %v5807
      %v6050 = vpack.c.b16 %v5810, %v5808
      %v6051 = vpack.c.b16 %v5813, %v5811
      %v6052 = vpack.c.b16 %v5814, %v5812
      %v6053 = vpack.c.b16 %v5817, %v5815
      %v6054 = vpack.c.b16 %v5818, %v5816
      %v6055 = vpack.c.b16 %v5821, %v5819
      %v6056 = vpack.c.b16 %v5822, %v5820
      %v6057 = vpack.c.b16 %v5825, %v5823
      %v6058 = vpack.c.b16 %v5826, %v5824
      %v6059 = vpack.c.b16 %v5829, %v5827
      %v6060 = vpack.c.b16 %v5830, %v5828
      %v6061 = vpack.c.b16 %v5833, %v5831
      %v6062 = vpack.c.b16 %v5834, %v5832
      %v6063 = vpack.c.b16 %v5837, %v5835
      %v6064 = vpack.c.b16 %v5838, %v5836
      %v6065 = vpack.c.b16 %v5841, %v5839
      %v6066 = vpack.c.b16 %v5842, %v5840
      %v6067 = vpack.c.b16 %v5845, %v5843
      %v6068 = vpack.c.b16 %v5846, %v5844
      %v6069 = vpack.c.b16 %v5849, %v5847
      %v6070 = vpack.c.b16 %v5850, %v5848
      %v6071 = vpack.c.b16 %v5853, %v5851
      %v6072 = vpack.c.b16 %v5854, %v5852
      %v6073 = vpack.c.b16 %v5857, %v5855
      %v6074 = vpack.c.b16 %v5858, %v5856
      %v6075 = vpack.c.b16 %v5861, %v5859
      %v6076 = vpack.c.b16 %v5862, %v5860
      %v6077 = vpack.c.b16 %v5865, %v5863
      %v6078 = vpack.c.b16 %v5866, %v5864
      %v6079 = vpack.c.b16 %v5869, %v5867
      %v6080 = vpack.c.b16 %v5870, %v5868
      %v6081 = vpack.c.b16 %v5873, %v5871
      %v6082 = vpack.c.b16 %v5874, %v5872
      %v6083 = vpack.c.b16 %v5877, %v5875
      %v6084 = vpack.c.b16 %v5878, %v5876
      %v6085 = vpack.c.b16 %v5881, %v5879
      %v6086 = vpack.c.b16 %v5882, %v5880
      %v6087 = vpack.c.b16 %v5885, %v5883
      %v6088 = vpack.c.b16 %v5886, %v5884
      %v6089 = vpack.c.b16 %v5889, %v5887
      %v6090 = vpack.c.b16 %v5890, %v5888
      %v6091 = vpack.c.b16 %v5893, %v5891
      %v6092 = vpack.c.b16 %v5894, %v5892
      %v6093 = vpack.c.b16 %v5897, %v5895
      %v6094 = vpack.c.b16 %v5898, %v5896
      %v6095 = vpack.c.b16 %v5901, %v5899
      %v6096 = vpack.c.b16 %v5902, %v5900
      %v6097 = vpack.c.b16 %v5905, %v5903
      %v6098 = vpack.c.b16 %v5906, %v5904
      %v6099 = vpack.c.b16 %v5909, %v5907
      %v6100 = vpack.c.b16 %v5910, %v5908
      %v6101 = vpack.c.b16 %v5913, %v5911
      %v6102 = vpack.c.b16 %v5914, %v5912
      %v6103 = vpack.c.b16 %v5917, %v5915
      %v6104 = vpack.c.b16 %v5918, %v5916
      %v6105 = vpack.c.b16 %v5921, %v5919
      %v6106 = vpack.c.b16 %v5922, %v5920
      %v6107 = vpack.c.b16 %v5925, %v5923
      %v6108 = vpack.c.b16 %v5926, %v5924
      %v6109 = vpack.c.b16 %v5929, %v5927
      %v6110 = vpack.c.b16 %v5930, %v5928
      %v6111 = vpack.c.b16 %v5933, %v5931
      %v6112 = vpack.c.b16 %v5934, %v5932
      %v6113 = vpack.c.b16 %v5937, %v5935
      %v6114 = vpack.c.b16 %v5938, %v5936
      %v6115 = vpack.c.b16 %v5941, %v5939
      %v6116 = vpack.c.b16 %v5942, %v5940
      %v6117 = vpack.c.b16 %v5945, %v5943
      %v6118 = vpack.c.b16 %v5946, %v5944
      %v6119 = vpack.c.b16 %v5949, %v5947
      %v6120 = vpack.c.b16 %v5950, %v5948
      %v6121 = vpack.c.b16 %v5953, %v5951
      %v6122 = vpack.c.b16 %v5954, %v5952
      %v6123 = vpack.c.b16 %v5957, %v5955
      %v6124 = vpack.c.b16 %v5958, %v5956
      %v6125 = vpack.c.b16 %v5961, %v5959
      %v6126 = vpack.c.b16 %v5962, %v5960
      %v6127 = vpack.c.b16 %v5965, %v5963
      %v6128 = vpack.c.b16 %v5966, %v5964
      %v6129 = vpack.c.b16 %v5969, %v5967
      %v6130 = vpack.c.b16 %v5970, %v5968
      %v6131 = vpack.c.b16 %v5973, %v5971
      %v6132 = vpack.c.b16 %v5974, %v5972
      %v6133 = vpack.c.b16 %v5977, %v5975
      %v6134 = vpack.c.b16 %v5978, %v5976
      %v6135 = vpack.c.b16 %v5981, %v5979
      %v6136 = vpack.c.b16 %v5982, %v5980
      %v6137 = vpack.c.b16 %v5985, %v5983
      %v6138 = vpack.c.b16 %v5986, %v5984
      %v6139 = vpack.c.b16 %v5989, %v5987
      %v6140 = vpack.c.b16 %v5990, %v5988
      %v6141 = vpack.c.b16 %v5993, %v5991
      %v6142 = vpack.c.b16 %v5994, %v5992
      %v6143 = vpack.c.b16 %v5997, %v5995
      %v6144 = vpack.c.b16 %v5998, %v5996
      %v6145 = vpack.c.b16 %v6001, %v5999
      %v6146 = vpack.c.b16 %v6002, %v6000
      %v6147 = vpack.c.b16 %v6005, %v6003
      %v6148 = vpack.c.b16 %v6006, %v6004
      %v6149 = vpack.c.b16 %v6009, %v6007
      %v6150 = vpack.c.b16 %v6010, %v6008
      %v6151 = vpack.c.b16 %v6013, %v6011
      %v6152 = vpack.c.b16 %v6014, %v6012
      %v6153 = vpack.c.b16 %v6017, %v6015
      %v6154 = vpack.c.b16 %v6018, %v6016
      %v6155 = vpack.c.b16 %v6021, %v6019
      %v6156 = vpack.c.b16 %v6022, %v6020
      %v6157 = vpack.c.b16 %v6025, %v6023
      %v6158 = vpack.c.b16 %v6026, %v6024
      %v6159 = vpack.c.b16 %v6029, %v6027
      %v6160 = vpack.c.b16 %v6030, %v6028
      %v6161 = vpack.c.b16 %v6033, %v6031
      %v6162 = vpack.c.b16 %v6034, %v6032
      %6291 = vmatprep.subr.bf16.mxu0 %v6036
      %6292 = vmatpush1.bf16.msra.mxu0 %v6035
      %6293 = vmatprep.subr.bf16.mxu0 %v6038
      %6294 = vmatpush1.bf16.msra.mxu0 %v6037
      %6295 = vmatprep.subr.bf16.mxu0 %v6040
      %6296 = vmatpush1.bf16.msra.mxu0 %v6039
      %6297 = vmatprep.subr.bf16.mxu0 %v6042
      %6298 = vmatpush1.bf16.msra.mxu0 %v6041
      %6299 = vmatprep.subr.bf16.mxu0 %v6044
      %6300 = vmatpush1.bf16.msra.mxu0 %v6043
      %6301 = vmatprep.subr.bf16.mxu0 %v6046
      %6302 = vmatpush1.bf16.msra.mxu0 %v6045
      %6303 = vmatprep.subr.bf16.mxu0 %v6048
      %6304 = vmatpush1.bf16.msra.mxu0 %v6047
      %6305 = vmatprep.subr.bf16.mxu0 %v6050
      %6306 = vmatpush1.bf16.msra.mxu0 %v6049
      %6307 = vmatprep.subr.bf16.mxu0 %v6052
      %6308 = vmatpush1.bf16.msra.mxu0 %v6051
      %6309 = vmatprep.subr.bf16.mxu0 %v6054
      %6310 = vmatpush1.bf16.msra.mxu0 %v6053
      %6311 = vmatprep.subr.bf16.mxu0 %v6056
      %6312 = vmatpush1.bf16.msra.mxu0 %v6055
      %6313 = vmatprep.subr.bf16.mxu0 %v6058
      %6314 = vmatpush1.bf16.msra.mxu0 %v6057
      %6315 = vmatprep.subr.bf16.mxu0 %v6060
      %6316 = vmatpush1.bf16.msra.mxu0 %v6059
      %6317 = vmatprep.subr.bf16.mxu0 %v6062
      %6318 = vmatpush1.bf16.msra.mxu0 %v6061
      %6319 = vmatprep.subr.bf16.mxu0 %v6064
      %6320 = vmatpush1.bf16.msra.mxu0 %v6063
      %6321 = vmatprep.subr.bf16.mxu0 %v6066
      %6322 = vmatpush1.bf16.msra.mxu0 %v6065
      %6323 = vmatprep.mubr.bf16.mxu0 %v5485
      %6324 = vmatmul.mubr.bf16.gmra.mrb[0].mxu0 %v5481
      %v6325 = vpop.f32.mrb[0].mxu0
      %v6326 = vadd.f32 %v5644, %v6325
      %v6327 = vpop.f32.mrb[0].mxu0
      %v6328 = vadd.f32 %v5648, %v6327
      %v6329 = vpop.f32.mrb[0].mxu0
      %v6330 = vpop.f32.mrb[0].mxu0
      %6331 = vdwg.mxu0
      %6332 = vmatprep.subr.bf16.mxu0 %v6068
      %6333 = vmatpush1.bf16.msra.mxu0 %v6067
      %6334 = vmatprep.subr.bf16.mxu0 %v6070
      %6335 = vmatpush1.bf16.msra.mxu0 %v6069
      %6336 = vmatprep.subr.bf16.mxu0 %v6072
      %6337 = vmatpush1.bf16.msra.mxu0 %v6071
      %6338 = vmatprep.subr.bf16.mxu0 %v6074
      %6339 = vmatpush1.bf16.msra.mxu0 %v6073
      %6340 = vmatprep.subr.bf16.mxu0 %v6076
      %6341 = vmatpush1.bf16.msra.mxu0 %v6075
      %6342 = vmatprep.subr.bf16.mxu0 %v6078
      %6343 = vmatpush1.bf16.msra.mxu0 %v6077
      %6344 = vmatprep.subr.bf16.mxu0 %v6080
      %6345 = vmatpush1.bf16.msra.mxu0 %v6079
      %6346 = vmatprep.subr.bf16.mxu0 %v6082
      %6347 = vmatpush1.bf16.msra.mxu0 %v6081
      %6348 = vmatprep.subr.bf16.mxu0 %v6084
      %6349 = vmatpush1.bf16.msra.mxu0 %v6083
      %6350 = vmatprep.subr.bf16.mxu0 %v6086
      %6351 = vmatpush1.bf16.msra.mxu0 %v6085
      %6352 = vmatprep.subr.bf16.mxu0 %v6088
      %6353 = vmatpush1.bf16.msra.mxu0 %v6087
      %6354 = vmatprep.subr.bf16.mxu0 %v6090
      %6355 = vmatpush1.bf16.msra.mxu0 %v6089
      %6356 = vmatprep.subr.bf16.mxu0 %v6092
      %6357 = vmatpush1.bf16.msra.mxu0 %v6091
      %6358 = vmatprep.subr.bf16.mxu0 %v6094
      %6359 = vmatpush1.bf16.msra.mxu0 %v6093
      %6360 = vmatprep.subr.bf16.mxu0 %v6096
      %6361 = vmatpush1.bf16.msra.mxu0 %v6095
      %6362 = vmatprep.subr.bf16.mxu0 %v6098
      %6363 = vmatpush1.bf16.msra.mxu0 %v6097
      %6364 = vmatprep.mubr.bf16.mxu0 %v5493
      %6365 = vmatmul.mubr.bf16.gmra.mrb[0].mxu0 %v5489
      %v6366 = vpop.f32.mrb[0].mxu0
      %v6367 = vadd.f32 %v6326, %v6366
      %v6368 = vpop.f32.mrb[0].mxu0
      %v6369 = vadd.f32 %v6328, %v6368
      %v6370 = vpop.f32.mrb[0].mxu0
      %v6371 = vpop.f32.mrb[0].mxu0
      %6372 = vdwg.mxu0
      %6373 = vmatprep.subr.bf16.mxu0 %v6100
      %6374 = vmatpush1.bf16.msra.mxu0 %v6099
      %6375 = vmatprep.subr.bf16.mxu0 %v6102
      %6376 = vmatpush1.bf16.msra.mxu0 %v6101
      %6377 = vmatprep.subr.bf16.mxu0 %v6104
      %6378 = vmatpush1.bf16.msra.mxu0 %v6103
      %6379 = vmatprep.subr.bf16.mxu0 %v6106
      %6380 = vmatpush1.bf16.msra.mxu0 %v6105
      %6381 = vmatprep.subr.bf16.mxu0 %v6108
      %6382 = vmatpush1.bf16.msra.mxu0 %v6107
      %6383 = vmatprep.subr.bf16.mxu0 %v6110
      %6384 = vmatpush1.bf16.msra.mxu0 %v6109
      %6385 = vmatprep.subr.bf16.mxu0 %v6112
      %6386 = vmatpush1.bf16.msra.mxu0 %v6111
      %6387 = vmatprep.subr.bf16.mxu0 %v6114
      %6388 = vmatpush1.bf16.msra.mxu0 %v6113
      %6389 = vmatprep.subr.bf16.mxu0 %v6116
      %6390 = vmatpush1.bf16.msra.mxu0 %v6115
      %6391 = vmatprep.subr.bf16.mxu0 %v6118
      %6392 = vmatpush1.bf16.msra.mxu0 %v6117
      %6393 = vmatprep.subr.bf16.mxu0 %v6120
      %6394 = vmatpush1.bf16.msra.mxu0 %v6119
      %6395 = vmatprep.subr.bf16.mxu0 %v6122
      %6396 = vmatpush1.bf16.msra.mxu0 %v6121
      %6397 = vmatprep.subr.bf16.mxu0 %v6124
      %6398 = vmatpush1.bf16.msra.mxu0 %v6123
      %6399 = vmatprep.subr.bf16.mxu0 %v6126
      %6400 = vmatpush1.bf16.msra.mxu0 %v6125
      %6401 = vmatprep.subr.bf16.mxu0 %v6128
      %6402 = vmatpush1.bf16.msra.mxu0 %v6127
      %6403 = vmatprep.subr.bf16.mxu0 %v6130
      %6404 = vmatpush1.bf16.msra.mxu0 %v6129
      %6405 = vmatprep.mubr.bf16.mxu0 %v5501
      %6406 = vmatmul.mubr.bf16.gmra.mrb[0].mxu0 %v5497
      %v6407 = vpop.f32.mrb[0].mxu0
      %v6408 = vadd.f32 %v6367, %v6407
      %v6409 = vpop.f32.mrb[0].mxu0
      %v6410 = vadd.f32 %v6369, %v6409
      %v6411 = vpop.f32.mrb[0].mxu0
      %v6412 = vpop.f32.mrb[0].mxu0
      %6413 = vdwg.mxu0
      %6414 = vmatprep.subr.bf16.mxu0 %v6132
      %6415 = vmatpush1.bf16.msra.mxu0 %v6131
      %6416 = vmatprep.subr.bf16.mxu0 %v6134
      %6417 = vmatpush1.bf16.msra.mxu0 %v6133
      %6418 = vmatprep.subr.bf16.mxu0 %v6136
      %6419 = vmatpush1.bf16.msra.mxu0 %v6135
      %6420 = vmatprep.subr.bf16.mxu0 %v6138
      %6421 = vmatpush1.bf16.msra.mxu0 %v6137
      %6422 = vmatprep.subr.bf16.mxu0 %v6140
      %6423 = vmatpush1.bf16.msra.mxu0 %v6139
      %6424 = vmatprep.subr.bf16.mxu0 %v6142
      %6425 = vmatpush1.bf16.msra.mxu0 %v6141
      %6426 = vmatprep.subr.bf16.mxu0 %v6144
      %6427 = vmatpush1.bf16.msra.mxu0 %v6143
      %6428 = vmatprep.subr.bf16.mxu0 %v6146
      %6429 = vmatpush1.bf16.msra.mxu0 %v6145
      %6430 = vmatprep.subr.bf16.mxu0 %v6148
      %6431 = vmatpush1.bf16.msra.mxu0 %v6147
      %6432 = vmatprep.subr.bf16.mxu0 %v6150
      %6433 = vmatpush1.bf16.msra.mxu0 %v6149
      %6434 = vmatprep.subr.bf16.mxu0 %v6152
      %6435 = vmatpush1.bf16.msra.mxu0 %v6151
      %6436 = vmatprep.subr.bf16.mxu0 %v6154
      %6437 = vmatpush1.bf16.msra.mxu0 %v6153
      %6438 = vmatprep.subr.bf16.mxu0 %v6156
      %6439 = vmatpush1.bf16.msra.mxu0 %v6155
      %6440 = vmatprep.subr.bf16.mxu0 %v6158
      %6441 = vmatpush1.bf16.msra.mxu0 %v6157
      %6442 = vmatprep.subr.bf16.mxu0 %v6160
      %6443 = vmatpush1.bf16.msra.mxu0 %v6159
      %6444 = vmatprep.subr.bf16.mxu0 %v6162
      %6445 = vmatpush1.bf16.msra.mxu0 %v6161
      %6446 = vmatprep.mubr.bf16.mxu0 %v5509
      %6447 = vmatmul.mubr.bf16.gmra.mrb[0].mxu0 %v5505
      %v6448 = vpop.f32.mrb[0].mxu0
      %v6449 = vadd.f32 %v6408, %v6448
      %v6450 = vpop.f32.mrb[0].mxu0
      %v6451 = vadd.f32 %v6410, %v6450
      %v6452 = vpop.f32.mrb[0].mxu0
      %v6453 = vpop.f32.mrb[0].mxu0
      %6454 = vdwg.mxu0
      %v6455 = vmax.f32 %v6449, 0.0
      %v6456 = vmax.f32 %v6451, 0.0
      %v6457 = vpack.c.bf16 %v6455, %v6455
      %v6458 = vpack.c.bf16 %v6456, %v6456
      %v6459 = vld [vmem:[%s19] sm:$0xf]
      %v6460 = vld [vmem:[%s19 + $0x4] sm:$0xf]
      %v6461 = vld [vmem:[%s19 + $0x8] sm:$0xf]
      %v6462 = vld [vmem:[%s19 + $0xc] sm:$0xf]
      %v6463 = vld [vmem:[%s19 + $0x10] sm:$0xf]
      %v6464 = vld [vmem:[%s19 + $0x14] sm:$0xf]
      %v6465 = vld [vmem:[%s19 + $0x18] sm:$0xf]
      %v6466 = vld [vmem:[%s19 + $0x1c] sm:$0xf]
      %v6467 = vld [vmem:[%s19 + $0x20] sm:$0xf]
      %v6468 = vld [vmem:[%s19 + $0x24] sm:$0xf]
      %v6469 = vld [vmem:[%s19 + $0x28] sm:$0xf]
      %v6470 = vld [vmem:[%s19 + $0x2c] sm:$0xf]
      %v6471 = vld [vmem:[%s19 + $0x30] sm:$0xf]
      %v6472 = vld [vmem:[%s19 + $0x34] sm:$0xf]
      %v6473 = vld [vmem:[%s19 + $0x38] sm:$0xf]
      %v6474 = vld [vmem:[%s19 + $0x3c] sm:$0xf]
      %v6475 = vld [vmem:[%s19 + $0x40] sm:$0xf]
      %v6476 = vld [vmem:[%s19 + $0x44] sm:$0xf]
      %v6477 = vld [vmem:[%s19 + $0x48] sm:$0xf]
      %v6478 = vld [vmem:[%s19 + $0x4c] sm:$0xf]
      %v6479 = vld [vmem:[%s19 + $0x50] sm:$0xf]
      %v6480 = vld [vmem:[%s19 + $0x54] sm:$0xf]
      %v6481 = vld [vmem:[%s19 + $0x58] sm:$0xf]
      %v6482 = vld [vmem:[%s19 + $0x5c] sm:$0xf]
      %v6483 = vld [vmem:[%s19 + $0x60] sm:$0xf]
      %v6484 = vld [vmem:[%s19 + $0x64] sm:$0xf]
      %v6485 = vld [vmem:[%s19 + $0x68] sm:$0xf]
      %v6486 = vld [vmem:[%s19 + $0x6c] sm:$0xf]
      %v6487 = vld [vmem:[%s19 + $0x70] sm:$0xf]
      %v6488 = vld [vmem:[%s19 + $0x74] sm:$0xf]
      %v6489 = vld [vmem:[%s19 + $0x78] sm:$0xf]
      %v6490 = vld [vmem:[%s19 + $0x7c] sm:$0xf]
      %v6491 = vld [vmem:[%s20] sm:$0x1]
      %v6493 = vlaneseq
      %v6494 = vshrl.u32 %v6493, 7
      %v6495 = vsub.s32 0, %v6494
      %v6496 = vrot.slane %v6491, %v6495
      %v6530 = vunpack.c.l.b16 %v6459
      %v6531 = vunpack.c.l.b16 %v6460
      %v6532 = vunpack.c.l.b16 %v6461
      %v6533 = vunpack.c.l.b16 %v6462
      %v6534 = vunpack.c.l.b16 %v6463
      %v6535 = vunpack.c.l.b16 %v6464
      %v6536 = vunpack.c.l.b16 %v6465
      %v6537 = vunpack.c.l.b16 %v6466
      %v6538 = vunpack.c.l.b16 %v6467
      %v6539 = vunpack.c.l.b16 %v6468
      %v6540 = vunpack.c.l.b16 %v6469
      %v6541 = vunpack.c.l.b16 %v6470
      %v6542 = vunpack.c.l.b16 %v6471
      %v6543 = vunpack.c.l.b16 %v6472
      %v6544 = vunpack.c.l.b16 %v6473
      %v6545 = vunpack.c.l.b16 %v6474
      %v6546 = vunpack.c.l.b16 %v6475
      %v6547 = vunpack.c.l.b16 %v6476
      %v6548 = vunpack.c.l.b16 %v6477
      %v6549 = vunpack.c.l.b16 %v6478
      %v6550 = vunpack.c.l.b16 %v6479
      %v6551 = vunpack.c.l.b16 %v6480
      %v6552 = vunpack.c.l.b16 %v6481
      %v6553 = vunpack.c.l.b16 %v6482
      %v6554 = vunpack.c.l.b16 %v6483
      %v6555 = vunpack.c.l.b16 %v6484
      %v6556 = vunpack.c.l.b16 %v6485
      %v6557 = vunpack.c.l.b16 %v6486
      %v6558 = vunpack.c.l.b16 %v6487
      %v6559 = vunpack.c.l.b16 %v6488
      %v6560 = vunpack.c.l.b16 %v6489
      %v6561 = vunpack.c.l.b16 %v6490
      %v6562 = vpack.c.b16 %v6531, %v6530
      %v6563 = vpack.c.b16 %v6533, %v6532
      %v6564 = vpack.c.b16 %v6535, %v6534
      %v6565 = vpack.c.b16 %v6537, %v6536
      %v6566 = vpack.c.b16 %v6539, %v6538
      %v6567 = vpack.c.b16 %v6541, %v6540
      %v6568 = vpack.c.b16 %v6543, %v6542
      %v6569 = vpack.c.b16 %v6545, %v6544
      %v6570 = vpack.c.b16 %v6547, %v6546
      %v6571 = vpack.c.b16 %v6549, %v6548
      %v6572 = vpack.c.b16 %v6551, %v6550
      %v6573 = vpack.c.b16 %v6553, %v6552
      %v6574 = vpack.c.b16 %v6555, %v6554
      %v6575 = vpack.c.b16 %v6557, %v6556
      %v6576 = vpack.c.b16 %v6559, %v6558
      %v6577 = vpack.c.b16 %v6561, %v6560
      %6594 = vmatprep.subr.bf16.mxu0 0
      %6595 = vmatpush1.bf16.msra.mxu0 %v6562
      %6596 = vmatprep.subr.bf16.mxu0 0
      %6597 = vmatpush1.bf16.msra.mxu0 %v6563
      %6598 = vmatprep.subr.bf16.mxu0 0
      %6599 = vmatpush1.bf16.msra.mxu0 %v6564
      %6600 = vmatprep.subr.bf16.mxu0 0
      %6601 = vmatpush1.bf16.msra.mxu0 %v6565
      %6602 = vmatprep.subr.bf16.mxu0 0
      %6603 = vmatpush1.bf16.msra.mxu0 %v6566
      %6604 = vmatprep.subr.bf16.mxu0 0
      %6605 = vmatpush1.bf16.msra.mxu0 %v6567
      %6606 = vmatprep.subr.bf16.mxu0 0
      %6607 = vmatpush1.bf16.msra.mxu0 %v6568
      %6608 = vmatprep.subr.bf16.mxu0 0
      %6609 = vmatpush1.bf16.msra.mxu0 %v6569
      %6610 = vmatprep.subr.bf16.mxu0 0
      %6611 = vmatpush1.bf16.msra.mxu0 %v6570
      %6612 = vmatprep.subr.bf16.mxu0 0
      %6613 = vmatpush1.bf16.msra.mxu0 %v6571
      %6614 = vmatprep.subr.bf16.mxu0 0
      %6615 = vmatpush1.bf16.msra.mxu0 %v6572
      %6616 = vmatprep.subr.bf16.mxu0 0
      %6617 = vmatpush1.bf16.msra.mxu0 %v6573
      %6618 = vmatprep.subr.bf16.mxu0 0
      %6619 = vmatpush1.bf16.msra.mxu0 %v6574
      %6620 = vmatprep.subr.bf16.mxu0 0
      %6621 = vmatpush1.bf16.msra.mxu0 %v6575
      %6622 = vmatprep.subr.bf16.mxu0 0
      %6623 = vmatpush1.bf16.msra.mxu0 %v6576
      %6624 = vmatprep.subr.bf16.mxu0 0
      %6625 = vmatpush1.bf16.msra.mxu0 %v6577
      %6626 = vmatprep.mubr.bf16.mxu0 %v6458
      %6627 = vmatmul.mubr.bf16.gmra.mrb[0].mxu0 %v6457
      %v6628 = vpop.f32.mrb[0].mxu0
      %v6629 = vadd.f32 %v6496, %v6628
      %v6630 = vpop.f32.mrb[0].mxu0
      %v6631 = vpop.f32.mrb[0].mxu0
      %v6632 = vpop.f32.mrb[0].mxu0
      %6633 = vdwg.mxu0
      %v6634 = vsub.f32 0.0, %v6629
      %v6635 = vmul.f32 %v6634, 1.442695
      %v6636 = vpow.pop %v6635
      %v6637 = vadd.f32 %v6636, 1.0
      %v6638 = vrcp.pop %v6637
      %6639 = vst [vmem:[%s656] sm:$0xff] %v6638
      %p6640 = scmp.lt.s32.totalorder %s32, 1
      %s6641 = scalar_select %p6640, %s32, 1
      %s6642 = smul.addr %s6641, 8
      %s6643 = scalar_lea.vmem %s21, %s6642
      // Predicated region
      $region105: #{simple_detection_net.1} parent=103 // pred_check
        %p6644 = pneg %p496
      $region106: #{simple_detection_net.1} parent=103 // pred_check_branch
        %6646 = sbr.rel (%p6644) target = $region108
      $region107: #{simple_detection_net.1} parent=103 // pred_region
        _
      $region108: #{simple_detection_net.1} parent=103 // pred_fallthru
        _
    $region104: #{simple_detection_net.1} parent=5 // pred_fallthru
      _
    %p6647 = scmp.le.s32.totalorder 2, %s27
    // Predicated region
    $region109: #{simple_detection_net.1} parent=5 // pred_check
      %p6648 = pneg %p6647
    $region110: #{simple_detection_net.1} parent=5 // pred_check_branch
      %6650 = sbr.rel (%p6648) target = $region112
    $region111: #{simple_detection_net.1} parent=5 // pred_region
      %s6651 = ssub.s32 %s27, 2
      // Predicated region
      $region113: #{simple_detection_net.1} parent=111 // pred_check
        %p6652 = pneg %p502
      $region114: #{simple_detection_net.1} parent=111 // pred_check_branch
        %6654 = sbr.rel (%p6652) target = $region116
      $region115: #{simple_detection_net.1} parent=111 // pred_region
        %p6655 = scmp.lt.s32.totalorder %s33, 1
        %s6656 = scalar_select %p6655, %s33, 1
        %s6657 = smul.addr %s6656, 8
        %s6658 = scalar_lea.vmem %s21, %s6657
      $region116: #{simple_detection_net.1} parent=111 // pred_fallthru
        _
    $region112: #{simple_detection_net.1} parent=5 // pred_fallthru
      _
  $region6: #{simple_detection_net.1} parent=0 // loop_footer
    %s31 = sadd.s32 1, %s27
  $region7: #{simple_detection_net.1} parent=0 // loop_footer_branch
    %26 = sbr.rel target = $region3
  $region8: #{simple_detection_net.1} parent=0 // loop_exit
    _

</llo_original>
